<compile_context>
chip_gen: v7x
topology: tpu7x:2x2x1
jax: 0.10.0
libtpu: 0.0.40
codegen_flags: <defaults>
</compile_context>

<pallas_src>
import functools
import math

import jax
import jax.numpy as jnp
from jax import lax
from jax.experimental import pallas as pl
from jax.experimental.pallas import tpu as pltpu

HIDDEN = 768
NUM_HEADS = 4
HEAD_DIM = HIDDEN // NUM_HEADS        # 192 (not 128-lane aligned)
HEAD_DIM_PAD = 256                    # zero-pad so per-head slices are lane aligned
Q_WIDTH = NUM_HEADS * HEAD_DIM_PAD    # 1024
KV_WIDTH = 2 * Q_WIDTH                # 2048
QKV_WIDTH = 3 * Q_WIDTH               # 3072
MIB = 1024 * 1024


# ---------------------------------------------------------------------------
# Kernel 1: fused, pre-scaled QKV projection (row-tiled GEMM).
# ---------------------------------------------------------------------------
def _qkv_proj_kernel(x_ref, wqkv_ref, bqkv_ref, q_ref, kv_ref):
    # x block: (TM, 768) bf16; wqkv: (768, 3072) bf16 with 1/sqrt(192) already
    # folded into the Q columns; bqkv: (1, 3072) f32.
    qkv = jnp.dot(x_ref[...], wqkv_ref[...],
                  preferred_element_type=jnp.float32) + bqkv_ref[...]
    qkv = qkv.astype(jnp.bfloat16)     # single f32->bf16 cast after the bias add
    q_ref[...] = qkv[:, :Q_WIDTH]      # 128-aligned column split: [Q | K,V]
    kv_ref[...] = qkv[:, Q_WIDTH:]


# ---------------------------------------------------------------------------
# Kernel 2: attention + fused output projection, per (batch, 128-query tile).
# ---------------------------------------------------------------------------
def _attention_kernel(q_ref, kv_ref, wo_ref, bo_ref, out_ref, *, seq_len):
    tq = q_ref.shape[1]                # query-tile rows
    s_pad = kv_ref.shape[1]            # padded key length

    # Key-only padding mask as a (1, S_pad) additive f32 bias, computed once
    # outside the head loop (broadcast add per head is nearly free).
    if s_pad != seq_len:
        key_ids = lax.broadcasted_iota(jnp.int32, (1, s_pad), 1)
        key_bias = jnp.where(key_ids < seq_len,
                             jnp.float32(0.0), jnp.float32(-1e30))
    else:
        key_bias = None

    out_acc = jnp.zeros((tq, HIDDEN), jnp.float32)
    # TODO(synk): if bundle dumps show spill vld/vst traffic at S_pad >= 512,
    # switch this static unroll to a lax.fori_loop so only one head's scores
    # stay live at a time.
    for h in range(NUM_HEADS):          # static unroll; offsets 256-aligned
        off = h * HEAD_DIM_PAD
        q_h = q_ref[0, :, off:off + HEAD_DIM_PAD]                  # (TQ, 256)
        k_h = kv_ref[0, :, off:off + HEAD_DIM_PAD]                 # (S_pad, 256)
        v_h = kv_ref[0, :, Q_WIDTH + off:Q_WIDTH + off + HEAD_DIM_PAD]

        # scores = (Q/sqrt(d)) K^T, contracting the native last axes of both
        # operands (NT form, no explicit transpose / XLU relayout).
        scores = lax.dot_general(
            q_h, k_h, dimension_numbers=(((1,), (1,)), ((), ())),
            preferred_element_type=jnp.float32)                    # (TQ, S_pad)
        if key_bias is not None:
            scores = scores + key_bias

        # Numerically stable softmax; reciprocal on the EUP (free slot).
        m = jnp.max(scores, axis=-1, keepdims=True)
        e = jnp.exp(scores - m)
        p = e * pl.reciprocal(jnp.sum(e, axis=-1, keepdims=True), approx=True)

        ctx_h = jnp.dot(p.astype(jnp.bfloat16), v_h,
                        preferred_element_type=jnp.float32)        # (TQ, 256)
        # Per-head sublane-aligned slab of Wo (replaces head concat + GEMM).
        out_acc = out_acc + jnp.dot(ctx_h.astype(jnp.bfloat16), wo_ref[h],
                                    preferred_element_type=jnp.float32)

    # TODO(synk): nn.Dropout(0.1) is stochastic in train mode; reproduced here
    # as eval-mode identity.
    out_ref[0] = (out_acc + bo_ref[...]).astype(out_ref.dtype)


def self_attention(x, wq, bq, wk, bk, wv, bv, wo, bo):
    """x: [B, S, 768]; weights [768, 768] stored [in, out]; biases [1, 768]."""
    B, S, H = x.shape
    assert H == HIDDEN
    out_dtype = x.dtype

    S_pad = max(128, ((S + 127) // 128) * 128)   # full MXU tiles everywhere
    TQ = 128
    NQ = S_pad // TQ

    # ----- host-side weight packing (once, outside the kernels) ------------
    scale = 1.0 / math.sqrt(HEAD_DIM)   # true head dim (192), not the padded 256

    def _pad_head_cols(w):              # (768, 4*192) -> (768, 4*256), zero cols
        w = w.reshape(H, NUM_HEADS, HEAD_DIM)
        w = jnp.pad(w, ((0, 0), (0, 0), (0, HEAD_DIM_PAD - HEAD_DIM)))
        return w.reshape(H, NUM_HEADS * HEAD_DIM_PAD)

    def _pad_head_bias(b):              # (1, 4*192) -> (1, 4*256)
        b = b.reshape(NUM_HEADS, HEAD_DIM)
        b = jnp.pad(b, ((0, 0), (0, HEAD_DIM_PAD - HEAD_DIM)))
        return b.reshape(1, NUM_HEADS * HEAD_DIM_PAD)

    # 1/sqrt(d) folded into the Q columns -> no in-kernel scale multiplies.
    wqkv = jnp.concatenate([_pad_head_cols(wq) * scale,
                            _pad_head_cols(wk),
                            _pad_head_cols(wv)], axis=1).astype(jnp.bfloat16)
    bqkv = jnp.concatenate([_pad_head_bias(bq) * scale,
                            _pad_head_bias(bk),
                            _pad_head_bias(bv)], axis=1).astype(jnp.float32)
    wo_p = jnp.pad(wo.reshape(NUM_HEADS, HEAD_DIM, H),
                   ((0, 0), (0, HEAD_DIM_PAD - HEAD_DIM), (0, 0))
                   ).astype(jnp.bfloat16)                      # (4, 256, 768)
    bo_p = bo.astype(jnp.float32)

    x_flat = jnp.pad(x, ((0, 0), (0, S_pad - S), (0, 0))
                     ).astype(jnp.bfloat16).reshape(B * S_pad, H)

    const = dict(pipeline_mode=pl.Buffered(1))   # grid-invariant weight blocks

    # ----- kernel 1: fused QKV projection (row-parallel) -------------------
    R = B * S_pad
    TM = 128
    for cand in (512, 256):
        if R % cand == 0 and R // cand >= 2:     # keep >=2 steps for megacore
            TM = cand
            break

    vmem_a = int(2 * TM * H * 2 + H * QKV_WIDTH * 2 + QKV_WIDTH * 4
                 + 2 * TM * Q_WIDTH * 2 + 2 * TM * KV_WIDTH * 2
                 + TM * QKV_WIDTH * 6 + 4 * MIB)
    cost_a = pl.CostEstimate(
        flops=2 * R * H * QKV_WIDTH, transcendentals=0,
        bytes_accessed=int(R * H * 2 + H * QKV_WIDTH * 2 + QKV_WIDTH * 4
                           + R * QKV_WIDTH * 2))

    q_flat, kv_flat = pl.pallas_call(
        _qkv_proj_kernel,
        out_shape=(jax.ShapeDtypeStruct((R, Q_WIDTH), jnp.bfloat16),
                   jax.ShapeDtypeStruct((R, KV_WIDTH), jnp.bfloat16)),
        grid_spec=pltpu.PrefetchScalarGridSpec(
            num_scalar_prefetch=0,
            grid=(R // TM,),
            in_specs=[
                pl.BlockSpec((TM, H), lambda i: (i, 0)),
                pl.BlockSpec((H, QKV_WIDTH), lambda i: (0, 0), **const),
                pl.BlockSpec((1, QKV_WIDTH), lambda i: (0, 0), **const),
            ],
            out_specs=[
                pl.BlockSpec((TM, Q_WIDTH), lambda i: (i, 0)),
                pl.BlockSpec((TM, KV_WIDTH), lambda i: (i, 0)),
            ],
        ),
        compiler_params=pltpu.CompilerParams(
            dimension_semantics=("parallel",),
            vmem_limit_bytes=min(vmem_a, 64 * MIB),
        ),
        cost_estimate=cost_a,
    )(x_flat, wqkv, bqkv)

    q = q_flat.reshape(B, S_pad, Q_WIDTH)
    kv = kv_flat.reshape(B, S_pad, KV_WIDTH)

    # ----- kernel 2: attention + output projection, (batch, q-tile) grid ---
    vmem_b = int(2 * TQ * Q_WIDTH * 2 + 2 * S_pad * KV_WIDTH * 2
                 + NUM_HEADS * HEAD_DIM_PAD * H * 2 + H * 4
                 + 2 * TQ * H * 2
                 + 8 * TQ * S_pad * 4 + 4 * TQ * H * 4 + 4 * MIB)
    cost_b = pl.CostEstimate(
        flops=2 * B * NUM_HEADS * (2 * S_pad * S_pad * HEAD_DIM_PAD
                                   + S_pad * HEAD_DIM_PAD * H),
        transcendentals=B * NUM_HEADS * S_pad * S_pad,
        bytes_accessed=int(B * S_pad * (Q_WIDTH + KV_WIDTH + H) * 2
                           + NUM_HEADS * HEAD_DIM_PAD * H * 2 + H * 4))

    out_pad = pl.pallas_call(
        functools.partial(_attention_kernel, seq_len=S),
        out_shape=jax.ShapeDtypeStruct((B, S_pad, H), jnp.bfloat16),
        grid_spec=pltpu.PrefetchScalarGridSpec(
            num_scalar_prefetch=0,
            grid=(B, NQ),
            in_specs=[
                pl.BlockSpec((1, TQ, Q_WIDTH), lambda b, qi: (b, qi, 0)),
                # Full K|V slab per batch; block index is constant along the
                # query axis, so it is only DMA'd when the batch changes.
                pl.BlockSpec((1, S_pad, KV_WIDTH), lambda b, qi: (b, 0, 0)),
                pl.BlockSpec((NUM_HEADS, HEAD_DIM_PAD, H),
                             lambda b, qi: (0, 0, 0), **const),
                pl.BlockSpec((1, H), lambda b, qi: (0, 0), **const),
            ],
            out_specs=pl.BlockSpec((1, TQ, H), lambda b, qi: (b, qi, 0)),
        ),
        compiler_params=pltpu.CompilerParams(
            dimension_semantics=("parallel", "parallel"),
            vmem_limit_bytes=min(vmem_b, 64 * MIB),
        ),
        cost_estimate=cost_b,
    )(q, kv, wo_p, bo_p)

    # bf16 kernel write-back halves store traffic; restore x.dtype and drop
    # the padded rows host-side in one small fused slice+cast.
    return out_pad[:, :S, :].astype(out_dtype)


def _reference(x, wq, bq, wk, bk, wv, bv, wo, bo):
    B, S, H = x.shape
    q = x @ wq + bq[0]
    k = x @ wk + bk[0]
    v = x @ wv + bv[0]

    def split(t):  # [B,S,H] -> [B, nH, S, Dh]
        return t.reshape(B, S, NUM_HEADS, HEAD_DIM).transpose(0, 2, 1, 3)

    qh, kh, vh = split(q), split(k), split(v)
    scores = jnp.einsum("bhqd,bhkd->bhqk", qh, kh) / math.sqrt(HEAD_DIM)
    p = jax.nn.softmax(scores, axis=-1)
    ctx = jnp.einsum("bhqk,bhkd->bhqd", p, vh)
    ctx = ctx.transpose(0, 2, 1, 3).reshape(B, S, H)
    return ctx @ wo + bo[0]


if __name__ == "__main__":
    B, S = 2, 16  # small sequence for the demo; hidden=768 is fixed by the module

    key = jax.random.PRNGKey(0)
    keys = jax.random.split(key, 9)

    bound = 1.0 / math.sqrt(HIDDEN)  # nn.Linear default uniform init bound

    def mk_w(k):
        return jax.random.uniform(k, (HIDDEN, HIDDEN), jnp.float32, -bound, bound)

    def mk_b(k):
        return jax.random.uniform(k, (1, HIDDEN), jnp.float32, -bound, bound)

    x = jax.random.normal(keys[0], (B, S, HIDDEN), jnp.float32)
    wq, bq = mk_w(keys[1]), mk_b(keys[2])
    wk, bk = mk_w(keys[3]), mk_b(keys[4])
    wv, bv = mk_w(keys[5]), mk_b(keys[6])
    wo, bo = mk_w(keys[7]), mk_b(keys[8])

    out = self_attention(x, wq, bq, wk, bk, wv, bv, wo, bo)
    out = jax.block_until_ready(out)

    ref = _reference(x, wq, bq, wk, bk, wv, bv, wo, bo)
    assert out.shape == (B, S, HIDDEN)
    # bf16 matmul operands / bf16 write-back (f32 accumulation) -> bf16 tolerance.
    assert jnp.allclose(out, ref, atol=2e-2, rtol=2e-2)

    print("KERNEL_OK")
</pallas_src>

<mosaic_0001>
module attributes {stable_mosaic.version = 11 : i64} {
  func.func @_qkv_proj_kernel(%arg0: i32, %arg1: memref<128x768xbf16, #tpu.memory_space<vmem>>, %arg2: memref<768x3072xbf16, #tpu.memory_space<vmem>>, %arg3: memref<1x3072xf32, #tpu.memory_space<vmem>>, %arg4: memref<128x1024xbf16, #tpu.memory_space<vmem>>, %arg5: memref<128x2048xbf16, #tpu.memory_space<vmem>>) attributes {dimension_semantics = [#tpu.dimension_semantics<parallel>], iteration_bounds = array<i64: 2>, scalar_prefetch = 0 : i64, scratch_operands = 0 : i64, tpu.core_type = #tpu.core_type<tc>, window_params = [{transform_indices = @transform_0, window_bounds = array<i64: 128, 768>}, {pipeline_mode = #tpu.pipeline_mode<synchronous>, transform_indices = @transform_1, window_bounds = array<i64: 768, 3072>}, {pipeline_mode = #tpu.pipeline_mode<synchronous>, transform_indices = @transform_2, window_bounds = array<i64: 1, 3072>}, {transform_indices = @transform_3, window_bounds = array<i64: 128, 1024>}, {transform_indices = @transform_4, window_bounds = array<i64: 128, 2048>}]} {
    %c0 = arith.constant 0 : index
    %c0_0 = arith.constant 0 : index
    %0 = vector.load %arg1[%c0, %c0_0] : memref<128x768xbf16, #tpu.memory_space<vmem>>, vector<128x768xbf16>
    %c0_1 = arith.constant 0 : index
    %c0_2 = arith.constant 0 : index
    %1 = vector.load %arg2[%c0_1, %c0_2] : memref<768x3072xbf16, #tpu.memory_space<vmem>>, vector<768x3072xbf16>
    %cst = arith.constant dense<0.000000e+00> : vector<128x3072xf32>
    %2 = tpu.matmul %0, %1, %cst {dimension_numbers = #tpu.dot_dimension_numbers<[1], [0], [0], [1], [0, 0, 1, 1], [], []>} : vector<128x768xbf16>, vector<768x3072xbf16>, vector<128x3072xf32> -> vector<128x3072xf32>
    %c0_3 = arith.constant 0 : index
    %c0_4 = arith.constant 0 : index
    %3 = vector.load %arg3[%c0_3, %c0_4] : memref<1x3072xf32, #tpu.memory_space<vmem>>, vector<1x3072xf32>
    %4 = vector.broadcast %3 : vector<1x3072xf32> to vector<128x3072xf32>
    %5 = arith.addf %2, %4 : vector<128x3072xf32>
    %6 = arith.truncf %5 : vector<128x3072xf32> to vector<128x3072xbf16>
    %7 = vector.extract_strided_slice %6 {offsets = [0, 0], sizes = [128, 1024], strides = [1, 1]} : vector<128x3072xbf16> to vector<128x1024xbf16>
    %c0_5 = arith.constant 0 : index
    %c0_6 = arith.constant 0 : index
    %8 = vector.load %arg4[%c0_5, %c0_6] : memref<128x1024xbf16, #tpu.memory_space<vmem>>, vector<128x1024xbf16>
    tpu.vector_store %arg4[%c0_5, %c0_6], %7 {strides = array<i32>} : memref<128x1024xbf16, #tpu.memory_space<vmem>>, vector<128x1024xbf16>,
    %9 = vector.extract_strided_slice %6 {offsets = [0, 1024], sizes = [128, 2048], strides = [1, 1]} : vector<128x3072xbf16> to vector<128x2048xbf16>
    %c0_7 = arith.constant 0 : index
    %c0_8 = arith.constant 0 : index
    %10 = vector.load %arg5[%c0_7, %c0_8] : memref<128x2048xbf16, #tpu.memory_space<vmem>>, vector<128x2048xbf16>
    tpu.vector_store %arg5[%c0_7, %c0_8], %9 {strides = array<i32>} : memref<128x2048xbf16, #tpu.memory_space<vmem>>, vector<128x2048xbf16>,
    return
  }
  func.func @transform_0(%arg0: i32) -> (i32, i32) {
    %c0_i32 = arith.constant 0 : i32
    %c0_i32_0 = arith.constant 0 : i32
    return %arg0, %c0_i32 : i32, i32
  }
  func.func @transform_1(%arg0: i32) -> (i32, i32) {
    %c0_i32 = arith.constant 0 : i32
    %c0_i32_0 = arith.constant 0 : i32
    %c0_i32_1 = arith.constant 0 : i32
    return %c0_i32, %c0_i32_0 : i32, i32
  }
  func.func @transform_2(%arg0: i32) -> (i32, i32) {
    %c0_i32 = arith.constant 0 : i32
    %c0_i32_0 = arith.constant 0 : i32
    %c0_i32_1 = arith.constant 0 : i32
    return %c0_i32, %c0_i32_0 : i32, i32
  }
  func.func @transform_3(%arg0: i32) -> (i32, i32) {
    %c0_i32 = arith.constant 0 : i32
    %c0_i32_0 = arith.constant 0 : i32
    return %arg0, %c0_i32 : i32, i32
  }
  func.func @transform_4(%arg0: i32) -> (i32, i32) {
    %c0_i32 = arith.constant 0 : i32
    %c0_i32_0 = arith.constant 0 : i32
    return %arg0, %c0_i32 : i32, i32
  }
}

</mosaic_0001>

<llo_original>
// kernel: tpu_custom_call.1
$region0: #{tpu_custom_call.1}
  #allocation0 [shape = 'u32[]', space=smem, size = 0x4, offset = 0x4, fixed_abs, tag = 'smem constant byte address 0x4 - core index']
  #allocation1 [shape = 'u32[144,128]{1,0:T(1,128)}', space=vmem, size = 0x12000, scoped, tag = 'internal scratch']
  %s0 = inlined_call_operand.hbm [shape: bf16[256,768], index: 0, kind: input, shape index: {}]
  %s1 = inlined_call_operand.hbm [shape: bf16[768,3072], index: 1, kind: input, shape index: {}]
  %s2 = inlined_call_operand.hbm [shape: f32[1,3072], index: 2, kind: input, shape index: {}]
  %s3 = inlined_call_operand.hbm [shape: bf16[256,1024], index: 3, kind: output, shape index: {0}]
  %s4 = inlined_call_operand.hbm [shape: bf16[256,2048], index: 4, kind: output, shape index: {1}]
  %5 = xla_tuple %s3, %s4
  %s6 = sld [smem:[#allocation0]]
  $region65: #{tpu_custom_call.1} parent=0
    _
  %s8 = ssub.s32 1, %s6
  %s9 = scalar_select 0, %s8, %s6
  $region1: #{tpu_custom_call.1} parent=0
    #allocation2 [shape = 'u8[393216]{0}', space=vmem, size = 0x60000, scoped, tag = 'input window, operand 0']
    #allocation3 [shape = 's32[2]{0}', space=sflag, size = 0x8, scoped, tag = 'scoped memory for tpu_custom_call.1']
    #allocation4 [shape = 's32[2]{0}', space=sflag, size = 0x8, scoped, tag = 'scoped memory for tpu_custom_call.1']
    #allocation5 [shape = 'u8[4718592]{0}', space=vmem, size = 0x480000, scoped, tag = 'input window, operand 1, single buffered']
    #allocation6 [shape = 's32[1]{0}', space=sflag, size = 0x4, scoped, tag = 'scoped memory for tpu_custom_call.1']
    #allocation7 [shape = 'u8[12288]{0}', space=vmem, size = 0x3000, scoped, tag = 'input window, operand 2, single buffered']
    #allocation8 [shape = 'u8[524288]{0}', space=vmem, size = 0x80000, scoped, tag = 'output window, operand 0']
    #allocation9 [shape = 'u8[1048576]{0}', space=vmem, size = 0x100000, scoped, tag = 'output window, operand 1']
    #allocation10 [shape = 's32[2]{0}', space=sflag, size = 0x8, scoped, tag = 'scoped memory for tpu_custom_call.1']
    %10 = vsyncpa [#allocation3], 0
    %s11 = scalar_lea.sflag [#allocation3], 1
    %12 = vsyncpa %s11, 0
    %13 = vsyncpa [#allocation6], 0
    %14 = vsyncpa [#allocation4], 0
    %s15 = scalar_lea.sflag [#allocation4], 1
    %16 = vsyncpa %s15, 0
    %17 = vsyncpa [#allocation10], 0
    %s18 = scalar_lea.sflag [#allocation10], 1
    %19 = vsyncpa %s18, 0
    loop: start=0, step=1, limit=4
    $region2: #{tpu_custom_call.1} parent=1 // loop_pre_header
      _
    $region3: #{tpu_custom_call.1} parent=1 // loop_header
      %s21 = sphi 0, %s25
      %p22 = scmp.ge.s32.totalorder %s21, 4
      %s31 = sphi 0, %s33
      %s34 = sphi 0, %s31
      %s35 = sphi 0, %s34
      %s51 = sphi 0, %s35
      %s55 = sphi 0, %s55
      %s57 = sphi 0, %s55
      %s58 = sphi 0, %s57
      %s72 = sphi 0, %s58
      %s76 = sphi 0, %s76
      %s78 = sphi 0, %s76
      %s79 = sphi 0, %s78
      %s93 = sphi 0, %s79
      %s99 = sphi 0, %s101
      %s102 = sphi 0, %s99
      %s103 = sphi 0, %s102
      %s119 = sphi 0, %s103
      %s125 = sphi 0, %s127
      %s128 = sphi 0, %s125
      %s129 = sphi 0, %s128
      %s145 = sphi 0, %s129
    $region4: #{tpu_custom_call.1} parent=1 // loop_header_branch
      %24 = sbr.rel (%p22) target = $region8
    $region5: #{tpu_custom_call.1} parent=1 // loop_body
      %s26 = ssub.s32 %s21, 1
      %s27 = ssub.s32 %s21, 2
      %s28 = sadd.s32 %s21, 1
      %s29 = ssub.s32 %s21, %s28
      %p30 = scmp.eq.s32.totalorder %s29, 0
      %s32 = sadd.s32 %s31, 1
      %s33 = scalar_select %p30, %s31, %s32
      %p36 = pneg %p30
      %p37 = scmp.eq.s32.totalorder %s21, 1
      %p38 = por %p36, %p37
      %p39 = scmp.ne.s32.totalorder %s31, %s34
      %p40 = scmp.eq.s32.totalorder %s21, 0
      %p41 = por %p39, %p40
      %p42 = scmp.ne.s32.totalorder %s31, %s34
      %p43 = scmp.eq.s32.totalorder %s26, 1
      %p44 = por %p42, %p43
      %p45 = scmp.ne.s32.totalorder %s34, %s35
      %p46 = scmp.eq.s32.totalorder %s26, 0
      %p47 = por %p45, %p46
      %p48 = scmp.ne.s32.totalorder %s34, %s35
      %p49 = scmp.eq.s32.totalorder %s27, 1
      %p50 = por %p48, %p49
      %p52 = scmp.ne.s32.totalorder %s35, %s51
      %p53 = scmp.eq.s32.totalorder %s27, 0
      %p54 = por %p52, %p53
      %s56 = sadd.s32 %s55, 1
      %p59 = scmp.eq.s32.totalorder %s21, 1
      %p60 = scmp.ne.s32.totalorder %s55, %s57
      %p61 = scmp.eq.s32.totalorder %s21, 0
      %p62 = por %p60, %p61
      %p63 = scmp.ne.s32.totalorder %s55, %s57
      %p64 = scmp.eq.s32.totalorder %s26, 1
      %p65 = por %p63, %p64
      %p66 = scmp.ne.s32.totalorder %s57, %s58
      %p67 = scmp.eq.s32.totalorder %s26, 0
      %p68 = por %p66, %p67
      %p69 = scmp.ne.s32.totalorder %s57, %s58
      %p70 = scmp.eq.s32.totalorder %s27, 1
      %p71 = por %p69, %p70
      %p73 = scmp.ne.s32.totalorder %s58, %s72
      %p74 = scmp.eq.s32.totalorder %s27, 0
      %p75 = por %p73, %p74
      %s77 = sadd.s32 %s76, 1
      %p80 = scmp.eq.s32.totalorder %s21, 1
      %p81 = scmp.ne.s32.totalorder %s76, %s78
      %p82 = scmp.eq.s32.totalorder %s21, 0
      %p83 = por %p81, %p82
      %p84 = scmp.ne.s32.totalorder %s76, %s78
      %p85 = scmp.eq.s32.totalorder %s26, 1
      %p86 = por %p84, %p85
      %p87 = scmp.ne.s32.totalorder %s78, %s79
      %p88 = scmp.eq.s32.totalorder %s26, 0
      %p89 = por %p87, %p88
      %p90 = scmp.ne.s32.totalorder %s78, %s79
      %p91 = scmp.eq.s32.totalorder %s27, 1
      %p92 = por %p90, %p91
      %p94 = scmp.ne.s32.totalorder %s79, %s93
      %p95 = scmp.eq.s32.totalorder %s27, 0
      %p96 = por %p94, %p95
      %s97 = ssub.s32 %s21, %s28
      %p98 = scmp.eq.s32.totalorder %s97, 0
      %s100 = sadd.s32 %s99, 1
      %s101 = scalar_select %p98, %s99, %s100
      %p104 = pneg %p98
      %p105 = scmp.eq.s32.totalorder %s21, 1
      %p106 = por %p104, %p105
      %p107 = scmp.ne.s32.totalorder %s99, %s102
      %p108 = scmp.eq.s32.totalorder %s21, 0
      %p109 = por %p107, %p108
      %p110 = scmp.ne.s32.totalorder %s99, %s102
      %p111 = scmp.eq.s32.totalorder %s26, 1
      %p112 = por %p110, %p111
      %p113 = scmp.ne.s32.totalorder %s102, %s103
      %p114 = scmp.eq.s32.totalorder %s26, 0
      %p115 = por %p113, %p114
      %p116 = scmp.ne.s32.totalorder %s102, %s103
      %p117 = scmp.eq.s32.totalorder %s27, 1
      %p118 = por %p116, %p117
      %p120 = scmp.ne.s32.totalorder %s103, %s119
      %p121 = scmp.eq.s32.totalorder %s27, 0
      %p122 = por %p120, %p121
      %s123 = ssub.s32 %s21, %s28
      %p124 = scmp.eq.s32.totalorder %s123, 0
      %s126 = sadd.s32 %s125, 1
      %s127 = scalar_select %p124, %s125, %s126
      %p130 = pneg %p124
      %p131 = scmp.eq.s32.totalorder %s21, 1
      %p132 = por %p130, %p131
      %p133 = scmp.ne.s32.totalorder %s125, %s128
      %p134 = scmp.eq.s32.totalorder %s21, 0
      %p135 = por %p133, %p134
      %p136 = scmp.ne.s32.totalorder %s125, %s128
      %p137 = scmp.eq.s32.totalorder %s26, 1
      %p138 = por %p136, %p137
      %p139 = scmp.ne.s32.totalorder %s128, %s129
      %p140 = scmp.eq.s32.totalorder %s26, 0
      %p141 = por %p139, %p140
      %p142 = scmp.ne.s32.totalorder %s128, %s129
      %p143 = scmp.eq.s32.totalorder %s27, 1
      %p144 = por %p142, %p143
      %p146 = scmp.ne.s32.totalorder %s129, %s145
      %p147 = scmp.eq.s32.totalorder %s27, 0
      %p148 = por %p146, %p147
      %p149 = scmp.le.s32.totalorder 1, %s21
      %p150 = scmp.lt.s32.totalorder %s21, 3
      %p151 = pnand %p149, %p150
      %p152 = pneg %p151
      // Predicated region
      $region9: #{tpu_custom_call.1} parent=5 // pred_check
        _
      $region10: #{tpu_custom_call.1} parent=5 // pred_check_branch
        %154 = sbr.rel (%p151) target = $region12
      $region11: #{tpu_custom_call.1} parent=5 // pred_region
        %s155 = ssub.s32 %s21, 1
        // Predicated region
        $region13: #{tpu_custom_call.1} parent=11 // pred_check
          %p156 = pneg %p68
        $region14: #{tpu_custom_call.1} parent=11 // pred_check_branch
          %158 = sbr.rel (%p156) target = $region16
        $region15: #{tpu_custom_call.1} parent=11 // pred_region
          %s160 = ssub.s32 147456, 147456
          %161 = vsyncadd [#allocation6], %s160
          %s162 = sshll.u32 [#allocation5], 4
          %s163 = int_to_ptr.vmem [resolvable:$true] %s162
          %168 = dma.hbm_to_vmem [thread:$0]  %s1, 147456, %s163, [#allocation6], 1536, 1536, 96
        $region16: #{tpu_custom_call.1} parent=11 // pred_fallthru
          _
        // Predicated region
        $region17: #{tpu_custom_call.1} parent=11 // pred_check
          %p169 = pneg %p89
        $region18: #{tpu_custom_call.1} parent=11 // pred_check_branch
          %171 = sbr.rel (%p169) target = $region20
        $region19: #{tpu_custom_call.1} parent=11 // pred_region
          %s173 = ssub.s32 384, 384
          %174 = vsyncadd [#allocation6], %s173
          %s176 = sshll.u32 [#allocation7], 4
          %s177 = int_to_ptr.vmem [resolvable:$true] %s176
          %179 = dma.hbm_to_vmem [thread:$0]  %s2, 384, %s177, [#allocation6]
        $region20: #{tpu_custom_call.1} parent=11 // pred_fallthru
          _
      $region12: #{tpu_custom_call.1} parent=5 // pred_fallthru
        _
      %p180 = scmp.lt.s32.totalorder %s21, 2
      // Predicated region
      $region21: #{tpu_custom_call.1} parent=5 // pred_check
        %p181 = pneg %p180
      $region22: #{tpu_custom_call.1} parent=5 // pred_check_branch
        %183 = sbr.rel (%p181) target = $region24
      $region23: #{tpu_custom_call.1} parent=5 // pred_region
        // Predicated region
        $region25: #{tpu_custom_call.1} parent=23 // pred_check
          %p184 = pneg %p41
        $region26: #{tpu_custom_call.1} parent=23 // pred_check_branch
          %186 = sbr.rel (%p184) target = $region28
        $region27: #{tpu_custom_call.1} parent=23 // pred_region
          %s187 = sand.u32 %s31, 1
          %s188 = scalar_lea.sflag [#allocation3], %s187
          %s189 = sand.u32 %s31, 1
          %s190 = smul.addr %s189, 384
          %s191 = scalar_lea.vmem [#allocation2], %s190
          %s192 = smul.u32 16, %s21
          %s194 = ssub.s32 6144, 6144
          %195 = vsyncadd %s188, %s194
          %s196 = smul.addr %s192, 6
          %s197 = smul.addr %s196, 64
          %s198 = scalar_lea.hbm %s0, %s197
          %s199 = sshll.u32 %s191, 4
          %s200 = int_to_ptr.vmem [resolvable:$true] %s199
          %205 = dma.hbm_to_vmem [thread:$0]  %s198, 6144, %s200, %s188, 384, 384, 24
        $region28: #{tpu_custom_call.1} parent=23 // pred_fallthru
          _
      $region24: #{tpu_custom_call.1} parent=5 // pred_fallthru
        _
      %p206 = scmp.le.s32.totalorder 1, %s21
      %p207 = scmp.lt.s32.totalorder %s21, 3
      %p208 = pnand %p206, %p207
      %p209 = pneg %p208
      // Predicated region
      $region29: #{tpu_custom_call.1} parent=5 // pred_check
        _
      $region30: #{tpu_custom_call.1} parent=5 // pred_check_branch
        %211 = sbr.rel (%p208) target = $region32
      $region31: #{tpu_custom_call.1} parent=5 // pred_region
        %s212 = ssub.s32 %s21, 1
        %s213 = sand.u32 %s34, 1
        %s214 = scalar_lea.sflag [#allocation3], %s213
        %s215 = sand.u32 %s34, 1
        %s216 = smul.addr %s215, 384
        %s217 = scalar_lea.vmem [#allocation2], %s216
        // Predicated region
        $region33: #{tpu_custom_call.1} parent=31 // pred_check
          %p218 = pneg %p47
        $region34: #{tpu_custom_call.1} parent=31 // pred_check_branch
          %220 = sbr.rel (%p218) target = $region36
        $region35: #{tpu_custom_call.1} parent=31 // pred_region
          %221 = dma.done %s214, 6144
        $region36: #{tpu_custom_call.1} parent=31 // pred_fallthru
          _
        // Predicated region
        $region37: #{tpu_custom_call.1} parent=31 // pred_check
          %p222 = pneg %p68
        $region38: #{tpu_custom_call.1} parent=31 // pred_check_branch
          %224 = sbr.rel (%p222) target = $region40
        $region39: #{tpu_custom_call.1} parent=31 // pred_region
          %225 = dma.done [#allocation6], 147456
        $region40: #{tpu_custom_call.1} parent=31 // pred_fallthru
          _
        // Predicated region
        $region41: #{tpu_custom_call.1} parent=31 // pred_check
          %p226 = pneg %p89
        $region42: #{tpu_custom_call.1} parent=31 // pred_check_branch
          %228 = sbr.rel (%p226) target = $region44
        $region43: #{tpu_custom_call.1} parent=31 // pred_region
          %229 = dma.done [#allocation6], 384
        $region44: #{tpu_custom_call.1} parent=31 // pred_fallthru
          _
        %s230 = sand.u32 %s34, 1
        %s231 = scalar_lea.sflag [#allocation3], %s230
        %s232 = sand.u32 %s34, 1
        %s233 = smul.addr %s232, 384
        %s234 = scalar_lea.vmem [#allocation2], %s233
        %p235 = pneg %p47
        %p236 = pneg %p44
        %p237 = pneg %p68
        %p238 = pneg %p65
        %p239 = pneg %p89
        %p240 = pneg %p86
        %p241 = pneg %p115
        %p242 = pneg %p112
        %s243 = sand.u32 %s102, 1
        %s244 = scalar_lea.sflag [#allocation4], %s243
        %s245 = sand.u32 %s102, 1
        %s246 = smul.addr %s245, 512
        %s247 = scalar_lea.vmem [#allocation8], %s246
        %p248 = pneg %p141
        %p249 = pneg %p138
        %s250 = sand.u32 %s128, 1
        %s251 = scalar_lea.sflag [#allocation10], %s250
        %s252 = sand.u32 %s128, 1
        %s253 = smul.addr %s252, 1024
        %s254 = scalar_lea.vmem [#allocation9], %s253
        %s255 = smul.u32 16, %s26
        %s256 = smul.u32 16, %s26
        %s257 = smul.u32 16, %s26
        %v258 = vld [vmem:[%s217] sm:$0xff]
        %v259 = vld [vmem:[%s217 + $0x8] sm:$0xff]
        %v260 = vld [vmem:[%s217 + $0x10] sm:$0xff]
        %v261 = vld [vmem:[%s217 + $0x18] sm:$0xff]
        %v262 = vld [vmem:[%s217 + $0x20] sm:$0xff]
        %v263 = vld [vmem:[%s217 + $0x28] sm:$0xff]
        %v264 = vld [vmem:[%s217 + $0x30] sm:$0xff]
        %v265 = vld [vmem:[%s217 + $0x38] sm:$0xff]
        %v266 = vld [vmem:[%s217 + $0x40] sm:$0xff]
        %v267 = vld [vmem:[%s217 + $0x48] sm:$0xff]
        %v268 = vld [vmem:[%s217 + $0x50] sm:$0xff]
        %v269 = vld [vmem:[%s217 + $0x58] sm:$0xff]
        %v270 = vld [vmem:[%s217 + $0x60] sm:$0xff]
        %v271 = vld [vmem:[%s217 + $0x68] sm:$0xff]
        %v272 = vld [vmem:[%s217 + $0x70] sm:$0xff]
        %v273 = vld [vmem:[%s217 + $0x78] sm:$0xff]
        %v274 = vld [vmem:[%s217 + $0x80] sm:$0xff]
        %v275 = vld [vmem:[%s217 + $0x88] sm:$0xff]
        %v276 = vld [vmem:[%s217 + $0x90] sm:$0xff]
        %v277 = vld [vmem:[%s217 + $0x98] sm:$0xff]
        %v278 = vld [vmem:[%s217 + $0xa0] sm:$0xff]
        %v279 = vld [vmem:[%s217 + $0xa8] sm:$0xff]
        %v280 = vld [vmem:[%s217 + $0xb0] sm:$0xff]
        %v281 = vld [vmem:[%s217 + $0xb8] sm:$0xff]
        %v282 = vld [vmem:[%s217 + $0xc0] sm:$0xff]
        %v283 = vld [vmem:[%s217 + $0xc8] sm:$0xff]
        %v284 = vld [vmem:[%s217 + $0xd0] sm:$0xff]
        %v285 = vld [vmem:[%s217 + $0xd8] sm:$0xff]
        %v286 = vld [vmem:[%s217 + $0xe0] sm:$0xff]
        %v287 = vld [vmem:[%s217 + $0xe8] sm:$0xff]
        %v288 = vld [vmem:[%s217 + $0xf0] sm:$0xff]
        %v289 = vld [vmem:[%s217 + $0xf8] sm:$0xff]
        %v290 = vld [vmem:[%s217 + $0x100] sm:$0xff]
        %v291 = vld [vmem:[%s217 + $0x108] sm:$0xff]
        %v292 = vld [vmem:[%s217 + $0x110] sm:$0xff]
        %v293 = vld [vmem:[%s217 + $0x118] sm:$0xff]
        %v294 = vld [vmem:[%s217 + $0x120] sm:$0xff]
        %v295 = vld [vmem:[%s217 + $0x128] sm:$0xff]
        %v296 = vld [vmem:[%s217 + $0x130] sm:$0xff]
        %v297 = vld [vmem:[%s217 + $0x138] sm:$0xff]
        %v298 = vld [vmem:[%s217 + $0x140] sm:$0xff]
        %v299 = vld [vmem:[%s217 + $0x148] sm:$0xff]
        %v300 = vld [vmem:[%s217 + $0x150] sm:$0xff]
        %v301 = vld [vmem:[%s217 + $0x158] sm:$0xff]
        %v302 = vld [vmem:[%s217 + $0x160] sm:$0xff]
        %v303 = vld [vmem:[%s217 + $0x168] sm:$0xff]
        %v304 = vld [vmem:[%s217 + $0x170] sm:$0xff]
        %v305 = vld [vmem:[%s217 + $0x178] sm:$0xff]
        %v306 = vld [vmem:[#allocation5] sm:$0xff]
        %v307 = vld [vmem:[#allocation5 + $0x8] sm:$0xff]
        %v308 = vld [vmem:[#allocation5 + $0x10] sm:$0xff]
        %v309 = vld [vmem:[#allocation5 + $0x18] sm:$0xff]
        %v310 = vld [vmem:[#allocation5 + $0x20] sm:$0xff]
        %v311 = vld [vmem:[#allocation5 + $0x28] sm:$0xff]
        %v312 = vld [vmem:[#allocation5 + $0x30] sm:$0xff]
        %v313 = vld [vmem:[#allocation5 + $0x38] sm:$0xff]
        %v314 = vld [vmem:[#allocation5 + $0x40] sm:$0xff]
        %v315 = vld [vmem:[#allocation5 + $0x48] sm:$0xff]
        %v316 = vld [vmem:[#allocation5 + $0x50] sm:$0xff]
        %v317 = vld [vmem:[#allocation5 + $0x58] sm:$0xff]
        %v318 = vld [vmem:[#allocation5 + $0x60] sm:$0xff]
        %v319 = vld [vmem:[#allocation5 + $0x68] sm:$0xff]
        %v320 = vld [vmem:[#allocation5 + $0x70] sm:$0xff]
        %v321 = vld [vmem:[#allocation5 + $0x78] sm:$0xff]
        %v322 = vld [vmem:[#allocation5 + $0x80] sm:$0xff]
        %v323 = vld [vmem:[#allocation5 + $0x88] sm:$0xff]
        %v324 = vld [vmem:[#allocation5 + $0x90] sm:$0xff]
        %v325 = vld [vmem:[#allocation5 + $0x98] sm:$0xff]
        %v326 = vld [vmem:[#allocation5 + $0xa0] sm:$0xff]
        %v327 = vld [vmem:[#allocation5 + $0xa8] sm:$0xff]
        %v328 = vld [vmem:[#allocation5 + $0xb0] sm:$0xff]
        %v329 = vld [vmem:[#allocation5 + $0xb8] sm:$0xff]
        %v330 = vld [vmem:[#allocation5 + $0xc0] sm:$0xff]
        %v331 = vld [vmem:[#allocation5 + $0xc8] sm:$0xff]
        %v332 = vld [vmem:[#allocation5 + $0xd0] sm:$0xff]
        %v333 = vld [vmem:[#allocation5 + $0xd8] sm:$0xff]
        %v334 = vld [vmem:[#allocation5 + $0xe0] sm:$0xff]
        %v335 = vld [vmem:[#allocation5 + $0xe8] sm:$0xff]
        %v336 = vld [vmem:[#allocation5 + $0xf0] sm:$0xff]
        %v337 = vld [vmem:[#allocation5 + $0xf8] sm:$0xff]
        %v338 = vld [vmem:[#allocation5 + $0x100] sm:$0xff]
        %v339 = vld [vmem:[#allocation5 + $0x108] sm:$0xff]
        %v340 = vld [vmem:[#allocation5 + $0x110] sm:$0xff]
        %v341 = vld [vmem:[#allocation5 + $0x118] sm:$0xff]
        %v342 = vld [vmem:[#allocation5 + $0x120] sm:$0xff]
        %v343 = vld [vmem:[#allocation5 + $0x128] sm:$0xff]
        %v344 = vld [vmem:[#allocation5 + $0x130] sm:$0xff]
        %v345 = vld [vmem:[#allocation5 + $0x138] sm:$0xff]
        %v346 = vld [vmem:[#allocation5 + $0x140] sm:$0xff]
        %v347 = vld [vmem:[#allocation5 + $0x148] sm:$0xff]
        %v348 = vld [vmem:[#allocation5 + $0x150] sm:$0xff]
        %v349 = vld [vmem:[#allocation5 + $0x158] sm:$0xff]
        %v350 = vld [vmem:[#allocation5 + $0x160] sm:$0xff]
        %v351 = vld [vmem:[#allocation5 + $0x168] sm:$0xff]
        %v352 = vld [vmem:[#allocation5 + $0x170] sm:$0xff]
        %v353 = vld [vmem:[#allocation5 + $0x178] sm:$0xff]
        %v354 = vld [vmem:[#allocation5 + $0x180] sm:$0xff]
        %v355 = vld [vmem:[#allocation5 + $0x188] sm:$0xff]
        %v356 = vld [vmem:[#allocation5 + $0x190] sm:$0xff]
        %v357 = vld [vmem:[#allocation5 + $0x198] sm:$0xff]
        %v358 = vld [vmem:[#allocation5 + $0x1a0] sm:$0xff]
        %v359 = vld [vmem:[#allocation5 + $0x1a8] sm:$0xff]
        %v360 = vld [vmem:[#allocation5 + $0x1b0] sm:$0xff]
        %v361 = vld [vmem:[#allocation5 + $0x1b8] sm:$0xff]
        %v362 = vld [vmem:[#allocation5 + $0x1c0] sm:$0xff]
        %v363 = vld [vmem:[#allocation5 + $0x1c8] sm:$0xff]
        %v364 = vld [vmem:[#allocation5 + $0x1d0] sm:$0xff]
        %v365 = vld [vmem:[#allocation5 + $0x1d8] sm:$0xff]
        %v366 = vld [vmem:[#allocation5 + $0x1e0] sm:$0xff]
        %v367 = vld [vmem:[#allocation5 + $0x1e8] sm:$0xff]
        %v368 = vld [vmem:[#allocation5 + $0x1f0] sm:$0xff]
        %v369 = vld [vmem:[#allocation5 + $0x1f8] sm:$0xff]
        %v370 = vld [vmem:[#allocation5 + $0x200] sm:$0xff]
        %v371 = vld [vmem:[#allocation5 + $0x208] sm:$0xff]
        %v372 = vld [vmem:[#allocation5 + $0x210] sm:$0xff]
        %v373 = vld [vmem:[#allocation5 + $0x218] sm:$0xff]
        %v374 = vld [vmem:[#allocation5 + $0x220] sm:$0xff]
        %v375 = vld [vmem:[#allocation5 + $0x228] sm:$0xff]
        %v376 = vld [vmem:[#allocation5 + $0x230] sm:$0xff]
        %v377 = vld [vmem:[#allocation5 + $0x238] sm:$0xff]
        %v378 = vld [vmem:[#allocation5 + $0x240] sm:$0xff]
        %v379 = vld [vmem:[#allocation5 + $0x248] sm:$0xff]
        %v380 = vld [vmem:[#allocation5 + $0x250] sm:$0xff]
        %v381 = vld [vmem:[#allocation5 + $0x258] sm:$0xff]
        %v382 = vld [vmem:[#allocation5 + $0x260] sm:$0xff]
        %v383 = vld [vmem:[#allocation5 + $0x268] sm:$0xff]
        %v384 = vld [vmem:[#allocation5 + $0x270] sm:$0xff]
        %v385 = vld [vmem:[#allocation5 + $0x278] sm:$0xff]
        %v386 = vld [vmem:[#allocation5 + $0x280] sm:$0xff]
        %v387 = vld [vmem:[#allocation5 + $0x288] sm:$0xff]
        %v388 = vld [vmem:[#allocation5 + $0x290] sm:$0xff]
        %v389 = vld [vmem:[#allocation5 + $0x298] sm:$0xff]
        %v390 = vld [vmem:[#allocation5 + $0x2a0] sm:$0xff]
        %v391 = vld [vmem:[#allocation5 + $0x2a8] sm:$0xff]
        %v392 = vld [vmem:[#allocation5 + $0x2b0] sm:$0xff]
        %v393 = vld [vmem:[#allocation5 + $0x2b8] sm:$0xff]
        %v394 = vld [vmem:[#allocation5 + $0x2c0] sm:$0xff]
        %v395 = vld [vmem:[#allocation5 + $0x2c8] sm:$0xff]
        %v396 = vld [vmem:[#allocation5 + $0x2d0] sm:$0xff]
        %v397 = vld [vmem:[#allocation5 + $0x2d8] sm:$0xff]
        %v398 = vld [vmem:[#allocation5 + $0x2e0] sm:$0xff]
        %v399 = vld [vmem:[#allocation5 + $0x2e8] sm:$0xff]
        %v400 = vld [vmem:[#allocation5 + $0x2f0] sm:$0xff]
        %v401 = vld [vmem:[#allocation5 + $0x2f8] sm:$0xff]
        %v402 = vld [vmem:[#allocation5 + $0x300] sm:$0xff]
        %v403 = vld [vmem:[#allocation5 + $0x308] sm:$0xff]
        %v404 = vld [vmem:[#allocation5 + $0x310] sm:$0xff]
        %v405 = vld [vmem:[#allocation5 + $0x318] sm:$0xff]
        %v406 = vld [vmem:[#allocation5 + $0x320] sm:$0xff]
        %v407 = vld [vmem:[#allocation5 + $0x328] sm:$0xff]
        %v408 = vld [vmem:[#allocation5 + $0x330] sm:$0xff]
        %v409 = vld [vmem:[#allocation5 + $0x338] sm:$0xff]
        %v410 = vld [vmem:[#allocation5 + $0x340] sm:$0xff]
        %v411 = vld [vmem:[#allocation5 + $0x348] sm:$0xff]
        %v412 = vld [vmem:[#allocation5 + $0x350] sm:$0xff]
        %v413 = vld [vmem:[#allocation5 + $0x358] sm:$0xff]
        %v414 = vld [vmem:[#allocation5 + $0x360] sm:$0xff]
        %v415 = vld [vmem:[#allocation5 + $0x368] sm:$0xff]
        %v416 = vld [vmem:[#allocation5 + $0x370] sm:$0xff]
        %v417 = vld [vmem:[#allocation5 + $0x378] sm:$0xff]
        %v418 = vld [vmem:[#allocation5 + $0x380] sm:$0xff]
        %v419 = vld [vmem:[#allocation5 + $0x388] sm:$0xff]
        %v420 = vld [vmem:[#allocation5 + $0x390] sm:$0xff]
        %v421 = vld [vmem:[#allocation5 + $0x398] sm:$0xff]
        %v422 = vld [vmem:[#allocation5 + $0x3a0] sm:$0xff]
        %v423 = vld [vmem:[#allocation5 + $0x3a8] sm:$0xff]
        %v424 = vld [vmem:[#allocation5 + $0x3b0] sm:$0xff]
        %v425 = vld [vmem:[#allocation5 + $0x3b8] sm:$0xff]
        %v426 = vld [vmem:[#allocation5 + $0x3c0] sm:$0xff]
        %v427 = vld [vmem:[#allocation5 + $0x3c8] sm:$0xff]
        %v428 = vld [vmem:[#allocation5 + $0x3d0] sm:$0xff]
        %v429 = vld [vmem:[#allocation5 + $0x3d8] sm:$0xff]
        %v430 = vld [vmem:[#allocation5 + $0x3e0] sm:$0xff]
        %v431 = vld [vmem:[#allocation5 + $0x3e8] sm:$0xff]
        %v432 = vld [vmem:[#allocation5 + $0x3f0] sm:$0xff]
        %v433 = vld [vmem:[#allocation5 + $0x3f8] sm:$0xff]
        %v434 = vld [vmem:[#allocation5 + $0x400] sm:$0xff]
        %v435 = vld [vmem:[#allocation5 + $0x408] sm:$0xff]
        %v436 = vld [vmem:[#allocation5 + $0x410] sm:$0xff]
        %v437 = vld [vmem:[#allocation5 + $0x418] sm:$0xff]
        %v438 = vld [vmem:[#allocation5 + $0x420] sm:$0xff]
        %v439 = vld [vmem:[#allocation5 + $0x428] sm:$0xff]
        %v440 = vld [vmem:[#allocation5 + $0x430] sm:$0xff]
        %v441 = vld [vmem:[#allocation5 + $0x438] sm:$0xff]
        %v442 = vld [vmem:[#allocation5 + $0x440] sm:$0xff]
        %v443 = vld [vmem:[#allocation5 + $0x448] sm:$0xff]
        %v444 = vld [vmem:[#allocation5 + $0x450] sm:$0xff]
        %v445 = vld [vmem:[#allocation5 + $0x458] sm:$0xff]
        %v446 = vld [vmem:[#allocation5 + $0x460] sm:$0xff]
        %v447 = vld [vmem:[#allocation5 + $0x468] sm:$0xff]
        %v448 = vld [vmem:[#allocation5 + $0x470] sm:$0xff]
        %v449 = vld [vmem:[#allocation5 + $0x478] sm:$0xff]
        %v450 = vld [vmem:[#allocation5 + $0x480] sm:$0xff]
        %v451 = vld [vmem:[#allocation5 + $0x488] sm:$0xff]
        %v452 = vld [vmem:[#allocation5 + $0x490] sm:$0xff]
        %v453 = vld [vmem:[#allocation5 + $0x498] sm:$0xff]
        %v454 = vld [vmem:[#allocation5 + $0x4a0] sm:$0xff]
        %v455 = vld [vmem:[#allocation5 + $0x4a8] sm:$0xff]
        %v456 = vld [vmem:[#allocation5 + $0x4b0] sm:$0xff]
        %v457 = vld [vmem:[#allocation5 + $0x4b8] sm:$0xff]
        %v458 = vld [vmem:[#allocation5 + $0x4c0] sm:$0xff]
        %v459 = vld [vmem:[#allocation5 + $0x4c8] sm:$0xff]
        %v460 = vld [vmem:[#allocation5 + $0x4d0] sm:$0xff]
        %v461 = vld [vmem:[#allocation5 + $0x4d8] sm:$0xff]
        %v462 = vld [vmem:[#allocation5 + $0x4e0] sm:$0xff]
        %v463 = vld [vmem:[#allocation5 + $0x4e8] sm:$0xff]
        %v464 = vld [vmem:[#allocation5 + $0x4f0] sm:$0xff]
        %v465 = vld [vmem:[#allocation5 + $0x4f8] sm:$0xff]
        %v466 = vld [vmem:[#allocation5 + $0x500] sm:$0xff]
        %v467 = vld [vmem:[#allocation5 + $0x508] sm:$0xff]
        %v468 = vld [vmem:[#allocation5 + $0x510] sm:$0xff]
        %v469 = vld [vmem:[#allocation5 + $0x518] sm:$0xff]
        %v470 = vld [vmem:[#allocation5 + $0x520] sm:$0xff]
        %v471 = vld [vmem:[#allocation5 + $0x528] sm:$0xff]
        %v472 = vld [vmem:[#allocation5 + $0x530] sm:$0xff]
        %v473 = vld [vmem:[#allocation5 + $0x538] sm:$0xff]
        %v474 = vld [vmem:[#allocation5 + $0x540] sm:$0xff]
        %v475 = vld [vmem:[#allocation5 + $0x548] sm:$0xff]
        %v476 = vld [vmem:[#allocation5 + $0x550] sm:$0xff]
        %v477 = vld [vmem:[#allocation5 + $0x558] sm:$0xff]
        %v478 = vld [vmem:[#allocation5 + $0x560] sm:$0xff]
        %v479 = vld [vmem:[#allocation5 + $0x568] sm:$0xff]
        %v480 = vld [vmem:[#allocation5 + $0x570] sm:$0xff]
        %v481 = vld [vmem:[#allocation5 + $0x578] sm:$0xff]
        %v482 = vld [vmem:[#allocation5 + $0x580] sm:$0xff]
        %v483 = vld [vmem:[#allocation5 + $0x588] sm:$0xff]
        %v484 = vld [vmem:[#allocation5 + $0x590] sm:$0xff]
        %v485 = vld [vmem:[#allocation5 + $0x598] sm:$0xff]
        %v486 = vld [vmem:[#allocation5 + $0x5a0] sm:$0xff]
        %v487 = vld [vmem:[#allocation5 + $0x5a8] sm:$0xff]
        %v488 = vld [vmem:[#allocation5 + $0x5b0] sm:$0xff]
        %v489 = vld [vmem:[#allocation5 + $0x5b8] sm:$0xff]
        %v490 = vld [vmem:[#allocation5 + $0x5c0] sm:$0xff]
        %v491 = vld [vmem:[#allocation5 + $0x5c8] sm:$0xff]
        %v492 = vld [vmem:[#allocation5 + $0x5d0] sm:$0xff]
        %v493 = vld [vmem:[#allocation5 + $0x5d8] sm:$0xff]
        %v494 = vld [vmem:[#allocation5 + $0x5e0] sm:$0xff]
        %v495 = vld [vmem:[#allocation5 + $0x5e8] sm:$0xff]
        %v496 = vld [vmem:[#allocation5 + $0x5f0] sm:$0xff]
        %v497 = vld [vmem:[#allocation5 + $0x5f8] sm:$0xff]
        %v498 = vld [vmem:[#allocation5 + $0x600] sm:$0xff]
        %v499 = vld [vmem:[#allocation5 + $0x608] sm:$0xff]
        %v500 = vld [vmem:[#allocation5 + $0x610] sm:$0xff]
        %v501 = vld [vmem:[#allocation5 + $0x618] sm:$0xff]
        %v502 = vld [vmem:[#allocation5 + $0x620] sm:$0xff]
        %v503 = vld [vmem:[#allocation5 + $0x628] sm:$0xff]
        %v504 = vld [vmem:[#allocation5 + $0x630] sm:$0xff]
        %v505 = vld [vmem:[#allocation5 + $0x638] sm:$0xff]
        %v506 = vld [vmem:[#allocation5 + $0x640] sm:$0xff]
        %v507 = vld [vmem:[#allocation5 + $0x648] sm:$0xff]
        %v508 = vld [vmem:[#allocation5 + $0x650] sm:$0xff]
        %v509 = vld [vmem:[#allocation5 + $0x658] sm:$0xff]
        %v510 = vld [vmem:[#allocation5 + $0x660] sm:$0xff]
        %v511 = vld [vmem:[#allocation5 + $0x668] sm:$0xff]
        %v512 = vld [vmem:[#allocation5 + $0x670] sm:$0xff]
        %v513 = vld [vmem:[#allocation5 + $0x678] sm:$0xff]
        %v514 = vld [vmem:[#allocation5 + $0x680] sm:$0xff]
        %v515 = vld [vmem:[#allocation5 + $0x688] sm:$0xff]
        %v516 = vld [vmem:[#allocation5 + $0x690] sm:$0xff]
        %v517 = vld [vmem:[#allocation5 + $0x698] sm:$0xff]
        %v518 = vld [vmem:[#allocation5 + $0x6a0] sm:$0xff]
        %v519 = vld [vmem:[#allocation5 + $0x6a8] sm:$0xff]
        %v520 = vld [vmem:[#allocation5 + $0x6b0] sm:$0xff]
        %v521 = vld [vmem:[#allocation5 + $0x6b8] sm:$0xff]
        %v522 = vld [vmem:[#allocation5 + $0x6c0] sm:$0xff]
        %v523 = vld [vmem:[#allocation5 + $0x6c8] sm:$0xff]
        %v524 = vld [vmem:[#allocation5 + $0x6d0] sm:$0xff]
        %v525 = vld [vmem:[#allocation5 + $0x6d8] sm:$0xff]
        %v526 = vld [vmem:[#allocation5 + $0x6e0] sm:$0xff]
        %v527 = vld [vmem:[#allocation5 + $0x6e8] sm:$0xff]
        %v528 = vld [vmem:[#allocation5 + $0x6f0] sm:$0xff]
        %v529 = vld [vmem:[#allocation5 + $0x6f8] sm:$0xff]
        %v530 = vld [vmem:[#allocation5 + $0x700] sm:$0xff]
        %v531 = vld [vmem:[#allocation5 + $0x708] sm:$0xff]
        %v532 = vld [vmem:[#allocation5 + $0x710] sm:$0xff]
        %v533 = vld [vmem:[#allocation5 + $0x718] sm:$0xff]
        %v534 = vld [vmem:[#allocation5 + $0x720] sm:$0xff]
        %v535 = vld [vmem:[#allocation5 + $0x728] sm:$0xff]
        %v536 = vld [vmem:[#allocation5 + $0x730] sm:$0xff]
        %v537 = vld [vmem:[#allocation5 + $0x738] sm:$0xff]
        %v538 = vld [vmem:[#allocation5 + $0x740] sm:$0xff]
        %v539 = vld [vmem:[#allocation5 + $0x748] sm:$0xff]
        %v540 = vld [vmem:[#allocation5 + $0x750] sm:$0xff]
        %v541 = vld [vmem:[#allocation5 + $0x758] sm:$0xff]
        %v542 = vld [vmem:[#allocation5 + $0x760] sm:$0xff]
        %v543 = vld [vmem:[#allocation5 + $0x768] sm:$0xff]
        %v544 = vld [vmem:[#allocation5 + $0x770] sm:$0xff]
        %v545 = vld [vmem:[#allocation5 + $0x778] sm:$0xff]
        %v546 = vld [vmem:[#allocation5 + $0x780] sm:$0xff]
        %v547 = vld [vmem:[#allocation5 + $0x788] sm:$0xff]
        %v548 = vld [vmem:[#allocation5 + $0x790] sm:$0xff]
        %v549 = vld [vmem:[#allocation5 + $0x798] sm:$0xff]
        %v550 = vld [vmem:[#allocation5 + $0x7a0] sm:$0xff]
        %v551 = vld [vmem:[#allocation5 + $0x7a8] sm:$0xff]
        %v552 = vld [vmem:[#allocation5 + $0x7b0] sm:$0xff]
        %v553 = vld [vmem:[#allocation5 + $0x7b8] sm:$0xff]
        %v554 = vld [vmem:[#allocation5 + $0x7c0] sm:$0xff]
        %v555 = vld [vmem:[#allocation5 + $0x7c8] sm:$0xff]
        %v556 = vld [vmem:[#allocation5 + $0x7d0] sm:$0xff]
        %v557 = vld [vmem:[#allocation5 + $0x7d8] sm:$0xff]
        %v558 = vld [vmem:[#allocation5 + $0x7e0] sm:$0xff]
        %v559 = vld [vmem:[#allocation5 + $0x7e8] sm:$0xff]
        %v560 = vld [vmem:[#allocation5 + $0x7f0] sm:$0xff]
        %v561 = vld [vmem:[#allocation5 + $0x7f8] sm:$0xff]
        %v562 = vld [vmem:[#allocation5 + $0x800] sm:$0xff]
        %v563 = vld [vmem:[#allocation5 + $0x808] sm:$0xff]
        %v564 = vld [vmem:[#allocation5 + $0x810] sm:$0xff]
        %v565 = vld [vmem:[#allocation5 + $0x818] sm:$0xff]
        %v566 = vld [vmem:[#allocation5 + $0x820] sm:$0xff]
        %v567 = vld [vmem:[#allocation5 + $0x828] sm:$0xff]
        %v568 = vld [vmem:[#allocation5 + $0x830] sm:$0xff]
        %v569 = vld [vmem:[#allocation5 + $0x838] sm:$0xff]
        %v570 = vld [vmem:[#allocation5 + $0x840] sm:$0xff]
        %v571 = vld [vmem:[#allocation5 + $0x848] sm:$0xff]
        %v572 = vld [vmem:[#allocation5 + $0x850] sm:$0xff]
        %v573 = vld [vmem:[#allocation5 + $0x858] sm:$0xff]
        %v574 = vld [vmem:[#allocation5 + $0x860] sm:$0xff]
        %v575 = vld [vmem:[#allocation5 + $0x868] sm:$0xff]
        %v576 = vld [vmem:[#allocation5 + $0x870] sm:$0xff]
        %v577 = vld [vmem:[#allocation5 + $0x878] sm:$0xff]
        %v578 = vld [vmem:[#allocation5 + $0x880] sm:$0xff]
        %v579 = vld [vmem:[#allocation5 + $0x888] sm:$0xff]
        %v580 = vld [vmem:[#allocation5 + $0x890] sm:$0xff]
        %v581 = vld [vmem:[#allocation5 + $0x898] sm:$0xff]
        %v582 = vld [vmem:[#allocation5 + $0x8a0] sm:$0xff]
        %v583 = vld [vmem:[#allocation5 + $0x8a8] sm:$0xff]
        %v584 = vld [vmem:[#allocation5 + $0x8b0] sm:$0xff]
        %v585 = vld [vmem:[#allocation5 + $0x8b8] sm:$0xff]
        %v586 = vld [vmem:[#allocation5 + $0x8c0] sm:$0xff]
        %v587 = vld [vmem:[#allocation5 + $0x8c8] sm:$0xff]
        %v588 = vld [vmem:[#allocation5 + $0x8d0] sm:$0xff]
        %v589 = vld [vmem:[#allocation5 + $0x8d8] sm:$0xff]
        %v590 = vld [vmem:[#allocation5 + $0x8e0] sm:$0xff]
        %v591 = vld [vmem:[#allocation5 + $0x8e8] sm:$0xff]
        %v592 = vld [vmem:[#allocation5 + $0x8f0] sm:$0xff]
        %v593 = vld [vmem:[#allocation5 + $0x8f8] sm:$0xff]
        %v594 = vld [vmem:[#allocation5 + $0x900] sm:$0xff]
        %v595 = vld [vmem:[#allocation5 + $0x908] sm:$0xff]
        %v596 = vld [vmem:[#allocation5 + $0x910] sm:$0xff]
        %v597 = vld [vmem:[#allocation5 + $0x918] sm:$0xff]
        %v598 = vld [vmem:[#allocation5 + $0x920] sm:$0xff]
        %v599 = vld [vmem:[#allocation5 + $0x928] sm:$0xff]
        %v600 = vld [vmem:[#allocation5 + $0x930] sm:$0xff]
        %v601 = vld [vmem:[#allocation5 + $0x938] sm:$0xff]
        %v602 = vld [vmem:[#allocation5 + $0x940] sm:$0xff]
        %v603 = vld [vmem:[#allocation5 + $0x948] sm:$0xff]
        %v604 = vld [vmem:[#allocation5 + $0x950] sm:$0xff]
        %v605 = vld [vmem:[#allocation5 + $0x958] sm:$0xff]
        %v606 = vld [vmem:[#allocation5 + $0x960] sm:$0xff]
        %v607 = vld [vmem:[#allocation5 + $0x968] sm:$0xff]
        %v608 = vld [vmem:[#allocation5 + $0x970] sm:$0xff]
        %v609 = vld [vmem:[#allocation5 + $0x978] sm:$0xff]
        %v610 = vld [vmem:[#allocation5 + $0x980] sm:$0xff]
        %v611 = vld [vmem:[#allocation5 + $0x988] sm:$0xff]
        %v612 = vld [vmem:[#allocation5 + $0x990] sm:$0xff]
        %v613 = vld [vmem:[#allocation5 + $0x998] sm:$0xff]
        %v614 = vld [vmem:[#allocation5 + $0x9a0] sm:$0xff]
        %v615 = vld [vmem:[#allocation5 + $0x9a8] sm:$0xff]
        %v616 = vld [vmem:[#allocation5 + $0x9b0] sm:$0xff]
        %v617 = vld [vmem:[#allocation5 + $0x9b8] sm:$0xff]
        %v618 = vld [vmem:[#allocation5 + $0x9c0] sm:$0xff]
        %v619 = vld [vmem:[#allocation5 + $0x9c8] sm:$0xff]
        %v620 = vld [vmem:[#allocation5 + $0x9d0] sm:$0xff]
        %v621 = vld [vmem:[#allocation5 + $0x9d8] sm:$0xff]
        %v622 = vld [vmem:[#allocation5 + $0x9e0] sm:$0xff]
        %v623 = vld [vmem:[#allocation5 + $0x9e8] sm:$0xff]
        %v624 = vld [vmem:[#allocation5 + $0x9f0] sm:$0xff]
        %v625 = vld [vmem:[#allocation5 + $0x9f8] sm:$0xff]
        %v626 = vld [vmem:[#allocation5 + $0xa00] sm:$0xff]
        %v627 = vld [vmem:[#allocation5 + $0xa08] sm:$0xff]
        %v628 = vld [vmem:[#allocation5 + $0xa10] sm:$0xff]
        %v629 = vld [vmem:[#allocation5 + $0xa18] sm:$0xff]
        %v630 = vld [vmem:[#allocation5 + $0xa20] sm:$0xff]
        %v631 = vld [vmem:[#allocation5 + $0xa28] sm:$0xff]
        %v632 = vld [vmem:[#allocation5 + $0xa30] sm:$0xff]
        %v633 = vld [vmem:[#allocation5 + $0xa38] sm:$0xff]
        %v634 = vld [vmem:[#allocation5 + $0xa40] sm:$0xff]
        %v635 = vld [vmem:[#allocation5 + $0xa48] sm:$0xff]
        %v636 = vld [vmem:[#allocation5 + $0xa50] sm:$0xff]
        %v637 = vld [vmem:[#allocation5 + $0xa58] sm:$0xff]
        %v638 = vld [vmem:[#allocation5 + $0xa60] sm:$0xff]
        %v639 = vld [vmem:[#allocation5 + $0xa68] sm:$0xff]
        %v640 = vld [vmem:[#allocation5 + $0xa70] sm:$0xff]
        %v641 = vld [vmem:[#allocation5 + $0xa78] sm:$0xff]
        %v642 = vld [vmem:[#allocation5 + $0xa80] sm:$0xff]
        %v643 = vld [vmem:[#allocation5 + $0xa88] sm:$0xff]
        %v644 = vld [vmem:[#allocation5 + $0xa90] sm:$0xff]
        %v645 = vld [vmem:[#allocation5 + $0xa98] sm:$0xff]
        %v646 = vld [vmem:[#allocation5 + $0xaa0] sm:$0xff]
        %v647 = vld [vmem:[#allocation5 + $0xaa8] sm:$0xff]
        %v648 = vld [vmem:[#allocation5 + $0xab0] sm:$0xff]
        %v649 = vld [vmem:[#allocation5 + $0xab8] sm:$0xff]
        %v650 = vld [vmem:[#allocation5 + $0xac0] sm:$0xff]
        %v651 = vld [vmem:[#allocation5 + $0xac8] sm:$0xff]
        %v652 = vld [vmem:[#allocation5 + $0xad0] sm:$0xff]
        %v653 = vld [vmem:[#allocation5 + $0xad8] sm:$0xff]
        %v654 = vld [vmem:[#allocation5 + $0xae0] sm:$0xff]
        %v655 = vld [vmem:[#allocation5 + $0xae8] sm:$0xff]
        %v656 = vld [vmem:[#allocation5 + $0xaf0] sm:$0xff]
        %v657 = vld [vmem:[#allocation5 + $0xaf8] sm:$0xff]
        %v658 = vld [vmem:[#allocation5 + $0xb00] sm:$0xff]
        %v659 = vld [vmem:[#allocation5 + $0xb08] sm:$0xff]
        %v660 = vld [vmem:[#allocation5 + $0xb10] sm:$0xff]
        %v661 = vld [vmem:[#allocation5 + $0xb18] sm:$0xff]
        %v662 = vld [vmem:[#allocation5 + $0xb20] sm:$0xff]
        %v663 = vld [vmem:[#allocation5 + $0xb28] sm:$0xff]
        %v664 = vld [vmem:[#allocation5 + $0xb30] sm:$0xff]
        %v665 = vld [vmem:[#allocation5 + $0xb38] sm:$0xff]
        %v666 = vld [vmem:[#allocation5 + $0xb40] sm:$0xff]
        %v667 = vld [vmem:[#allocation5 + $0xb48] sm:$0xff]
        %v668 = vld [vmem:[#allocation5 + $0xb50] sm:$0xff]
        %v669 = vld [vmem:[#allocation5 + $0xb58] sm:$0xff]
        %v670 = vld [vmem:[#allocation5 + $0xb60] sm:$0xff]
        %v671 = vld [vmem:[#allocation5 + $0xb68] sm:$0xff]
        %v672 = vld [vmem:[#allocation5 + $0xb70] sm:$0xff]
        %v673 = vld [vmem:[#allocation5 + $0xb78] sm:$0xff]
        %v674 = vld [vmem:[#allocation5 + $0xb80] sm:$0xff]
        %v675 = vld [vmem:[#allocation5 + $0xb88] sm:$0xff]
        %v676 = vld [vmem:[#allocation5 + $0xb90] sm:$0xff]
        %v677 = vld [vmem:[#allocation5 + $0xb98] sm:$0xff]
        %v678 = vld [vmem:[#allocation5 + $0xba0] sm:$0xff]
        %v679 = vld [vmem:[#allocation5 + $0xba8] sm:$0xff]
        %v680 = vld [vmem:[#allocation5 + $0xbb0] sm:$0xff]
        %v681 = vld [vmem:[#allocation5 + $0xbb8] sm:$0xff]
        %v682 = vld [vmem:[#allocation5 + $0xbc0] sm:$0xff]
        %v683 = vld [vmem:[#allocation5 + $0xbc8] sm:$0xff]
        %v684 = vld [vmem:[#allocation5 + $0xbd0] sm:$0xff]
        %v685 = vld [vmem:[#allocation5 + $0xbd8] sm:$0xff]
        %v686 = vld [vmem:[#allocation5 + $0xbe0] sm:$0xff]
        %v687 = vld [vmem:[#allocation5 + $0xbe8] sm:$0xff]
        %v688 = vld [vmem:[#allocation5 + $0xbf0] sm:$0xff]
        %v689 = vld [vmem:[#allocation5 + $0xbf8] sm:$0xff]
        %v690 = vld [vmem:[#allocation5 + $0xc00] sm:$0xff]
        %v691 = vld [vmem:[#allocation5 + $0xc08] sm:$0xff]
        %v692 = vld [vmem:[#allocation5 + $0xc10] sm:$0xff]
        %v693 = vld [vmem:[#allocation5 + $0xc18] sm:$0xff]
        %v694 = vld [vmem:[#allocation5 + $0xc20] sm:$0xff]
        %v695 = vld [vmem:[#allocation5 + $0xc28] sm:$0xff]
        %v696 = vld [vmem:[#allocation5 + $0xc30] sm:$0xff]
        %v697 = vld [vmem:[#allocation5 + $0xc38] sm:$0xff]
        %v698 = vld [vmem:[#allocation5 + $0xc40] sm:$0xff]
        %v699 = vld [vmem:[#allocation5 + $0xc48] sm:$0xff]
        %v700 = vld [vmem:[#allocation5 + $0xc50] sm:$0xff]
        %v701 = vld [vmem:[#allocation5 + $0xc58] sm:$0xff]
        %v702 = vld [vmem:[#allocation5 + $0xc60] sm:$0xff]
        %v703 = vld [vmem:[#allocation5 + $0xc68] sm:$0xff]
        %v704 = vld [vmem:[#allocation5 + $0xc70] sm:$0xff]
        %v705 = vld [vmem:[#allocation5 + $0xc78] sm:$0xff]
        %v706 = vld [vmem:[#allocation5 + $0xc80] sm:$0xff]
        %v707 = vld [vmem:[#allocation5 + $0xc88] sm:$0xff]
        %v708 = vld [vmem:[#allocation5 + $0xc90] sm:$0xff]
        %v709 = vld [vmem:[#allocation5 + $0xc98] sm:$0xff]
        %v710 = vld [vmem:[#allocation5 + $0xca0] sm:$0xff]
        %v711 = vld [vmem:[#allocation5 + $0xca8] sm:$0xff]
        %v712 = vld [vmem:[#allocation5 + $0xcb0] sm:$0xff]
        %v713 = vld [vmem:[#allocation5 + $0xcb8] sm:$0xff]
        %v714 = vld [vmem:[#allocation5 + $0xcc0] sm:$0xff]
        %v715 = vld [vmem:[#allocation5 + $0xcc8] sm:$0xff]
        %v716 = vld [vmem:[#allocation5 + $0xcd0] sm:$0xff]
        %v717 = vld [vmem:[#allocation5 + $0xcd8] sm:$0xff]
        %v718 = vld [vmem:[#allocation5 + $0xce0] sm:$0xff]
        %v719 = vld [vmem:[#allocation5 + $0xce8] sm:$0xff]
        %v720 = vld [vmem:[#allocation5 + $0xcf0] sm:$0xff]
        %v721 = vld [vmem:[#allocation5 + $0xcf8] sm:$0xff]
        %v722 = vld [vmem:[#allocation5 + $0xd00] sm:$0xff]
        %v723 = vld [vmem:[#allocation5 + $0xd08] sm:$0xff]
        %v724 = vld [vmem:[#allocation5 + $0xd10] sm:$0xff]
        %v725 = vld [vmem:[#allocation5 + $0xd18] sm:$0xff]
        %v726 = vld [vmem:[#allocation5 + $0xd20] sm:$0xff]
        %v727 = vld [vmem:[#allocation5 + $0xd28] sm:$0xff]
        %v728 = vld [vmem:[#allocation5 + $0xd30] sm:$0xff]
        %v729 = vld [vmem:[#allocation5 + $0xd38] sm:$0xff]
        %v730 = vld [vmem:[#allocation5 + $0xd40] sm:$0xff]
        %v731 = vld [vmem:[#allocation5 + $0xd48] sm:$0xff]
        %v732 = vld [vmem:[#allocation5 + $0xd50] sm:$0xff]
        %v733 = vld [vmem:[#allocation5 + $0xd58] sm:$0xff]
        %v734 = vld [vmem:[#allocation5 + $0xd60] sm:$0xff]
        %v735 = vld [vmem:[#allocation5 + $0xd68] sm:$0xff]
        %v736 = vld [vmem:[#allocation5 + $0xd70] sm:$0xff]
        %v737 = vld [vmem:[#allocation5 + $0xd78] sm:$0xff]
        %v738 = vld [vmem:[#allocation5 + $0xd80] sm:$0xff]
        %v739 = vld [vmem:[#allocation5 + $0xd88] sm:$0xff]
        %v740 = vld [vmem:[#allocation5 + $0xd90] sm:$0xff]
        %v741 = vld [vmem:[#allocation5 + $0xd98] sm:$0xff]
        %v742 = vld [vmem:[#allocation5 + $0xda0] sm:$0xff]
        %v743 = vld [vmem:[#allocation5 + $0xda8] sm:$0xff]
        %v744 = vld [vmem:[#allocation5 + $0xdb0] sm:$0xff]
        %v745 = vld [vmem:[#allocation5 + $0xdb8] sm:$0xff]
        %v746 = vld [vmem:[#allocation5 + $0xdc0] sm:$0xff]
        %v747 = vld [vmem:[#allocation5 + $0xdc8] sm:$0xff]
        %v748 = vld [vmem:[#allocation5 + $0xdd0] sm:$0xff]
        %v749 = vld [vmem:[#allocation5 + $0xdd8] sm:$0xff]
        %v750 = vld [vmem:[#allocation5 + $0xde0] sm:$0xff]
        %v751 = vld [vmem:[#allocation5 + $0xde8] sm:$0xff]
        %v752 = vld [vmem:[#allocation5 + $0xdf0] sm:$0xff]
        %v753 = vld [vmem:[#allocation5 + $0xdf8] sm:$0xff]
        %v754 = vld [vmem:[#allocation5 + $0xe00] sm:$0xff]
        %v755 = vld [vmem:[#allocation5 + $0xe08] sm:$0xff]
        %v756 = vld [vmem:[#allocation5 + $0xe10] sm:$0xff]
        %v757 = vld [vmem:[#allocation5 + $0xe18] sm:$0xff]
        %v758 = vld [vmem:[#allocation5 + $0xe20] sm:$0xff]
        %v759 = vld [vmem:[#allocation5 + $0xe28] sm:$0xff]
        %v760 = vld [vmem:[#allocation5 + $0xe30] sm:$0xff]
        %v761 = vld [vmem:[#allocation5 + $0xe38] sm:$0xff]
        %v762 = vld [vmem:[#allocation5 + $0xe40] sm:$0xff]
        %v763 = vld [vmem:[#allocation5 + $0xe48] sm:$0xff]
        %v764 = vld [vmem:[#allocation5 + $0xe50] sm:$0xff]
        %v765 = vld [vmem:[#allocation5 + $0xe58] sm:$0xff]
        %v766 = vld [vmem:[#allocation5 + $0xe60] sm:$0xff]
        %v767 = vld [vmem:[#allocation5 + $0xe68] sm:$0xff]
        %v768 = vld [vmem:[#allocation5 + $0xe70] sm:$0xff]
        %v769 = vld [vmem:[#allocation5 + $0xe78] sm:$0xff]
        %v770 = vld [vmem:[#allocation5 + $0xe80] sm:$0xff]
        %v771 = vld [vmem:[#allocation5 + $0xe88] sm:$0xff]
        %v772 = vld [vmem:[#allocation5 + $0xe90] sm:$0xff]
        %v773 = vld [vmem:[#allocation5 + $0xe98] sm:$0xff]
        %v774 = vld [vmem:[#allocation5 + $0xea0] sm:$0xff]
        %v775 = vld [vmem:[#allocation5 + $0xea8] sm:$0xff]
        %v776 = vld [vmem:[#allocation5 + $0xeb0] sm:$0xff]
        %v777 = vld [vmem:[#allocation5 + $0xeb8] sm:$0xff]
        %v778 = vld [vmem:[#allocation5 + $0xec0] sm:$0xff]
        %v779 = vld [vmem:[#allocation5 + $0xec8] sm:$0xff]
        %v780 = vld [vmem:[#allocation5 + $0xed0] sm:$0xff]
        %v781 = vld [vmem:[#allocation5 + $0xed8] sm:$0xff]
        %v782 = vld [vmem:[#allocation5 + $0xee0] sm:$0xff]
        %v783 = vld [vmem:[#allocation5 + $0xee8] sm:$0xff]
        %v784 = vld [vmem:[#allocation5 + $0xef0] sm:$0xff]
        %v785 = vld [vmem:[#allocation5 + $0xef8] sm:$0xff]
        %v786 = vld [vmem:[#allocation5 + $0xf00] sm:$0xff]
        %v787 = vld [vmem:[#allocation5 + $0xf08] sm:$0xff]
        %v788 = vld [vmem:[#allocation5 + $0xf10] sm:$0xff]
        %v789 = vld [vmem:[#allocation5 + $0xf18] sm:$0xff]
        %v790 = vld [vmem:[#allocation5 + $0xf20] sm:$0xff]
        %v791 = vld [vmem:[#allocation5 + $0xf28] sm:$0xff]
        %v792 = vld [vmem:[#allocation5 + $0xf30] sm:$0xff]
        %v793 = vld [vmem:[#allocation5 + $0xf38] sm:$0xff]
        %v794 = vld [vmem:[#allocation5 + $0xf40] sm:$0xff]
        %v795 = vld [vmem:[#allocation5 + $0xf48] sm:$0xff]
        %v796 = vld [vmem:[#allocation5 + $0xf50] sm:$0xff]
        %v797 = vld [vmem:[#allocation5 + $0xf58] sm:$0xff]
        %v798 = vld [vmem:[#allocation5 + $0xf60] sm:$0xff]
        %v799 = vld [vmem:[#allocation5 + $0xf68] sm:$0xff]
        %v800 = vld [vmem:[#allocation5 + $0xf70] sm:$0xff]
        %v801 = vld [vmem:[#allocation5 + $0xf78] sm:$0xff]
        %v802 = vld [vmem:[#allocation5 + $0xf80] sm:$0xff]
        %v803 = vld [vmem:[#allocation5 + $0xf88] sm:$0xff]
        %v804 = vld [vmem:[#allocation5 + $0xf90] sm:$0xff]
        %v805 = vld [vmem:[#allocation5 + $0xf98] sm:$0xff]
        %v806 = vld [vmem:[#allocation5 + $0xfa0] sm:$0xff]
        %v807 = vld [vmem:[#allocation5 + $0xfa8] sm:$0xff]
        %v808 = vld [vmem:[#allocation5 + $0xfb0] sm:$0xff]
        %v809 = vld [vmem:[#allocation5 + $0xfb8] sm:$0xff]
        %v810 = vld [vmem:[#allocation5 + $0xfc0] sm:$0xff]
        %v811 = vld [vmem:[#allocation5 + $0xfc8] sm:$0xff]
        %v812 = vld [vmem:[#allocation5 + $0xfd0] sm:$0xff]
        %v813 = vld [vmem:[#allocation5 + $0xfd8] sm:$0xff]
        %v814 = vld [vmem:[#allocation5 + $0xfe0] sm:$0xff]
        %v815 = vld [vmem:[#allocation5 + $0xfe8] sm:$0xff]
        %v816 = vld [vmem:[#allocation5 + $0xff0] sm:$0xff]
        %v817 = vld [vmem:[#allocation5 + $0xff8] sm:$0xff]
        %v818 = vld [vmem:[#allocation5 + $0x1000] sm:$0xff]
        %v819 = vld [vmem:[#allocation5 + $0x1008] sm:$0xff]
        %v820 = vld [vmem:[#allocation5 + $0x1010] sm:$0xff]
        %v821 = vld [vmem:[#allocation5 + $0x1018] sm:$0xff]
        %v822 = vld [vmem:[#allocation5 + $0x1020] sm:$0xff]
        %v823 = vld [vmem:[#allocation5 + $0x1028] sm:$0xff]
        %v824 = vld [vmem:[#allocation5 + $0x1030] sm:$0xff]
        %v825 = vld [vmem:[#allocation5 + $0x1038] sm:$0xff]
        %v826 = vld [vmem:[#allocation5 + $0x1040] sm:$0xff]
        %v827 = vld [vmem:[#allocation5 + $0x1048] sm:$0xff]
        %v828 = vld [vmem:[#allocation5 + $0x1050] sm:$0xff]
        %v829 = vld [vmem:[#allocation5 + $0x1058] sm:$0xff]
        %v830 = vld [vmem:[#allocation5 + $0x1060] sm:$0xff]
        %v831 = vld [vmem:[#allocation5 + $0x1068] sm:$0xff]
        %v832 = vld [vmem:[#allocation5 + $0x1070] sm:$0xff]
        %v833 = vld [vmem:[#allocation5 + $0x1078] sm:$0xff]
        %v834 = vld [vmem:[#allocation5 + $0x1080] sm:$0xff]
        %v835 = vld [vmem:[#allocation5 + $0x1088] sm:$0xff]
        %v836 = vld [vmem:[#allocation5 + $0x1090] sm:$0xff]
        %v837 = vld [vmem:[#allocation5 + $0x1098] sm:$0xff]
        %v838 = vld [vmem:[#allocation5 + $0x10a0] sm:$0xff]
        %v839 = vld [vmem:[#allocation5 + $0x10a8] sm:$0xff]
        %v840 = vld [vmem:[#allocation5 + $0x10b0] sm:$0xff]
        %v841 = vld [vmem:[#allocation5 + $0x10b8] sm:$0xff]
        %v842 = vld [vmem:[#allocation5 + $0x10c0] sm:$0xff]
        %v843 = vld [vmem:[#allocation5 + $0x10c8] sm:$0xff]
        %v844 = vld [vmem:[#allocation5 + $0x10d0] sm:$0xff]
        %v845 = vld [vmem:[#allocation5 + $0x10d8] sm:$0xff]
        %v846 = vld [vmem:[#allocation5 + $0x10e0] sm:$0xff]
        %v847 = vld [vmem:[#allocation5 + $0x10e8] sm:$0xff]
        %v848 = vld [vmem:[#allocation5 + $0x10f0] sm:$0xff]
        %v849 = vld [vmem:[#allocation5 + $0x10f8] sm:$0xff]
        %v850 = vld [vmem:[#allocation5 + $0x1100] sm:$0xff]
        %v851 = vld [vmem:[#allocation5 + $0x1108] sm:$0xff]
        %v852 = vld [vmem:[#allocation5 + $0x1110] sm:$0xff]
        %v853 = vld [vmem:[#allocation5 + $0x1118] sm:$0xff]
        %v854 = vld [vmem:[#allocation5 + $0x1120] sm:$0xff]
        %v855 = vld [vmem:[#allocation5 + $0x1128] sm:$0xff]
        %v856 = vld [vmem:[#allocation5 + $0x1130] sm:$0xff]
        %v857 = vld [vmem:[#allocation5 + $0x1138] sm:$0xff]
        %v858 = vld [vmem:[#allocation5 + $0x1140] sm:$0xff]
        %v859 = vld [vmem:[#allocation5 + $0x1148] sm:$0xff]
        %v860 = vld [vmem:[#allocation5 + $0x1150] sm:$0xff]
        %v861 = vld [vmem:[#allocation5 + $0x1158] sm:$0xff]
        %v862 = vld [vmem:[#allocation5 + $0x1160] sm:$0xff]
        %v863 = vld [vmem:[#allocation5 + $0x1168] sm:$0xff]
        %v864 = vld [vmem:[#allocation5 + $0x1170] sm:$0xff]
        %v865 = vld [vmem:[#allocation5 + $0x1178] sm:$0xff]
        %v866 = vld [vmem:[#allocation5 + $0x1180] sm:$0xff]
        %v867 = vld [vmem:[#allocation5 + $0x1188] sm:$0xff]
        %v868 = vld [vmem:[#allocation5 + $0x1190] sm:$0xff]
        %v869 = vld [vmem:[#allocation5 + $0x1198] sm:$0xff]
        %v870 = vld [vmem:[#allocation5 + $0x11a0] sm:$0xff]
        %v871 = vld [vmem:[#allocation5 + $0x11a8] sm:$0xff]
        %v872 = vld [vmem:[#allocation5 + $0x11b0] sm:$0xff]
        %v873 = vld [vmem:[#allocation5 + $0x11b8] sm:$0xff]
        %v874 = vld [vmem:[#allocation5 + $0x11c0] sm:$0xff]
        %v875 = vld [vmem:[#allocation5 + $0x11c8] sm:$0xff]
        %v876 = vld [vmem:[#allocation5 + $0x11d0] sm:$0xff]
        %v877 = vld [vmem:[#allocation5 + $0x11d8] sm:$0xff]
        %v878 = vld [vmem:[#allocation5 + $0x11e0] sm:$0xff]
        %v879 = vld [vmem:[#allocation5 + $0x11e8] sm:$0xff]
        %v880 = vld [vmem:[#allocation5 + $0x11f0] sm:$0xff]
        %v881 = vld [vmem:[#allocation5 + $0x11f8] sm:$0xff]
        %v882 = vld [vmem:[#allocation5 + $0x1200] sm:$0xff]
        %v883 = vld [vmem:[#allocation5 + $0x1208] sm:$0xff]
        %v884 = vld [vmem:[#allocation5 + $0x1210] sm:$0xff]
        %v885 = vld [vmem:[#allocation5 + $0x1218] sm:$0xff]
        %v886 = vld [vmem:[#allocation5 + $0x1220] sm:$0xff]
        %v887 = vld [vmem:[#allocation5 + $0x1228] sm:$0xff]
        %v888 = vld [vmem:[#allocation5 + $0x1230] sm:$0xff]
        %v889 = vld [vmem:[#allocation5 + $0x1238] sm:$0xff]
        %v890 = vld [vmem:[#allocation5 + $0x1240] sm:$0xff]
        %v891 = vld [vmem:[#allocation5 + $0x1248] sm:$0xff]
        %v892 = vld [vmem:[#allocation5 + $0x1250] sm:$0xff]
        %v893 = vld [vmem:[#allocation5 + $0x1258] sm:$0xff]
        %v894 = vld [vmem:[#allocation5 + $0x1260] sm:$0xff]
        %v895 = vld [vmem:[#allocation5 + $0x1268] sm:$0xff]
        %v896 = vld [vmem:[#allocation5 + $0x1270] sm:$0xff]
        %v897 = vld [vmem:[#allocation5 + $0x1278] sm:$0xff]
        %v898 = vld [vmem:[#allocation5 + $0x1280] sm:$0xff]
        %v899 = vld [vmem:[#allocation5 + $0x1288] sm:$0xff]
        %v900 = vld [vmem:[#allocation5 + $0x1290] sm:$0xff]
        %v901 = vld [vmem:[#allocation5 + $0x1298] sm:$0xff]
        %v902 = vld [vmem:[#allocation5 + $0x12a0] sm:$0xff]
        %v903 = vld [vmem:[#allocation5 + $0x12a8] sm:$0xff]
        %v904 = vld [vmem:[#allocation5 + $0x12b0] sm:$0xff]
        %v905 = vld [vmem:[#allocation5 + $0x12b8] sm:$0xff]
        %v906 = vld [vmem:[#allocation5 + $0x12c0] sm:$0xff]
        %v907 = vld [vmem:[#allocation5 + $0x12c8] sm:$0xff]
        %v908 = vld [vmem:[#allocation5 + $0x12d0] sm:$0xff]
        %v909 = vld [vmem:[#allocation5 + $0x12d8] sm:$0xff]
        %v910 = vld [vmem:[#allocation5 + $0x12e0] sm:$0xff]
        %v911 = vld [vmem:[#allocation5 + $0x12e8] sm:$0xff]
        %v912 = vld [vmem:[#allocation5 + $0x12f0] sm:$0xff]
        %v913 = vld [vmem:[#allocation5 + $0x12f8] sm:$0xff]
        %v914 = vld [vmem:[#allocation5 + $0x1300] sm:$0xff]
        %v915 = vld [vmem:[#allocation5 + $0x1308] sm:$0xff]
        %v916 = vld [vmem:[#allocation5 + $0x1310] sm:$0xff]
        %v917 = vld [vmem:[#allocation5 + $0x1318] sm:$0xff]
        %v918 = vld [vmem:[#allocation5 + $0x1320] sm:$0xff]
        %v919 = vld [vmem:[#allocation5 + $0x1328] sm:$0xff]
        %v920 = vld [vmem:[#allocation5 + $0x1330] sm:$0xff]
        %v921 = vld [vmem:[#allocation5 + $0x1338] sm:$0xff]
        %v922 = vld [vmem:[#allocation5 + $0x1340] sm:$0xff]
        %v923 = vld [vmem:[#allocation5 + $0x1348] sm:$0xff]
        %v924 = vld [vmem:[#allocation5 + $0x1350] sm:$0xff]
        %v925 = vld [vmem:[#allocation5 + $0x1358] sm:$0xff]
        %v926 = vld [vmem:[#allocation5 + $0x1360] sm:$0xff]
        %v927 = vld [vmem:[#allocation5 + $0x1368] sm:$0xff]
        %v928 = vld [vmem:[#allocation5 + $0x1370] sm:$0xff]
        %v929 = vld [vmem:[#allocation5 + $0x1378] sm:$0xff]
        %v930 = vld [vmem:[#allocation5 + $0x1380] sm:$0xff]
        %v931 = vld [vmem:[#allocation5 + $0x1388] sm:$0xff]
        %v932 = vld [vmem:[#allocation5 + $0x1390] sm:$0xff]
        %v933 = vld [vmem:[#allocation5 + $0x1398] sm:$0xff]
        %v934 = vld [vmem:[#allocation5 + $0x13a0] sm:$0xff]
        %v935 = vld [vmem:[#allocation5 + $0x13a8] sm:$0xff]
        %v936 = vld [vmem:[#allocation5 + $0x13b0] sm:$0xff]
        %v937 = vld [vmem:[#allocation5 + $0x13b8] sm:$0xff]
        %v938 = vld [vmem:[#allocation5 + $0x13c0] sm:$0xff]
        %v939 = vld [vmem:[#allocation5 + $0x13c8] sm:$0xff]
        %v940 = vld [vmem:[#allocation5 + $0x13d0] sm:$0xff]
        %v941 = vld [vmem:[#allocation5 + $0x13d8] sm:$0xff]
        %v942 = vld [vmem:[#allocation5 + $0x13e0] sm:$0xff]
        %v943 = vld [vmem:[#allocation5 + $0x13e8] sm:$0xff]
        %v944 = vld [vmem:[#allocation5 + $0x13f0] sm:$0xff]
        %v945 = vld [vmem:[#allocation5 + $0x13f8] sm:$0xff]
        %v946 = vld [vmem:[#allocation5 + $0x1400] sm:$0xff]
        %v947 = vld [vmem:[#allocation5 + $0x1408] sm:$0xff]
        %v948 = vld [vmem:[#allocation5 + $0x1410] sm:$0xff]
        %v949 = vld [vmem:[#allocation5 + $0x1418] sm:$0xff]
        %v950 = vld [vmem:[#allocation5 + $0x1420] sm:$0xff]
        %v951 = vld [vmem:[#allocation5 + $0x1428] sm:$0xff]
        %v952 = vld [vmem:[#allocation5 + $0x1430] sm:$0xff]
        %v953 = vld [vmem:[#allocation5 + $0x1438] sm:$0xff]
        %v954 = vld [vmem:[#allocation5 + $0x1440] sm:$0xff]
        %v955 = vld [vmem:[#allocation5 + $0x1448] sm:$0xff]
        %v956 = vld [vmem:[#allocation5 + $0x1450] sm:$0xff]
        %v957 = vld [vmem:[#allocation5 + $0x1458] sm:$0xff]
        %v958 = vld [vmem:[#allocation5 + $0x1460] sm:$0xff]
        %v959 = vld [vmem:[#allocation5 + $0x1468] sm:$0xff]
        %v960 = vld [vmem:[#allocation5 + $0x1470] sm:$0xff]
        %v961 = vld [vmem:[#allocation5 + $0x1478] sm:$0xff]
        %v962 = vld [vmem:[#allocation5 + $0x1480] sm:$0xff]
        %v963 = vld [vmem:[#allocation5 + $0x1488] sm:$0xff]
        %v964 = vld [vmem:[#allocation5 + $0x1490] sm:$0xff]
        %v965 = vld [vmem:[#allocation5 + $0x1498] sm:$0xff]
        %v966 = vld [vmem:[#allocation5 + $0x14a0] sm:$0xff]
        %v967 = vld [vmem:[#allocation5 + $0x14a8] sm:$0xff]
        %v968 = vld [vmem:[#allocation5 + $0x14b0] sm:$0xff]
        %v969 = vld [vmem:[#allocation5 + $0x14b8] sm:$0xff]
        %v970 = vld [vmem:[#allocation5 + $0x14c0] sm:$0xff]
        %v971 = vld [vmem:[#allocation5 + $0x14c8] sm:$0xff]
        %v972 = vld [vmem:[#allocation5 + $0x14d0] sm:$0xff]
        %v973 = vld [vmem:[#allocation5 + $0x14d8] sm:$0xff]
        %v974 = vld [vmem:[#allocation5 + $0x14e0] sm:$0xff]
        %v975 = vld [vmem:[#allocation5 + $0x14e8] sm:$0xff]
        %v976 = vld [vmem:[#allocation5 + $0x14f0] sm:$0xff]
        %v977 = vld [vmem:[#allocation5 + $0x14f8] sm:$0xff]
        %v978 = vld [vmem:[#allocation5 + $0x1500] sm:$0xff]
        %v979 = vld [vmem:[#allocation5 + $0x1508] sm:$0xff]
        %v980 = vld [vmem:[#allocation5 + $0x1510] sm:$0xff]
        %v981 = vld [vmem:[#allocation5 + $0x1518] sm:$0xff]
        %v982 = vld [vmem:[#allocation5 + $0x1520] sm:$0xff]
        %v983 = vld [vmem:[#allocation5 + $0x1528] sm:$0xff]
        %v984 = vld [vmem:[#allocation5 + $0x1530] sm:$0xff]
        %v985 = vld [vmem:[#allocation5 + $0x1538] sm:$0xff]
        %v986 = vld [vmem:[#allocation5 + $0x1540] sm:$0xff]
        %v987 = vld [vmem:[#allocation5 + $0x1548] sm:$0xff]
        %v988 = vld [vmem:[#allocation5 + $0x1550] sm:$0xff]
        %v989 = vld [vmem:[#allocation5 + $0x1558] sm:$0xff]
        %v990 = vld [vmem:[#allocation5 + $0x1560] sm:$0xff]
        %v991 = vld [vmem:[#allocation5 + $0x1568] sm:$0xff]
        %v992 = vld [vmem:[#allocation5 + $0x1570] sm:$0xff]
        %v993 = vld [vmem:[#allocation5 + $0x1578] sm:$0xff]
        %v994 = vld [vmem:[#allocation5 + $0x1580] sm:$0xff]
        %v995 = vld [vmem:[#allocation5 + $0x1588] sm:$0xff]
        %v996 = vld [vmem:[#allocation5 + $0x1590] sm:$0xff]
        %v997 = vld [vmem:[#allocation5 + $0x1598] sm:$0xff]
        %v998 = vld [vmem:[#allocation5 + $0x15a0] sm:$0xff]
        %v999 = vld [vmem:[#allocation5 + $0x15a8] sm:$0xff]
        %v1000 = vld [vmem:[#allocation5 + $0x15b0] sm:$0xff]
        %v1001 = vld [vmem:[#allocation5 + $0x15b8] sm:$0xff]
        %v1002 = vld [vmem:[#allocation5 + $0x15c0] sm:$0xff]
        %v1003 = vld [vmem:[#allocation5 + $0x15c8] sm:$0xff]
        %v1004 = vld [vmem:[#allocation5 + $0x15d0] sm:$0xff]
        %v1005 = vld [vmem:[#allocation5 + $0x15d8] sm:$0xff]
        %v1006 = vld [vmem:[#allocation5 + $0x15e0] sm:$0xff]
        %v1007 = vld [vmem:[#allocation5 + $0x15e8] sm:$0xff]
        %v1008 = vld [vmem:[#allocation5 + $0x15f0] sm:$0xff]
        %v1009 = vld [vmem:[#allocation5 + $0x15f8] sm:$0xff]
        %v1010 = vld [vmem:[#allocation5 + $0x1600] sm:$0xff]
        %v1011 = vld [vmem:[#allocation5 + $0x1608] sm:$0xff]
        %v1012 = vld [vmem:[#allocation5 + $0x1610] sm:$0xff]
        %v1013 = vld [vmem:[#allocation5 + $0x1618] sm:$0xff]
        %v1014 = vld [vmem:[#allocation5 + $0x1620] sm:$0xff]
        %v1015 = vld [vmem:[#allocation5 + $0x1628] sm:$0xff]
        %v1016 = vld [vmem:[#allocation5 + $0x1630] sm:$0xff]
        %v1017 = vld [vmem:[#allocation5 + $0x1638] sm:$0xff]
        %v1018 = vld [vmem:[#allocation5 + $0x1640] sm:$0xff]
        %v1019 = vld [vmem:[#allocation5 + $0x1648] sm:$0xff]
        %v1020 = vld [vmem:[#allocation5 + $0x1650] sm:$0xff]
        %v1021 = vld [vmem:[#allocation5 + $0x1658] sm:$0xff]
        %v1022 = vld [vmem:[#allocation5 + $0x1660] sm:$0xff]
        %v1023 = vld [vmem:[#allocation5 + $0x1668] sm:$0xff]
        %v1024 = vld [vmem:[#allocation5 + $0x1670] sm:$0xff]
        %v1025 = vld [vmem:[#allocation5 + $0x1678] sm:$0xff]
        %v1026 = vld [vmem:[#allocation5 + $0x1680] sm:$0xff]
        %v1027 = vld [vmem:[#allocation5 + $0x1688] sm:$0xff]
        %v1028 = vld [vmem:[#allocation5 + $0x1690] sm:$0xff]
        %v1029 = vld [vmem:[#allocation5 + $0x1698] sm:$0xff]
        %v1030 = vld [vmem:[#allocation5 + $0x16a0] sm:$0xff]
        %v1031 = vld [vmem:[#allocation5 + $0x16a8] sm:$0xff]
        %v1032 = vld [vmem:[#allocation5 + $0x16b0] sm:$0xff]
        %v1033 = vld [vmem:[#allocation5 + $0x16b8] sm:$0xff]
        %v1034 = vld [vmem:[#allocation5 + $0x16c0] sm:$0xff]
        %v1035 = vld [vmem:[#allocation5 + $0x16c8] sm:$0xff]
        %v1036 = vld [vmem:[#allocation5 + $0x16d0] sm:$0xff]
        %v1037 = vld [vmem:[#allocation5 + $0x16d8] sm:$0xff]
        %v1038 = vld [vmem:[#allocation5 + $0x16e0] sm:$0xff]
        %v1039 = vld [vmem:[#allocation5 + $0x16e8] sm:$0xff]
        %v1040 = vld [vmem:[#allocation5 + $0x16f0] sm:$0xff]
        %v1041 = vld [vmem:[#allocation5 + $0x16f8] sm:$0xff]
        %v1042 = vld [vmem:[#allocation5 + $0x1700] sm:$0xff]
        %v1043 = vld [vmem:[#allocation5 + $0x1708] sm:$0xff]
        %v1044 = vld [vmem:[#allocation5 + $0x1710] sm:$0xff]
        %v1045 = vld [vmem:[#allocation5 + $0x1718] sm:$0xff]
        %v1046 = vld [vmem:[#allocation5 + $0x1720] sm:$0xff]
        %v1047 = vld [vmem:[#allocation5 + $0x1728] sm:$0xff]
        %v1048 = vld [vmem:[#allocation5 + $0x1730] sm:$0xff]
        %v1049 = vld [vmem:[#allocation5 + $0x1738] sm:$0xff]
        %v1050 = vld [vmem:[#allocation5 + $0x1740] sm:$0xff]
        %v1051 = vld [vmem:[#allocation5 + $0x1748] sm:$0xff]
        %v1052 = vld [vmem:[#allocation5 + $0x1750] sm:$0xff]
        %v1053 = vld [vmem:[#allocation5 + $0x1758] sm:$0xff]
        %v1054 = vld [vmem:[#allocation5 + $0x1760] sm:$0xff]
        %v1055 = vld [vmem:[#allocation5 + $0x1768] sm:$0xff]
        %v1056 = vld [vmem:[#allocation5 + $0x1770] sm:$0xff]
        %v1057 = vld [vmem:[#allocation5 + $0x1778] sm:$0xff]
        %v1058 = vld [vmem:[#allocation5 + $0x1780] sm:$0xff]
        %v1059 = vld [vmem:[#allocation5 + $0x1788] sm:$0xff]
        %v1060 = vld [vmem:[#allocation5 + $0x1790] sm:$0xff]
        %v1061 = vld [vmem:[#allocation5 + $0x1798] sm:$0xff]
        %v1062 = vld [vmem:[#allocation5 + $0x17a0] sm:$0xff]
        %v1063 = vld [vmem:[#allocation5 + $0x17a8] sm:$0xff]
        %v1064 = vld [vmem:[#allocation5 + $0x17b0] sm:$0xff]
        %v1065 = vld [vmem:[#allocation5 + $0x17b8] sm:$0xff]
        %v1066 = vld [vmem:[#allocation5 + $0x17c0] sm:$0xff]
        %v1067 = vld [vmem:[#allocation5 + $0x17c8] sm:$0xff]
        %v1068 = vld [vmem:[#allocation5 + $0x17d0] sm:$0xff]
        %v1069 = vld [vmem:[#allocation5 + $0x17d8] sm:$0xff]
        %v1070 = vld [vmem:[#allocation5 + $0x17e0] sm:$0xff]
        %v1071 = vld [vmem:[#allocation5 + $0x17e8] sm:$0xff]
        %v1072 = vld [vmem:[#allocation5 + $0x17f0] sm:$0xff]
        %v1073 = vld [vmem:[#allocation5 + $0x17f8] sm:$0xff]
        %v1074 = vld [vmem:[#allocation5 + $0x1800] sm:$0xff]
        %v1075 = vld [vmem:[#allocation5 + $0x1808] sm:$0xff]
        %v1076 = vld [vmem:[#allocation5 + $0x1810] sm:$0xff]
        %v1077 = vld [vmem:[#allocation5 + $0x1818] sm:$0xff]
        %v1078 = vld [vmem:[#allocation5 + $0x1820] sm:$0xff]
        %v1079 = vld [vmem:[#allocation5 + $0x1828] sm:$0xff]
        %v1080 = vld [vmem:[#allocation5 + $0x1830] sm:$0xff]
        %v1081 = vld [vmem:[#allocation5 + $0x1838] sm:$0xff]
        %v1082 = vld [vmem:[#allocation5 + $0x1840] sm:$0xff]
        %v1083 = vld [vmem:[#allocation5 + $0x1848] sm:$0xff]
        %v1084 = vld [vmem:[#allocation5 + $0x1850] sm:$0xff]
        %v1085 = vld [vmem:[#allocation5 + $0x1858] sm:$0xff]
        %v1086 = vld [vmem:[#allocation5 + $0x1860] sm:$0xff]
        %v1087 = vld [vmem:[#allocation5 + $0x1868] sm:$0xff]
        %v1088 = vld [vmem:[#allocation5 + $0x1870] sm:$0xff]
        %v1089 = vld [vmem:[#allocation5 + $0x1878] sm:$0xff]
        %v1090 = vld [vmem:[#allocation5 + $0x1880] sm:$0xff]
        %v1091 = vld [vmem:[#allocation5 + $0x1888] sm:$0xff]
        %v1092 = vld [vmem:[#allocation5 + $0x1890] sm:$0xff]
        %v1093 = vld [vmem:[#allocation5 + $0x1898] sm:$0xff]
        %v1094 = vld [vmem:[#allocation5 + $0x18a0] sm:$0xff]
        %v1095 = vld [vmem:[#allocation5 + $0x18a8] sm:$0xff]
        %v1096 = vld [vmem:[#allocation5 + $0x18b0] sm:$0xff]
        %v1097 = vld [vmem:[#allocation5 + $0x18b8] sm:$0xff]
        %v1098 = vld [vmem:[#allocation5 + $0x18c0] sm:$0xff]
        %v1099 = vld [vmem:[#allocation5 + $0x18c8] sm:$0xff]
        %v1100 = vld [vmem:[#allocation5 + $0x18d0] sm:$0xff]
        %v1101 = vld [vmem:[#allocation5 + $0x18d8] sm:$0xff]
        %v1102 = vld [vmem:[#allocation5 + $0x18e0] sm:$0xff]
        %v1103 = vld [vmem:[#allocation5 + $0x18e8] sm:$0xff]
        %v1104 = vld [vmem:[#allocation5 + $0x18f0] sm:$0xff]
        %v1105 = vld [vmem:[#allocation5 + $0x18f8] sm:$0xff]
        %v1106 = vld [vmem:[#allocation5 + $0x1900] sm:$0xff]
        %v1107 = vld [vmem:[#allocation5 + $0x1908] sm:$0xff]
        %v1108 = vld [vmem:[#allocation5 + $0x1910] sm:$0xff]
        %v1109 = vld [vmem:[#allocation5 + $0x1918] sm:$0xff]
        %v1110 = vld [vmem:[#allocation5 + $0x1920] sm:$0xff]
        %v1111 = vld [vmem:[#allocation5 + $0x1928] sm:$0xff]
        %v1112 = vld [vmem:[#allocation5 + $0x1930] sm:$0xff]
        %v1113 = vld [vmem:[#allocation5 + $0x1938] sm:$0xff]
        %v1114 = vld [vmem:[#allocation5 + $0x1940] sm:$0xff]
        %v1115 = vld [vmem:[#allocation5 + $0x1948] sm:$0xff]
        %v1116 = vld [vmem:[#allocation5 + $0x1950] sm:$0xff]
        %v1117 = vld [vmem:[#allocation5 + $0x1958] sm:$0xff]
        %v1118 = vld [vmem:[#allocation5 + $0x1960] sm:$0xff]
        %v1119 = vld [vmem:[#allocation5 + $0x1968] sm:$0xff]
        %v1120 = vld [vmem:[#allocation5 + $0x1970] sm:$0xff]
        %v1121 = vld [vmem:[#allocation5 + $0x1978] sm:$0xff]
        %v1122 = vld [vmem:[#allocation5 + $0x1980] sm:$0xff]
        %v1123 = vld [vmem:[#allocation5 + $0x1988] sm:$0xff]
        %v1124 = vld [vmem:[#allocation5 + $0x1990] sm:$0xff]
        %v1125 = vld [vmem:[#allocation5 + $0x1998] sm:$0xff]
        %v1126 = vld [vmem:[#allocation5 + $0x19a0] sm:$0xff]
        %v1127 = vld [vmem:[#allocation5 + $0x19a8] sm:$0xff]
        %v1128 = vld [vmem:[#allocation5 + $0x19b0] sm:$0xff]
        %v1129 = vld [vmem:[#allocation5 + $0x19b8] sm:$0xff]
        %v1130 = vld [vmem:[#allocation5 + $0x19c0] sm:$0xff]
        %v1131 = vld [vmem:[#allocation5 + $0x19c8] sm:$0xff]
        %v1132 = vld [vmem:[#allocation5 + $0x19d0] sm:$0xff]
        %v1133 = vld [vmem:[#allocation5 + $0x19d8] sm:$0xff]
        %v1134 = vld [vmem:[#allocation5 + $0x19e0] sm:$0xff]
        %v1135 = vld [vmem:[#allocation5 + $0x19e8] sm:$0xff]
        %v1136 = vld [vmem:[#allocation5 + $0x19f0] sm:$0xff]
        %v1137 = vld [vmem:[#allocation5 + $0x19f8] sm:$0xff]
        %v1138 = vld [vmem:[#allocation5 + $0x1a00] sm:$0xff]
        %v1139 = vld [vmem:[#allocation5 + $0x1a08] sm:$0xff]
        %v1140 = vld [vmem:[#allocation5 + $0x1a10] sm:$0xff]
        %v1141 = vld [vmem:[#allocation5 + $0x1a18] sm:$0xff]
        %v1142 = vld [vmem:[#allocation5 + $0x1a20] sm:$0xff]
        %v1143 = vld [vmem:[#allocation5 + $0x1a28] sm:$0xff]
        %v1144 = vld [vmem:[#allocation5 + $0x1a30] sm:$0xff]
        %v1145 = vld [vmem:[#allocation5 + $0x1a38] sm:$0xff]
        %v1146 = vld [vmem:[#allocation5 + $0x1a40] sm:$0xff]
        %v1147 = vld [vmem:[#allocation5 + $0x1a48] sm:$0xff]
        %v1148 = vld [vmem:[#allocation5 + $0x1a50] sm:$0xff]
        %v1149 = vld [vmem:[#allocation5 + $0x1a58] sm:$0xff]
        %v1150 = vld [vmem:[#allocation5 + $0x1a60] sm:$0xff]
        %v1151 = vld [vmem:[#allocation5 + $0x1a68] sm:$0xff]
        %v1152 = vld [vmem:[#allocation5 + $0x1a70] sm:$0xff]
        %v1153 = vld [vmem:[#allocation5 + $0x1a78] sm:$0xff]
        %v1154 = vld [vmem:[#allocation5 + $0x1a80] sm:$0xff]
        %v1155 = vld [vmem:[#allocation5 + $0x1a88] sm:$0xff]
        %v1156 = vld [vmem:[#allocation5 + $0x1a90] sm:$0xff]
        %v1157 = vld [vmem:[#allocation5 + $0x1a98] sm:$0xff]
        %v1158 = vld [vmem:[#allocation5 + $0x1aa0] sm:$0xff]
        %v1159 = vld [vmem:[#allocation5 + $0x1aa8] sm:$0xff]
        %v1160 = vld [vmem:[#allocation5 + $0x1ab0] sm:$0xff]
        %v1161 = vld [vmem:[#allocation5 + $0x1ab8] sm:$0xff]
        %v1162 = vld [vmem:[#allocation5 + $0x1ac0] sm:$0xff]
        %v1163 = vld [vmem:[#allocation5 + $0x1ac8] sm:$0xff]
        %v1164 = vld [vmem:[#allocation5 + $0x1ad0] sm:$0xff]
        %v1165 = vld [vmem:[#allocation5 + $0x1ad8] sm:$0xff]
        %v1166 = vld [vmem:[#allocation5 + $0x1ae0] sm:$0xff]
        %v1167 = vld [vmem:[#allocation5 + $0x1ae8] sm:$0xff]
        %v1168 = vld [vmem:[#allocation5 + $0x1af0] sm:$0xff]
        %v1169 = vld [vmem:[#allocation5 + $0x1af8] sm:$0xff]
        %v1170 = vld [vmem:[#allocation5 + $0x1b00] sm:$0xff]
        %v1171 = vld [vmem:[#allocation5 + $0x1b08] sm:$0xff]
        %v1172 = vld [vmem:[#allocation5 + $0x1b10] sm:$0xff]
        %v1173 = vld [vmem:[#allocation5 + $0x1b18] sm:$0xff]
        %v1174 = vld [vmem:[#allocation5 + $0x1b20] sm:$0xff]
        %v1175 = vld [vmem:[#allocation5 + $0x1b28] sm:$0xff]
        %v1176 = vld [vmem:[#allocation5 + $0x1b30] sm:$0xff]
        %v1177 = vld [vmem:[#allocation5 + $0x1b38] sm:$0xff]
        %v1178 = vld [vmem:[#allocation5 + $0x1b40] sm:$0xff]
        %v1179 = vld [vmem:[#allocation5 + $0x1b48] sm:$0xff]
        %v1180 = vld [vmem:[#allocation5 + $0x1b50] sm:$0xff]
        %v1181 = vld [vmem:[#allocation5 + $0x1b58] sm:$0xff]
        %v1182 = vld [vmem:[#allocation5 + $0x1b60] sm:$0xff]
        %v1183 = vld [vmem:[#allocation5 + $0x1b68] sm:$0xff]
        %v1184 = vld [vmem:[#allocation5 + $0x1b70] sm:$0xff]
        %v1185 = vld [vmem:[#allocation5 + $0x1b78] sm:$0xff]
        %v1186 = vld [vmem:[#allocation5 + $0x1b80] sm:$0xff]
        %v1187 = vld [vmem:[#allocation5 + $0x1b88] sm:$0xff]
        %v1188 = vld [vmem:[#allocation5 + $0x1b90] sm:$0xff]
        %v1189 = vld [vmem:[#allocation5 + $0x1b98] sm:$0xff]
        %v1190 = vld [vmem:[#allocation5 + $0x1ba0] sm:$0xff]
        %v1191 = vld [vmem:[#allocation5 + $0x1ba8] sm:$0xff]
        %v1192 = vld [vmem:[#allocation5 + $0x1bb0] sm:$0xff]
        %v1193 = vld [vmem:[#allocation5 + $0x1bb8] sm:$0xff]
        %v1194 = vld [vmem:[#allocation5 + $0x1bc0] sm:$0xff]
        %v1195 = vld [vmem:[#allocation5 + $0x1bc8] sm:$0xff]
        %v1196 = vld [vmem:[#allocation5 + $0x1bd0] sm:$0xff]
        %v1197 = vld [vmem:[#allocation5 + $0x1bd8] sm:$0xff]
        %v1198 = vld [vmem:[#allocation5 + $0x1be0] sm:$0xff]
        %v1199 = vld [vmem:[#allocation5 + $0x1be8] sm:$0xff]
        %v1200 = vld [vmem:[#allocation5 + $0x1bf0] sm:$0xff]
        %v1201 = vld [vmem:[#allocation5 + $0x1bf8] sm:$0xff]
        %v1202 = vld [vmem:[#allocation5 + $0x1c00] sm:$0xff]
        %v1203 = vld [vmem:[#allocation5 + $0x1c08] sm:$0xff]
        %v1204 = vld [vmem:[#allocation5 + $0x1c10] sm:$0xff]
        %v1205 = vld [vmem:[#allocation5 + $0x1c18] sm:$0xff]
        %v1206 = vld [vmem:[#allocation5 + $0x1c20] sm:$0xff]
        %v1207 = vld [vmem:[#allocation5 + $0x1c28] sm:$0xff]
        %v1208 = vld [vmem:[#allocation5 + $0x1c30] sm:$0xff]
        %v1209 = vld [vmem:[#allocation5 + $0x1c38] sm:$0xff]
        %v1210 = vld [vmem:[#allocation5 + $0x1c40] sm:$0xff]
        %v1211 = vld [vmem:[#allocation5 + $0x1c48] sm:$0xff]
        %v1212 = vld [vmem:[#allocation5 + $0x1c50] sm:$0xff]
        %v1213 = vld [vmem:[#allocation5 + $0x1c58] sm:$0xff]
        %v1214 = vld [vmem:[#allocation5 + $0x1c60] sm:$0xff]
        %v1215 = vld [vmem:[#allocation5 + $0x1c68] sm:$0xff]
        %v1216 = vld [vmem:[#allocation5 + $0x1c70] sm:$0xff]
        %v1217 = vld [vmem:[#allocation5 + $0x1c78] sm:$0xff]
        %v1218 = vld [vmem:[#allocation5 + $0x1c80] sm:$0xff]
        %v1219 = vld [vmem:[#allocation5 + $0x1c88] sm:$0xff]
        %v1220 = vld [vmem:[#allocation5 + $0x1c90] sm:$0xff]
        %v1221 = vld [vmem:[#allocation5 + $0x1c98] sm:$0xff]
        %v1222 = vld [vmem:[#allocation5 + $0x1ca0] sm:$0xff]
        %v1223 = vld [vmem:[#allocation5 + $0x1ca8] sm:$0xff]
        %v1224 = vld [vmem:[#allocation5 + $0x1cb0] sm:$0xff]
        %v1225 = vld [vmem:[#allocation5 + $0x1cb8] sm:$0xff]
        %v1226 = vld [vmem:[#allocation5 + $0x1cc0] sm:$0xff]
        %v1227 = vld [vmem:[#allocation5 + $0x1cc8] sm:$0xff]
        %v1228 = vld [vmem:[#allocation5 + $0x1cd0] sm:$0xff]
        %v1229 = vld [vmem:[#allocation5 + $0x1cd8] sm:$0xff]
        %v1230 = vld [vmem:[#allocation5 + $0x1ce0] sm:$0xff]
        %v1231 = vld [vmem:[#allocation5 + $0x1ce8] sm:$0xff]
        %v1232 = vld [vmem:[#allocation5 + $0x1cf0] sm:$0xff]
        %v1233 = vld [vmem:[#allocation5 + $0x1cf8] sm:$0xff]
        %v1234 = vld [vmem:[#allocation5 + $0x1d00] sm:$0xff]
        %v1235 = vld [vmem:[#allocation5 + $0x1d08] sm:$0xff]
        %v1236 = vld [vmem:[#allocation5 + $0x1d10] sm:$0xff]
        %v1237 = vld [vmem:[#allocation5 + $0x1d18] sm:$0xff]
        %v1238 = vld [vmem:[#allocation5 + $0x1d20] sm:$0xff]
        %v1239 = vld [vmem:[#allocation5 + $0x1d28] sm:$0xff]
        %v1240 = vld [vmem:[#allocation5 + $0x1d30] sm:$0xff]
        %v1241 = vld [vmem:[#allocation5 + $0x1d38] sm:$0xff]
        %v1242 = vld [vmem:[#allocation5 + $0x1d40] sm:$0xff]
        %v1243 = vld [vmem:[#allocation5 + $0x1d48] sm:$0xff]
        %v1244 = vld [vmem:[#allocation5 + $0x1d50] sm:$0xff]
        %v1245 = vld [vmem:[#allocation5 + $0x1d58] sm:$0xff]
        %v1246 = vld [vmem:[#allocation5 + $0x1d60] sm:$0xff]
        %v1247 = vld [vmem:[#allocation5 + $0x1d68] sm:$0xff]
        %v1248 = vld [vmem:[#allocation5 + $0x1d70] sm:$0xff]
        %v1249 = vld [vmem:[#allocation5 + $0x1d78] sm:$0xff]
        %v1250 = vld [vmem:[#allocation5 + $0x1d80] sm:$0xff]
        %v1251 = vld [vmem:[#allocation5 + $0x1d88] sm:$0xff]
        %v1252 = vld [vmem:[#allocation5 + $0x1d90] sm:$0xff]
        %v1253 = vld [vmem:[#allocation5 + $0x1d98] sm:$0xff]
        %v1254 = vld [vmem:[#allocation5 + $0x1da0] sm:$0xff]
        %v1255 = vld [vmem:[#allocation5 + $0x1da8] sm:$0xff]
        %v1256 = vld [vmem:[#allocation5 + $0x1db0] sm:$0xff]
        %v1257 = vld [vmem:[#allocation5 + $0x1db8] sm:$0xff]
        %v1258 = vld [vmem:[#allocation5 + $0x1dc0] sm:$0xff]
        %v1259 = vld [vmem:[#allocation5 + $0x1dc8] sm:$0xff]
        %v1260 = vld [vmem:[#allocation5 + $0x1dd0] sm:$0xff]
        %v1261 = vld [vmem:[#allocation5 + $0x1dd8] sm:$0xff]
        %v1262 = vld [vmem:[#allocation5 + $0x1de0] sm:$0xff]
        %v1263 = vld [vmem:[#allocation5 + $0x1de8] sm:$0xff]
        %v1264 = vld [vmem:[#allocation5 + $0x1df0] sm:$0xff]
        %v1265 = vld [vmem:[#allocation5 + $0x1df8] sm:$0xff]
        %v1266 = vld [vmem:[#allocation5 + $0x1e00] sm:$0xff]
        %v1267 = vld [vmem:[#allocation5 + $0x1e08] sm:$0xff]
        %v1268 = vld [vmem:[#allocation5 + $0x1e10] sm:$0xff]
        %v1269 = vld [vmem:[#allocation5 + $0x1e18] sm:$0xff]
        %v1270 = vld [vmem:[#allocation5 + $0x1e20] sm:$0xff]
        %v1271 = vld [vmem:[#allocation5 + $0x1e28] sm:$0xff]
        %v1272 = vld [vmem:[#allocation5 + $0x1e30] sm:$0xff]
        %v1273 = vld [vmem:[#allocation5 + $0x1e38] sm:$0xff]
        %v1274 = vld [vmem:[#allocation5 + $0x1e40] sm:$0xff]
        %v1275 = vld [vmem:[#allocation5 + $0x1e48] sm:$0xff]
        %v1276 = vld [vmem:[#allocation5 + $0x1e50] sm:$0xff]
        %v1277 = vld [vmem:[#allocation5 + $0x1e58] sm:$0xff]
        %v1278 = vld [vmem:[#allocation5 + $0x1e60] sm:$0xff]
        %v1279 = vld [vmem:[#allocation5 + $0x1e68] sm:$0xff]
        %v1280 = vld [vmem:[#allocation5 + $0x1e70] sm:$0xff]
        %v1281 = vld [vmem:[#allocation5 + $0x1e78] sm:$0xff]
        %v1282 = vld [vmem:[#allocation5 + $0x1e80] sm:$0xff]
        %v1283 = vld [vmem:[#allocation5 + $0x1e88] sm:$0xff]
        %v1284 = vld [vmem:[#allocation5 + $0x1e90] sm:$0xff]
        %v1285 = vld [vmem:[#allocation5 + $0x1e98] sm:$0xff]
        %v1286 = vld [vmem:[#allocation5 + $0x1ea0] sm:$0xff]
        %v1287 = vld [vmem:[#allocation5 + $0x1ea8] sm:$0xff]
        %v1288 = vld [vmem:[#allocation5 + $0x1eb0] sm:$0xff]
        %v1289 = vld [vmem:[#allocation5 + $0x1eb8] sm:$0xff]
        %v1290 = vld [vmem:[#allocation5 + $0x1ec0] sm:$0xff]
        %v1291 = vld [vmem:[#allocation5 + $0x1ec8] sm:$0xff]
        %v1292 = vld [vmem:[#allocation5 + $0x1ed0] sm:$0xff]
        %v1293 = vld [vmem:[#allocation5 + $0x1ed8] sm:$0xff]
        %v1294 = vld [vmem:[#allocation5 + $0x1ee0] sm:$0xff]
        %v1295 = vld [vmem:[#allocation5 + $0x1ee8] sm:$0xff]
        %v1296 = vld [vmem:[#allocation5 + $0x1ef0] sm:$0xff]
        %v1297 = vld [vmem:[#allocation5 + $0x1ef8] sm:$0xff]
        %v1298 = vld [vmem:[#allocation5 + $0x1f00] sm:$0xff]
        %v1299 = vld [vmem:[#allocation5 + $0x1f08] sm:$0xff]
        %v1300 = vld [vmem:[#allocation5 + $0x1f10] sm:$0xff]
        %v1301 = vld [vmem:[#allocation5 + $0x1f18] sm:$0xff]
        %v1302 = vld [vmem:[#allocation5 + $0x1f20] sm:$0xff]
        %v1303 = vld [vmem:[#allocation5 + $0x1f28] sm:$0xff]
        %v1304 = vld [vmem:[#allocation5 + $0x1f30] sm:$0xff]
        %v1305 = vld [vmem:[#allocation5 + $0x1f38] sm:$0xff]
        %v1306 = vld [vmem:[#allocation5 + $0x1f40] sm:$0xff]
        %v1307 = vld [vmem:[#allocation5 + $0x1f48] sm:$0xff]
        %v1308 = vld [vmem:[#allocation5 + $0x1f50] sm:$0xff]
        %v1309 = vld [vmem:[#allocation5 + $0x1f58] sm:$0xff]
        %v1310 = vld [vmem:[#allocation5 + $0x1f60] sm:$0xff]
        %v1311 = vld [vmem:[#allocation5 + $0x1f68] sm:$0xff]
        %v1312 = vld [vmem:[#allocation5 + $0x1f70] sm:$0xff]
        %v1313 = vld [vmem:[#allocation5 + $0x1f78] sm:$0xff]
        %v1314 = vld [vmem:[#allocation5 + $0x1f80] sm:$0xff]
        %v1315 = vld [vmem:[#allocation5 + $0x1f88] sm:$0xff]
        %v1316 = vld [vmem:[#allocation5 + $0x1f90] sm:$0xff]
        %v1317 = vld [vmem:[#allocation5 + $0x1f98] sm:$0xff]
        %v1318 = vld [vmem:[#allocation5 + $0x1fa0] sm:$0xff]
        %v1319 = vld [vmem:[#allocation5 + $0x1fa8] sm:$0xff]
        %v1320 = vld [vmem:[#allocation5 + $0x1fb0] sm:$0xff]
        %v1321 = vld [vmem:[#allocation5 + $0x1fb8] sm:$0xff]
        %v1322 = vld [vmem:[#allocation5 + $0x1fc0] sm:$0xff]
        %v1323 = vld [vmem:[#allocation5 + $0x1fc8] sm:$0xff]
        %v1324 = vld [vmem:[#allocation5 + $0x1fd0] sm:$0xff]
        %v1325 = vld [vmem:[#allocation5 + $0x1fd8] sm:$0xff]
        %v1326 = vld [vmem:[#allocation5 + $0x1fe0] sm:$0xff]
        %v1327 = vld [vmem:[#allocation5 + $0x1fe8] sm:$0xff]
        %v1328 = vld [vmem:[#allocation5 + $0x1ff0] sm:$0xff]
        %v1329 = vld [vmem:[#allocation5 + $0x1ff8] sm:$0xff]
        %v1330 = vld [vmem:[#allocation5 + $0x2000] sm:$0xff]
        %v1331 = vld [vmem:[#allocation5 + $0x2008] sm:$0xff]
        %v1332 = vld [vmem:[#allocation5 + $0x2010] sm:$0xff]
        %v1333 = vld [vmem:[#allocation5 + $0x2018] sm:$0xff]
        %v1334 = vld [vmem:[#allocation5 + $0x2020] sm:$0xff]
        %v1335 = vld [vmem:[#allocation5 + $0x2028] sm:$0xff]
        %v1336 = vld [vmem:[#allocation5 + $0x2030] sm:$0xff]
        %v1337 = vld [vmem:[#allocation5 + $0x2038] sm:$0xff]
        %v1338 = vld [vmem:[#allocation5 + $0x2040] sm:$0xff]
        %v1339 = vld [vmem:[#allocation5 + $0x2048] sm:$0xff]
        %v1340 = vld [vmem:[#allocation5 + $0x2050] sm:$0xff]
        %v1341 = vld [vmem:[#allocation5 + $0x2058] sm:$0xff]
        %v1342 = vld [vmem:[#allocation5 + $0x2060] sm:$0xff]
        %v1343 = vld [vmem:[#allocation5 + $0x2068] sm:$0xff]
        %v1344 = vld [vmem:[#allocation5 + $0x2070] sm:$0xff]
        %v1345 = vld [vmem:[#allocation5 + $0x2078] sm:$0xff]
        %v1346 = vld [vmem:[#allocation5 + $0x2080] sm:$0xff]
        %v1347 = vld [vmem:[#allocation5 + $0x2088] sm:$0xff]
        %v1348 = vld [vmem:[#allocation5 + $0x2090] sm:$0xff]
        %v1349 = vld [vmem:[#allocation5 + $0x2098] sm:$0xff]
        %v1350 = vld [vmem:[#allocation5 + $0x20a0] sm:$0xff]
        %v1351 = vld [vmem:[#allocation5 + $0x20a8] sm:$0xff]
        %v1352 = vld [vmem:[#allocation5 + $0x20b0] sm:$0xff]
        %v1353 = vld [vmem:[#allocation5 + $0x20b8] sm:$0xff]
        %v1354 = vld [vmem:[#allocation5 + $0x20c0] sm:$0xff]
        %v1355 = vld [vmem:[#allocation5 + $0x20c8] sm:$0xff]
        %v1356 = vld [vmem:[#allocation5 + $0x20d0] sm:$0xff]
        %v1357 = vld [vmem:[#allocation5 + $0x20d8] sm:$0xff]
        %v1358 = vld [vmem:[#allocation5 + $0x20e0] sm:$0xff]
        %v1359 = vld [vmem:[#allocation5 + $0x20e8] sm:$0xff]
        %v1360 = vld [vmem:[#allocation5 + $0x20f0] sm:$0xff]
        %v1361 = vld [vmem:[#allocation5 + $0x20f8] sm:$0xff]
        %v1362 = vld [vmem:[#allocation5 + $0x2100] sm:$0xff]
        %v1363 = vld [vmem:[#allocation5 + $0x2108] sm:$0xff]
        %v1364 = vld [vmem:[#allocation5 + $0x2110] sm:$0xff]
        %v1365 = vld [vmem:[#allocation5 + $0x2118] sm:$0xff]
        %v1366 = vld [vmem:[#allocation5 + $0x2120] sm:$0xff]
        %v1367 = vld [vmem:[#allocation5 + $0x2128] sm:$0xff]
        %v1368 = vld [vmem:[#allocation5 + $0x2130] sm:$0xff]
        %v1369 = vld [vmem:[#allocation5 + $0x2138] sm:$0xff]
        %v1370 = vld [vmem:[#allocation5 + $0x2140] sm:$0xff]
        %v1371 = vld [vmem:[#allocation5 + $0x2148] sm:$0xff]
        %v1372 = vld [vmem:[#allocation5 + $0x2150] sm:$0xff]
        %v1373 = vld [vmem:[#allocation5 + $0x2158] sm:$0xff]
        %v1374 = vld [vmem:[#allocation5 + $0x2160] sm:$0xff]
        %v1375 = vld [vmem:[#allocation5 + $0x2168] sm:$0xff]
        %v1376 = vld [vmem:[#allocation5 + $0x2170] sm:$0xff]
        %v1377 = vld [vmem:[#allocation5 + $0x2178] sm:$0xff]
        %v1378 = vld [vmem:[#allocation5 + $0x2180] sm:$0xff]
        %v1379 = vld [vmem:[#allocation5 + $0x2188] sm:$0xff]
        %v1380 = vld [vmem:[#allocation5 + $0x2190] sm:$0xff]
        %v1381 = vld [vmem:[#allocation5 + $0x2198] sm:$0xff]
        %v1382 = vld [vmem:[#allocation5 + $0x21a0] sm:$0xff]
        %v1383 = vld [vmem:[#allocation5 + $0x21a8] sm:$0xff]
        %v1384 = vld [vmem:[#allocation5 + $0x21b0] sm:$0xff]
        %v1385 = vld [vmem:[#allocation5 + $0x21b8] sm:$0xff]
        %v1386 = vld [vmem:[#allocation5 + $0x21c0] sm:$0xff]
        %v1387 = vld [vmem:[#allocation5 + $0x21c8] sm:$0xff]
        %v1388 = vld [vmem:[#allocation5 + $0x21d0] sm:$0xff]
        %v1389 = vld [vmem:[#allocation5 + $0x21d8] sm:$0xff]
        %v1390 = vld [vmem:[#allocation5 + $0x21e0] sm:$0xff]
        %v1391 = vld [vmem:[#allocation5 + $0x21e8] sm:$0xff]
        %v1392 = vld [vmem:[#allocation5 + $0x21f0] sm:$0xff]
        %v1393 = vld [vmem:[#allocation5 + $0x21f8] sm:$0xff]
        %v1394 = vld [vmem:[#allocation5 + $0x2200] sm:$0xff]
        %v1395 = vld [vmem:[#allocation5 + $0x2208] sm:$0xff]
        %v1396 = vld [vmem:[#allocation5 + $0x2210] sm:$0xff]
        %v1397 = vld [vmem:[#allocation5 + $0x2218] sm:$0xff]
        %v1398 = vld [vmem:[#allocation5 + $0x2220] sm:$0xff]
        %v1399 = vld [vmem:[#allocation5 + $0x2228] sm:$0xff]
        %v1400 = vld [vmem:[#allocation5 + $0x2230] sm:$0xff]
        %v1401 = vld [vmem:[#allocation5 + $0x2238] sm:$0xff]
        %v1402 = vld [vmem:[#allocation5 + $0x2240] sm:$0xff]
        %v1403 = vld [vmem:[#allocation5 + $0x2248] sm:$0xff]
        %v1404 = vld [vmem:[#allocation5 + $0x2250] sm:$0xff]
        %v1405 = vld [vmem:[#allocation5 + $0x2258] sm:$0xff]
        %v1406 = vld [vmem:[#allocation5 + $0x2260] sm:$0xff]
        %v1407 = vld [vmem:[#allocation5 + $0x2268] sm:$0xff]
        %v1408 = vld [vmem:[#allocation5 + $0x2270] sm:$0xff]
        %v1409 = vld [vmem:[#allocation5 + $0x2278] sm:$0xff]
        %v1410 = vld [vmem:[#allocation5 + $0x2280] sm:$0xff]
        %v1411 = vld [vmem:[#allocation5 + $0x2288] sm:$0xff]
        %v1412 = vld [vmem:[#allocation5 + $0x2290] sm:$0xff]
        %v1413 = vld [vmem:[#allocation5 + $0x2298] sm:$0xff]
        %v1414 = vld [vmem:[#allocation5 + $0x22a0] sm:$0xff]
        %v1415 = vld [vmem:[#allocation5 + $0x22a8] sm:$0xff]
        %v1416 = vld [vmem:[#allocation5 + $0x22b0] sm:$0xff]
        %v1417 = vld [vmem:[#allocation5 + $0x22b8] sm:$0xff]
        %v1418 = vld [vmem:[#allocation5 + $0x22c0] sm:$0xff]
        %v1419 = vld [vmem:[#allocation5 + $0x22c8] sm:$0xff]
        %v1420 = vld [vmem:[#allocation5 + $0x22d0] sm:$0xff]
        %v1421 = vld [vmem:[#allocation5 + $0x22d8] sm:$0xff]
        %v1422 = vld [vmem:[#allocation5 + $0x22e0] sm:$0xff]
        %v1423 = vld [vmem:[#allocation5 + $0x22e8] sm:$0xff]
        %v1424 = vld [vmem:[#allocation5 + $0x22f0] sm:$0xff]
        %v1425 = vld [vmem:[#allocation5 + $0x22f8] sm:$0xff]
        %v1426 = vld [vmem:[#allocation5 + $0x2300] sm:$0xff]
        %v1427 = vld [vmem:[#allocation5 + $0x2308] sm:$0xff]
        %v1428 = vld [vmem:[#allocation5 + $0x2310] sm:$0xff]
        %v1429 = vld [vmem:[#allocation5 + $0x2318] sm:$0xff]
        %v1430 = vld [vmem:[#allocation5 + $0x2320] sm:$0xff]
        %v1431 = vld [vmem:[#allocation5 + $0x2328] sm:$0xff]
        %v1432 = vld [vmem:[#allocation5 + $0x2330] sm:$0xff]
        %v1433 = vld [vmem:[#allocation5 + $0x2338] sm:$0xff]
        %v1434 = vld [vmem:[#allocation5 + $0x2340] sm:$0xff]
        %v1435 = vld [vmem:[#allocation5 + $0x2348] sm:$0xff]
        %v1436 = vld [vmem:[#allocation5 + $0x2350] sm:$0xff]
        %v1437 = vld [vmem:[#allocation5 + $0x2358] sm:$0xff]
        %v1438 = vld [vmem:[#allocation5 + $0x2360] sm:$0xff]
        %v1439 = vld [vmem:[#allocation5 + $0x2368] sm:$0xff]
        %v1440 = vld [vmem:[#allocation5 + $0x2370] sm:$0xff]
        %v1441 = vld [vmem:[#allocation5 + $0x2378] sm:$0xff]
        %v1442 = vld [vmem:[#allocation5 + $0x2380] sm:$0xff]
        %v1443 = vld [vmem:[#allocation5 + $0x2388] sm:$0xff]
        %v1444 = vld [vmem:[#allocation5 + $0x2390] sm:$0xff]
        %v1445 = vld [vmem:[#allocation5 + $0x2398] sm:$0xff]
        %v1446 = vld [vmem:[#allocation5 + $0x23a0] sm:$0xff]
        %v1447 = vld [vmem:[#allocation5 + $0x23a8] sm:$0xff]
        %v1448 = vld [vmem:[#allocation5 + $0x23b0] sm:$0xff]
        %v1449 = vld [vmem:[#allocation5 + $0x23b8] sm:$0xff]
        %v1450 = vld [vmem:[#allocation5 + $0x23c0] sm:$0xff]
        %v1451 = vld [vmem:[#allocation5 + $0x23c8] sm:$0xff]
        %v1452 = vld [vmem:[#allocation5 + $0x23d0] sm:$0xff]
        %v1453 = vld [vmem:[#allocation5 + $0x23d8] sm:$0xff]
        %v1454 = vld [vmem:[#allocation5 + $0x23e0] sm:$0xff]
        %v1455 = vld [vmem:[#allocation5 + $0x23e8] sm:$0xff]
        %v1456 = vld [vmem:[#allocation5 + $0x23f0] sm:$0xff]
        %v1457 = vld [vmem:[#allocation5 + $0x23f8] sm:$0xff]
        %v1458 = vld [vmem:[#allocation7] sm:$0xff]
        %v1459 = vld [vmem:[#allocation7 + $0x8] sm:$0xff]
        %v1460 = vld [vmem:[#allocation7 + $0x10] sm:$0xff]
        %v1464 = vlaneseq
        %v1465 = vshrl.u32 %v1464, 7
        %v1466 = vsub.s32 0, %v1465
        %v1467 = vrot.slane %v1458, %v1466
        %v1468 = vlaneseq
        %v1469 = vshrl.u32 %v1468, 7
        %v1470 = vsub.s32 1, %v1469
        %v1471 = vrot.slane %v1458, %v1470
        %v1472 = vlaneseq
        %v1473 = vshrl.u32 %v1472, 7
        %v1474 = vsub.s32 2, %v1473
        %v1475 = vrot.slane %v1458, %v1474
        %v1476 = vlaneseq
        %v1477 = vshrl.u32 %v1476, 7
        %v1478 = vsub.s32 3, %v1477
        %v1479 = vrot.slane %v1458, %v1478
        %v1480 = vlaneseq
        %v1481 = vshrl.u32 %v1480, 7
        %v1482 = vsub.s32 4, %v1481
        %v1483 = vrot.slane %v1458, %v1482
        %v1484 = vlaneseq
        %v1485 = vshrl.u32 %v1484, 7
        %v1486 = vsub.s32 5, %v1485
        %v1487 = vrot.slane %v1458, %v1486
        %v1488 = vlaneseq
        %v1489 = vshrl.u32 %v1488, 7
        %v1490 = vsub.s32 6, %v1489
        %v1491 = vrot.slane %v1458, %v1490
        %v1492 = vlaneseq
        %v1493 = vshrl.u32 %v1492, 7
        %v1494 = vsub.s32 7, %v1493
        %v1495 = vrot.slane %v1458, %v1494
        %v1496 = vlaneseq
        %v1497 = vshrl.u32 %v1496, 7
        %v1498 = vsub.s32 0, %v1497
        %v1499 = vrot.slane %v1459, %v1498
        %v1500 = vlaneseq
        %v1501 = vshrl.u32 %v1500, 7
        %v1502 = vsub.s32 1, %v1501
        %v1503 = vrot.slane %v1459, %v1502
        %v1504 = vlaneseq
        %v1505 = vshrl.u32 %v1504, 7
        %v1506 = vsub.s32 2, %v1505
        %v1507 = vrot.slane %v1459, %v1506
        %v1508 = vlaneseq
        %v1509 = vshrl.u32 %v1508, 7
        %v1510 = vsub.s32 3, %v1509
        %v1511 = vrot.slane %v1459, %v1510
        %v1512 = vlaneseq
        %v1513 = vshrl.u32 %v1512, 7
        %v1514 = vsub.s32 4, %v1513
        %v1515 = vrot.slane %v1459, %v1514
        %v1516 = vlaneseq
        %v1517 = vshrl.u32 %v1516, 7
        %v1518 = vsub.s32 5, %v1517
        %v1519 = vrot.slane %v1459, %v1518
        %v1520 = vlaneseq
        %v1521 = vshrl.u32 %v1520, 7
        %v1522 = vsub.s32 6, %v1521
        %v1523 = vrot.slane %v1459, %v1522
        %v1524 = vlaneseq
        %v1525 = vshrl.u32 %v1524, 7
        %v1526 = vsub.s32 7, %v1525
        %v1527 = vrot.slane %v1459, %v1526
        %v1528 = vlaneseq
        %v1529 = vshrl.u32 %v1528, 7
        %v1530 = vsub.s32 0, %v1529
        %v1531 = vrot.slane %v1460, %v1530
        %v1532 = vlaneseq
        %v1533 = vshrl.u32 %v1532, 7
        %v1534 = vsub.s32 1, %v1533
        %v1535 = vrot.slane %v1460, %v1534
        %v1536 = vlaneseq
        %v1537 = vshrl.u32 %v1536, 7
        %v1538 = vsub.s32 2, %v1537
        %v1539 = vrot.slane %v1460, %v1538
        %v1540 = vlaneseq
        %v1541 = vshrl.u32 %v1540, 7
        %v1542 = vsub.s32 3, %v1541
        %v1543 = vrot.slane %v1460, %v1542
        %v1544 = vlaneseq
        %v1545 = vshrl.u32 %v1544, 7
        %v1546 = vsub.s32 4, %v1545
        %v1547 = vrot.slane %v1460, %v1546
        %v1548 = vlaneseq
        %v1549 = vshrl.u32 %v1548, 7
        %v1550 = vsub.s32 5, %v1549
        %v1551 = vrot.slane %v1460, %v1550
        %v1552 = vlaneseq
        %v1553 = vshrl.u32 %v1552, 7
        %v1554 = vsub.s32 6, %v1553
        %v1555 = vrot.slane %v1460, %v1554
        %v1556 = vlaneseq
        %v1557 = vshrl.u32 %v1556, 7
        %v1558 = vsub.s32 7, %v1557
        %v1559 = vrot.slane %v1460, %v1558
        %v1632 = vunpack.c.l.b16 %v258
        %v1633 = vunpack.c.h.b16 %v258
        %v1634 = vunpack.c.l.b16 %v259
        %v1635 = vunpack.c.h.b16 %v259
        %v1636 = vunpack.c.l.b16 %v260
        %v1637 = vunpack.c.h.b16 %v260
        %v1638 = vunpack.c.l.b16 %v261
        %v1639 = vunpack.c.h.b16 %v261
        %v1640 = vunpack.c.l.b16 %v262
        %v1641 = vunpack.c.h.b16 %v262
        %v1642 = vunpack.c.l.b16 %v263
        %v1643 = vunpack.c.h.b16 %v263
        %v1644 = vunpack.c.l.b16 %v264
        %v1645 = vunpack.c.h.b16 %v264
        %v1646 = vunpack.c.l.b16 %v265
        %v1647 = vunpack.c.h.b16 %v265
        %v1648 = vunpack.c.l.b16 %v266
        %v1649 = vunpack.c.h.b16 %v266
        %v1650 = vunpack.c.l.b16 %v267
        %v1651 = vunpack.c.h.b16 %v267
        %v1652 = vunpack.c.l.b16 %v268
        %v1653 = vunpack.c.h.b16 %v268
        %v1654 = vunpack.c.l.b16 %v269
        %v1655 = vunpack.c.h.b16 %v269
        %v1656 = vunpack.c.l.b16 %v270
        %v1657 = vunpack.c.h.b16 %v270
        %v1658 = vunpack.c.l.b16 %v271
        %v1659 = vunpack.c.h.b16 %v271
        %v1660 = vunpack.c.l.b16 %v272
        %v1661 = vunpack.c.h.b16 %v272
        %v1662 = vunpack.c.l.b16 %v273
        %v1663 = vunpack.c.h.b16 %v273
        %v1664 = vunpack.c.l.b16 %v274
        %v1665 = vunpack.c.h.b16 %v274
        %v1666 = vunpack.c.l.b16 %v275
        %v1667 = vunpack.c.h.b16 %v275
        %v1668 = vunpack.c.l.b16 %v276
        %v1669 = vunpack.c.h.b16 %v276
        %v1670 = vunpack.c.l.b16 %v277
        %v1671 = vunpack.c.h.b16 %v277
        %v1672 = vunpack.c.l.b16 %v278
        %v1673 = vunpack.c.h.b16 %v278
        %v1674 = vunpack.c.l.b16 %v279
        %v1675 = vunpack.c.h.b16 %v279
        %v1676 = vunpack.c.l.b16 %v280
        %v1677 = vunpack.c.h.b16 %v280
        %v1678 = vunpack.c.l.b16 %v281
        %v1679 = vunpack.c.h.b16 %v281
        %v1680 = vunpack.c.l.b16 %v282
        %v1681 = vunpack.c.h.b16 %v282
        %v1682 = vunpack.c.l.b16 %v283
        %v1683 = vunpack.c.h.b16 %v283
        %v1684 = vunpack.c.l.b16 %v284
        %v1685 = vunpack.c.h.b16 %v284
        %v1686 = vunpack.c.l.b16 %v285
        %v1687 = vunpack.c.h.b16 %v285
        %v1688 = vunpack.c.l.b16 %v286
        %v1689 = vunpack.c.h.b16 %v286
        %v1690 = vunpack.c.l.b16 %v287
        %v1691 = vunpack.c.h.b16 %v287
        %v1692 = vunpack.c.l.b16 %v288
        %v1693 = vunpack.c.h.b16 %v288
        %v1694 = vunpack.c.l.b16 %v289
        %v1695 = vunpack.c.h.b16 %v289
        %v1696 = vunpack.c.l.b16 %v290
        %v1697 = vunpack.c.h.b16 %v290
        %v1698 = vunpack.c.l.b16 %v291
        %v1699 = vunpack.c.h.b16 %v291
        %v1700 = vunpack.c.l.b16 %v292
        %v1701 = vunpack.c.h.b16 %v292
        %v1702 = vunpack.c.l.b16 %v293
        %v1703 = vunpack.c.h.b16 %v293
        %v1704 = vunpack.c.l.b16 %v294
        %v1705 = vunpack.c.h.b16 %v294
        %v1706 = vunpack.c.l.b16 %v295
        %v1707 = vunpack.c.h.b16 %v295
        %v1708 = vunpack.c.l.b16 %v296
        %v1709 = vunpack.c.h.b16 %v296
        %v1710 = vunpack.c.l.b16 %v297
        %v1711 = vunpack.c.h.b16 %v297
        %v1712 = vunpack.c.l.b16 %v298
        %v1713 = vunpack.c.h.b16 %v298
        %v1714 = vunpack.c.l.b16 %v299
        %v1715 = vunpack.c.h.b16 %v299
        %v1716 = vunpack.c.l.b16 %v300
        %v1717 = vunpack.c.h.b16 %v300
        %v1718 = vunpack.c.l.b16 %v301
        %v1719 = vunpack.c.h.b16 %v301
        %v1720 = vunpack.c.l.b16 %v302
        %v1721 = vunpack.c.h.b16 %v302
        %v1722 = vunpack.c.l.b16 %v303
        %v1723 = vunpack.c.h.b16 %v303
        %v1724 = vunpack.c.l.b16 %v304
        %v1725 = vunpack.c.h.b16 %v304
        %v1726 = vunpack.c.l.b16 %v305
        %v1727 = vunpack.c.h.b16 %v305
        %v1728 = vpack.c.b16 %v1638, %v1632
        %v1729 = vpack.c.b16 %v1639, %v1633
        %v1730 = vpack.c.b16 %v1640, %v1634
        %v1731 = vpack.c.b16 %v1641, %v1635
        %v1732 = vpack.c.b16 %v1642, %v1636
        %v1733 = vpack.c.b16 %v1643, %v1637
        %v1734 = vpack.c.b16 %v1650, %v1644
        %v1735 = vpack.c.b16 %v1651, %v1645
        %v1736 = vpack.c.b16 %v1652, %v1646
        %v1737 = vpack.c.b16 %v1653, %v1647
        %v1738 = vpack.c.b16 %v1654, %v1648
        %v1739 = vpack.c.b16 %v1655, %v1649
        %v1740 = vpack.c.b16 %v1662, %v1656
        %v1741 = vpack.c.b16 %v1663, %v1657
        %v1742 = vpack.c.b16 %v1664, %v1658
        %v1743 = vpack.c.b16 %v1665, %v1659
        %v1744 = vpack.c.b16 %v1666, %v1660
        %v1745 = vpack.c.b16 %v1667, %v1661
        %v1746 = vpack.c.b16 %v1674, %v1668
        %v1747 = vpack.c.b16 %v1675, %v1669
        %v1748 = vpack.c.b16 %v1676, %v1670
        %v1749 = vpack.c.b16 %v1677, %v1671
        %v1750 = vpack.c.b16 %v1678, %v1672
        %v1751 = vpack.c.b16 %v1679, %v1673
        %v1752 = vpack.c.b16 %v1686, %v1680
        %v1753 = vpack.c.b16 %v1687, %v1681
        %v1754 = vpack.c.b16 %v1688, %v1682
        %v1755 = vpack.c.b16 %v1689, %v1683
        %v1756 = vpack.c.b16 %v1690, %v1684
        %v1757 = vpack.c.b16 %v1691, %v1685
        %v1758 = vpack.c.b16 %v1698, %v1692
        %v1759 = vpack.c.b16 %v1699, %v1693
        %v1760 = vpack.c.b16 %v1700, %v1694
        %v1761 = vpack.c.b16 %v1701, %v1695
        %v1762 = vpack.c.b16 %v1702, %v1696
        %v1763 = vpack.c.b16 %v1703, %v1697
        %v1764 = vpack.c.b16 %v1710, %v1704
        %v1765 = vpack.c.b16 %v1711, %v1705
        %v1766 = vpack.c.b16 %v1712, %v1706
        %v1767 = vpack.c.b16 %v1713, %v1707
        %v1768 = vpack.c.b16 %v1714, %v1708
        %v1769 = vpack.c.b16 %v1715, %v1709
        %v1770 = vpack.c.b16 %v1722, %v1716
        %v1771 = vpack.c.b16 %v1723, %v1717
        %v1772 = vpack.c.b16 %v1724, %v1718
        %v1773 = vpack.c.b16 %v1725, %v1719
        %v1774 = vpack.c.b16 %v1726, %v1720
        %v1775 = vpack.c.b16 %v1727, %v1721
        %v2976 = vunpack.c.l.b16 %v306
        %v2977 = vunpack.c.h.b16 %v306
        %v2978 = vunpack.c.l.b16 %v307
        %v2979 = vunpack.c.h.b16 %v307
        %v2980 = vunpack.c.l.b16 %v308
        %v2981 = vunpack.c.h.b16 %v308
        %v2982 = vunpack.c.l.b16 %v309
        %v2983 = vunpack.c.h.b16 %v309
        %v2984 = vunpack.c.l.b16 %v310
        %v2985 = vunpack.c.h.b16 %v310
        %v2986 = vunpack.c.l.b16 %v311
        %v2987 = vunpack.c.h.b16 %v311
        %v2988 = vunpack.c.l.b16 %v312
        %v2989 = vunpack.c.h.b16 %v312
        %v2990 = vunpack.c.l.b16 %v313
        %v2991 = vunpack.c.h.b16 %v313
        %v2992 = vunpack.c.l.b16 %v314
        %v2993 = vunpack.c.h.b16 %v314
        %v2994 = vunpack.c.l.b16 %v315
        %v2995 = vunpack.c.h.b16 %v315
        %v2996 = vunpack.c.l.b16 %v316
        %v2997 = vunpack.c.h.b16 %v316
        %v2998 = vunpack.c.l.b16 %v317
        %v2999 = vunpack.c.h.b16 %v317
        %v3000 = vunpack.c.l.b16 %v318
        %v3001 = vunpack.c.h.b16 %v318
        %v3002 = vunpack.c.l.b16 %v319
        %v3003 = vunpack.c.h.b16 %v319
        %v3004 = vunpack.c.l.b16 %v320
        %v3005 = vunpack.c.h.b16 %v320
        %v3006 = vunpack.c.l.b16 %v321
        %v3007 = vunpack.c.h.b16 %v321
        %v3008 = vunpack.c.l.b16 %v322
        %v3009 = vunpack.c.h.b16 %v322
        %v3010 = vunpack.c.l.b16 %v323
        %v3011 = vunpack.c.h.b16 %v323
        %v3012 = vunpack.c.l.b16 %v324
        %v3013 = vunpack.c.h.b16 %v324
        %v3014 = vunpack.c.l.b16 %v325
        %v3015 = vunpack.c.h.b16 %v325
        %v3016 = vunpack.c.l.b16 %v326
        %v3017 = vunpack.c.h.b16 %v326
        %v3018 = vunpack.c.l.b16 %v327
        %v3019 = vunpack.c.h.b16 %v327
        %v3020 = vunpack.c.l.b16 %v328
        %v3021 = vunpack.c.h.b16 %v328
        %v3022 = vunpack.c.l.b16 %v329
        %v3023 = vunpack.c.h.b16 %v329
        %v3024 = vunpack.c.l.b16 %v330
        %v3025 = vunpack.c.h.b16 %v330
        %v3026 = vunpack.c.l.b16 %v331
        %v3027 = vunpack.c.h.b16 %v331
        %v3028 = vunpack.c.l.b16 %v332
        %v3029 = vunpack.c.h.b16 %v332
        %v3030 = vunpack.c.l.b16 %v333
        %v3031 = vunpack.c.h.b16 %v333
        %v3032 = vunpack.c.l.b16 %v334
        %v3033 = vunpack.c.h.b16 %v334
        %v3034 = vunpack.c.l.b16 %v335
        %v3035 = vunpack.c.h.b16 %v335
        %v3036 = vunpack.c.l.b16 %v336
        %v3037 = vunpack.c.h.b16 %v336
        %v3038 = vunpack.c.l.b16 %v337
        %v3039 = vunpack.c.h.b16 %v337
        %v3040 = vunpack.c.l.b16 %v338
        %v3041 = vunpack.c.h.b16 %v338
        %v3042 = vunpack.c.l.b16 %v339
        %v3043 = vunpack.c.h.b16 %v339
        %v3044 = vunpack.c.l.b16 %v340
        %v3045 = vunpack.c.h.b16 %v340
        %v3046 = vunpack.c.l.b16 %v341
        %v3047 = vunpack.c.h.b16 %v341
        %v3048 = vunpack.c.l.b16 %v342
        %v3049 = vunpack.c.h.b16 %v342
        %v3050 = vunpack.c.l.b16 %v343
        %v3051 = vunpack.c.h.b16 %v343
        %v3052 = vunpack.c.l.b16 %v344
        %v3053 = vunpack.c.h.b16 %v344
        %v3054 = vunpack.c.l.b16 %v345
        %v3055 = vunpack.c.h.b16 %v345
        %v3056 = vunpack.c.l.b16 %v346
        %v3057 = vunpack.c.h.b16 %v346
        %v3058 = vunpack.c.l.b16 %v347
        %v3059 = vunpack.c.h.b16 %v347
        %v3060 = vunpack.c.l.b16 %v348
        %v3061 = vunpack.c.h.b16 %v348
        %v3062 = vunpack.c.l.b16 %v349
        %v3063 = vunpack.c.h.b16 %v349
        %v3064 = vunpack.c.l.b16 %v350
        %v3065 = vunpack.c.h.b16 %v350
        %v3066 = vunpack.c.l.b16 %v351
        %v3067 = vunpack.c.h.b16 %v351
        %v3068 = vunpack.c.l.b16 %v352
        %v3069 = vunpack.c.h.b16 %v352
        %v3070 = vunpack.c.l.b16 %v353
        %v3071 = vunpack.c.h.b16 %v353
        %v3072 = vunpack.c.l.b16 %v354
        %v3073 = vunpack.c.h.b16 %v354
        %v3074 = vunpack.c.l.b16 %v355
        %v3075 = vunpack.c.h.b16 %v355
        %v3076 = vunpack.c.l.b16 %v356
        %v3077 = vunpack.c.h.b16 %v356
        %v3078 = vunpack.c.l.b16 %v357
        %v3079 = vunpack.c.h.b16 %v357
        %v3080 = vunpack.c.l.b16 %v358
        %v3081 = vunpack.c.h.b16 %v358
        %v3082 = vunpack.c.l.b16 %v359
        %v3083 = vunpack.c.h.b16 %v359
        %v3084 = vunpack.c.l.b16 %v360
        %v3085 = vunpack.c.h.b16 %v360
        %v3086 = vunpack.c.l.b16 %v361
        %v3087 = vunpack.c.h.b16 %v361
        %v3088 = vunpack.c.l.b16 %v362
        %v3089 = vunpack.c.h.b16 %v362
        %v3090 = vunpack.c.l.b16 %v363
        %v3091 = vunpack.c.h.b16 %v363
        %v3092 = vunpack.c.l.b16 %v364
        %v3093 = vunpack.c.h.b16 %v364
        %v3094 = vunpack.c.l.b16 %v365
        %v3095 = vunpack.c.h.b16 %v365
        %v3096 = vunpack.c.l.b16 %v366
        %v3097 = vunpack.c.h.b16 %v366
        %v3098 = vunpack.c.l.b16 %v367
        %v3099 = vunpack.c.h.b16 %v367
        %v3100 = vunpack.c.l.b16 %v368
        %v3101 = vunpack.c.h.b16 %v368
        %v3102 = vunpack.c.l.b16 %v369
        %v3103 = vunpack.c.h.b16 %v369
        %v3104 = vunpack.c.l.b16 %v370
        %v3105 = vunpack.c.h.b16 %v370
        %v3106 = vunpack.c.l.b16 %v371
        %v3107 = vunpack.c.h.b16 %v371
        %v3108 = vunpack.c.l.b16 %v372
        %v3109 = vunpack.c.h.b16 %v372
        %v3110 = vunpack.c.l.b16 %v373
        %v3111 = vunpack.c.h.b16 %v373
        %v3112 = vunpack.c.l.b16 %v374
        %v3113 = vunpack.c.h.b16 %v374
        %v3114 = vunpack.c.l.b16 %v375
        %v3115 = vunpack.c.h.b16 %v375
        %v3116 = vunpack.c.l.b16 %v376
        %v3117 = vunpack.c.h.b16 %v376
        %v3118 = vunpack.c.l.b16 %v377
        %v3119 = vunpack.c.h.b16 %v377
        %v3120 = vunpack.c.l.b16 %v378
        %v3121 = vunpack.c.h.b16 %v378
        %v3122 = vunpack.c.l.b16 %v379
        %v3123 = vunpack.c.h.b16 %v379
        %v3124 = vunpack.c.l.b16 %v380
        %v3125 = vunpack.c.h.b16 %v380
        %v3126 = vunpack.c.l.b16 %v381
        %v3127 = vunpack.c.h.b16 %v381
        %v3128 = vunpack.c.l.b16 %v382
        %v3129 = vunpack.c.h.b16 %v382
        %v3130 = vunpack.c.l.b16 %v383
        %v3131 = vunpack.c.h.b16 %v383
        %v3132 = vunpack.c.l.b16 %v384
        %v3133 = vunpack.c.h.b16 %v384
        %v3134 = vunpack.c.l.b16 %v385
        %v3135 = vunpack.c.h.b16 %v385
        %v3136 = vunpack.c.l.b16 %v386
        %v3137 = vunpack.c.h.b16 %v386
        %v3138 = vunpack.c.l.b16 %v387
        %v3139 = vunpack.c.h.b16 %v387
        %v3140 = vunpack.c.l.b16 %v388
        %v3141 = vunpack.c.h.b16 %v388
        %v3142 = vunpack.c.l.b16 %v389
        %v3143 = vunpack.c.h.b16 %v389
        %v3144 = vunpack.c.l.b16 %v390
        %v3145 = vunpack.c.h.b16 %v390
        %v3146 = vunpack.c.l.b16 %v391
        %v3147 = vunpack.c.h.b16 %v391
        %v3148 = vunpack.c.l.b16 %v392
        %v3149 = vunpack.c.h.b16 %v392
        %v3150 = vunpack.c.l.b16 %v393
        %v3151 = vunpack.c.h.b16 %v393
        %v3152 = vunpack.c.l.b16 %v394
        %v3153 = vunpack.c.h.b16 %v394
        %v3154 = vunpack.c.l.b16 %v395
        %v3155 = vunpack.c.h.b16 %v395
        %v3156 = vunpack.c.l.b16 %v396
        %v3157 = vunpack.c.h.b16 %v396
        %v3158 = vunpack.c.l.b16 %v397
        %v3159 = vunpack.c.h.b16 %v397
        %v3160 = vunpack.c.l.b16 %v398
        %v3161 = vunpack.c.h.b16 %v398
        %v3162 = vunpack.c.l.b16 %v399
        %v3163 = vunpack.c.h.b16 %v399
        %v3164 = vunpack.c.l.b16 %v400
        %v3165 = vunpack.c.h.b16 %v400
        %v3166 = vunpack.c.l.b16 %v401
        %v3167 = vunpack.c.h.b16 %v401
        %v3168 = vunpack.c.l.b16 %v402
        %v3169 = vunpack.c.h.b16 %v402
        %v3170 = vunpack.c.l.b16 %v403
        %v3171 = vunpack.c.h.b16 %v403
        %v3172 = vunpack.c.l.b16 %v404
        %v3173 = vunpack.c.h.b16 %v404
        %v3174 = vunpack.c.l.b16 %v405
        %v3175 = vunpack.c.h.b16 %v405
        %v3176 = vunpack.c.l.b16 %v406
        %v3177 = vunpack.c.h.b16 %v406
        %v3178 = vunpack.c.l.b16 %v407
        %v3179 = vunpack.c.h.b16 %v407
        %v3180 = vunpack.c.l.b16 %v408
        %v3181 = vunpack.c.h.b16 %v408
        %v3182 = vunpack.c.l.b16 %v409
        %v3183 = vunpack.c.h.b16 %v409
        %v3184 = vunpack.c.l.b16 %v410
        %v3185 = vunpack.c.h.b16 %v410
        %v3186 = vunpack.c.l.b16 %v411
        %v3187 = vunpack.c.h.b16 %v411
        %v3188 = vunpack.c.l.b16 %v412
        %v3189 = vunpack.c.h.b16 %v412
        %v3190 = vunpack.c.l.b16 %v413
        %v3191 = vunpack.c.h.b16 %v413
        %v3192 = vunpack.c.l.b16 %v414
        %v3193 = vunpack.c.h.b16 %v414
        %v3194 = vunpack.c.l.b16 %v415
        %v3195 = vunpack.c.h.b16 %v415
        %v3196 = vunpack.c.l.b16 %v416
        %v3197 = vunpack.c.h.b16 %v416
        %v3198 = vunpack.c.l.b16 %v417
        %v3199 = vunpack.c.h.b16 %v417
        %v3200 = vunpack.c.l.b16 %v418
        %v3201 = vunpack.c.h.b16 %v418
        %v3202 = vunpack.c.l.b16 %v419
        %v3203 = vunpack.c.h.b16 %v419
        %v3204 = vunpack.c.l.b16 %v420
        %v3205 = vunpack.c.h.b16 %v420
        %v3206 = vunpack.c.l.b16 %v421
        %v3207 = vunpack.c.h.b16 %v421
        %v3208 = vunpack.c.l.b16 %v422
        %v3209 = vunpack.c.h.b16 %v422
        %v3210 = vunpack.c.l.b16 %v423
        %v3211 = vunpack.c.h.b16 %v423
        %v3212 = vunpack.c.l.b16 %v424
        %v3213 = vunpack.c.h.b16 %v424
        %v3214 = vunpack.c.l.b16 %v425
        %v3215 = vunpack.c.h.b16 %v425
        %v3216 = vunpack.c.l.b16 %v426
        %v3217 = vunpack.c.h.b16 %v426
        %v3218 = vunpack.c.l.b16 %v427
        %v3219 = vunpack.c.h.b16 %v427
        %v3220 = vunpack.c.l.b16 %v428
        %v3221 = vunpack.c.h.b16 %v428
        %v3222 = vunpack.c.l.b16 %v429
        %v3223 = vunpack.c.h.b16 %v429
        %v3224 = vunpack.c.l.b16 %v430
        %v3225 = vunpack.c.h.b16 %v430
        %v3226 = vunpack.c.l.b16 %v431
        %v3227 = vunpack.c.h.b16 %v431
        %v3228 = vunpack.c.l.b16 %v432
        %v3229 = vunpack.c.h.b16 %v432
        %v3230 = vunpack.c.l.b16 %v433
        %v3231 = vunpack.c.h.b16 %v433
        %v3232 = vunpack.c.l.b16 %v434
        %v3233 = vunpack.c.h.b16 %v434
        %v3234 = vunpack.c.l.b16 %v435
        %v3235 = vunpack.c.h.b16 %v435
        %v3236 = vunpack.c.l.b16 %v436
        %v3237 = vunpack.c.h.b16 %v436
        %v3238 = vunpack.c.l.b16 %v437
        %v3239 = vunpack.c.h.b16 %v437
        %v3240 = vunpack.c.l.b16 %v438
        %v3241 = vunpack.c.h.b16 %v438
        %v3242 = vunpack.c.l.b16 %v439
        %v3243 = vunpack.c.h.b16 %v439
        %v3244 = vunpack.c.l.b16 %v440
        %v3245 = vunpack.c.h.b16 %v440
        %v3246 = vunpack.c.l.b16 %v441
        %v3247 = vunpack.c.h.b16 %v441
        %v3248 = vunpack.c.l.b16 %v442
        %v3249 = vunpack.c.h.b16 %v442
        %v3250 = vunpack.c.l.b16 %v443
        %v3251 = vunpack.c.h.b16 %v443
        %v3252 = vunpack.c.l.b16 %v444
        %v3253 = vunpack.c.h.b16 %v444
        %v3254 = vunpack.c.l.b16 %v445
        %v3255 = vunpack.c.h.b16 %v445
        %v3256 = vunpack.c.l.b16 %v446
        %v3257 = vunpack.c.h.b16 %v446
        %v3258 = vunpack.c.l.b16 %v447
        %v3259 = vunpack.c.h.b16 %v447
        %v3260 = vunpack.c.l.b16 %v448
        %v3261 = vunpack.c.h.b16 %v448
        %v3262 = vunpack.c.l.b16 %v449
        %v3263 = vunpack.c.h.b16 %v449
        %v3264 = vunpack.c.l.b16 %v450
        %v3265 = vunpack.c.h.b16 %v450
        %v3266 = vunpack.c.l.b16 %v451
        %v3267 = vunpack.c.h.b16 %v451
        %v3268 = vunpack.c.l.b16 %v452
        %v3269 = vunpack.c.h.b16 %v452
        %v3270 = vunpack.c.l.b16 %v453
        %v3271 = vunpack.c.h.b16 %v453
        %v3272 = vunpack.c.l.b16 %v454
        %v3273 = vunpack.c.h.b16 %v454
        %v3274 = vunpack.c.l.b16 %v455
        %v3275 = vunpack.c.h.b16 %v455
        %v3276 = vunpack.c.l.b16 %v456
        %v3277 = vunpack.c.h.b16 %v456
        %v3278 = vunpack.c.l.b16 %v457
        %v3279 = vunpack.c.h.b16 %v457
        %v3280 = vunpack.c.l.b16 %v458
        %v3281 = vunpack.c.h.b16 %v458
        %v3282 = vunpack.c.l.b16 %v459
        %v3283 = vunpack.c.h.b16 %v459
        %v3284 = vunpack.c.l.b16 %v460
        %v3285 = vunpack.c.h.b16 %v460
        %v3286 = vunpack.c.l.b16 %v461
        %v3287 = vunpack.c.h.b16 %v461
        %v3288 = vunpack.c.l.b16 %v462
        %v3289 = vunpack.c.h.b16 %v462
        %v3290 = vunpack.c.l.b16 %v463
        %v3291 = vunpack.c.h.b16 %v463
        %v3292 = vunpack.c.l.b16 %v464
        %v3293 = vunpack.c.h.b16 %v464
        %v3294 = vunpack.c.l.b16 %v465
        %v3295 = vunpack.c.h.b16 %v465
        %v3296 = vunpack.c.l.b16 %v466
        %v3297 = vunpack.c.h.b16 %v466
        %v3298 = vunpack.c.l.b16 %v467
        %v3299 = vunpack.c.h.b16 %v467
        %v3300 = vunpack.c.l.b16 %v468
        %v3301 = vunpack.c.h.b16 %v468
        %v3302 = vunpack.c.l.b16 %v469
        %v3303 = vunpack.c.h.b16 %v469
        %v3304 = vunpack.c.l.b16 %v470
        %v3305 = vunpack.c.h.b16 %v470
        %v3306 = vunpack.c.l.b16 %v471
        %v3307 = vunpack.c.h.b16 %v471
        %v3308 = vunpack.c.l.b16 %v472
        %v3309 = vunpack.c.h.b16 %v472
        %v3310 = vunpack.c.l.b16 %v473
        %v3311 = vunpack.c.h.b16 %v473
        %v3312 = vunpack.c.l.b16 %v474
        %v3313 = vunpack.c.h.b16 %v474
        %v3314 = vunpack.c.l.b16 %v475
        %v3315 = vunpack.c.h.b16 %v475
        %v3316 = vunpack.c.l.b16 %v476
        %v3317 = vunpack.c.h.b16 %v476
        %v3318 = vunpack.c.l.b16 %v477
        %v3319 = vunpack.c.h.b16 %v477
        %v3320 = vunpack.c.l.b16 %v478
        %v3321 = vunpack.c.h.b16 %v478
        %v3322 = vunpack.c.l.b16 %v479
        %v3323 = vunpack.c.h.b16 %v479
        %v3324 = vunpack.c.l.b16 %v480
        %v3325 = vunpack.c.h.b16 %v480
        %v3326 = vunpack.c.l.b16 %v481
        %v3327 = vunpack.c.h.b16 %v481
        %v3328 = vunpack.c.l.b16 %v482
        %v3329 = vunpack.c.h.b16 %v482
        %v3330 = vunpack.c.l.b16 %v483
        %v3331 = vunpack.c.h.b16 %v483
        %v3332 = vunpack.c.l.b16 %v484
        %v3333 = vunpack.c.h.b16 %v484
        %v3334 = vunpack.c.l.b16 %v485
        %v3335 = vunpack.c.h.b16 %v485
        %v3336 = vunpack.c.l.b16 %v486
        %v3337 = vunpack.c.h.b16 %v486
        %v3338 = vunpack.c.l.b16 %v487
        %v3339 = vunpack.c.h.b16 %v487
        %v3340 = vunpack.c.l.b16 %v488
        %v3341 = vunpack.c.h.b16 %v488
        %v3342 = vunpack.c.l.b16 %v489
        %v3343 = vunpack.c.h.b16 %v489
        %v3344 = vunpack.c.l.b16 %v490
        %v3345 = vunpack.c.h.b16 %v490
        %v3346 = vunpack.c.l.b16 %v491
        %v3347 = vunpack.c.h.b16 %v491
        %v3348 = vunpack.c.l.b16 %v492
        %v3349 = vunpack.c.h.b16 %v492
        %v3350 = vunpack.c.l.b16 %v493
        %v3351 = vunpack.c.h.b16 %v493
        %v3352 = vunpack.c.l.b16 %v494
        %v3353 = vunpack.c.h.b16 %v494
        %v3354 = vunpack.c.l.b16 %v495
        %v3355 = vunpack.c.h.b16 %v495
        %v3356 = vunpack.c.l.b16 %v496
        %v3357 = vunpack.c.h.b16 %v496
        %v3358 = vunpack.c.l.b16 %v497
        %v3359 = vunpack.c.h.b16 %v497
        %v3360 = vunpack.c.l.b16 %v498
        %v3361 = vunpack.c.h.b16 %v498
        %v3362 = vunpack.c.l.b16 %v499
        %v3363 = vunpack.c.h.b16 %v499
        %v3364 = vunpack.c.l.b16 %v500
        %v3365 = vunpack.c.h.b16 %v500
        %v3366 = vunpack.c.l.b16 %v501
        %v3367 = vunpack.c.h.b16 %v501
        %v3368 = vunpack.c.l.b16 %v502
        %v3369 = vunpack.c.h.b16 %v502
        %v3370 = vunpack.c.l.b16 %v503
        %v3371 = vunpack.c.h.b16 %v503
        %v3372 = vunpack.c.l.b16 %v504
        %v3373 = vunpack.c.h.b16 %v504
        %v3374 = vunpack.c.l.b16 %v505
        %v3375 = vunpack.c.h.b16 %v505
        %v3376 = vunpack.c.l.b16 %v506
        %v3377 = vunpack.c.h.b16 %v506
        %v3378 = vunpack.c.l.b16 %v507
        %v3379 = vunpack.c.h.b16 %v507
        %v3380 = vunpack.c.l.b16 %v508
        %v3381 = vunpack.c.h.b16 %v508
        %v3382 = vunpack.c.l.b16 %v509
        %v3383 = vunpack.c.h.b16 %v509
        %v3384 = vunpack.c.l.b16 %v510
        %v3385 = vunpack.c.h.b16 %v510
        %v3386 = vunpack.c.l.b16 %v511
        %v3387 = vunpack.c.h.b16 %v511
        %v3388 = vunpack.c.l.b16 %v512
        %v3389 = vunpack.c.h.b16 %v512
        %v3390 = vunpack.c.l.b16 %v513
        %v3391 = vunpack.c.h.b16 %v513
        %v3392 = vunpack.c.l.b16 %v514
        %v3393 = vunpack.c.h.b16 %v514
        %v3394 = vunpack.c.l.b16 %v515
        %v3395 = vunpack.c.h.b16 %v515
        %v3396 = vunpack.c.l.b16 %v516
        %v3397 = vunpack.c.h.b16 %v516
        %v3398 = vunpack.c.l.b16 %v517
        %v3399 = vunpack.c.h.b16 %v517
        %v3400 = vunpack.c.l.b16 %v518
        %v3401 = vunpack.c.h.b16 %v518
        %v3402 = vunpack.c.l.b16 %v519
        %v3403 = vunpack.c.h.b16 %v519
        %v3404 = vunpack.c.l.b16 %v520
        %v3405 = vunpack.c.h.b16 %v520
        %v3406 = vunpack.c.l.b16 %v521
        %v3407 = vunpack.c.h.b16 %v521
        %v3408 = vunpack.c.l.b16 %v522
        %v3409 = vunpack.c.h.b16 %v522
        %v3410 = vunpack.c.l.b16 %v523
        %v3411 = vunpack.c.h.b16 %v523
        %v3412 = vunpack.c.l.b16 %v524
        %v3413 = vunpack.c.h.b16 %v524
        %v3414 = vunpack.c.l.b16 %v525
        %v3415 = vunpack.c.h.b16 %v525
        %v3416 = vunpack.c.l.b16 %v526
        %v3417 = vunpack.c.h.b16 %v526
        %v3418 = vunpack.c.l.b16 %v527
        %v3419 = vunpack.c.h.b16 %v527
        %v3420 = vunpack.c.l.b16 %v528
        %v3421 = vunpack.c.h.b16 %v528
        %v3422 = vunpack.c.l.b16 %v529
        %v3423 = vunpack.c.h.b16 %v529
        %v3424 = vunpack.c.l.b16 %v530
        %v3425 = vunpack.c.h.b16 %v530
        %v3426 = vunpack.c.l.b16 %v531
        %v3427 = vunpack.c.h.b16 %v531
        %v3428 = vunpack.c.l.b16 %v532
        %v3429 = vunpack.c.h.b16 %v532
        %v3430 = vunpack.c.l.b16 %v533
        %v3431 = vunpack.c.h.b16 %v533
        %v3432 = vunpack.c.l.b16 %v534
        %v3433 = vunpack.c.h.b16 %v534
        %v3434 = vunpack.c.l.b16 %v535
        %v3435 = vunpack.c.h.b16 %v535
        %v3436 = vunpack.c.l.b16 %v536
        %v3437 = vunpack.c.h.b16 %v536
        %v3438 = vunpack.c.l.b16 %v537
        %v3439 = vunpack.c.h.b16 %v537
        %v3440 = vunpack.c.l.b16 %v538
        %v3441 = vunpack.c.h.b16 %v538
        %v3442 = vunpack.c.l.b16 %v539
        %v3443 = vunpack.c.h.b16 %v539
        %v3444 = vunpack.c.l.b16 %v540
        %v3445 = vunpack.c.h.b16 %v540
        %v3446 = vunpack.c.l.b16 %v541
        %v3447 = vunpack.c.h.b16 %v541
        %v3448 = vunpack.c.l.b16 %v542
        %v3449 = vunpack.c.h.b16 %v542
        %v3450 = vunpack.c.l.b16 %v543
        %v3451 = vunpack.c.h.b16 %v543
        %v3452 = vunpack.c.l.b16 %v544
        %v3453 = vunpack.c.h.b16 %v544
        %v3454 = vunpack.c.l.b16 %v545
        %v3455 = vunpack.c.h.b16 %v545
        %v3456 = vunpack.c.l.b16 %v546
        %v3457 = vunpack.c.h.b16 %v546
        %v3458 = vunpack.c.l.b16 %v547
        %v3459 = vunpack.c.h.b16 %v547
        %v3460 = vunpack.c.l.b16 %v548
        %v3461 = vunpack.c.h.b16 %v548
        %v3462 = vunpack.c.l.b16 %v549
        %v3463 = vunpack.c.h.b16 %v549
        %v3464 = vunpack.c.l.b16 %v550
        %v3465 = vunpack.c.h.b16 %v550
        %v3466 = vunpack.c.l.b16 %v551
        %v3467 = vunpack.c.h.b16 %v551
        %v3468 = vunpack.c.l.b16 %v552
        %v3469 = vunpack.c.h.b16 %v552
        %v3470 = vunpack.c.l.b16 %v553
        %v3471 = vunpack.c.h.b16 %v553
        %v3472 = vunpack.c.l.b16 %v554
        %v3473 = vunpack.c.h.b16 %v554
        %v3474 = vunpack.c.l.b16 %v555
        %v3475 = vunpack.c.h.b16 %v555
        %v3476 = vunpack.c.l.b16 %v556
        %v3477 = vunpack.c.h.b16 %v556
        %v3478 = vunpack.c.l.b16 %v557
        %v3479 = vunpack.c.h.b16 %v557
        %v3480 = vunpack.c.l.b16 %v558
        %v3481 = vunpack.c.h.b16 %v558
        %v3482 = vunpack.c.l.b16 %v559
        %v3483 = vunpack.c.h.b16 %v559
        %v3484 = vunpack.c.l.b16 %v560
        %v3485 = vunpack.c.h.b16 %v560
        %v3486 = vunpack.c.l.b16 %v561
        %v3487 = vunpack.c.h.b16 %v561
        %v3488 = vunpack.c.l.b16 %v562
        %v3489 = vunpack.c.h.b16 %v562
        %v3490 = vunpack.c.l.b16 %v563
        %v3491 = vunpack.c.h.b16 %v563
        %v3492 = vunpack.c.l.b16 %v564
        %v3493 = vunpack.c.h.b16 %v564
        %v3494 = vunpack.c.l.b16 %v565
        %v3495 = vunpack.c.h.b16 %v565
        %v3496 = vunpack.c.l.b16 %v566
        %v3497 = vunpack.c.h.b16 %v566
        %v3498 = vunpack.c.l.b16 %v567
        %v3499 = vunpack.c.h.b16 %v567
        %v3500 = vunpack.c.l.b16 %v568
        %v3501 = vunpack.c.h.b16 %v568
        %v3502 = vunpack.c.l.b16 %v569
        %v3503 = vunpack.c.h.b16 %v569
        %v3504 = vunpack.c.l.b16 %v570
        %v3505 = vunpack.c.h.b16 %v570
        %v3506 = vunpack.c.l.b16 %v571
        %v3507 = vunpack.c.h.b16 %v571
        %v3508 = vunpack.c.l.b16 %v572
        %v3509 = vunpack.c.h.b16 %v572
        %v3510 = vunpack.c.l.b16 %v573
        %v3511 = vunpack.c.h.b16 %v573
        %v3512 = vunpack.c.l.b16 %v574
        %v3513 = vunpack.c.h.b16 %v574
        %v3514 = vunpack.c.l.b16 %v575
        %v3515 = vunpack.c.h.b16 %v575
        %v3516 = vunpack.c.l.b16 %v576
        %v3517 = vunpack.c.h.b16 %v576
        %v3518 = vunpack.c.l.b16 %v577
        %v3519 = vunpack.c.h.b16 %v577
        %v3520 = vunpack.c.l.b16 %v578
        %v3521 = vunpack.c.h.b16 %v578
        %v3522 = vunpack.c.l.b16 %v579
        %v3523 = vunpack.c.h.b16 %v579
        %v3524 = vunpack.c.l.b16 %v580
        %v3525 = vunpack.c.h.b16 %v580
        %v3526 = vunpack.c.l.b16 %v581
        %v3527 = vunpack.c.h.b16 %v581
        %v3528 = vunpack.c.l.b16 %v582
        %v3529 = vunpack.c.h.b16 %v582
        %v3530 = vunpack.c.l.b16 %v583
        %v3531 = vunpack.c.h.b16 %v583
        %v3532 = vunpack.c.l.b16 %v584
        %v3533 = vunpack.c.h.b16 %v584
        %v3534 = vunpack.c.l.b16 %v585
        %v3535 = vunpack.c.h.b16 %v585
        %v3536 = vunpack.c.l.b16 %v586
        %v3537 = vunpack.c.h.b16 %v586
        %v3538 = vunpack.c.l.b16 %v587
        %v3539 = vunpack.c.h.b16 %v587
        %v3540 = vunpack.c.l.b16 %v588
        %v3541 = vunpack.c.h.b16 %v588
        %v3542 = vunpack.c.l.b16 %v589
        %v3543 = vunpack.c.h.b16 %v589
        %v3544 = vunpack.c.l.b16 %v590
        %v3545 = vunpack.c.h.b16 %v590
        %v3546 = vunpack.c.l.b16 %v591
        %v3547 = vunpack.c.h.b16 %v591
        %v3548 = vunpack.c.l.b16 %v592
        %v3549 = vunpack.c.h.b16 %v592
        %v3550 = vunpack.c.l.b16 %v593
        %v3551 = vunpack.c.h.b16 %v593
        %v3552 = vunpack.c.l.b16 %v594
        %v3553 = vunpack.c.h.b16 %v594
        %v3554 = vunpack.c.l.b16 %v595
        %v3555 = vunpack.c.h.b16 %v595
        %v3556 = vunpack.c.l.b16 %v596
        %v3557 = vunpack.c.h.b16 %v596
        %v3558 = vunpack.c.l.b16 %v597
        %v3559 = vunpack.c.h.b16 %v597
        %v3560 = vunpack.c.l.b16 %v598
        %v3561 = vunpack.c.h.b16 %v598
        %v3562 = vunpack.c.l.b16 %v599
        %v3563 = vunpack.c.h.b16 %v599
        %v3564 = vunpack.c.l.b16 %v600
        %v3565 = vunpack.c.h.b16 %v600
        %v3566 = vunpack.c.l.b16 %v601
        %v3567 = vunpack.c.h.b16 %v601
        %v3568 = vunpack.c.l.b16 %v602
        %v3569 = vunpack.c.h.b16 %v602
        %v3570 = vunpack.c.l.b16 %v603
        %v3571 = vunpack.c.h.b16 %v603
        %v3572 = vunpack.c.l.b16 %v604
        %v3573 = vunpack.c.h.b16 %v604
        %v3574 = vunpack.c.l.b16 %v605
        %v3575 = vunpack.c.h.b16 %v605
        %v3576 = vunpack.c.l.b16 %v606
        %v3577 = vunpack.c.h.b16 %v606
        %v3578 = vunpack.c.l.b16 %v607
        %v3579 = vunpack.c.h.b16 %v607
        %v3580 = vunpack.c.l.b16 %v608
        %v3581 = vunpack.c.h.b16 %v608
        %v3582 = vunpack.c.l.b16 %v609
        %v3583 = vunpack.c.h.b16 %v609
        %v3584 = vunpack.c.l.b16 %v610
        %v3585 = vunpack.c.h.b16 %v610
        %v3586 = vunpack.c.l.b16 %v611
        %v3587 = vunpack.c.h.b16 %v611
        %v3588 = vunpack.c.l.b16 %v612
        %v3589 = vunpack.c.h.b16 %v612
        %v3590 = vunpack.c.l.b16 %v613
        %v3591 = vunpack.c.h.b16 %v613
        %v3592 = vunpack.c.l.b16 %v614
        %v3593 = vunpack.c.h.b16 %v614
        %v3594 = vunpack.c.l.b16 %v615
        %v3595 = vunpack.c.h.b16 %v615
        %v3596 = vunpack.c.l.b16 %v616
        %v3597 = vunpack.c.h.b16 %v616
        %v3598 = vunpack.c.l.b16 %v617
        %v3599 = vunpack.c.h.b16 %v617
        %v3600 = vunpack.c.l.b16 %v618
        %v3601 = vunpack.c.h.b16 %v618
        %v3602 = vunpack.c.l.b16 %v619
        %v3603 = vunpack.c.h.b16 %v619
        %v3604 = vunpack.c.l.b16 %v620
        %v3605 = vunpack.c.h.b16 %v620
        %v3606 = vunpack.c.l.b16 %v621
        %v3607 = vunpack.c.h.b16 %v621
        %v3608 = vunpack.c.l.b16 %v622
        %v3609 = vunpack.c.h.b16 %v622
        %v3610 = vunpack.c.l.b16 %v623
        %v3611 = vunpack.c.h.b16 %v623
        %v3612 = vunpack.c.l.b16 %v624
        %v3613 = vunpack.c.h.b16 %v624
        %v3614 = vunpack.c.l.b16 %v625
        %v3615 = vunpack.c.h.b16 %v625
        %v3616 = vunpack.c.l.b16 %v626
        %v3617 = vunpack.c.h.b16 %v626
        %v3618 = vunpack.c.l.b16 %v627
        %v3619 = vunpack.c.h.b16 %v627
        %v3620 = vunpack.c.l.b16 %v628
        %v3621 = vunpack.c.h.b16 %v628
        %v3622 = vunpack.c.l.b16 %v629
        %v3623 = vunpack.c.h.b16 %v629
        %v3624 = vunpack.c.l.b16 %v630
        %v3625 = vunpack.c.h.b16 %v630
        %v3626 = vunpack.c.l.b16 %v631
        %v3627 = vunpack.c.h.b16 %v631
        %v3628 = vunpack.c.l.b16 %v632
        %v3629 = vunpack.c.h.b16 %v632
        %v3630 = vunpack.c.l.b16 %v633
        %v3631 = vunpack.c.h.b16 %v633
        %v3632 = vunpack.c.l.b16 %v634
        %v3633 = vunpack.c.h.b16 %v634
        %v3634 = vunpack.c.l.b16 %v635
        %v3635 = vunpack.c.h.b16 %v635
        %v3636 = vunpack.c.l.b16 %v636
        %v3637 = vunpack.c.h.b16 %v636
        %v3638 = vunpack.c.l.b16 %v637
        %v3639 = vunpack.c.h.b16 %v637
        %v3640 = vunpack.c.l.b16 %v638
        %v3641 = vunpack.c.h.b16 %v638
        %v3642 = vunpack.c.l.b16 %v639
        %v3643 = vunpack.c.h.b16 %v639
        %v3644 = vunpack.c.l.b16 %v640
        %v3645 = vunpack.c.h.b16 %v640
        %v3646 = vunpack.c.l.b16 %v641
        %v3647 = vunpack.c.h.b16 %v641
        %v3648 = vunpack.c.l.b16 %v642
        %v3649 = vunpack.c.h.b16 %v642
        %v3650 = vunpack.c.l.b16 %v643
        %v3651 = vunpack.c.h.b16 %v643
        %v3652 = vunpack.c.l.b16 %v644
        %v3653 = vunpack.c.h.b16 %v644
        %v3654 = vunpack.c.l.b16 %v645
        %v3655 = vunpack.c.h.b16 %v645
        %v3656 = vunpack.c.l.b16 %v646
        %v3657 = vunpack.c.h.b16 %v646
        %v3658 = vunpack.c.l.b16 %v647
        %v3659 = vunpack.c.h.b16 %v647
        %v3660 = vunpack.c.l.b16 %v648
        %v3661 = vunpack.c.h.b16 %v648
        %v3662 = vunpack.c.l.b16 %v649
        %v3663 = vunpack.c.h.b16 %v649
        %v3664 = vunpack.c.l.b16 %v650
        %v3665 = vunpack.c.h.b16 %v650
        %v3666 = vunpack.c.l.b16 %v651
        %v3667 = vunpack.c.h.b16 %v651
        %v3668 = vunpack.c.l.b16 %v652
        %v3669 = vunpack.c.h.b16 %v652
        %v3670 = vunpack.c.l.b16 %v653
        %v3671 = vunpack.c.h.b16 %v653
        %v3672 = vunpack.c.l.b16 %v654
        %v3673 = vunpack.c.h.b16 %v654
        %v3674 = vunpack.c.l.b16 %v655
        %v3675 = vunpack.c.h.b16 %v655
        %v3676 = vunpack.c.l.b16 %v656
        %v3677 = vunpack.c.h.b16 %v656
        %v3678 = vunpack.c.l.b16 %v657
        %v3679 = vunpack.c.h.b16 %v657
        %v3680 = vunpack.c.l.b16 %v658
        %v3681 = vunpack.c.h.b16 %v658
        %v3682 = vunpack.c.l.b16 %v659
        %v3683 = vunpack.c.h.b16 %v659
        %v3684 = vunpack.c.l.b16 %v660
        %v3685 = vunpack.c.h.b16 %v660
        %v3686 = vunpack.c.l.b16 %v661
        %v3687 = vunpack.c.h.b16 %v661
        %v3688 = vunpack.c.l.b16 %v662
        %v3689 = vunpack.c.h.b16 %v662
        %v3690 = vunpack.c.l.b16 %v663
        %v3691 = vunpack.c.h.b16 %v663
        %v3692 = vunpack.c.l.b16 %v664
        %v3693 = vunpack.c.h.b16 %v664
        %v3694 = vunpack.c.l.b16 %v665
        %v3695 = vunpack.c.h.b16 %v665
        %v3696 = vunpack.c.l.b16 %v666
        %v3697 = vunpack.c.h.b16 %v666
        %v3698 = vunpack.c.l.b16 %v667
        %v3699 = vunpack.c.h.b16 %v667
        %v3700 = vunpack.c.l.b16 %v668
        %v3701 = vunpack.c.h.b16 %v668
        %v3702 = vunpack.c.l.b16 %v669
        %v3703 = vunpack.c.h.b16 %v669
        %v3704 = vunpack.c.l.b16 %v670
        %v3705 = vunpack.c.h.b16 %v670
        %v3706 = vunpack.c.l.b16 %v671
        %v3707 = vunpack.c.h.b16 %v671
        %v3708 = vunpack.c.l.b16 %v672
        %v3709 = vunpack.c.h.b16 %v672
        %v3710 = vunpack.c.l.b16 %v673
        %v3711 = vunpack.c.h.b16 %v673
        %v3712 = vunpack.c.l.b16 %v674
        %v3713 = vunpack.c.h.b16 %v674
        %v3714 = vunpack.c.l.b16 %v675
        %v3715 = vunpack.c.h.b16 %v675
        %v3716 = vunpack.c.l.b16 %v676
        %v3717 = vunpack.c.h.b16 %v676
        %v3718 = vunpack.c.l.b16 %v677
        %v3719 = vunpack.c.h.b16 %v677
        %v3720 = vunpack.c.l.b16 %v678
        %v3721 = vunpack.c.h.b16 %v678
        %v3722 = vunpack.c.l.b16 %v679
        %v3723 = vunpack.c.h.b16 %v679
        %v3724 = vunpack.c.l.b16 %v680
        %v3725 = vunpack.c.h.b16 %v680
        %v3726 = vunpack.c.l.b16 %v681
        %v3727 = vunpack.c.h.b16 %v681
        %v3728 = vunpack.c.l.b16 %v682
        %v3729 = vunpack.c.h.b16 %v682
        %v3730 = vunpack.c.l.b16 %v683
        %v3731 = vunpack.c.h.b16 %v683
        %v3732 = vunpack.c.l.b16 %v684
        %v3733 = vunpack.c.h.b16 %v684
        %v3734 = vunpack.c.l.b16 %v685
        %v3735 = vunpack.c.h.b16 %v685
        %v3736 = vunpack.c.l.b16 %v686
        %v3737 = vunpack.c.h.b16 %v686
        %v3738 = vunpack.c.l.b16 %v687
        %v3739 = vunpack.c.h.b16 %v687
        %v3740 = vunpack.c.l.b16 %v688
        %v3741 = vunpack.c.h.b16 %v688
        %v3742 = vunpack.c.l.b16 %v689
        %v3743 = vunpack.c.h.b16 %v689
        %v3744 = vunpack.c.l.b16 %v690
        %v3745 = vunpack.c.h.b16 %v690
        %v3746 = vunpack.c.l.b16 %v691
        %v3747 = vunpack.c.h.b16 %v691
        %v3748 = vunpack.c.l.b16 %v692
        %v3749 = vunpack.c.h.b16 %v692
        %v3750 = vunpack.c.l.b16 %v693
        %v3751 = vunpack.c.h.b16 %v693
        %v3752 = vunpack.c.l.b16 %v694
        %v3753 = vunpack.c.h.b16 %v694
        %v3754 = vunpack.c.l.b16 %v695
        %v3755 = vunpack.c.h.b16 %v695
        %v3756 = vunpack.c.l.b16 %v696
        %v3757 = vunpack.c.h.b16 %v696
        %v3758 = vunpack.c.l.b16 %v697
        %v3759 = vunpack.c.h.b16 %v697
        %v3760 = vunpack.c.l.b16 %v698
        %v3761 = vunpack.c.h.b16 %v698
        %v3762 = vunpack.c.l.b16 %v699
        %v3763 = vunpack.c.h.b16 %v699
        %v3764 = vunpack.c.l.b16 %v700
        %v3765 = vunpack.c.h.b16 %v700
        %v3766 = vunpack.c.l.b16 %v701
        %v3767 = vunpack.c.h.b16 %v701
        %v3768 = vunpack.c.l.b16 %v702
        %v3769 = vunpack.c.h.b16 %v702
        %v3770 = vunpack.c.l.b16 %v703
        %v3771 = vunpack.c.h.b16 %v703
        %v3772 = vunpack.c.l.b16 %v704
        %v3773 = vunpack.c.h.b16 %v704
        %v3774 = vunpack.c.l.b16 %v705
        %v3775 = vunpack.c.h.b16 %v705
        %v3776 = vunpack.c.l.b16 %v706
        %v3777 = vunpack.c.h.b16 %v706
        %v3778 = vunpack.c.l.b16 %v707
        %v3779 = vunpack.c.h.b16 %v707
        %v3780 = vunpack.c.l.b16 %v708
        %v3781 = vunpack.c.h.b16 %v708
        %v3782 = vunpack.c.l.b16 %v709
        %v3783 = vunpack.c.h.b16 %v709
        %v3784 = vunpack.c.l.b16 %v710
        %v3785 = vunpack.c.h.b16 %v710
        %v3786 = vunpack.c.l.b16 %v711
        %v3787 = vunpack.c.h.b16 %v711
        %v3788 = vunpack.c.l.b16 %v712
        %v3789 = vunpack.c.h.b16 %v712
        %v3790 = vunpack.c.l.b16 %v713
        %v3791 = vunpack.c.h.b16 %v713
        %v3792 = vunpack.c.l.b16 %v714
        %v3793 = vunpack.c.h.b16 %v714
        %v3794 = vunpack.c.l.b16 %v715
        %v3795 = vunpack.c.h.b16 %v715
        %v3796 = vunpack.c.l.b16 %v716
        %v3797 = vunpack.c.h.b16 %v716
        %v3798 = vunpack.c.l.b16 %v717
        %v3799 = vunpack.c.h.b16 %v717
        %v3800 = vunpack.c.l.b16 %v718
        %v3801 = vunpack.c.h.b16 %v718
        %v3802 = vunpack.c.l.b16 %v719
        %v3803 = vunpack.c.h.b16 %v719
        %v3804 = vunpack.c.l.b16 %v720
        %v3805 = vunpack.c.h.b16 %v720
        %v3806 = vunpack.c.l.b16 %v721
        %v3807 = vunpack.c.h.b16 %v721
        %v3808 = vunpack.c.l.b16 %v722
        %v3809 = vunpack.c.h.b16 %v722
        %v3810 = vunpack.c.l.b16 %v723
        %v3811 = vunpack.c.h.b16 %v723
        %v3812 = vunpack.c.l.b16 %v724
        %v3813 = vunpack.c.h.b16 %v724
        %v3814 = vunpack.c.l.b16 %v725
        %v3815 = vunpack.c.h.b16 %v725
        %v3816 = vunpack.c.l.b16 %v726
        %v3817 = vunpack.c.h.b16 %v726
        %v3818 = vunpack.c.l.b16 %v727
        %v3819 = vunpack.c.h.b16 %v727
        %v3820 = vunpack.c.l.b16 %v728
        %v3821 = vunpack.c.h.b16 %v728
        %v3822 = vunpack.c.l.b16 %v729
        %v3823 = vunpack.c.h.b16 %v729
        %v3824 = vunpack.c.l.b16 %v730
        %v3825 = vunpack.c.h.b16 %v730
        %v3826 = vunpack.c.l.b16 %v731
        %v3827 = vunpack.c.h.b16 %v731
        %v3828 = vunpack.c.l.b16 %v732
        %v3829 = vunpack.c.h.b16 %v732
        %v3830 = vunpack.c.l.b16 %v733
        %v3831 = vunpack.c.h.b16 %v733
        %v3832 = vunpack.c.l.b16 %v734
        %v3833 = vunpack.c.h.b16 %v734
        %v3834 = vunpack.c.l.b16 %v735
        %v3835 = vunpack.c.h.b16 %v735
        %v3836 = vunpack.c.l.b16 %v736
        %v3837 = vunpack.c.h.b16 %v736
        %v3838 = vunpack.c.l.b16 %v737
        %v3839 = vunpack.c.h.b16 %v737
        %v3840 = vunpack.c.l.b16 %v738
        %v3841 = vunpack.c.h.b16 %v738
        %v3842 = vunpack.c.l.b16 %v739
        %v3843 = vunpack.c.h.b16 %v739
        %v3844 = vunpack.c.l.b16 %v740
        %v3845 = vunpack.c.h.b16 %v740
        %v3846 = vunpack.c.l.b16 %v741
        %v3847 = vunpack.c.h.b16 %v741
        %v3848 = vunpack.c.l.b16 %v742
        %v3849 = vunpack.c.h.b16 %v742
        %v3850 = vunpack.c.l.b16 %v743
        %v3851 = vunpack.c.h.b16 %v743
        %v3852 = vunpack.c.l.b16 %v744
        %v3853 = vunpack.c.h.b16 %v744
        %v3854 = vunpack.c.l.b16 %v745
        %v3855 = vunpack.c.h.b16 %v745
        %v3856 = vunpack.c.l.b16 %v746
        %v3857 = vunpack.c.h.b16 %v746
        %v3858 = vunpack.c.l.b16 %v747
        %v3859 = vunpack.c.h.b16 %v747
        %v3860 = vunpack.c.l.b16 %v748
        %v3861 = vunpack.c.h.b16 %v748
        %v3862 = vunpack.c.l.b16 %v749
        %v3863 = vunpack.c.h.b16 %v749
        %v3864 = vunpack.c.l.b16 %v750
        %v3865 = vunpack.c.h.b16 %v750
        %v3866 = vunpack.c.l.b16 %v751
        %v3867 = vunpack.c.h.b16 %v751
        %v3868 = vunpack.c.l.b16 %v752
        %v3869 = vunpack.c.h.b16 %v752
        %v3870 = vunpack.c.l.b16 %v753
        %v3871 = vunpack.c.h.b16 %v753
        %v3872 = vunpack.c.l.b16 %v754
        %v3873 = vunpack.c.h.b16 %v754
        %v3874 = vunpack.c.l.b16 %v755
        %v3875 = vunpack.c.h.b16 %v755
        %v3876 = vunpack.c.l.b16 %v756
        %v3877 = vunpack.c.h.b16 %v756
        %v3878 = vunpack.c.l.b16 %v757
        %v3879 = vunpack.c.h.b16 %v757
        %v3880 = vunpack.c.l.b16 %v758
        %v3881 = vunpack.c.h.b16 %v758
        %v3882 = vunpack.c.l.b16 %v759
        %v3883 = vunpack.c.h.b16 %v759
        %v3884 = vunpack.c.l.b16 %v760
        %v3885 = vunpack.c.h.b16 %v760
        %v3886 = vunpack.c.l.b16 %v761
        %v3887 = vunpack.c.h.b16 %v761
        %v3888 = vunpack.c.l.b16 %v762
        %v3889 = vunpack.c.h.b16 %v762
        %v3890 = vunpack.c.l.b16 %v763
        %v3891 = vunpack.c.h.b16 %v763
        %v3892 = vunpack.c.l.b16 %v764
        %v3893 = vunpack.c.h.b16 %v764
        %v3894 = vunpack.c.l.b16 %v765
        %v3895 = vunpack.c.h.b16 %v765
        %v3896 = vunpack.c.l.b16 %v766
        %v3897 = vunpack.c.h.b16 %v766
        %v3898 = vunpack.c.l.b16 %v767
        %v3899 = vunpack.c.h.b16 %v767
        %v3900 = vunpack.c.l.b16 %v768
        %v3901 = vunpack.c.h.b16 %v768
        %v3902 = vunpack.c.l.b16 %v769
        %v3903 = vunpack.c.h.b16 %v769
        %v3904 = vunpack.c.l.b16 %v770
        %v3905 = vunpack.c.h.b16 %v770
        %v3906 = vunpack.c.l.b16 %v771
        %v3907 = vunpack.c.h.b16 %v771
        %v3908 = vunpack.c.l.b16 %v772
        %v3909 = vunpack.c.h.b16 %v772
        %v3910 = vunpack.c.l.b16 %v773
        %v3911 = vunpack.c.h.b16 %v773
        %v3912 = vunpack.c.l.b16 %v774
        %v3913 = vunpack.c.h.b16 %v774
        %v3914 = vunpack.c.l.b16 %v775
        %v3915 = vunpack.c.h.b16 %v775
        %v3916 = vunpack.c.l.b16 %v776
        %v3917 = vunpack.c.h.b16 %v776
        %v3918 = vunpack.c.l.b16 %v777
        %v3919 = vunpack.c.h.b16 %v777
        %v3920 = vunpack.c.l.b16 %v778
        %v3921 = vunpack.c.h.b16 %v778
        %v3922 = vunpack.c.l.b16 %v779
        %v3923 = vunpack.c.h.b16 %v779
        %v3924 = vunpack.c.l.b16 %v780
        %v3925 = vunpack.c.h.b16 %v780
        %v3926 = vunpack.c.l.b16 %v781
        %v3927 = vunpack.c.h.b16 %v781
        %v3928 = vunpack.c.l.b16 %v782
        %v3929 = vunpack.c.h.b16 %v782
        %v3930 = vunpack.c.l.b16 %v783
        %v3931 = vunpack.c.h.b16 %v783
        %v3932 = vunpack.c.l.b16 %v784
        %v3933 = vunpack.c.h.b16 %v784
        %v3934 = vunpack.c.l.b16 %v785
        %v3935 = vunpack.c.h.b16 %v785
        %v3936 = vunpack.c.l.b16 %v786
        %v3937 = vunpack.c.h.b16 %v786
        %v3938 = vunpack.c.l.b16 %v787
        %v3939 = vunpack.c.h.b16 %v787
        %v3940 = vunpack.c.l.b16 %v788
        %v3941 = vunpack.c.h.b16 %v788
        %v3942 = vunpack.c.l.b16 %v789
        %v3943 = vunpack.c.h.b16 %v789
        %v3944 = vunpack.c.l.b16 %v790
        %v3945 = vunpack.c.h.b16 %v790
        %v3946 = vunpack.c.l.b16 %v791
        %v3947 = vunpack.c.h.b16 %v791
        %v3948 = vunpack.c.l.b16 %v792
        %v3949 = vunpack.c.h.b16 %v792
        %v3950 = vunpack.c.l.b16 %v793
        %v3951 = vunpack.c.h.b16 %v793
        %v3952 = vunpack.c.l.b16 %v794
        %v3953 = vunpack.c.h.b16 %v794
        %v3954 = vunpack.c.l.b16 %v795
        %v3955 = vunpack.c.h.b16 %v795
        %v3956 = vunpack.c.l.b16 %v796
        %v3957 = vunpack.c.h.b16 %v796
        %v3958 = vunpack.c.l.b16 %v797
        %v3959 = vunpack.c.h.b16 %v797
        %v3960 = vunpack.c.l.b16 %v798
        %v3961 = vunpack.c.h.b16 %v798
        %v3962 = vunpack.c.l.b16 %v799
        %v3963 = vunpack.c.h.b16 %v799
        %v3964 = vunpack.c.l.b16 %v800
        %v3965 = vunpack.c.h.b16 %v800
        %v3966 = vunpack.c.l.b16 %v801
        %v3967 = vunpack.c.h.b16 %v801
        %v3968 = vunpack.c.l.b16 %v802
        %v3969 = vunpack.c.h.b16 %v802
        %v3970 = vunpack.c.l.b16 %v803
        %v3971 = vunpack.c.h.b16 %v803
        %v3972 = vunpack.c.l.b16 %v804
        %v3973 = vunpack.c.h.b16 %v804
        %v3974 = vunpack.c.l.b16 %v805
        %v3975 = vunpack.c.h.b16 %v805
        %v3976 = vunpack.c.l.b16 %v806
        %v3977 = vunpack.c.h.b16 %v806
        %v3978 = vunpack.c.l.b16 %v807
        %v3979 = vunpack.c.h.b16 %v807
        %v3980 = vunpack.c.l.b16 %v808
        %v3981 = vunpack.c.h.b16 %v808
        %v3982 = vunpack.c.l.b16 %v809
        %v3983 = vunpack.c.h.b16 %v809
        %v3984 = vunpack.c.l.b16 %v810
        %v3985 = vunpack.c.h.b16 %v810
        %v3986 = vunpack.c.l.b16 %v811
        %v3987 = vunpack.c.h.b16 %v811
        %v3988 = vunpack.c.l.b16 %v812
        %v3989 = vunpack.c.h.b16 %v812
        %v3990 = vunpack.c.l.b16 %v813
        %v3991 = vunpack.c.h.b16 %v813
        %v3992 = vunpack.c.l.b16 %v814
        %v3993 = vunpack.c.h.b16 %v814
        %v3994 = vunpack.c.l.b16 %v815
        %v3995 = vunpack.c.h.b16 %v815
        %v3996 = vunpack.c.l.b16 %v816
        %v3997 = vunpack.c.h.b16 %v816
        %v3998 = vunpack.c.l.b16 %v817
        %v3999 = vunpack.c.h.b16 %v817
        %v4000 = vunpack.c.l.b16 %v818
        %v4001 = vunpack.c.h.b16 %v818
        %v4002 = vunpack.c.l.b16 %v819
        %v4003 = vunpack.c.h.b16 %v819
        %v4004 = vunpack.c.l.b16 %v820
        %v4005 = vunpack.c.h.b16 %v820
        %v4006 = vunpack.c.l.b16 %v821
        %v4007 = vunpack.c.h.b16 %v821
        %v4008 = vunpack.c.l.b16 %v822
        %v4009 = vunpack.c.h.b16 %v822
        %v4010 = vunpack.c.l.b16 %v823
        %v4011 = vunpack.c.h.b16 %v823
        %v4012 = vunpack.c.l.b16 %v824
        %v4013 = vunpack.c.h.b16 %v824
        %v4014 = vunpack.c.l.b16 %v825
        %v4015 = vunpack.c.h.b16 %v825
        %v4016 = vunpack.c.l.b16 %v826
        %v4017 = vunpack.c.h.b16 %v826
        %v4018 = vunpack.c.l.b16 %v827
        %v4019 = vunpack.c.h.b16 %v827
        %v4020 = vunpack.c.l.b16 %v828
        %v4021 = vunpack.c.h.b16 %v828
        %v4022 = vunpack.c.l.b16 %v829
        %v4023 = vunpack.c.h.b16 %v829
        %v4024 = vunpack.c.l.b16 %v830
        %v4025 = vunpack.c.h.b16 %v830
        %v4026 = vunpack.c.l.b16 %v831
        %v4027 = vunpack.c.h.b16 %v831
        %v4028 = vunpack.c.l.b16 %v832
        %v4029 = vunpack.c.h.b16 %v832
        %v4030 = vunpack.c.l.b16 %v833
        %v4031 = vunpack.c.h.b16 %v833
        %v4032 = vunpack.c.l.b16 %v834
        %v4033 = vunpack.c.h.b16 %v834
        %v4034 = vunpack.c.l.b16 %v835
        %v4035 = vunpack.c.h.b16 %v835
        %v4036 = vunpack.c.l.b16 %v836
        %v4037 = vunpack.c.h.b16 %v836
        %v4038 = vunpack.c.l.b16 %v837
        %v4039 = vunpack.c.h.b16 %v837
        %v4040 = vunpack.c.l.b16 %v838
        %v4041 = vunpack.c.h.b16 %v838
        %v4042 = vunpack.c.l.b16 %v839
        %v4043 = vunpack.c.h.b16 %v839
        %v4044 = vunpack.c.l.b16 %v840
        %v4045 = vunpack.c.h.b16 %v840
        %v4046 = vunpack.c.l.b16 %v841
        %v4047 = vunpack.c.h.b16 %v841
        %v4048 = vunpack.c.l.b16 %v842
        %v4049 = vunpack.c.h.b16 %v842
        %v4050 = vunpack.c.l.b16 %v843
        %v4051 = vunpack.c.h.b16 %v843
        %v4052 = vunpack.c.l.b16 %v844
        %v4053 = vunpack.c.h.b16 %v844
        %v4054 = vunpack.c.l.b16 %v845
        %v4055 = vunpack.c.h.b16 %v845
        %v4056 = vunpack.c.l.b16 %v846
        %v4057 = vunpack.c.h.b16 %v846
        %v4058 = vunpack.c.l.b16 %v847
        %v4059 = vunpack.c.h.b16 %v847
        %v4060 = vunpack.c.l.b16 %v848
        %v4061 = vunpack.c.h.b16 %v848
        %v4062 = vunpack.c.l.b16 %v849
        %v4063 = vunpack.c.h.b16 %v849
        %v4064 = vunpack.c.l.b16 %v850
        %v4065 = vunpack.c.h.b16 %v850
        %v4066 = vunpack.c.l.b16 %v851
        %v4067 = vunpack.c.h.b16 %v851
        %v4068 = vunpack.c.l.b16 %v852
        %v4069 = vunpack.c.h.b16 %v852
        %v4070 = vunpack.c.l.b16 %v853
        %v4071 = vunpack.c.h.b16 %v853
        %v4072 = vunpack.c.l.b16 %v854
        %v4073 = vunpack.c.h.b16 %v854
        %v4074 = vunpack.c.l.b16 %v855
        %v4075 = vunpack.c.h.b16 %v855
        %v4076 = vunpack.c.l.b16 %v856
        %v4077 = vunpack.c.h.b16 %v856
        %v4078 = vunpack.c.l.b16 %v857
        %v4079 = vunpack.c.h.b16 %v857
        %v4080 = vunpack.c.l.b16 %v858
        %v4081 = vunpack.c.h.b16 %v858
        %v4082 = vunpack.c.l.b16 %v859
        %v4083 = vunpack.c.h.b16 %v859
        %v4084 = vunpack.c.l.b16 %v860
        %v4085 = vunpack.c.h.b16 %v860
        %v4086 = vunpack.c.l.b16 %v861
        %v4087 = vunpack.c.h.b16 %v861
        %v4088 = vunpack.c.l.b16 %v862
        %v4089 = vunpack.c.h.b16 %v862
        %v4090 = vunpack.c.l.b16 %v863
        %v4091 = vunpack.c.h.b16 %v863
        %v4092 = vunpack.c.l.b16 %v864
        %v4093 = vunpack.c.h.b16 %v864
        %v4094 = vunpack.c.l.b16 %v865
        %v4095 = vunpack.c.h.b16 %v865
        %v4096 = vunpack.c.l.b16 %v866
        %v4097 = vunpack.c.h.b16 %v866
        %v4098 = vunpack.c.l.b16 %v867
        %v4099 = vunpack.c.h.b16 %v867
        %v4100 = vunpack.c.l.b16 %v868
        %v4101 = vunpack.c.h.b16 %v868
        %v4102 = vunpack.c.l.b16 %v869
        %v4103 = vunpack.c.h.b16 %v869
        %v4104 = vunpack.c.l.b16 %v870
        %v4105 = vunpack.c.h.b16 %v870
        %v4106 = vunpack.c.l.b16 %v871
        %v4107 = vunpack.c.h.b16 %v871
        %v4108 = vunpack.c.l.b16 %v872
        %v4109 = vunpack.c.h.b16 %v872
        %v4110 = vunpack.c.l.b16 %v873
        %v4111 = vunpack.c.h.b16 %v873
        %v4112 = vunpack.c.l.b16 %v874
        %v4113 = vunpack.c.h.b16 %v874
        %v4114 = vunpack.c.l.b16 %v875
        %v4115 = vunpack.c.h.b16 %v875
        %v4116 = vunpack.c.l.b16 %v876
        %v4117 = vunpack.c.h.b16 %v876
        %v4118 = vunpack.c.l.b16 %v877
        %v4119 = vunpack.c.h.b16 %v877
        %v4120 = vunpack.c.l.b16 %v878
        %v4121 = vunpack.c.h.b16 %v878
        %v4122 = vunpack.c.l.b16 %v879
        %v4123 = vunpack.c.h.b16 %v879
        %v4124 = vunpack.c.l.b16 %v880
        %v4125 = vunpack.c.h.b16 %v880
        %v4126 = vunpack.c.l.b16 %v881
        %v4127 = vunpack.c.h.b16 %v881
        %v4128 = vunpack.c.l.b16 %v882
        %v4129 = vunpack.c.h.b16 %v882
        %v4130 = vunpack.c.l.b16 %v883
        %v4131 = vunpack.c.h.b16 %v883
        %v4132 = vunpack.c.l.b16 %v884
        %v4133 = vunpack.c.h.b16 %v884
        %v4134 = vunpack.c.l.b16 %v885
        %v4135 = vunpack.c.h.b16 %v885
        %v4136 = vunpack.c.l.b16 %v886
        %v4137 = vunpack.c.h.b16 %v886
        %v4138 = vunpack.c.l.b16 %v887
        %v4139 = vunpack.c.h.b16 %v887
        %v4140 = vunpack.c.l.b16 %v888
        %v4141 = vunpack.c.h.b16 %v888
        %v4142 = vunpack.c.l.b16 %v889
        %v4143 = vunpack.c.h.b16 %v889
        %v4144 = vunpack.c.l.b16 %v890
        %v4145 = vunpack.c.h.b16 %v890
        %v4146 = vunpack.c.l.b16 %v891
        %v4147 = vunpack.c.h.b16 %v891
        %v4148 = vunpack.c.l.b16 %v892
        %v4149 = vunpack.c.h.b16 %v892
        %v4150 = vunpack.c.l.b16 %v893
        %v4151 = vunpack.c.h.b16 %v893
        %v4152 = vunpack.c.l.b16 %v894
        %v4153 = vunpack.c.h.b16 %v894
        %v4154 = vunpack.c.l.b16 %v895
        %v4155 = vunpack.c.h.b16 %v895
        %v4156 = vunpack.c.l.b16 %v896
        %v4157 = vunpack.c.h.b16 %v896
        %v4158 = vunpack.c.l.b16 %v897
        %v4159 = vunpack.c.h.b16 %v897
        %v4160 = vunpack.c.l.b16 %v898
        %v4161 = vunpack.c.h.b16 %v898
        %v4162 = vunpack.c.l.b16 %v899
        %v4163 = vunpack.c.h.b16 %v899
        %v4164 = vunpack.c.l.b16 %v900
        %v4165 = vunpack.c.h.b16 %v900
        %v4166 = vunpack.c.l.b16 %v901
        %v4167 = vunpack.c.h.b16 %v901
        %v4168 = vunpack.c.l.b16 %v902
        %v4169 = vunpack.c.h.b16 %v902
        %v4170 = vunpack.c.l.b16 %v903
        %v4171 = vunpack.c.h.b16 %v903
        %v4172 = vunpack.c.l.b16 %v904
        %v4173 = vunpack.c.h.b16 %v904
        %v4174 = vunpack.c.l.b16 %v905
        %v4175 = vunpack.c.h.b16 %v905
        %v4176 = vunpack.c.l.b16 %v906
        %v4177 = vunpack.c.h.b16 %v906
        %v4178 = vunpack.c.l.b16 %v907
        %v4179 = vunpack.c.h.b16 %v907
        %v4180 = vunpack.c.l.b16 %v908
        %v4181 = vunpack.c.h.b16 %v908
        %v4182 = vunpack.c.l.b16 %v909
        %v4183 = vunpack.c.h.b16 %v909
        %v4184 = vunpack.c.l.b16 %v910
        %v4185 = vunpack.c.h.b16 %v910
        %v4186 = vunpack.c.l.b16 %v911
        %v4187 = vunpack.c.h.b16 %v911
        %v4188 = vunpack.c.l.b16 %v912
        %v4189 = vunpack.c.h.b16 %v912
        %v4190 = vunpack.c.l.b16 %v913
        %v4191 = vunpack.c.h.b16 %v913
        %v4192 = vunpack.c.l.b16 %v914
        %v4193 = vunpack.c.h.b16 %v914
        %v4194 = vunpack.c.l.b16 %v915
        %v4195 = vunpack.c.h.b16 %v915
        %v4196 = vunpack.c.l.b16 %v916
        %v4197 = vunpack.c.h.b16 %v916
        %v4198 = vunpack.c.l.b16 %v917
        %v4199 = vunpack.c.h.b16 %v917
        %v4200 = vunpack.c.l.b16 %v918
        %v4201 = vunpack.c.h.b16 %v918
        %v4202 = vunpack.c.l.b16 %v919
        %v4203 = vunpack.c.h.b16 %v919
        %v4204 = vunpack.c.l.b16 %v920
        %v4205 = vunpack.c.h.b16 %v920
        %v4206 = vunpack.c.l.b16 %v921
        %v4207 = vunpack.c.h.b16 %v921
        %v4208 = vunpack.c.l.b16 %v922
        %v4209 = vunpack.c.h.b16 %v922
        %v4210 = vunpack.c.l.b16 %v923
        %v4211 = vunpack.c.h.b16 %v923
        %v4212 = vunpack.c.l.b16 %v924
        %v4213 = vunpack.c.h.b16 %v924
        %v4214 = vunpack.c.l.b16 %v925
        %v4215 = vunpack.c.h.b16 %v925
        %v4216 = vunpack.c.l.b16 %v926
        %v4217 = vunpack.c.h.b16 %v926
        %v4218 = vunpack.c.l.b16 %v927
        %v4219 = vunpack.c.h.b16 %v927
        %v4220 = vunpack.c.l.b16 %v928
        %v4221 = vunpack.c.h.b16 %v928
        %v4222 = vunpack.c.l.b16 %v929
        %v4223 = vunpack.c.h.b16 %v929
        %v4224 = vunpack.c.l.b16 %v930
        %v4225 = vunpack.c.h.b16 %v930
        %v4226 = vunpack.c.l.b16 %v931
        %v4227 = vunpack.c.h.b16 %v931
        %v4228 = vunpack.c.l.b16 %v932
        %v4229 = vunpack.c.h.b16 %v932
        %v4230 = vunpack.c.l.b16 %v933
        %v4231 = vunpack.c.h.b16 %v933
        %v4232 = vunpack.c.l.b16 %v934
        %v4233 = vunpack.c.h.b16 %v934
        %v4234 = vunpack.c.l.b16 %v935
        %v4235 = vunpack.c.h.b16 %v935
        %v4236 = vunpack.c.l.b16 %v936
        %v4237 = vunpack.c.h.b16 %v936
        %v4238 = vunpack.c.l.b16 %v937
        %v4239 = vunpack.c.h.b16 %v937
        %v4240 = vunpack.c.l.b16 %v938
        %v4241 = vunpack.c.h.b16 %v938
        %v4242 = vunpack.c.l.b16 %v939
        %v4243 = vunpack.c.h.b16 %v939
        %v4244 = vunpack.c.l.b16 %v940
        %v4245 = vunpack.c.h.b16 %v940
        %v4246 = vunpack.c.l.b16 %v941
        %v4247 = vunpack.c.h.b16 %v941
        %v4248 = vunpack.c.l.b16 %v942
        %v4249 = vunpack.c.h.b16 %v942
        %v4250 = vunpack.c.l.b16 %v943
        %v4251 = vunpack.c.h.b16 %v943
        %v4252 = vunpack.c.l.b16 %v944
        %v4253 = vunpack.c.h.b16 %v944
        %v4254 = vunpack.c.l.b16 %v945
        %v4255 = vunpack.c.h.b16 %v945
        %v4256 = vunpack.c.l.b16 %v946
        %v4257 = vunpack.c.h.b16 %v946
        %v4258 = vunpack.c.l.b16 %v947
        %v4259 = vunpack.c.h.b16 %v947
        %v4260 = vunpack.c.l.b16 %v948
        %v4261 = vunpack.c.h.b16 %v948
        %v4262 = vunpack.c.l.b16 %v949
        %v4263 = vunpack.c.h.b16 %v949
        %v4264 = vunpack.c.l.b16 %v950
        %v4265 = vunpack.c.h.b16 %v950
        %v4266 = vunpack.c.l.b16 %v951
        %v4267 = vunpack.c.h.b16 %v951
        %v4268 = vunpack.c.l.b16 %v952
        %v4269 = vunpack.c.h.b16 %v952
        %v4270 = vunpack.c.l.b16 %v953
        %v4271 = vunpack.c.h.b16 %v953
        %v4272 = vunpack.c.l.b16 %v954
        %v4273 = vunpack.c.h.b16 %v954
        %v4274 = vunpack.c.l.b16 %v955
        %v4275 = vunpack.c.h.b16 %v955
        %v4276 = vunpack.c.l.b16 %v956
        %v4277 = vunpack.c.h.b16 %v956
        %v4278 = vunpack.c.l.b16 %v957
        %v4279 = vunpack.c.h.b16 %v957
        %v4280 = vunpack.c.l.b16 %v958
        %v4281 = vunpack.c.h.b16 %v958
        %v4282 = vunpack.c.l.b16 %v959
        %v4283 = vunpack.c.h.b16 %v959
        %v4284 = vunpack.c.l.b16 %v960
        %v4285 = vunpack.c.h.b16 %v960
        %v4286 = vunpack.c.l.b16 %v961
        %v4287 = vunpack.c.h.b16 %v961
        %v4288 = vunpack.c.l.b16 %v962
        %v4289 = vunpack.c.h.b16 %v962
        %v4290 = vunpack.c.l.b16 %v963
        %v4291 = vunpack.c.h.b16 %v963
        %v4292 = vunpack.c.l.b16 %v964
        %v4293 = vunpack.c.h.b16 %v964
        %v4294 = vunpack.c.l.b16 %v965
        %v4295 = vunpack.c.h.b16 %v965
        %v4296 = vunpack.c.l.b16 %v966
        %v4297 = vunpack.c.h.b16 %v966
        %v4298 = vunpack.c.l.b16 %v967
        %v4299 = vunpack.c.h.b16 %v967
        %v4300 = vunpack.c.l.b16 %v968
        %v4301 = vunpack.c.h.b16 %v968
        %v4302 = vunpack.c.l.b16 %v969
        %v4303 = vunpack.c.h.b16 %v969
        %v4304 = vunpack.c.l.b16 %v970
        %v4305 = vunpack.c.h.b16 %v970
        %v4306 = vunpack.c.l.b16 %v971
        %v4307 = vunpack.c.h.b16 %v971
        %v4308 = vunpack.c.l.b16 %v972
        %v4309 = vunpack.c.h.b16 %v972
        %v4310 = vunpack.c.l.b16 %v973
        %v4311 = vunpack.c.h.b16 %v973
        %v4312 = vunpack.c.l.b16 %v974
        %v4313 = vunpack.c.h.b16 %v974
        %v4314 = vunpack.c.l.b16 %v975
        %v4315 = vunpack.c.h.b16 %v975
        %v4316 = vunpack.c.l.b16 %v976
        %v4317 = vunpack.c.h.b16 %v976
        %v4318 = vunpack.c.l.b16 %v977
        %v4319 = vunpack.c.h.b16 %v977
        %v4320 = vunpack.c.l.b16 %v978
        %v4321 = vunpack.c.h.b16 %v978
        %v4322 = vunpack.c.l.b16 %v979
        %v4323 = vunpack.c.h.b16 %v979
        %v4324 = vunpack.c.l.b16 %v980
        %v4325 = vunpack.c.h.b16 %v980
        %v4326 = vunpack.c.l.b16 %v981
        %v4327 = vunpack.c.h.b16 %v981
        %v4328 = vunpack.c.l.b16 %v982
        %v4329 = vunpack.c.h.b16 %v982
        %v4330 = vunpack.c.l.b16 %v983
        %v4331 = vunpack.c.h.b16 %v983
        %v4332 = vunpack.c.l.b16 %v984
        %v4333 = vunpack.c.h.b16 %v984
        %v4334 = vunpack.c.l.b16 %v985
        %v4335 = vunpack.c.h.b16 %v985
        %v4336 = vunpack.c.l.b16 %v986
        %v4337 = vunpack.c.h.b16 %v986
        %v4338 = vunpack.c.l.b16 %v987
        %v4339 = vunpack.c.h.b16 %v987
        %v4340 = vunpack.c.l.b16 %v988
        %v4341 = vunpack.c.h.b16 %v988
        %v4342 = vunpack.c.l.b16 %v989
        %v4343 = vunpack.c.h.b16 %v989
        %v4344 = vunpack.c.l.b16 %v990
        %v4345 = vunpack.c.h.b16 %v990
        %v4346 = vunpack.c.l.b16 %v991
        %v4347 = vunpack.c.h.b16 %v991
        %v4348 = vunpack.c.l.b16 %v992
        %v4349 = vunpack.c.h.b16 %v992
        %v4350 = vunpack.c.l.b16 %v993
        %v4351 = vunpack.c.h.b16 %v993
        %v4352 = vunpack.c.l.b16 %v994
        %v4353 = vunpack.c.h.b16 %v994
        %v4354 = vunpack.c.l.b16 %v995
        %v4355 = vunpack.c.h.b16 %v995
        %v4356 = vunpack.c.l.b16 %v996
        %v4357 = vunpack.c.h.b16 %v996
        %v4358 = vunpack.c.l.b16 %v997
        %v4359 = vunpack.c.h.b16 %v997
        %v4360 = vunpack.c.l.b16 %v998
        %v4361 = vunpack.c.h.b16 %v998
        %v4362 = vunpack.c.l.b16 %v999
        %v4363 = vunpack.c.h.b16 %v999
        %v4364 = vunpack.c.l.b16 %v1000
        %v4365 = vunpack.c.h.b16 %v1000
        %v4366 = vunpack.c.l.b16 %v1001
        %v4367 = vunpack.c.h.b16 %v1001
        %v4368 = vunpack.c.l.b16 %v1002
        %v4369 = vunpack.c.h.b16 %v1002
        %v4370 = vunpack.c.l.b16 %v1003
        %v4371 = vunpack.c.h.b16 %v1003
        %v4372 = vunpack.c.l.b16 %v1004
        %v4373 = vunpack.c.h.b16 %v1004
        %v4374 = vunpack.c.l.b16 %v1005
        %v4375 = vunpack.c.h.b16 %v1005
        %v4376 = vunpack.c.l.b16 %v1006
        %v4377 = vunpack.c.h.b16 %v1006
        %v4378 = vunpack.c.l.b16 %v1007
        %v4379 = vunpack.c.h.b16 %v1007
        %v4380 = vunpack.c.l.b16 %v1008
        %v4381 = vunpack.c.h.b16 %v1008
        %v4382 = vunpack.c.l.b16 %v1009
        %v4383 = vunpack.c.h.b16 %v1009
        %v4384 = vunpack.c.l.b16 %v1010
        %v4385 = vunpack.c.h.b16 %v1010
        %v4386 = vunpack.c.l.b16 %v1011
        %v4387 = vunpack.c.h.b16 %v1011
        %v4388 = vunpack.c.l.b16 %v1012
        %v4389 = vunpack.c.h.b16 %v1012
        %v4390 = vunpack.c.l.b16 %v1013
        %v4391 = vunpack.c.h.b16 %v1013
        %v4392 = vunpack.c.l.b16 %v1014
        %v4393 = vunpack.c.h.b16 %v1014
        %v4394 = vunpack.c.l.b16 %v1015
        %v4395 = vunpack.c.h.b16 %v1015
        %v4396 = vunpack.c.l.b16 %v1016
        %v4397 = vunpack.c.h.b16 %v1016
        %v4398 = vunpack.c.l.b16 %v1017
        %v4399 = vunpack.c.h.b16 %v1017
        %v4400 = vunpack.c.l.b16 %v1018
        %v4401 = vunpack.c.h.b16 %v1018
        %v4402 = vunpack.c.l.b16 %v1019
        %v4403 = vunpack.c.h.b16 %v1019
        %v4404 = vunpack.c.l.b16 %v1020
        %v4405 = vunpack.c.h.b16 %v1020
        %v4406 = vunpack.c.l.b16 %v1021
        %v4407 = vunpack.c.h.b16 %v1021
        %v4408 = vunpack.c.l.b16 %v1022
        %v4409 = vunpack.c.h.b16 %v1022
        %v4410 = vunpack.c.l.b16 %v1023
        %v4411 = vunpack.c.h.b16 %v1023
        %v4412 = vunpack.c.l.b16 %v1024
        %v4413 = vunpack.c.h.b16 %v1024
        %v4414 = vunpack.c.l.b16 %v1025
        %v4415 = vunpack.c.h.b16 %v1025
        %v4416 = vunpack.c.l.b16 %v1026
        %v4417 = vunpack.c.h.b16 %v1026
        %v4418 = vunpack.c.l.b16 %v1027
        %v4419 = vunpack.c.h.b16 %v1027
        %v4420 = vunpack.c.l.b16 %v1028
        %v4421 = vunpack.c.h.b16 %v1028
        %v4422 = vunpack.c.l.b16 %v1029
        %v4423 = vunpack.c.h.b16 %v1029
        %v4424 = vunpack.c.l.b16 %v1030
        %v4425 = vunpack.c.h.b16 %v1030
        %v4426 = vunpack.c.l.b16 %v1031
        %v4427 = vunpack.c.h.b16 %v1031
        %v4428 = vunpack.c.l.b16 %v1032
        %v4429 = vunpack.c.h.b16 %v1032
        %v4430 = vunpack.c.l.b16 %v1033
        %v4431 = vunpack.c.h.b16 %v1033
        %v4432 = vunpack.c.l.b16 %v1034
        %v4433 = vunpack.c.h.b16 %v1034
        %v4434 = vunpack.c.l.b16 %v1035
        %v4435 = vunpack.c.h.b16 %v1035
        %v4436 = vunpack.c.l.b16 %v1036
        %v4437 = vunpack.c.h.b16 %v1036
        %v4438 = vunpack.c.l.b16 %v1037
        %v4439 = vunpack.c.h.b16 %v1037
        %v4440 = vunpack.c.l.b16 %v1038
        %v4441 = vunpack.c.h.b16 %v1038
        %v4442 = vunpack.c.l.b16 %v1039
        %v4443 = vunpack.c.h.b16 %v1039
        %v4444 = vunpack.c.l.b16 %v1040
        %v4445 = vunpack.c.h.b16 %v1040
        %v4446 = vunpack.c.l.b16 %v1041
        %v4447 = vunpack.c.h.b16 %v1041
        %v4448 = vunpack.c.l.b16 %v1042
        %v4449 = vunpack.c.h.b16 %v1042
        %v4450 = vunpack.c.l.b16 %v1043
        %v4451 = vunpack.c.h.b16 %v1043
        %v4452 = vunpack.c.l.b16 %v1044
        %v4453 = vunpack.c.h.b16 %v1044
        %v4454 = vunpack.c.l.b16 %v1045
        %v4455 = vunpack.c.h.b16 %v1045
        %v4456 = vunpack.c.l.b16 %v1046
        %v4457 = vunpack.c.h.b16 %v1046
        %v4458 = vunpack.c.l.b16 %v1047
        %v4459 = vunpack.c.h.b16 %v1047
        %v4460 = vunpack.c.l.b16 %v1048
        %v4461 = vunpack.c.h.b16 %v1048
        %v4462 = vunpack.c.l.b16 %v1049
        %v4463 = vunpack.c.h.b16 %v1049
        %v4464 = vunpack.c.l.b16 %v1050
        %v4465 = vunpack.c.h.b16 %v1050
        %v4466 = vunpack.c.l.b16 %v1051
        %v4467 = vunpack.c.h.b16 %v1051
        %v4468 = vunpack.c.l.b16 %v1052
        %v4469 = vunpack.c.h.b16 %v1052
        %v4470 = vunpack.c.l.b16 %v1053
        %v4471 = vunpack.c.h.b16 %v1053
        %v4472 = vunpack.c.l.b16 %v1054
        %v4473 = vunpack.c.h.b16 %v1054
        %v4474 = vunpack.c.l.b16 %v1055
        %v4475 = vunpack.c.h.b16 %v1055
        %v4476 = vunpack.c.l.b16 %v1056
        %v4477 = vunpack.c.h.b16 %v1056
        %v4478 = vunpack.c.l.b16 %v1057
        %v4479 = vunpack.c.h.b16 %v1057
        %v4480 = vunpack.c.l.b16 %v1058
        %v4481 = vunpack.c.h.b16 %v1058
        %v4482 = vunpack.c.l.b16 %v1059
        %v4483 = vunpack.c.h.b16 %v1059
        %v4484 = vunpack.c.l.b16 %v1060
        %v4485 = vunpack.c.h.b16 %v1060
        %v4486 = vunpack.c.l.b16 %v1061
        %v4487 = vunpack.c.h.b16 %v1061
        %v4488 = vunpack.c.l.b16 %v1062
        %v4489 = vunpack.c.h.b16 %v1062
        %v4490 = vunpack.c.l.b16 %v1063
        %v4491 = vunpack.c.h.b16 %v1063
        %v4492 = vunpack.c.l.b16 %v1064
        %v4493 = vunpack.c.h.b16 %v1064
        %v4494 = vunpack.c.l.b16 %v1065
        %v4495 = vunpack.c.h.b16 %v1065
        %v4496 = vunpack.c.l.b16 %v1066
        %v4497 = vunpack.c.h.b16 %v1066
        %v4498 = vunpack.c.l.b16 %v1067
        %v4499 = vunpack.c.h.b16 %v1067
        %v4500 = vunpack.c.l.b16 %v1068
        %v4501 = vunpack.c.h.b16 %v1068
        %v4502 = vunpack.c.l.b16 %v1069
        %v4503 = vunpack.c.h.b16 %v1069
        %v4504 = vunpack.c.l.b16 %v1070
        %v4505 = vunpack.c.h.b16 %v1070
        %v4506 = vunpack.c.l.b16 %v1071
        %v4507 = vunpack.c.h.b16 %v1071
        %v4508 = vunpack.c.l.b16 %v1072
        %v4509 = vunpack.c.h.b16 %v1072
        %v4510 = vunpack.c.l.b16 %v1073
        %v4511 = vunpack.c.h.b16 %v1073
        %v4512 = vunpack.c.l.b16 %v1074
        %v4513 = vunpack.c.h.b16 %v1074
        %v4514 = vunpack.c.l.b16 %v1075
        %v4515 = vunpack.c.h.b16 %v1075
        %v4516 = vunpack.c.l.b16 %v1076
        %v4517 = vunpack.c.h.b16 %v1076
        %v4518 = vunpack.c.l.b16 %v1077
        %v4519 = vunpack.c.h.b16 %v1077
        %v4520 = vunpack.c.l.b16 %v1078
        %v4521 = vunpack.c.h.b16 %v1078
        %v4522 = vunpack.c.l.b16 %v1079
        %v4523 = vunpack.c.h.b16 %v1079
        %v4524 = vunpack.c.l.b16 %v1080
        %v4525 = vunpack.c.h.b16 %v1080
        %v4526 = vunpack.c.l.b16 %v1081
        %v4527 = vunpack.c.h.b16 %v1081
        %v4528 = vunpack.c.l.b16 %v1082
        %v4529 = vunpack.c.h.b16 %v1082
        %v4530 = vunpack.c.l.b16 %v1083
        %v4531 = vunpack.c.h.b16 %v1083
        %v4532 = vunpack.c.l.b16 %v1084
        %v4533 = vunpack.c.h.b16 %v1084
        %v4534 = vunpack.c.l.b16 %v1085
        %v4535 = vunpack.c.h.b16 %v1085
        %v4536 = vunpack.c.l.b16 %v1086
        %v4537 = vunpack.c.h.b16 %v1086
        %v4538 = vunpack.c.l.b16 %v1087
        %v4539 = vunpack.c.h.b16 %v1087
        %v4540 = vunpack.c.l.b16 %v1088
        %v4541 = vunpack.c.h.b16 %v1088
        %v4542 = vunpack.c.l.b16 %v1089
        %v4543 = vunpack.c.h.b16 %v1089
        %v4544 = vunpack.c.l.b16 %v1090
        %v4545 = vunpack.c.h.b16 %v1090
        %v4546 = vunpack.c.l.b16 %v1091
        %v4547 = vunpack.c.h.b16 %v1091
        %v4548 = vunpack.c.l.b16 %v1092
        %v4549 = vunpack.c.h.b16 %v1092
        %v4550 = vunpack.c.l.b16 %v1093
        %v4551 = vunpack.c.h.b16 %v1093
        %v4552 = vunpack.c.l.b16 %v1094
        %v4553 = vunpack.c.h.b16 %v1094
        %v4554 = vunpack.c.l.b16 %v1095
        %v4555 = vunpack.c.h.b16 %v1095
        %v4556 = vunpack.c.l.b16 %v1096
        %v4557 = vunpack.c.h.b16 %v1096
        %v4558 = vunpack.c.l.b16 %v1097
        %v4559 = vunpack.c.h.b16 %v1097
        %v4560 = vunpack.c.l.b16 %v1098
        %v4561 = vunpack.c.h.b16 %v1098
        %v4562 = vunpack.c.l.b16 %v1099
        %v4563 = vunpack.c.h.b16 %v1099
        %v4564 = vunpack.c.l.b16 %v1100
        %v4565 = vunpack.c.h.b16 %v1100
        %v4566 = vunpack.c.l.b16 %v1101
        %v4567 = vunpack.c.h.b16 %v1101
        %v4568 = vunpack.c.l.b16 %v1102
        %v4569 = vunpack.c.h.b16 %v1102
        %v4570 = vunpack.c.l.b16 %v1103
        %v4571 = vunpack.c.h.b16 %v1103
        %v4572 = vunpack.c.l.b16 %v1104
        %v4573 = vunpack.c.h.b16 %v1104
        %v4574 = vunpack.c.l.b16 %v1105
        %v4575 = vunpack.c.h.b16 %v1105
        %v4576 = vunpack.c.l.b16 %v1106
        %v4577 = vunpack.c.h.b16 %v1106
        %v4578 = vunpack.c.l.b16 %v1107
        %v4579 = vunpack.c.h.b16 %v1107
        %v4580 = vunpack.c.l.b16 %v1108
        %v4581 = vunpack.c.h.b16 %v1108
        %v4582 = vunpack.c.l.b16 %v1109
        %v4583 = vunpack.c.h.b16 %v1109
        %v4584 = vunpack.c.l.b16 %v1110
        %v4585 = vunpack.c.h.b16 %v1110
        %v4586 = vunpack.c.l.b16 %v1111
        %v4587 = vunpack.c.h.b16 %v1111
        %v4588 = vunpack.c.l.b16 %v1112
        %v4589 = vunpack.c.h.b16 %v1112
        %v4590 = vunpack.c.l.b16 %v1113
        %v4591 = vunpack.c.h.b16 %v1113
        %v4592 = vunpack.c.l.b16 %v1114
        %v4593 = vunpack.c.h.b16 %v1114
        %v4594 = vunpack.c.l.b16 %v1115
        %v4595 = vunpack.c.h.b16 %v1115
        %v4596 = vunpack.c.l.b16 %v1116
        %v4597 = vunpack.c.h.b16 %v1116
        %v4598 = vunpack.c.l.b16 %v1117
        %v4599 = vunpack.c.h.b16 %v1117
        %v4600 = vunpack.c.l.b16 %v1118
        %v4601 = vunpack.c.h.b16 %v1118
        %v4602 = vunpack.c.l.b16 %v1119
        %v4603 = vunpack.c.h.b16 %v1119
        %v4604 = vunpack.c.l.b16 %v1120
        %v4605 = vunpack.c.h.b16 %v1120
        %v4606 = vunpack.c.l.b16 %v1121
        %v4607 = vunpack.c.h.b16 %v1121
        %v4608 = vunpack.c.l.b16 %v1122
        %v4609 = vunpack.c.h.b16 %v1122
        %v4610 = vunpack.c.l.b16 %v1123
        %v4611 = vunpack.c.h.b16 %v1123
        %v4612 = vunpack.c.l.b16 %v1124
        %v4613 = vunpack.c.h.b16 %v1124
        %v4614 = vunpack.c.l.b16 %v1125
        %v4615 = vunpack.c.h.b16 %v1125
        %v4616 = vunpack.c.l.b16 %v1126
        %v4617 = vunpack.c.h.b16 %v1126
        %v4618 = vunpack.c.l.b16 %v1127
        %v4619 = vunpack.c.h.b16 %v1127
        %v4620 = vunpack.c.l.b16 %v1128
        %v4621 = vunpack.c.h.b16 %v1128
        %v4622 = vunpack.c.l.b16 %v1129
        %v4623 = vunpack.c.h.b16 %v1129
        %v4624 = vunpack.c.l.b16 %v1130
        %v4625 = vunpack.c.h.b16 %v1130
        %v4626 = vunpack.c.l.b16 %v1131
        %v4627 = vunpack.c.h.b16 %v1131
        %v4628 = vunpack.c.l.b16 %v1132
        %v4629 = vunpack.c.h.b16 %v1132
        %v4630 = vunpack.c.l.b16 %v1133
        %v4631 = vunpack.c.h.b16 %v1133
        %v4632 = vunpack.c.l.b16 %v1134
        %v4633 = vunpack.c.h.b16 %v1134
        %v4634 = vunpack.c.l.b16 %v1135
        %v4635 = vunpack.c.h.b16 %v1135
        %v4636 = vunpack.c.l.b16 %v1136
        %v4637 = vunpack.c.h.b16 %v1136
        %v4638 = vunpack.c.l.b16 %v1137
        %v4639 = vunpack.c.h.b16 %v1137
        %v4640 = vunpack.c.l.b16 %v1138
        %v4641 = vunpack.c.h.b16 %v1138
        %v4642 = vunpack.c.l.b16 %v1139
        %v4643 = vunpack.c.h.b16 %v1139
        %v4644 = vunpack.c.l.b16 %v1140
        %v4645 = vunpack.c.h.b16 %v1140
        %v4646 = vunpack.c.l.b16 %v1141
        %v4647 = vunpack.c.h.b16 %v1141
        %v4648 = vunpack.c.l.b16 %v1142
        %v4649 = vunpack.c.h.b16 %v1142
        %v4650 = vunpack.c.l.b16 %v1143
        %v4651 = vunpack.c.h.b16 %v1143
        %v4652 = vunpack.c.l.b16 %v1144
        %v4653 = vunpack.c.h.b16 %v1144
        %v4654 = vunpack.c.l.b16 %v1145
        %v4655 = vunpack.c.h.b16 %v1145
        %v4656 = vunpack.c.l.b16 %v1146
        %v4657 = vunpack.c.h.b16 %v1146
        %v4658 = vunpack.c.l.b16 %v1147
        %v4659 = vunpack.c.h.b16 %v1147
        %v4660 = vunpack.c.l.b16 %v1148
        %v4661 = vunpack.c.h.b16 %v1148
        %v4662 = vunpack.c.l.b16 %v1149
        %v4663 = vunpack.c.h.b16 %v1149
        %v4664 = vunpack.c.l.b16 %v1150
        %v4665 = vunpack.c.h.b16 %v1150
        %v4666 = vunpack.c.l.b16 %v1151
        %v4667 = vunpack.c.h.b16 %v1151
        %v4668 = vunpack.c.l.b16 %v1152
        %v4669 = vunpack.c.h.b16 %v1152
        %v4670 = vunpack.c.l.b16 %v1153
        %v4671 = vunpack.c.h.b16 %v1153
        %v4672 = vunpack.c.l.b16 %v1154
        %v4673 = vunpack.c.h.b16 %v1154
        %v4674 = vunpack.c.l.b16 %v1155
        %v4675 = vunpack.c.h.b16 %v1155
        %v4676 = vunpack.c.l.b16 %v1156
        %v4677 = vunpack.c.h.b16 %v1156
        %v4678 = vunpack.c.l.b16 %v1157
        %v4679 = vunpack.c.h.b16 %v1157
        %v4680 = vunpack.c.l.b16 %v1158
        %v4681 = vunpack.c.h.b16 %v1158
        %v4682 = vunpack.c.l.b16 %v1159
        %v4683 = vunpack.c.h.b16 %v1159
        %v4684 = vunpack.c.l.b16 %v1160
        %v4685 = vunpack.c.h.b16 %v1160
        %v4686 = vunpack.c.l.b16 %v1161
        %v4687 = vunpack.c.h.b16 %v1161
        %v4688 = vunpack.c.l.b16 %v1162
        %v4689 = vunpack.c.h.b16 %v1162
        %v4690 = vunpack.c.l.b16 %v1163
        %v4691 = vunpack.c.h.b16 %v1163
        %v4692 = vunpack.c.l.b16 %v1164
        %v4693 = vunpack.c.h.b16 %v1164
        %v4694 = vunpack.c.l.b16 %v1165
        %v4695 = vunpack.c.h.b16 %v1165
        %v4696 = vunpack.c.l.b16 %v1166
        %v4697 = vunpack.c.h.b16 %v1166
        %v4698 = vunpack.c.l.b16 %v1167
        %v4699 = vunpack.c.h.b16 %v1167
        %v4700 = vunpack.c.l.b16 %v1168
        %v4701 = vunpack.c.h.b16 %v1168
        %v4702 = vunpack.c.l.b16 %v1169
        %v4703 = vunpack.c.h.b16 %v1169
        %v4704 = vunpack.c.l.b16 %v1170
        %v4705 = vunpack.c.h.b16 %v1170
        %v4706 = vunpack.c.l.b16 %v1171
        %v4707 = vunpack.c.h.b16 %v1171
        %v4708 = vunpack.c.l.b16 %v1172
        %v4709 = vunpack.c.h.b16 %v1172
        %v4710 = vunpack.c.l.b16 %v1173
        %v4711 = vunpack.c.h.b16 %v1173
        %v4712 = vunpack.c.l.b16 %v1174
        %v4713 = vunpack.c.h.b16 %v1174
        %v4714 = vunpack.c.l.b16 %v1175
        %v4715 = vunpack.c.h.b16 %v1175
        %v4716 = vunpack.c.l.b16 %v1176
        %v4717 = vunpack.c.h.b16 %v1176
        %v4718 = vunpack.c.l.b16 %v1177
        %v4719 = vunpack.c.h.b16 %v1177
        %v4720 = vunpack.c.l.b16 %v1178
        %v4721 = vunpack.c.h.b16 %v1178
        %v4722 = vunpack.c.l.b16 %v1179
        %v4723 = vunpack.c.h.b16 %v1179
        %v4724 = vunpack.c.l.b16 %v1180
        %v4725 = vunpack.c.h.b16 %v1180
        %v4726 = vunpack.c.l.b16 %v1181
        %v4727 = vunpack.c.h.b16 %v1181
        %v4728 = vunpack.c.l.b16 %v1182
        %v4729 = vunpack.c.h.b16 %v1182
        %v4730 = vunpack.c.l.b16 %v1183
        %v4731 = vunpack.c.h.b16 %v1183
        %v4732 = vunpack.c.l.b16 %v1184
        %v4733 = vunpack.c.h.b16 %v1184
        %v4734 = vunpack.c.l.b16 %v1185
        %v4735 = vunpack.c.h.b16 %v1185
        %v4736 = vunpack.c.l.b16 %v1186
        %v4737 = vunpack.c.h.b16 %v1186
        %v4738 = vunpack.c.l.b16 %v1187
        %v4739 = vunpack.c.h.b16 %v1187
        %v4740 = vunpack.c.l.b16 %v1188
        %v4741 = vunpack.c.h.b16 %v1188
        %v4742 = vunpack.c.l.b16 %v1189
        %v4743 = vunpack.c.h.b16 %v1189
        %v4744 = vunpack.c.l.b16 %v1190
        %v4745 = vunpack.c.h.b16 %v1190
        %v4746 = vunpack.c.l.b16 %v1191
        %v4747 = vunpack.c.h.b16 %v1191
        %v4748 = vunpack.c.l.b16 %v1192
        %v4749 = vunpack.c.h.b16 %v1192
        %v4750 = vunpack.c.l.b16 %v1193
        %v4751 = vunpack.c.h.b16 %v1193
        %v4752 = vunpack.c.l.b16 %v1194
        %v4753 = vunpack.c.h.b16 %v1194
        %v4754 = vunpack.c.l.b16 %v1195
        %v4755 = vunpack.c.h.b16 %v1195
        %v4756 = vunpack.c.l.b16 %v1196
        %v4757 = vunpack.c.h.b16 %v1196
        %v4758 = vunpack.c.l.b16 %v1197
        %v4759 = vunpack.c.h.b16 %v1197
        %v4760 = vunpack.c.l.b16 %v1198
        %v4761 = vunpack.c.h.b16 %v1198
        %v4762 = vunpack.c.l.b16 %v1199
        %v4763 = vunpack.c.h.b16 %v1199
        %v4764 = vunpack.c.l.b16 %v1200
        %v4765 = vunpack.c.h.b16 %v1200
        %v4766 = vunpack.c.l.b16 %v1201
        %v4767 = vunpack.c.h.b16 %v1201
        %v4768 = vunpack.c.l.b16 %v1202
        %v4769 = vunpack.c.h.b16 %v1202
        %v4770 = vunpack.c.l.b16 %v1203
        %v4771 = vunpack.c.h.b16 %v1203
        %v4772 = vunpack.c.l.b16 %v1204
        %v4773 = vunpack.c.h.b16 %v1204
        %v4774 = vunpack.c.l.b16 %v1205
        %v4775 = vunpack.c.h.b16 %v1205
        %v4776 = vunpack.c.l.b16 %v1206
        %v4777 = vunpack.c.h.b16 %v1206
        %v4778 = vunpack.c.l.b16 %v1207
        %v4779 = vunpack.c.h.b16 %v1207
        %v4780 = vunpack.c.l.b16 %v1208
        %v4781 = vunpack.c.h.b16 %v1208
        %v4782 = vunpack.c.l.b16 %v1209
        %v4783 = vunpack.c.h.b16 %v1209
        %v4784 = vunpack.c.l.b16 %v1210
        %v4785 = vunpack.c.h.b16 %v1210
        %v4786 = vunpack.c.l.b16 %v1211
        %v4787 = vunpack.c.h.b16 %v1211
        %v4788 = vunpack.c.l.b16 %v1212
        %v4789 = vunpack.c.h.b16 %v1212
        %v4790 = vunpack.c.l.b16 %v1213
        %v4791 = vunpack.c.h.b16 %v1213
        %v4792 = vunpack.c.l.b16 %v1214
        %v4793 = vunpack.c.h.b16 %v1214
        %v4794 = vunpack.c.l.b16 %v1215
        %v4795 = vunpack.c.h.b16 %v1215
        %v4796 = vunpack.c.l.b16 %v1216
        %v4797 = vunpack.c.h.b16 %v1216
        %v4798 = vunpack.c.l.b16 %v1217
        %v4799 = vunpack.c.h.b16 %v1217
        %v4800 = vunpack.c.l.b16 %v1218
        %v4801 = vunpack.c.h.b16 %v1218
        %v4802 = vunpack.c.l.b16 %v1219
        %v4803 = vunpack.c.h.b16 %v1219
        %v4804 = vunpack.c.l.b16 %v1220
        %v4805 = vunpack.c.h.b16 %v1220
        %v4806 = vunpack.c.l.b16 %v1221
        %v4807 = vunpack.c.h.b16 %v1221
        %v4808 = vunpack.c.l.b16 %v1222
        %v4809 = vunpack.c.h.b16 %v1222
        %v4810 = vunpack.c.l.b16 %v1223
        %v4811 = vunpack.c.h.b16 %v1223
        %v4812 = vunpack.c.l.b16 %v1224
        %v4813 = vunpack.c.h.b16 %v1224
        %v4814 = vunpack.c.l.b16 %v1225
        %v4815 = vunpack.c.h.b16 %v1225
        %v4816 = vunpack.c.l.b16 %v1226
        %v4817 = vunpack.c.h.b16 %v1226
        %v4818 = vunpack.c.l.b16 %v1227
        %v4819 = vunpack.c.h.b16 %v1227
        %v4820 = vunpack.c.l.b16 %v1228
        %v4821 = vunpack.c.h.b16 %v1228
        %v4822 = vunpack.c.l.b16 %v1229
        %v4823 = vunpack.c.h.b16 %v1229
        %v4824 = vunpack.c.l.b16 %v1230
        %v4825 = vunpack.c.h.b16 %v1230
        %v4826 = vunpack.c.l.b16 %v1231
        %v4827 = vunpack.c.h.b16 %v1231
        %v4828 = vunpack.c.l.b16 %v1232
        %v4829 = vunpack.c.h.b16 %v1232
        %v4830 = vunpack.c.l.b16 %v1233
        %v4831 = vunpack.c.h.b16 %v1233
        %v4832 = vunpack.c.l.b16 %v1234
        %v4833 = vunpack.c.h.b16 %v1234
        %v4834 = vunpack.c.l.b16 %v1235
        %v4835 = vunpack.c.h.b16 %v1235
        %v4836 = vunpack.c.l.b16 %v1236
        %v4837 = vunpack.c.h.b16 %v1236
        %v4838 = vunpack.c.l.b16 %v1237
        %v4839 = vunpack.c.h.b16 %v1237
        %v4840 = vunpack.c.l.b16 %v1238
        %v4841 = vunpack.c.h.b16 %v1238
        %v4842 = vunpack.c.l.b16 %v1239
        %v4843 = vunpack.c.h.b16 %v1239
        %v4844 = vunpack.c.l.b16 %v1240
        %v4845 = vunpack.c.h.b16 %v1240
        %v4846 = vunpack.c.l.b16 %v1241
        %v4847 = vunpack.c.h.b16 %v1241
        %v4848 = vunpack.c.l.b16 %v1242
        %v4849 = vunpack.c.h.b16 %v1242
        %v4850 = vunpack.c.l.b16 %v1243
        %v4851 = vunpack.c.h.b16 %v1243
        %v4852 = vunpack.c.l.b16 %v1244
        %v4853 = vunpack.c.h.b16 %v1244
        %v4854 = vunpack.c.l.b16 %v1245
        %v4855 = vunpack.c.h.b16 %v1245
        %v4856 = vunpack.c.l.b16 %v1246
        %v4857 = vunpack.c.h.b16 %v1246
        %v4858 = vunpack.c.l.b16 %v1247
        %v4859 = vunpack.c.h.b16 %v1247
        %v4860 = vunpack.c.l.b16 %v1248
        %v4861 = vunpack.c.h.b16 %v1248
        %v4862 = vunpack.c.l.b16 %v1249
        %v4863 = vunpack.c.h.b16 %v1249
        %v4864 = vunpack.c.l.b16 %v1250
        %v4865 = vunpack.c.h.b16 %v1250
        %v4866 = vunpack.c.l.b16 %v1251
        %v4867 = vunpack.c.h.b16 %v1251
        %v4868 = vunpack.c.l.b16 %v1252
        %v4869 = vunpack.c.h.b16 %v1252
        %v4870 = vunpack.c.l.b16 %v1253
        %v4871 = vunpack.c.h.b16 %v1253
        %v4872 = vunpack.c.l.b16 %v1254
        %v4873 = vunpack.c.h.b16 %v1254
        %v4874 = vunpack.c.l.b16 %v1255
        %v4875 = vunpack.c.h.b16 %v1255
        %v4876 = vunpack.c.l.b16 %v1256
        %v4877 = vunpack.c.h.b16 %v1256
        %v4878 = vunpack.c.l.b16 %v1257
        %v4879 = vunpack.c.h.b16 %v1257
        %v4880 = vunpack.c.l.b16 %v1258
        %v4881 = vunpack.c.h.b16 %v1258
        %v4882 = vunpack.c.l.b16 %v1259
        %v4883 = vunpack.c.h.b16 %v1259
        %v4884 = vunpack.c.l.b16 %v1260
        %v4885 = vunpack.c.h.b16 %v1260
        %v4886 = vunpack.c.l.b16 %v1261
        %v4887 = vunpack.c.h.b16 %v1261
        %v4888 = vunpack.c.l.b16 %v1262
        %v4889 = vunpack.c.h.b16 %v1262
        %v4890 = vunpack.c.l.b16 %v1263
        %v4891 = vunpack.c.h.b16 %v1263
        %v4892 = vunpack.c.l.b16 %v1264
        %v4893 = vunpack.c.h.b16 %v1264
        %v4894 = vunpack.c.l.b16 %v1265
        %v4895 = vunpack.c.h.b16 %v1265
        %v4896 = vunpack.c.l.b16 %v1266
        %v4897 = vunpack.c.h.b16 %v1266
        %v4898 = vunpack.c.l.b16 %v1267
        %v4899 = vunpack.c.h.b16 %v1267
        %v4900 = vunpack.c.l.b16 %v1268
        %v4901 = vunpack.c.h.b16 %v1268
        %v4902 = vunpack.c.l.b16 %v1269
        %v4903 = vunpack.c.h.b16 %v1269
        %v4904 = vunpack.c.l.b16 %v1270
        %v4905 = vunpack.c.h.b16 %v1270
        %v4906 = vunpack.c.l.b16 %v1271
        %v4907 = vunpack.c.h.b16 %v1271
        %v4908 = vunpack.c.l.b16 %v1272
        %v4909 = vunpack.c.h.b16 %v1272
        %v4910 = vunpack.c.l.b16 %v1273
        %v4911 = vunpack.c.h.b16 %v1273
        %v4912 = vunpack.c.l.b16 %v1274
        %v4913 = vunpack.c.h.b16 %v1274
        %v4914 = vunpack.c.l.b16 %v1275
        %v4915 = vunpack.c.h.b16 %v1275
        %v4916 = vunpack.c.l.b16 %v1276
        %v4917 = vunpack.c.h.b16 %v1276
        %v4918 = vunpack.c.l.b16 %v1277
        %v4919 = vunpack.c.h.b16 %v1277
        %v4920 = vunpack.c.l.b16 %v1278
        %v4921 = vunpack.c.h.b16 %v1278
        %v4922 = vunpack.c.l.b16 %v1279
        %v4923 = vunpack.c.h.b16 %v1279
        %v4924 = vunpack.c.l.b16 %v1280
        %v4925 = vunpack.c.h.b16 %v1280
        %v4926 = vunpack.c.l.b16 %v1281
        %v4927 = vunpack.c.h.b16 %v1281
        %v4928 = vunpack.c.l.b16 %v1282
        %v4929 = vunpack.c.h.b16 %v1282
        %v4930 = vunpack.c.l.b16 %v1283
        %v4931 = vunpack.c.h.b16 %v1283
        %v4932 = vunpack.c.l.b16 %v1284
        %v4933 = vunpack.c.h.b16 %v1284
        %v4934 = vunpack.c.l.b16 %v1285
        %v4935 = vunpack.c.h.b16 %v1285
        %v4936 = vunpack.c.l.b16 %v1286
        %v4937 = vunpack.c.h.b16 %v1286
        %v4938 = vunpack.c.l.b16 %v1287
        %v4939 = vunpack.c.h.b16 %v1287
        %v4940 = vunpack.c.l.b16 %v1288
        %v4941 = vunpack.c.h.b16 %v1288
        %v4942 = vunpack.c.l.b16 %v1289
        %v4943 = vunpack.c.h.b16 %v1289
        %v4944 = vunpack.c.l.b16 %v1290
        %v4945 = vunpack.c.h.b16 %v1290
        %v4946 = vunpack.c.l.b16 %v1291
        %v4947 = vunpack.c.h.b16 %v1291
        %v4948 = vunpack.c.l.b16 %v1292
        %v4949 = vunpack.c.h.b16 %v1292
        %v4950 = vunpack.c.l.b16 %v1293
        %v4951 = vunpack.c.h.b16 %v1293
        %v4952 = vunpack.c.l.b16 %v1294
        %v4953 = vunpack.c.h.b16 %v1294
        %v4954 = vunpack.c.l.b16 %v1295
        %v4955 = vunpack.c.h.b16 %v1295
        %v4956 = vunpack.c.l.b16 %v1296
        %v4957 = vunpack.c.h.b16 %v1296
        %v4958 = vunpack.c.l.b16 %v1297
        %v4959 = vunpack.c.h.b16 %v1297
        %v4960 = vunpack.c.l.b16 %v1298
        %v4961 = vunpack.c.h.b16 %v1298
        %v4962 = vunpack.c.l.b16 %v1299
        %v4963 = vunpack.c.h.b16 %v1299
        %v4964 = vunpack.c.l.b16 %v1300
        %v4965 = vunpack.c.h.b16 %v1300
        %v4966 = vunpack.c.l.b16 %v1301
        %v4967 = vunpack.c.h.b16 %v1301
        %v4968 = vunpack.c.l.b16 %v1302
        %v4969 = vunpack.c.h.b16 %v1302
        %v4970 = vunpack.c.l.b16 %v1303
        %v4971 = vunpack.c.h.b16 %v1303
        %v4972 = vunpack.c.l.b16 %v1304
        %v4973 = vunpack.c.h.b16 %v1304
        %v4974 = vunpack.c.l.b16 %v1305
        %v4975 = vunpack.c.h.b16 %v1305
        %v4976 = vunpack.c.l.b16 %v1306
        %v4977 = vunpack.c.h.b16 %v1306
        %v4978 = vunpack.c.l.b16 %v1307
        %v4979 = vunpack.c.h.b16 %v1307
        %v4980 = vunpack.c.l.b16 %v1308
        %v4981 = vunpack.c.h.b16 %v1308
        %v4982 = vunpack.c.l.b16 %v1309
        %v4983 = vunpack.c.h.b16 %v1309
        %v4984 = vunpack.c.l.b16 %v1310
        %v4985 = vunpack.c.h.b16 %v1310
        %v4986 = vunpack.c.l.b16 %v1311
        %v4987 = vunpack.c.h.b16 %v1311
        %v4988 = vunpack.c.l.b16 %v1312
        %v4989 = vunpack.c.h.b16 %v1312
        %v4990 = vunpack.c.l.b16 %v1313
        %v4991 = vunpack.c.h.b16 %v1313
        %v4992 = vunpack.c.l.b16 %v1314
        %v4993 = vunpack.c.h.b16 %v1314
        %v4994 = vunpack.c.l.b16 %v1315
        %v4995 = vunpack.c.h.b16 %v1315
        %v4996 = vunpack.c.l.b16 %v1316
        %v4997 = vunpack.c.h.b16 %v1316
        %v4998 = vunpack.c.l.b16 %v1317
        %v4999 = vunpack.c.h.b16 %v1317
        %v5000 = vunpack.c.l.b16 %v1318
        %v5001 = vunpack.c.h.b16 %v1318
        %v5002 = vunpack.c.l.b16 %v1319
        %v5003 = vunpack.c.h.b16 %v1319
        %v5004 = vunpack.c.l.b16 %v1320
        %v5005 = vunpack.c.h.b16 %v1320
        %v5006 = vunpack.c.l.b16 %v1321
        %v5007 = vunpack.c.h.b16 %v1321
        %v5008 = vunpack.c.l.b16 %v1322
        %v5009 = vunpack.c.h.b16 %v1322
        %v5010 = vunpack.c.l.b16 %v1323
        %v5011 = vunpack.c.h.b16 %v1323
        %v5012 = vunpack.c.l.b16 %v1324
        %v5013 = vunpack.c.h.b16 %v1324
        %v5014 = vunpack.c.l.b16 %v1325
        %v5015 = vunpack.c.h.b16 %v1325
        %v5016 = vunpack.c.l.b16 %v1326
        %v5017 = vunpack.c.h.b16 %v1326
        %v5018 = vunpack.c.l.b16 %v1327
        %v5019 = vunpack.c.h.b16 %v1327
        %v5020 = vunpack.c.l.b16 %v1328
        %v5021 = vunpack.c.h.b16 %v1328
        %v5022 = vunpack.c.l.b16 %v1329
        %v5023 = vunpack.c.h.b16 %v1329
        %v5024 = vunpack.c.l.b16 %v1330
        %v5025 = vunpack.c.h.b16 %v1330
        %v5026 = vunpack.c.l.b16 %v1331
        %v5027 = vunpack.c.h.b16 %v1331
        %v5028 = vunpack.c.l.b16 %v1332
        %v5029 = vunpack.c.h.b16 %v1332
        %v5030 = vunpack.c.l.b16 %v1333
        %v5031 = vunpack.c.h.b16 %v1333
        %v5032 = vunpack.c.l.b16 %v1334
        %v5033 = vunpack.c.h.b16 %v1334
        %v5034 = vunpack.c.l.b16 %v1335
        %v5035 = vunpack.c.h.b16 %v1335
        %v5036 = vunpack.c.l.b16 %v1336
        %v5037 = vunpack.c.h.b16 %v1336
        %v5038 = vunpack.c.l.b16 %v1337
        %v5039 = vunpack.c.h.b16 %v1337
        %v5040 = vunpack.c.l.b16 %v1338
        %v5041 = vunpack.c.h.b16 %v1338
        %v5042 = vunpack.c.l.b16 %v1339
        %v5043 = vunpack.c.h.b16 %v1339
        %v5044 = vunpack.c.l.b16 %v1340
        %v5045 = vunpack.c.h.b16 %v1340
        %v5046 = vunpack.c.l.b16 %v1341
        %v5047 = vunpack.c.h.b16 %v1341
        %v5048 = vunpack.c.l.b16 %v1342
        %v5049 = vunpack.c.h.b16 %v1342
        %v5050 = vunpack.c.l.b16 %v1343
        %v5051 = vunpack.c.h.b16 %v1343
        %v5052 = vunpack.c.l.b16 %v1344
        %v5053 = vunpack.c.h.b16 %v1344
        %v5054 = vunpack.c.l.b16 %v1345
        %v5055 = vunpack.c.h.b16 %v1345
        %v5056 = vunpack.c.l.b16 %v1346
        %v5057 = vunpack.c.h.b16 %v1346
        %v5058 = vunpack.c.l.b16 %v1347
        %v5059 = vunpack.c.h.b16 %v1347
        %v5060 = vunpack.c.l.b16 %v1348
        %v5061 = vunpack.c.h.b16 %v1348
        %v5062 = vunpack.c.l.b16 %v1349
        %v5063 = vunpack.c.h.b16 %v1349
        %v5064 = vunpack.c.l.b16 %v1350
        %v5065 = vunpack.c.h.b16 %v1350
        %v5066 = vunpack.c.l.b16 %v1351
        %v5067 = vunpack.c.h.b16 %v1351
        %v5068 = vunpack.c.l.b16 %v1352
        %v5069 = vunpack.c.h.b16 %v1352
        %v5070 = vunpack.c.l.b16 %v1353
        %v5071 = vunpack.c.h.b16 %v1353
        %v5072 = vunpack.c.l.b16 %v1354
        %v5073 = vunpack.c.h.b16 %v1354
        %v5074 = vunpack.c.l.b16 %v1355
        %v5075 = vunpack.c.h.b16 %v1355
        %v5076 = vunpack.c.l.b16 %v1356
        %v5077 = vunpack.c.h.b16 %v1356
        %v5078 = vunpack.c.l.b16 %v1357
        %v5079 = vunpack.c.h.b16 %v1357
        %v5080 = vunpack.c.l.b16 %v1358
        %v5081 = vunpack.c.h.b16 %v1358
        %v5082 = vunpack.c.l.b16 %v1359
        %v5083 = vunpack.c.h.b16 %v1359
        %v5084 = vunpack.c.l.b16 %v1360
        %v5085 = vunpack.c.h.b16 %v1360
        %v5086 = vunpack.c.l.b16 %v1361
        %v5087 = vunpack.c.h.b16 %v1361
        %v5088 = vunpack.c.l.b16 %v1362
        %v5089 = vunpack.c.h.b16 %v1362
        %v5090 = vunpack.c.l.b16 %v1363
        %v5091 = vunpack.c.h.b16 %v1363
        %v5092 = vunpack.c.l.b16 %v1364
        %v5093 = vunpack.c.h.b16 %v1364
        %v5094 = vunpack.c.l.b16 %v1365
        %v5095 = vunpack.c.h.b16 %v1365
        %v5096 = vunpack.c.l.b16 %v1366
        %v5097 = vunpack.c.h.b16 %v1366
        %v5098 = vunpack.c.l.b16 %v1367
        %v5099 = vunpack.c.h.b16 %v1367
        %v5100 = vunpack.c.l.b16 %v1368
        %v5101 = vunpack.c.h.b16 %v1368
        %v5102 = vunpack.c.l.b16 %v1369
        %v5103 = vunpack.c.h.b16 %v1369
        %v5104 = vunpack.c.l.b16 %v1370
        %v5105 = vunpack.c.h.b16 %v1370
        %v5106 = vunpack.c.l.b16 %v1371
        %v5107 = vunpack.c.h.b16 %v1371
        %v5108 = vunpack.c.l.b16 %v1372
        %v5109 = vunpack.c.h.b16 %v1372
        %v5110 = vunpack.c.l.b16 %v1373
        %v5111 = vunpack.c.h.b16 %v1373
        %v5112 = vunpack.c.l.b16 %v1374
        %v5113 = vunpack.c.h.b16 %v1374
        %v5114 = vunpack.c.l.b16 %v1375
        %v5115 = vunpack.c.h.b16 %v1375
        %v5116 = vunpack.c.l.b16 %v1376
        %v5117 = vunpack.c.h.b16 %v1376
        %v5118 = vunpack.c.l.b16 %v1377
        %v5119 = vunpack.c.h.b16 %v1377
        %v5120 = vunpack.c.l.b16 %v1378
        %v5121 = vunpack.c.h.b16 %v1378
        %v5122 = vunpack.c.l.b16 %v1379
        %v5123 = vunpack.c.h.b16 %v1379
        %v5124 = vunpack.c.l.b16 %v1380
        %v5125 = vunpack.c.h.b16 %v1380
        %v5126 = vunpack.c.l.b16 %v1381
        %v5127 = vunpack.c.h.b16 %v1381
        %v5128 = vunpack.c.l.b16 %v1382
        %v5129 = vunpack.c.h.b16 %v1382
        %v5130 = vunpack.c.l.b16 %v1383
        %v5131 = vunpack.c.h.b16 %v1383
        %v5132 = vunpack.c.l.b16 %v1384
        %v5133 = vunpack.c.h.b16 %v1384
        %v5134 = vunpack.c.l.b16 %v1385
        %v5135 = vunpack.c.h.b16 %v1385
        %v5136 = vunpack.c.l.b16 %v1386
        %v5137 = vunpack.c.h.b16 %v1386
        %v5138 = vunpack.c.l.b16 %v1387
        %v5139 = vunpack.c.h.b16 %v1387
        %v5140 = vunpack.c.l.b16 %v1388
        %v5141 = vunpack.c.h.b16 %v1388
        %v5142 = vunpack.c.l.b16 %v1389
        %v5143 = vunpack.c.h.b16 %v1389
        %v5144 = vunpack.c.l.b16 %v1390
        %v5145 = vunpack.c.h.b16 %v1390
        %v5146 = vunpack.c.l.b16 %v1391
        %v5147 = vunpack.c.h.b16 %v1391
        %v5148 = vunpack.c.l.b16 %v1392
        %v5149 = vunpack.c.h.b16 %v1392
        %v5150 = vunpack.c.l.b16 %v1393
        %v5151 = vunpack.c.h.b16 %v1393
        %v5152 = vunpack.c.l.b16 %v1394
        %v5153 = vunpack.c.h.b16 %v1394
        %v5154 = vunpack.c.l.b16 %v1395
        %v5155 = vunpack.c.h.b16 %v1395
        %v5156 = vunpack.c.l.b16 %v1396
        %v5157 = vunpack.c.h.b16 %v1396
        %v5158 = vunpack.c.l.b16 %v1397
        %v5159 = vunpack.c.h.b16 %v1397
        %v5160 = vunpack.c.l.b16 %v1398
        %v5161 = vunpack.c.h.b16 %v1398
        %v5162 = vunpack.c.l.b16 %v1399
        %v5163 = vunpack.c.h.b16 %v1399
        %v5164 = vunpack.c.l.b16 %v1400
        %v5165 = vunpack.c.h.b16 %v1400
        %v5166 = vunpack.c.l.b16 %v1401
        %v5167 = vunpack.c.h.b16 %v1401
        %v5168 = vunpack.c.l.b16 %v1402
        %v5169 = vunpack.c.h.b16 %v1402
        %v5170 = vunpack.c.l.b16 %v1403
        %v5171 = vunpack.c.h.b16 %v1403
        %v5172 = vunpack.c.l.b16 %v1404
        %v5173 = vunpack.c.h.b16 %v1404
        %v5174 = vunpack.c.l.b16 %v1405
        %v5175 = vunpack.c.h.b16 %v1405
        %v5176 = vunpack.c.l.b16 %v1406
        %v5177 = vunpack.c.h.b16 %v1406
        %v5178 = vunpack.c.l.b16 %v1407
        %v5179 = vunpack.c.h.b16 %v1407
        %v5180 = vunpack.c.l.b16 %v1408
        %v5181 = vunpack.c.h.b16 %v1408
        %v5182 = vunpack.c.l.b16 %v1409
        %v5183 = vunpack.c.h.b16 %v1409
        %v5184 = vunpack.c.l.b16 %v1410
        %v5185 = vunpack.c.h.b16 %v1410
        %v5186 = vunpack.c.l.b16 %v1411
        %v5187 = vunpack.c.h.b16 %v1411
        %v5188 = vunpack.c.l.b16 %v1412
        %v5189 = vunpack.c.h.b16 %v1412
        %v5190 = vunpack.c.l.b16 %v1413
        %v5191 = vunpack.c.h.b16 %v1413
        %v5192 = vunpack.c.l.b16 %v1414
        %v5193 = vunpack.c.h.b16 %v1414
        %v5194 = vunpack.c.l.b16 %v1415
        %v5195 = vunpack.c.h.b16 %v1415
        %v5196 = vunpack.c.l.b16 %v1416
        %v5197 = vunpack.c.h.b16 %v1416
        %v5198 = vunpack.c.l.b16 %v1417
        %v5199 = vunpack.c.h.b16 %v1417
        %v5200 = vunpack.c.l.b16 %v1418
        %v5201 = vunpack.c.h.b16 %v1418
        %v5202 = vunpack.c.l.b16 %v1419
        %v5203 = vunpack.c.h.b16 %v1419
        %v5204 = vunpack.c.l.b16 %v1420
        %v5205 = vunpack.c.h.b16 %v1420
        %v5206 = vunpack.c.l.b16 %v1421
        %v5207 = vunpack.c.h.b16 %v1421
        %v5208 = vunpack.c.l.b16 %v1422
        %v5209 = vunpack.c.h.b16 %v1422
        %v5210 = vunpack.c.l.b16 %v1423
        %v5211 = vunpack.c.h.b16 %v1423
        %v5212 = vunpack.c.l.b16 %v1424
        %v5213 = vunpack.c.h.b16 %v1424
        %v5214 = vunpack.c.l.b16 %v1425
        %v5215 = vunpack.c.h.b16 %v1425
        %v5216 = vunpack.c.l.b16 %v1426
        %v5217 = vunpack.c.h.b16 %v1426
        %v5218 = vunpack.c.l.b16 %v1427
        %v5219 = vunpack.c.h.b16 %v1427
        %v5220 = vunpack.c.l.b16 %v1428
        %v5221 = vunpack.c.h.b16 %v1428
        %v5222 = vunpack.c.l.b16 %v1429
        %v5223 = vunpack.c.h.b16 %v1429
        %v5224 = vunpack.c.l.b16 %v1430
        %v5225 = vunpack.c.h.b16 %v1430
        %v5226 = vunpack.c.l.b16 %v1431
        %v5227 = vunpack.c.h.b16 %v1431
        %v5228 = vunpack.c.l.b16 %v1432
        %v5229 = vunpack.c.h.b16 %v1432
        %v5230 = vunpack.c.l.b16 %v1433
        %v5231 = vunpack.c.h.b16 %v1433
        %v5232 = vunpack.c.l.b16 %v1434
        %v5233 = vunpack.c.h.b16 %v1434
        %v5234 = vunpack.c.l.b16 %v1435
        %v5235 = vunpack.c.h.b16 %v1435
        %v5236 = vunpack.c.l.b16 %v1436
        %v5237 = vunpack.c.h.b16 %v1436
        %v5238 = vunpack.c.l.b16 %v1437
        %v5239 = vunpack.c.h.b16 %v1437
        %v5240 = vunpack.c.l.b16 %v1438
        %v5241 = vunpack.c.h.b16 %v1438
        %v5242 = vunpack.c.l.b16 %v1439
        %v5243 = vunpack.c.h.b16 %v1439
        %v5244 = vunpack.c.l.b16 %v1440
        %v5245 = vunpack.c.h.b16 %v1440
        %v5246 = vunpack.c.l.b16 %v1441
        %v5247 = vunpack.c.h.b16 %v1441
        %v5248 = vunpack.c.l.b16 %v1442
        %v5249 = vunpack.c.h.b16 %v1442
        %v5250 = vunpack.c.l.b16 %v1443
        %v5251 = vunpack.c.h.b16 %v1443
        %v5252 = vunpack.c.l.b16 %v1444
        %v5253 = vunpack.c.h.b16 %v1444
        %v5254 = vunpack.c.l.b16 %v1445
        %v5255 = vunpack.c.h.b16 %v1445
        %v5256 = vunpack.c.l.b16 %v1446
        %v5257 = vunpack.c.h.b16 %v1446
        %v5258 = vunpack.c.l.b16 %v1447
        %v5259 = vunpack.c.h.b16 %v1447
        %v5260 = vunpack.c.l.b16 %v1448
        %v5261 = vunpack.c.h.b16 %v1448
        %v5262 = vunpack.c.l.b16 %v1449
        %v5263 = vunpack.c.h.b16 %v1449
        %v5264 = vunpack.c.l.b16 %v1450
        %v5265 = vunpack.c.h.b16 %v1450
        %v5266 = vunpack.c.l.b16 %v1451
        %v5267 = vunpack.c.h.b16 %v1451
        %v5268 = vunpack.c.l.b16 %v1452
        %v5269 = vunpack.c.h.b16 %v1452
        %v5270 = vunpack.c.l.b16 %v1453
        %v5271 = vunpack.c.h.b16 %v1453
        %v5272 = vunpack.c.l.b16 %v1454
        %v5273 = vunpack.c.h.b16 %v1454
        %v5274 = vunpack.c.l.b16 %v1455
        %v5275 = vunpack.c.h.b16 %v1455
        %v5276 = vunpack.c.l.b16 %v1456
        %v5277 = vunpack.c.h.b16 %v1456
        %v5278 = vunpack.c.l.b16 %v1457
        %v5279 = vunpack.c.h.b16 %v1457
        %v5280 = vpack.c.b16 %v3000, %v2976
        %v5281 = vpack.c.b16 %v3001, %v2977
        %v5282 = vpack.c.b16 %v3002, %v2978
        %v5283 = vpack.c.b16 %v3003, %v2979
        %v5284 = vpack.c.b16 %v3004, %v2980
        %v5285 = vpack.c.b16 %v3005, %v2981
        %v5286 = vpack.c.b16 %v3006, %v2982
        %v5287 = vpack.c.b16 %v3007, %v2983
        %v5288 = vpack.c.b16 %v3008, %v2984
        %v5289 = vpack.c.b16 %v3009, %v2985
        %v5290 = vpack.c.b16 %v3010, %v2986
        %v5291 = vpack.c.b16 %v3011, %v2987
        %v5292 = vpack.c.b16 %v3012, %v2988
        %v5293 = vpack.c.b16 %v3013, %v2989
        %v5294 = vpack.c.b16 %v3014, %v2990
        %v5295 = vpack.c.b16 %v3015, %v2991
        %v5296 = vpack.c.b16 %v3016, %v2992
        %v5297 = vpack.c.b16 %v3017, %v2993
        %v5298 = vpack.c.b16 %v3018, %v2994
        %v5299 = vpack.c.b16 %v3019, %v2995
        %v5300 = vpack.c.b16 %v3020, %v2996
        %v5301 = vpack.c.b16 %v3021, %v2997
        %v5302 = vpack.c.b16 %v3022, %v2998
        %v5303 = vpack.c.b16 %v3023, %v2999
        %v5304 = vpack.c.b16 %v3048, %v3024
        %v5305 = vpack.c.b16 %v3049, %v3025
        %v5306 = vpack.c.b16 %v3050, %v3026
        %v5307 = vpack.c.b16 %v3051, %v3027
        %v5308 = vpack.c.b16 %v3052, %v3028
        %v5309 = vpack.c.b16 %v3053, %v3029
        %v5310 = vpack.c.b16 %v3054, %v3030
        %v5311 = vpack.c.b16 %v3055, %v3031
        %v5312 = vpack.c.b16 %v3056, %v3032
        %v5313 = vpack.c.b16 %v3057, %v3033
        %v5314 = vpack.c.b16 %v3058, %v3034
        %v5315 = vpack.c.b16 %v3059, %v3035
        %v5316 = vpack.c.b16 %v3060, %v3036
        %v5317 = vpack.c.b16 %v3061, %v3037
        %v5318 = vpack.c.b16 %v3062, %v3038
        %v5319 = vpack.c.b16 %v3063, %v3039
        %v5320 = vpack.c.b16 %v3064, %v3040
        %v5321 = vpack.c.b16 %v3065, %v3041
        %v5322 = vpack.c.b16 %v3066, %v3042
        %v5323 = vpack.c.b16 %v3067, %v3043
        %v5324 = vpack.c.b16 %v3068, %v3044
        %v5325 = vpack.c.b16 %v3069, %v3045
        %v5326 = vpack.c.b16 %v3070, %v3046
        %v5327 = vpack.c.b16 %v3071, %v3047
        %v5328 = vpack.c.b16 %v3096, %v3072
        %v5329 = vpack.c.b16 %v3097, %v3073
        %v5330 = vpack.c.b16 %v3098, %v3074
        %v5331 = vpack.c.b16 %v3099, %v3075
        %v5332 = vpack.c.b16 %v3100, %v3076
        %v5333 = vpack.c.b16 %v3101, %v3077
        %v5334 = vpack.c.b16 %v3102, %v3078
        %v5335 = vpack.c.b16 %v3103, %v3079
        %v5336 = vpack.c.b16 %v3104, %v3080
        %v5337 = vpack.c.b16 %v3105, %v3081
        %v5338 = vpack.c.b16 %v3106, %v3082
        %v5339 = vpack.c.b16 %v3107, %v3083
        %v5340 = vpack.c.b16 %v3108, %v3084
        %v5341 = vpack.c.b16 %v3109, %v3085
        %v5342 = vpack.c.b16 %v3110, %v3086
        %v5343 = vpack.c.b16 %v3111, %v3087
        %v5344 = vpack.c.b16 %v3112, %v3088
        %v5345 = vpack.c.b16 %v3113, %v3089
        %v5346 = vpack.c.b16 %v3114, %v3090
        %v5347 = vpack.c.b16 %v3115, %v3091
        %v5348 = vpack.c.b16 %v3116, %v3092
        %v5349 = vpack.c.b16 %v3117, %v3093
        %v5350 = vpack.c.b16 %v3118, %v3094
        %v5351 = vpack.c.b16 %v3119, %v3095
        %v5352 = vpack.c.b16 %v3144, %v3120
        %v5353 = vpack.c.b16 %v3145, %v3121
        %v5354 = vpack.c.b16 %v3146, %v3122
        %v5355 = vpack.c.b16 %v3147, %v3123
        %v5356 = vpack.c.b16 %v3148, %v3124
        %v5357 = vpack.c.b16 %v3149, %v3125
        %v5358 = vpack.c.b16 %v3150, %v3126
        %v5359 = vpack.c.b16 %v3151, %v3127
        %v5360 = vpack.c.b16 %v3152, %v3128
        %v5361 = vpack.c.b16 %v3153, %v3129
        %v5362 = vpack.c.b16 %v3154, %v3130
        %v5363 = vpack.c.b16 %v3155, %v3131
        %v5364 = vpack.c.b16 %v3156, %v3132
        %v5365 = vpack.c.b16 %v3157, %v3133
        %v5366 = vpack.c.b16 %v3158, %v3134
        %v5367 = vpack.c.b16 %v3159, %v3135
        %v5368 = vpack.c.b16 %v3160, %v3136
        %v5369 = vpack.c.b16 %v3161, %v3137
        %v5370 = vpack.c.b16 %v3162, %v3138
        %v5371 = vpack.c.b16 %v3163, %v3139
        %v5372 = vpack.c.b16 %v3164, %v3140
        %v5373 = vpack.c.b16 %v3165, %v3141
        %v5374 = vpack.c.b16 %v3166, %v3142
        %v5375 = vpack.c.b16 %v3167, %v3143
        %v5376 = vpack.c.b16 %v3192, %v3168
        %v5377 = vpack.c.b16 %v3193, %v3169
        %v5378 = vpack.c.b16 %v3194, %v3170
        %v5379 = vpack.c.b16 %v3195, %v3171
        %v5380 = vpack.c.b16 %v3196, %v3172
        %v5381 = vpack.c.b16 %v3197, %v3173
        %v5382 = vpack.c.b16 %v3198, %v3174
        %v5383 = vpack.c.b16 %v3199, %v3175
        %v5384 = vpack.c.b16 %v3200, %v3176
        %v5385 = vpack.c.b16 %v3201, %v3177
        %v5386 = vpack.c.b16 %v3202, %v3178
        %v5387 = vpack.c.b16 %v3203, %v3179
        %v5388 = vpack.c.b16 %v3204, %v3180
        %v5389 = vpack.c.b16 %v3205, %v3181
        %v5390 = vpack.c.b16 %v3206, %v3182
        %v5391 = vpack.c.b16 %v3207, %v3183
        %v5392 = vpack.c.b16 %v3208, %v3184
        %v5393 = vpack.c.b16 %v3209, %v3185
        %v5394 = vpack.c.b16 %v3210, %v3186
        %v5395 = vpack.c.b16 %v3211, %v3187
        %v5396 = vpack.c.b16 %v3212, %v3188
        %v5397 = vpack.c.b16 %v3213, %v3189
        %v5398 = vpack.c.b16 %v3214, %v3190
        %v5399 = vpack.c.b16 %v3215, %v3191
        %v5400 = vpack.c.b16 %v3240, %v3216
        %v5401 = vpack.c.b16 %v3241, %v3217
        %v5402 = vpack.c.b16 %v3242, %v3218
        %v5403 = vpack.c.b16 %v3243, %v3219
        %v5404 = vpack.c.b16 %v3244, %v3220
        %v5405 = vpack.c.b16 %v3245, %v3221
        %v5406 = vpack.c.b16 %v3246, %v3222
        %v5407 = vpack.c.b16 %v3247, %v3223
        %v5408 = vpack.c.b16 %v3248, %v3224
        %v5409 = vpack.c.b16 %v3249, %v3225
        %v5410 = vpack.c.b16 %v3250, %v3226
        %v5411 = vpack.c.b16 %v3251, %v3227
        %v5412 = vpack.c.b16 %v3252, %v3228
        %v5413 = vpack.c.b16 %v3253, %v3229
        %v5414 = vpack.c.b16 %v3254, %v3230
        %v5415 = vpack.c.b16 %v3255, %v3231
        %v5416 = vpack.c.b16 %v3256, %v3232
        %v5417 = vpack.c.b16 %v3257, %v3233
        %v5418 = vpack.c.b16 %v3258, %v3234
        %v5419 = vpack.c.b16 %v3259, %v3235
        %v5420 = vpack.c.b16 %v3260, %v3236
        %v5421 = vpack.c.b16 %v3261, %v3237
        %v5422 = vpack.c.b16 %v3262, %v3238
        %v5423 = vpack.c.b16 %v3263, %v3239
        %v5424 = vpack.c.b16 %v3288, %v3264
        %v5425 = vpack.c.b16 %v3289, %v3265
        %v5426 = vpack.c.b16 %v3290, %v3266
        %v5427 = vpack.c.b16 %v3291, %v3267
        %v5428 = vpack.c.b16 %v3292, %v3268
        %v5429 = vpack.c.b16 %v3293, %v3269
        %v5430 = vpack.c.b16 %v3294, %v3270
        %v5431 = vpack.c.b16 %v3295, %v3271
        %v5432 = vpack.c.b16 %v3296, %v3272
        %v5433 = vpack.c.b16 %v3297, %v3273
        %v5434 = vpack.c.b16 %v3298, %v3274
        %v5435 = vpack.c.b16 %v3299, %v3275
        %v5436 = vpack.c.b16 %v3300, %v3276
        %v5437 = vpack.c.b16 %v3301, %v3277
        %v5438 = vpack.c.b16 %v3302, %v3278
        %v5439 = vpack.c.b16 %v3303, %v3279
        %v5440 = vpack.c.b16 %v3304, %v3280
        %v5441 = vpack.c.b16 %v3305, %v3281
        %v5442 = vpack.c.b16 %v3306, %v3282
        %v5443 = vpack.c.b16 %v3307, %v3283
        %v5444 = vpack.c.b16 %v3308, %v3284
        %v5445 = vpack.c.b16 %v3309, %v3285
        %v5446 = vpack.c.b16 %v3310, %v3286
        %v5447 = vpack.c.b16 %v3311, %v3287
        %v5448 = vpack.c.b16 %v3336, %v3312
        %v5449 = vpack.c.b16 %v3337, %v3313
        %v5450 = vpack.c.b16 %v3338, %v3314
        %v5451 = vpack.c.b16 %v3339, %v3315
        %v5452 = vpack.c.b16 %v3340, %v3316
        %v5453 = vpack.c.b16 %v3341, %v3317
        %v5454 = vpack.c.b16 %v3342, %v3318
        %v5455 = vpack.c.b16 %v3343, %v3319
        %v5456 = vpack.c.b16 %v3344, %v3320
        %v5457 = vpack.c.b16 %v3345, %v3321
        %v5458 = vpack.c.b16 %v3346, %v3322
        %v5459 = vpack.c.b16 %v3347, %v3323
        %v5460 = vpack.c.b16 %v3348, %v3324
        %v5461 = vpack.c.b16 %v3349, %v3325
        %v5462 = vpack.c.b16 %v3350, %v3326
        %v5463 = vpack.c.b16 %v3351, %v3327
        %v5464 = vpack.c.b16 %v3352, %v3328
        %v5465 = vpack.c.b16 %v3353, %v3329
        %v5466 = vpack.c.b16 %v3354, %v3330
        %v5467 = vpack.c.b16 %v3355, %v3331
        %v5468 = vpack.c.b16 %v3356, %v3332
        %v5469 = vpack.c.b16 %v3357, %v3333
        %v5470 = vpack.c.b16 %v3358, %v3334
        %v5471 = vpack.c.b16 %v3359, %v3335
        %v5472 = vpack.c.b16 %v3384, %v3360
        %v5473 = vpack.c.b16 %v3385, %v3361
        %v5474 = vpack.c.b16 %v3386, %v3362
        %v5475 = vpack.c.b16 %v3387, %v3363
        %v5476 = vpack.c.b16 %v3388, %v3364
        %v5477 = vpack.c.b16 %v3389, %v3365
        %v5478 = vpack.c.b16 %v3390, %v3366
        %v5479 = vpack.c.b16 %v3391, %v3367
        %v5480 = vpack.c.b16 %v3392, %v3368
        %v5481 = vpack.c.b16 %v3393, %v3369
        %v5482 = vpack.c.b16 %v3394, %v3370
        %v5483 = vpack.c.b16 %v3395, %v3371
        %v5484 = vpack.c.b16 %v3396, %v3372
        %v5485 = vpack.c.b16 %v3397, %v3373
        %v5486 = vpack.c.b16 %v3398, %v3374
        %v5487 = vpack.c.b16 %v3399, %v3375
        %v5488 = vpack.c.b16 %v3400, %v3376
        %v5489 = vpack.c.b16 %v3401, %v3377
        %v5490 = vpack.c.b16 %v3402, %v3378
        %v5491 = vpack.c.b16 %v3403, %v3379
        %v5492 = vpack.c.b16 %v3404, %v3380
        %v5493 = vpack.c.b16 %v3405, %v3381
        %v5494 = vpack.c.b16 %v3406, %v3382
        %v5495 = vpack.c.b16 %v3407, %v3383
        %v5496 = vpack.c.b16 %v3432, %v3408
        %v5497 = vpack.c.b16 %v3433, %v3409
        %v5498 = vpack.c.b16 %v3434, %v3410
        %v5499 = vpack.c.b16 %v3435, %v3411
        %v5500 = vpack.c.b16 %v3436, %v3412
        %v5501 = vpack.c.b16 %v3437, %v3413
        %v5502 = vpack.c.b16 %v3438, %v3414
        %v5503 = vpack.c.b16 %v3439, %v3415
        %v5504 = vpack.c.b16 %v3440, %v3416
        %v5505 = vpack.c.b16 %v3441, %v3417
        %v5506 = vpack.c.b16 %v3442, %v3418
        %v5507 = vpack.c.b16 %v3443, %v3419
        %v5508 = vpack.c.b16 %v3444, %v3420
        %v5509 = vpack.c.b16 %v3445, %v3421
        %v5510 = vpack.c.b16 %v3446, %v3422
        %v5511 = vpack.c.b16 %v3447, %v3423
        %v5512 = vpack.c.b16 %v3448, %v3424
        %v5513 = vpack.c.b16 %v3449, %v3425
        %v5514 = vpack.c.b16 %v3450, %v3426
        %v5515 = vpack.c.b16 %v3451, %v3427
        %v5516 = vpack.c.b16 %v3452, %v3428
        %v5517 = vpack.c.b16 %v3453, %v3429
        %v5518 = vpack.c.b16 %v3454, %v3430
        %v5519 = vpack.c.b16 %v3455, %v3431
        %v5520 = vpack.c.b16 %v3480, %v3456
        %v5521 = vpack.c.b16 %v3481, %v3457
        %v5522 = vpack.c.b16 %v3482, %v3458
        %v5523 = vpack.c.b16 %v3483, %v3459
        %v5524 = vpack.c.b16 %v3484, %v3460
        %v5525 = vpack.c.b16 %v3485, %v3461
        %v5526 = vpack.c.b16 %v3486, %v3462
        %v5527 = vpack.c.b16 %v3487, %v3463
        %v5528 = vpack.c.b16 %v3488, %v3464
        %v5529 = vpack.c.b16 %v3489, %v3465
        %v5530 = vpack.c.b16 %v3490, %v3466
        %v5531 = vpack.c.b16 %v3491, %v3467
        %v5532 = vpack.c.b16 %v3492, %v3468
        %v5533 = vpack.c.b16 %v3493, %v3469
        %v5534 = vpack.c.b16 %v3494, %v3470
        %v5535 = vpack.c.b16 %v3495, %v3471
        %v5536 = vpack.c.b16 %v3496, %v3472
        %v5537 = vpack.c.b16 %v3497, %v3473
        %v5538 = vpack.c.b16 %v3498, %v3474
        %v5539 = vpack.c.b16 %v3499, %v3475
        %v5540 = vpack.c.b16 %v3500, %v3476
        %v5541 = vpack.c.b16 %v3501, %v3477
        %v5542 = vpack.c.b16 %v3502, %v3478
        %v5543 = vpack.c.b16 %v3503, %v3479
        %v5544 = vpack.c.b16 %v3528, %v3504
        %v5545 = vpack.c.b16 %v3529, %v3505
        %v5546 = vpack.c.b16 %v3530, %v3506
        %v5547 = vpack.c.b16 %v3531, %v3507
        %v5548 = vpack.c.b16 %v3532, %v3508
        %v5549 = vpack.c.b16 %v3533, %v3509
        %v5550 = vpack.c.b16 %v3534, %v3510
        %v5551 = vpack.c.b16 %v3535, %v3511
        %v5552 = vpack.c.b16 %v3536, %v3512
        %v5553 = vpack.c.b16 %v3537, %v3513
        %v5554 = vpack.c.b16 %v3538, %v3514
        %v5555 = vpack.c.b16 %v3539, %v3515
        %v5556 = vpack.c.b16 %v3540, %v3516
        %v5557 = vpack.c.b16 %v3541, %v3517
        %v5558 = vpack.c.b16 %v3542, %v3518
        %v5559 = vpack.c.b16 %v3543, %v3519
        %v5560 = vpack.c.b16 %v3544, %v3520
        %v5561 = vpack.c.b16 %v3545, %v3521
        %v5562 = vpack.c.b16 %v3546, %v3522
        %v5563 = vpack.c.b16 %v3547, %v3523
        %v5564 = vpack.c.b16 %v3548, %v3524
        %v5565 = vpack.c.b16 %v3549, %v3525
        %v5566 = vpack.c.b16 %v3550, %v3526
        %v5567 = vpack.c.b16 %v3551, %v3527
        %v5568 = vpack.c.b16 %v3576, %v3552
        %v5569 = vpack.c.b16 %v3577, %v3553
        %v5570 = vpack.c.b16 %v3578, %v3554
        %v5571 = vpack.c.b16 %v3579, %v3555
        %v5572 = vpack.c.b16 %v3580, %v3556
        %v5573 = vpack.c.b16 %v3581, %v3557
        %v5574 = vpack.c.b16 %v3582, %v3558
        %v5575 = vpack.c.b16 %v3583, %v3559
        %v5576 = vpack.c.b16 %v3584, %v3560
        %v5577 = vpack.c.b16 %v3585, %v3561
        %v5578 = vpack.c.b16 %v3586, %v3562
        %v5579 = vpack.c.b16 %v3587, %v3563
        %v5580 = vpack.c.b16 %v3588, %v3564
        %v5581 = vpack.c.b16 %v3589, %v3565
        %v5582 = vpack.c.b16 %v3590, %v3566
        %v5583 = vpack.c.b16 %v3591, %v3567
        %v5584 = vpack.c.b16 %v3592, %v3568
        %v5585 = vpack.c.b16 %v3593, %v3569
        %v5586 = vpack.c.b16 %v3594, %v3570
        %v5587 = vpack.c.b16 %v3595, %v3571
        %v5588 = vpack.c.b16 %v3596, %v3572
        %v5589 = vpack.c.b16 %v3597, %v3573
        %v5590 = vpack.c.b16 %v3598, %v3574
        %v5591 = vpack.c.b16 %v3599, %v3575
        %v5592 = vpack.c.b16 %v3624, %v3600
        %v5593 = vpack.c.b16 %v3625, %v3601
        %v5594 = vpack.c.b16 %v3626, %v3602
        %v5595 = vpack.c.b16 %v3627, %v3603
        %v5596 = vpack.c.b16 %v3628, %v3604
        %v5597 = vpack.c.b16 %v3629, %v3605
        %v5598 = vpack.c.b16 %v3630, %v3606
        %v5599 = vpack.c.b16 %v3631, %v3607
        %v5600 = vpack.c.b16 %v3632, %v3608
        %v5601 = vpack.c.b16 %v3633, %v3609
        %v5602 = vpack.c.b16 %v3634, %v3610
        %v5603 = vpack.c.b16 %v3635, %v3611
        %v5604 = vpack.c.b16 %v3636, %v3612
        %v5605 = vpack.c.b16 %v3637, %v3613
        %v5606 = vpack.c.b16 %v3638, %v3614
        %v5607 = vpack.c.b16 %v3639, %v3615
        %v5608 = vpack.c.b16 %v3640, %v3616
        %v5609 = vpack.c.b16 %v3641, %v3617
        %v5610 = vpack.c.b16 %v3642, %v3618
        %v5611 = vpack.c.b16 %v3643, %v3619
        %v5612 = vpack.c.b16 %v3644, %v3620
        %v5613 = vpack.c.b16 %v3645, %v3621
        %v5614 = vpack.c.b16 %v3646, %v3622
        %v5615 = vpack.c.b16 %v3647, %v3623
        %v5616 = vpack.c.b16 %v3672, %v3648
        %v5617 = vpack.c.b16 %v3673, %v3649
        %v5618 = vpack.c.b16 %v3674, %v3650
        %v5619 = vpack.c.b16 %v3675, %v3651
        %v5620 = vpack.c.b16 %v3676, %v3652
        %v5621 = vpack.c.b16 %v3677, %v3653
        %v5622 = vpack.c.b16 %v3678, %v3654
        %v5623 = vpack.c.b16 %v3679, %v3655
        %v5624 = vpack.c.b16 %v3680, %v3656
        %v5625 = vpack.c.b16 %v3681, %v3657
        %v5626 = vpack.c.b16 %v3682, %v3658
        %v5627 = vpack.c.b16 %v3683, %v3659
        %v5628 = vpack.c.b16 %v3684, %v3660
        %v5629 = vpack.c.b16 %v3685, %v3661
        %v5630 = vpack.c.b16 %v3686, %v3662
        %v5631 = vpack.c.b16 %v3687, %v3663
        %v5632 = vpack.c.b16 %v3688, %v3664
        %v5633 = vpack.c.b16 %v3689, %v3665
        %v5634 = vpack.c.b16 %v3690, %v3666
        %v5635 = vpack.c.b16 %v3691, %v3667
        %v5636 = vpack.c.b16 %v3692, %v3668
        %v5637 = vpack.c.b16 %v3693, %v3669
        %v5638 = vpack.c.b16 %v3694, %v3670
        %v5639 = vpack.c.b16 %v3695, %v3671
        %v5640 = vpack.c.b16 %v3720, %v3696
        %v5641 = vpack.c.b16 %v3721, %v3697
        %v5642 = vpack.c.b16 %v3722, %v3698
        %v5643 = vpack.c.b16 %v3723, %v3699
        %v5644 = vpack.c.b16 %v3724, %v3700
        %v5645 = vpack.c.b16 %v3725, %v3701
        %v5646 = vpack.c.b16 %v3726, %v3702
        %v5647 = vpack.c.b16 %v3727, %v3703
        %v5648 = vpack.c.b16 %v3728, %v3704
        %v5649 = vpack.c.b16 %v3729, %v3705
        %v5650 = vpack.c.b16 %v3730, %v3706
        %v5651 = vpack.c.b16 %v3731, %v3707
        %v5652 = vpack.c.b16 %v3732, %v3708
        %v5653 = vpack.c.b16 %v3733, %v3709
        %v5654 = vpack.c.b16 %v3734, %v3710
        %v5655 = vpack.c.b16 %v3735, %v3711
        %v5656 = vpack.c.b16 %v3736, %v3712
        %v5657 = vpack.c.b16 %v3737, %v3713
        %v5658 = vpack.c.b16 %v3738, %v3714
        %v5659 = vpack.c.b16 %v3739, %v3715
        %v5660 = vpack.c.b16 %v3740, %v3716
        %v5661 = vpack.c.b16 %v3741, %v3717
        %v5662 = vpack.c.b16 %v3742, %v3718
        %v5663 = vpack.c.b16 %v3743, %v3719
        %v5664 = vpack.c.b16 %v3768, %v3744
        %v5665 = vpack.c.b16 %v3769, %v3745
        %v5666 = vpack.c.b16 %v3770, %v3746
        %v5667 = vpack.c.b16 %v3771, %v3747
        %v5668 = vpack.c.b16 %v3772, %v3748
        %v5669 = vpack.c.b16 %v3773, %v3749
        %v5670 = vpack.c.b16 %v3774, %v3750
        %v5671 = vpack.c.b16 %v3775, %v3751
        %v5672 = vpack.c.b16 %v3776, %v3752
        %v5673 = vpack.c.b16 %v3777, %v3753
        %v5674 = vpack.c.b16 %v3778, %v3754
        %v5675 = vpack.c.b16 %v3779, %v3755
        %v5676 = vpack.c.b16 %v3780, %v3756
        %v5677 = vpack.c.b16 %v3781, %v3757
        %v5678 = vpack.c.b16 %v3782, %v3758
        %v5679 = vpack.c.b16 %v3783, %v3759
        %v5680 = vpack.c.b16 %v3784, %v3760
        %v5681 = vpack.c.b16 %v3785, %v3761
        %v5682 = vpack.c.b16 %v3786, %v3762
        %v5683 = vpack.c.b16 %v3787, %v3763
        %v5684 = vpack.c.b16 %v3788, %v3764
        %v5685 = vpack.c.b16 %v3789, %v3765
        %v5686 = vpack.c.b16 %v3790, %v3766
        %v5687 = vpack.c.b16 %v3791, %v3767
        %v5688 = vpack.c.b16 %v3816, %v3792
        %v5689 = vpack.c.b16 %v3817, %v3793
        %v5690 = vpack.c.b16 %v3818, %v3794
        %v5691 = vpack.c.b16 %v3819, %v3795
        %v5692 = vpack.c.b16 %v3820, %v3796
        %v5693 = vpack.c.b16 %v3821, %v3797
        %v5694 = vpack.c.b16 %v3822, %v3798
        %v5695 = vpack.c.b16 %v3823, %v3799
        %v5696 = vpack.c.b16 %v3824, %v3800
        %v5697 = vpack.c.b16 %v3825, %v3801
        %v5698 = vpack.c.b16 %v3826, %v3802
        %v5699 = vpack.c.b16 %v3827, %v3803
        %v5700 = vpack.c.b16 %v3828, %v3804
        %v5701 = vpack.c.b16 %v3829, %v3805
        %v5702 = vpack.c.b16 %v3830, %v3806
        %v5703 = vpack.c.b16 %v3831, %v3807
        %v5704 = vpack.c.b16 %v3832, %v3808
        %v5705 = vpack.c.b16 %v3833, %v3809
        %v5706 = vpack.c.b16 %v3834, %v3810
        %v5707 = vpack.c.b16 %v3835, %v3811
        %v5708 = vpack.c.b16 %v3836, %v3812
        %v5709 = vpack.c.b16 %v3837, %v3813
        %v5710 = vpack.c.b16 %v3838, %v3814
        %v5711 = vpack.c.b16 %v3839, %v3815
        %v5712 = vpack.c.b16 %v3864, %v3840
        %v5713 = vpack.c.b16 %v3865, %v3841
        %v5714 = vpack.c.b16 %v3866, %v3842
        %v5715 = vpack.c.b16 %v3867, %v3843
        %v5716 = vpack.c.b16 %v3868, %v3844
        %v5717 = vpack.c.b16 %v3869, %v3845
        %v5718 = vpack.c.b16 %v3870, %v3846
        %v5719 = vpack.c.b16 %v3871, %v3847
        %v5720 = vpack.c.b16 %v3872, %v3848
        %v5721 = vpack.c.b16 %v3873, %v3849
        %v5722 = vpack.c.b16 %v3874, %v3850
        %v5723 = vpack.c.b16 %v3875, %v3851
        %v5724 = vpack.c.b16 %v3876, %v3852
        %v5725 = vpack.c.b16 %v3877, %v3853
        %v5726 = vpack.c.b16 %v3878, %v3854
        %v5727 = vpack.c.b16 %v3879, %v3855
        %v5728 = vpack.c.b16 %v3880, %v3856
        %v5729 = vpack.c.b16 %v3881, %v3857
        %v5730 = vpack.c.b16 %v3882, %v3858
        %v5731 = vpack.c.b16 %v3883, %v3859
        %v5732 = vpack.c.b16 %v3884, %v3860
        %v5733 = vpack.c.b16 %v3885, %v3861
        %v5734 = vpack.c.b16 %v3886, %v3862
        %v5735 = vpack.c.b16 %v3887, %v3863
        %v5736 = vpack.c.b16 %v3912, %v3888
        %v5737 = vpack.c.b16 %v3913, %v3889
        %v5738 = vpack.c.b16 %v3914, %v3890
        %v5739 = vpack.c.b16 %v3915, %v3891
        %v5740 = vpack.c.b16 %v3916, %v3892
        %v5741 = vpack.c.b16 %v3917, %v3893
        %v5742 = vpack.c.b16 %v3918, %v3894
        %v5743 = vpack.c.b16 %v3919, %v3895
        %v5744 = vpack.c.b16 %v3920, %v3896
        %v5745 = vpack.c.b16 %v3921, %v3897
        %v5746 = vpack.c.b16 %v3922, %v3898
        %v5747 = vpack.c.b16 %v3923, %v3899
        %v5748 = vpack.c.b16 %v3924, %v3900
        %v5749 = vpack.c.b16 %v3925, %v3901
        %v5750 = vpack.c.b16 %v3926, %v3902
        %v5751 = vpack.c.b16 %v3927, %v3903
        %v5752 = vpack.c.b16 %v3928, %v3904
        %v5753 = vpack.c.b16 %v3929, %v3905
        %v5754 = vpack.c.b16 %v3930, %v3906
        %v5755 = vpack.c.b16 %v3931, %v3907
        %v5756 = vpack.c.b16 %v3932, %v3908
        %v5757 = vpack.c.b16 %v3933, %v3909
        %v5758 = vpack.c.b16 %v3934, %v3910
        %v5759 = vpack.c.b16 %v3935, %v3911
        %v5760 = vpack.c.b16 %v3960, %v3936
        %v5761 = vpack.c.b16 %v3961, %v3937
        %v5762 = vpack.c.b16 %v3962, %v3938
        %v5763 = vpack.c.b16 %v3963, %v3939
        %v5764 = vpack.c.b16 %v3964, %v3940
        %v5765 = vpack.c.b16 %v3965, %v3941
        %v5766 = vpack.c.b16 %v3966, %v3942
        %v5767 = vpack.c.b16 %v3967, %v3943
        %v5768 = vpack.c.b16 %v3968, %v3944
        %v5769 = vpack.c.b16 %v3969, %v3945
        %v5770 = vpack.c.b16 %v3970, %v3946
        %v5771 = vpack.c.b16 %v3971, %v3947
        %v5772 = vpack.c.b16 %v3972, %v3948
        %v5773 = vpack.c.b16 %v3973, %v3949
        %v5774 = vpack.c.b16 %v3974, %v3950
        %v5775 = vpack.c.b16 %v3975, %v3951
        %v5776 = vpack.c.b16 %v3976, %v3952
        %v5777 = vpack.c.b16 %v3977, %v3953
        %v5778 = vpack.c.b16 %v3978, %v3954
        %v5779 = vpack.c.b16 %v3979, %v3955
        %v5780 = vpack.c.b16 %v3980, %v3956
        %v5781 = vpack.c.b16 %v3981, %v3957
        %v5782 = vpack.c.b16 %v3982, %v3958
        %v5783 = vpack.c.b16 %v3983, %v3959
        %v5784 = vpack.c.b16 %v4008, %v3984
        %v5785 = vpack.c.b16 %v4009, %v3985
        %v5786 = vpack.c.b16 %v4010, %v3986
        %v5787 = vpack.c.b16 %v4011, %v3987
        %v5788 = vpack.c.b16 %v4012, %v3988
        %v5789 = vpack.c.b16 %v4013, %v3989
        %v5790 = vpack.c.b16 %v4014, %v3990
        %v5791 = vpack.c.b16 %v4015, %v3991
        %v5792 = vpack.c.b16 %v4016, %v3992
        %v5793 = vpack.c.b16 %v4017, %v3993
        %v5794 = vpack.c.b16 %v4018, %v3994
        %v5795 = vpack.c.b16 %v4019, %v3995
        %v5796 = vpack.c.b16 %v4020, %v3996
        %v5797 = vpack.c.b16 %v4021, %v3997
        %v5798 = vpack.c.b16 %v4022, %v3998
        %v5799 = vpack.c.b16 %v4023, %v3999
        %v5800 = vpack.c.b16 %v4024, %v4000
        %v5801 = vpack.c.b16 %v4025, %v4001
        %v5802 = vpack.c.b16 %v4026, %v4002
        %v5803 = vpack.c.b16 %v4027, %v4003
        %v5804 = vpack.c.b16 %v4028, %v4004
        %v5805 = vpack.c.b16 %v4029, %v4005
        %v5806 = vpack.c.b16 %v4030, %v4006
        %v5807 = vpack.c.b16 %v4031, %v4007
        %v5808 = vpack.c.b16 %v4056, %v4032
        %v5809 = vpack.c.b16 %v4057, %v4033
        %v5810 = vpack.c.b16 %v4058, %v4034
        %v5811 = vpack.c.b16 %v4059, %v4035
        %v5812 = vpack.c.b16 %v4060, %v4036
        %v5813 = vpack.c.b16 %v4061, %v4037
        %v5814 = vpack.c.b16 %v4062, %v4038
        %v5815 = vpack.c.b16 %v4063, %v4039
        %v5816 = vpack.c.b16 %v4064, %v4040
        %v5817 = vpack.c.b16 %v4065, %v4041
        %v5818 = vpack.c.b16 %v4066, %v4042
        %v5819 = vpack.c.b16 %v4067, %v4043
        %v5820 = vpack.c.b16 %v4068, %v4044
        %v5821 = vpack.c.b16 %v4069, %v4045
        %v5822 = vpack.c.b16 %v4070, %v4046
        %v5823 = vpack.c.b16 %v4071, %v4047
        %v5824 = vpack.c.b16 %v4072, %v4048
        %v5825 = vpack.c.b16 %v4073, %v4049
        %v5826 = vpack.c.b16 %v4074, %v4050
        %v5827 = vpack.c.b16 %v4075, %v4051
        %v5828 = vpack.c.b16 %v4076, %v4052
        %v5829 = vpack.c.b16 %v4077, %v4053
        %v5830 = vpack.c.b16 %v4078, %v4054
        %v5831 = vpack.c.b16 %v4079, %v4055
        %v5832 = vpack.c.b16 %v4104, %v4080
        %v5833 = vpack.c.b16 %v4105, %v4081
        %v5834 = vpack.c.b16 %v4106, %v4082
        %v5835 = vpack.c.b16 %v4107, %v4083
        %v5836 = vpack.c.b16 %v4108, %v4084
        %v5837 = vpack.c.b16 %v4109, %v4085
        %v5838 = vpack.c.b16 %v4110, %v4086
        %v5839 = vpack.c.b16 %v4111, %v4087
        %v5840 = vpack.c.b16 %v4112, %v4088
        %v5841 = vpack.c.b16 %v4113, %v4089
        %v5842 = vpack.c.b16 %v4114, %v4090
        %v5843 = vpack.c.b16 %v4115, %v4091
        %v5844 = vpack.c.b16 %v4116, %v4092
        %v5845 = vpack.c.b16 %v4117, %v4093
        %v5846 = vpack.c.b16 %v4118, %v4094
        %v5847 = vpack.c.b16 %v4119, %v4095
        %v5848 = vpack.c.b16 %v4120, %v4096
        %v5849 = vpack.c.b16 %v4121, %v4097
        %v5850 = vpack.c.b16 %v4122, %v4098
        %v5851 = vpack.c.b16 %v4123, %v4099
        %v5852 = vpack.c.b16 %v4124, %v4100
        %v5853 = vpack.c.b16 %v4125, %v4101
        %v5854 = vpack.c.b16 %v4126, %v4102
        %v5855 = vpack.c.b16 %v4127, %v4103
        %v5856 = vpack.c.b16 %v4152, %v4128
        %v5857 = vpack.c.b16 %v4153, %v4129
        %v5858 = vpack.c.b16 %v4154, %v4130
        %v5859 = vpack.c.b16 %v4155, %v4131
        %v5860 = vpack.c.b16 %v4156, %v4132
        %v5861 = vpack.c.b16 %v4157, %v4133
        %v5862 = vpack.c.b16 %v4158, %v4134
        %v5863 = vpack.c.b16 %v4159, %v4135
        %v5864 = vpack.c.b16 %v4160, %v4136
        %v5865 = vpack.c.b16 %v4161, %v4137
        %v5866 = vpack.c.b16 %v4162, %v4138
        %v5867 = vpack.c.b16 %v4163, %v4139
        %v5868 = vpack.c.b16 %v4164, %v4140
        %v5869 = vpack.c.b16 %v4165, %v4141
        %v5870 = vpack.c.b16 %v4166, %v4142
        %v5871 = vpack.c.b16 %v4167, %v4143
        %v5872 = vpack.c.b16 %v4168, %v4144
        %v5873 = vpack.c.b16 %v4169, %v4145
        %v5874 = vpack.c.b16 %v4170, %v4146
        %v5875 = vpack.c.b16 %v4171, %v4147
        %v5876 = vpack.c.b16 %v4172, %v4148
        %v5877 = vpack.c.b16 %v4173, %v4149
        %v5878 = vpack.c.b16 %v4174, %v4150
        %v5879 = vpack.c.b16 %v4175, %v4151
        %v5880 = vpack.c.b16 %v4200, %v4176
        %v5881 = vpack.c.b16 %v4201, %v4177
        %v5882 = vpack.c.b16 %v4202, %v4178
        %v5883 = vpack.c.b16 %v4203, %v4179
        %v5884 = vpack.c.b16 %v4204, %v4180
        %v5885 = vpack.c.b16 %v4205, %v4181
        %v5886 = vpack.c.b16 %v4206, %v4182
        %v5887 = vpack.c.b16 %v4207, %v4183
        %v5888 = vpack.c.b16 %v4208, %v4184
        %v5889 = vpack.c.b16 %v4209, %v4185
        %v5890 = vpack.c.b16 %v4210, %v4186
        %v5891 = vpack.c.b16 %v4211, %v4187
        %v5892 = vpack.c.b16 %v4212, %v4188
        %v5893 = vpack.c.b16 %v4213, %v4189
        %v5894 = vpack.c.b16 %v4214, %v4190
        %v5895 = vpack.c.b16 %v4215, %v4191
        %v5896 = vpack.c.b16 %v4216, %v4192
        %v5897 = vpack.c.b16 %v4217, %v4193
        %v5898 = vpack.c.b16 %v4218, %v4194
        %v5899 = vpack.c.b16 %v4219, %v4195
        %v5900 = vpack.c.b16 %v4220, %v4196
        %v5901 = vpack.c.b16 %v4221, %v4197
        %v5902 = vpack.c.b16 %v4222, %v4198
        %v5903 = vpack.c.b16 %v4223, %v4199
        %v5904 = vpack.c.b16 %v4248, %v4224
        %v5905 = vpack.c.b16 %v4249, %v4225
        %v5906 = vpack.c.b16 %v4250, %v4226
        %v5907 = vpack.c.b16 %v4251, %v4227
        %v5908 = vpack.c.b16 %v4252, %v4228
        %v5909 = vpack.c.b16 %v4253, %v4229
        %v5910 = vpack.c.b16 %v4254, %v4230
        %v5911 = vpack.c.b16 %v4255, %v4231
        %v5912 = vpack.c.b16 %v4256, %v4232
        %v5913 = vpack.c.b16 %v4257, %v4233
        %v5914 = vpack.c.b16 %v4258, %v4234
        %v5915 = vpack.c.b16 %v4259, %v4235
        %v5916 = vpack.c.b16 %v4260, %v4236
        %v5917 = vpack.c.b16 %v4261, %v4237
        %v5918 = vpack.c.b16 %v4262, %v4238
        %v5919 = vpack.c.b16 %v4263, %v4239
        %v5920 = vpack.c.b16 %v4264, %v4240
        %v5921 = vpack.c.b16 %v4265, %v4241
        %v5922 = vpack.c.b16 %v4266, %v4242
        %v5923 = vpack.c.b16 %v4267, %v4243
        %v5924 = vpack.c.b16 %v4268, %v4244
        %v5925 = vpack.c.b16 %v4269, %v4245
        %v5926 = vpack.c.b16 %v4270, %v4246
        %v5927 = vpack.c.b16 %v4271, %v4247
        %v5928 = vpack.c.b16 %v4296, %v4272
        %v5929 = vpack.c.b16 %v4297, %v4273
        %v5930 = vpack.c.b16 %v4298, %v4274
        %v5931 = vpack.c.b16 %v4299, %v4275
        %v5932 = vpack.c.b16 %v4300, %v4276
        %v5933 = vpack.c.b16 %v4301, %v4277
        %v5934 = vpack.c.b16 %v4302, %v4278
        %v5935 = vpack.c.b16 %v4303, %v4279
        %v5936 = vpack.c.b16 %v4304, %v4280
        %v5937 = vpack.c.b16 %v4305, %v4281
        %v5938 = vpack.c.b16 %v4306, %v4282
        %v5939 = vpack.c.b16 %v4307, %v4283
        %v5940 = vpack.c.b16 %v4308, %v4284
        %v5941 = vpack.c.b16 %v4309, %v4285
        %v5942 = vpack.c.b16 %v4310, %v4286
        %v5943 = vpack.c.b16 %v4311, %v4287
        %v5944 = vpack.c.b16 %v4312, %v4288
        %v5945 = vpack.c.b16 %v4313, %v4289
        %v5946 = vpack.c.b16 %v4314, %v4290
        %v5947 = vpack.c.b16 %v4315, %v4291
        %v5948 = vpack.c.b16 %v4316, %v4292
        %v5949 = vpack.c.b16 %v4317, %v4293
        %v5950 = vpack.c.b16 %v4318, %v4294
        %v5951 = vpack.c.b16 %v4319, %v4295
        %v5952 = vpack.c.b16 %v4344, %v4320
        %v5953 = vpack.c.b16 %v4345, %v4321
        %v5954 = vpack.c.b16 %v4346, %v4322
        %v5955 = vpack.c.b16 %v4347, %v4323
        %v5956 = vpack.c.b16 %v4348, %v4324
        %v5957 = vpack.c.b16 %v4349, %v4325
        %v5958 = vpack.c.b16 %v4350, %v4326
        %v5959 = vpack.c.b16 %v4351, %v4327
        %v5960 = vpack.c.b16 %v4352, %v4328
        %v5961 = vpack.c.b16 %v4353, %v4329
        %v5962 = vpack.c.b16 %v4354, %v4330
        %v5963 = vpack.c.b16 %v4355, %v4331
        %v5964 = vpack.c.b16 %v4356, %v4332
        %v5965 = vpack.c.b16 %v4357, %v4333
        %v5966 = vpack.c.b16 %v4358, %v4334
        %v5967 = vpack.c.b16 %v4359, %v4335
        %v5968 = vpack.c.b16 %v4360, %v4336
        %v5969 = vpack.c.b16 %v4361, %v4337
        %v5970 = vpack.c.b16 %v4362, %v4338
        %v5971 = vpack.c.b16 %v4363, %v4339
        %v5972 = vpack.c.b16 %v4364, %v4340
        %v5973 = vpack.c.b16 %v4365, %v4341
        %v5974 = vpack.c.b16 %v4366, %v4342
        %v5975 = vpack.c.b16 %v4367, %v4343
        %v5976 = vpack.c.b16 %v4392, %v4368
        %v5977 = vpack.c.b16 %v4393, %v4369
        %v5978 = vpack.c.b16 %v4394, %v4370
        %v5979 = vpack.c.b16 %v4395, %v4371
        %v5980 = vpack.c.b16 %v4396, %v4372
        %v5981 = vpack.c.b16 %v4397, %v4373
        %v5982 = vpack.c.b16 %v4398, %v4374
        %v5983 = vpack.c.b16 %v4399, %v4375
        %v5984 = vpack.c.b16 %v4400, %v4376
        %v5985 = vpack.c.b16 %v4401, %v4377
        %v5986 = vpack.c.b16 %v4402, %v4378
        %v5987 = vpack.c.b16 %v4403, %v4379
        %v5988 = vpack.c.b16 %v4404, %v4380
        %v5989 = vpack.c.b16 %v4405, %v4381
        %v5990 = vpack.c.b16 %v4406, %v4382
        %v5991 = vpack.c.b16 %v4407, %v4383
        %v5992 = vpack.c.b16 %v4408, %v4384
        %v5993 = vpack.c.b16 %v4409, %v4385
        %v5994 = vpack.c.b16 %v4410, %v4386
        %v5995 = vpack.c.b16 %v4411, %v4387
        %v5996 = vpack.c.b16 %v4412, %v4388
        %v5997 = vpack.c.b16 %v4413, %v4389
        %v5998 = vpack.c.b16 %v4414, %v4390
        %v5999 = vpack.c.b16 %v4415, %v4391
        %v6000 = vpack.c.b16 %v4440, %v4416
        %v6001 = vpack.c.b16 %v4441, %v4417
        %v6002 = vpack.c.b16 %v4442, %v4418
        %v6003 = vpack.c.b16 %v4443, %v4419
        %v6004 = vpack.c.b16 %v4444, %v4420
        %v6005 = vpack.c.b16 %v4445, %v4421
        %v6006 = vpack.c.b16 %v4446, %v4422
        %v6007 = vpack.c.b16 %v4447, %v4423
        %v6008 = vpack.c.b16 %v4448, %v4424
        %v6009 = vpack.c.b16 %v4449, %v4425
        %v6010 = vpack.c.b16 %v4450, %v4426
        %v6011 = vpack.c.b16 %v4451, %v4427
        %v6012 = vpack.c.b16 %v4452, %v4428
        %v6013 = vpack.c.b16 %v4453, %v4429
        %v6014 = vpack.c.b16 %v4454, %v4430
        %v6015 = vpack.c.b16 %v4455, %v4431
        %v6016 = vpack.c.b16 %v4456, %v4432
        %v6017 = vpack.c.b16 %v4457, %v4433
        %v6018 = vpack.c.b16 %v4458, %v4434
        %v6019 = vpack.c.b16 %v4459, %v4435
        %v6020 = vpack.c.b16 %v4460, %v4436
        %v6021 = vpack.c.b16 %v4461, %v4437
        %v6022 = vpack.c.b16 %v4462, %v4438
        %v6023 = vpack.c.b16 %v4463, %v4439
        %v6024 = vpack.c.b16 %v4488, %v4464
        %v6025 = vpack.c.b16 %v4489, %v4465
        %v6026 = vpack.c.b16 %v4490, %v4466
        %v6027 = vpack.c.b16 %v4491, %v4467
        %v6028 = vpack.c.b16 %v4492, %v4468
        %v6029 = vpack.c.b16 %v4493, %v4469
        %v6030 = vpack.c.b16 %v4494, %v4470
        %v6031 = vpack.c.b16 %v4495, %v4471
        %v6032 = vpack.c.b16 %v4496, %v4472
        %v6033 = vpack.c.b16 %v4497, %v4473
        %v6034 = vpack.c.b16 %v4498, %v4474
        %v6035 = vpack.c.b16 %v4499, %v4475
        %v6036 = vpack.c.b16 %v4500, %v4476
        %v6037 = vpack.c.b16 %v4501, %v4477
        %v6038 = vpack.c.b16 %v4502, %v4478
        %v6039 = vpack.c.b16 %v4503, %v4479
        %v6040 = vpack.c.b16 %v4504, %v4480
        %v6041 = vpack.c.b16 %v4505, %v4481
        %v6042 = vpack.c.b16 %v4506, %v4482
        %v6043 = vpack.c.b16 %v4507, %v4483
        %v6044 = vpack.c.b16 %v4508, %v4484
        %v6045 = vpack.c.b16 %v4509, %v4485
        %v6046 = vpack.c.b16 %v4510, %v4486
        %v6047 = vpack.c.b16 %v4511, %v4487
        %v6048 = vpack.c.b16 %v4536, %v4512
        %v6049 = vpack.c.b16 %v4537, %v4513
        %v6050 = vpack.c.b16 %v4538, %v4514
        %v6051 = vpack.c.b16 %v4539, %v4515
        %v6052 = vpack.c.b16 %v4540, %v4516
        %v6053 = vpack.c.b16 %v4541, %v4517
        %v6054 = vpack.c.b16 %v4542, %v4518
        %v6055 = vpack.c.b16 %v4543, %v4519
        %v6056 = vpack.c.b16 %v4544, %v4520
        %v6057 = vpack.c.b16 %v4545, %v4521
        %v6058 = vpack.c.b16 %v4546, %v4522
        %v6059 = vpack.c.b16 %v4547, %v4523
        %v6060 = vpack.c.b16 %v4548, %v4524
        %v6061 = vpack.c.b16 %v4549, %v4525
        %v6062 = vpack.c.b16 %v4550, %v4526
        %v6063 = vpack.c.b16 %v4551, %v4527
        %v6064 = vpack.c.b16 %v4552, %v4528
        %v6065 = vpack.c.b16 %v4553, %v4529
        %v6066 = vpack.c.b16 %v4554, %v4530
        %v6067 = vpack.c.b16 %v4555, %v4531
        %v6068 = vpack.c.b16 %v4556, %v4532
        %v6069 = vpack.c.b16 %v4557, %v4533
        %v6070 = vpack.c.b16 %v4558, %v4534
        %v6071 = vpack.c.b16 %v4559, %v4535
        %v6072 = vpack.c.b16 %v4584, %v4560
        %v6073 = vpack.c.b16 %v4585, %v4561
        %v6074 = vpack.c.b16 %v4586, %v4562
        %v6075 = vpack.c.b16 %v4587, %v4563
        %v6076 = vpack.c.b16 %v4588, %v4564
        %v6077 = vpack.c.b16 %v4589, %v4565
        %v6078 = vpack.c.b16 %v4590, %v4566
        %v6079 = vpack.c.b16 %v4591, %v4567
        %v6080 = vpack.c.b16 %v4592, %v4568
        %v6081 = vpack.c.b16 %v4593, %v4569
        %v6082 = vpack.c.b16 %v4594, %v4570
        %v6083 = vpack.c.b16 %v4595, %v4571
        %v6084 = vpack.c.b16 %v4596, %v4572
        %v6085 = vpack.c.b16 %v4597, %v4573
        %v6086 = vpack.c.b16 %v4598, %v4574
        %v6087 = vpack.c.b16 %v4599, %v4575
        %v6088 = vpack.c.b16 %v4600, %v4576
        %v6089 = vpack.c.b16 %v4601, %v4577
        %v6090 = vpack.c.b16 %v4602, %v4578
        %v6091 = vpack.c.b16 %v4603, %v4579
        %v6092 = vpack.c.b16 %v4604, %v4580
        %v6093 = vpack.c.b16 %v4605, %v4581
        %v6094 = vpack.c.b16 %v4606, %v4582
        %v6095 = vpack.c.b16 %v4607, %v4583
        %v6096 = vpack.c.b16 %v4632, %v4608
        %v6097 = vpack.c.b16 %v4633, %v4609
        %v6098 = vpack.c.b16 %v4634, %v4610
        %v6099 = vpack.c.b16 %v4635, %v4611
        %v6100 = vpack.c.b16 %v4636, %v4612
        %v6101 = vpack.c.b16 %v4637, %v4613
        %v6102 = vpack.c.b16 %v4638, %v4614
        %v6103 = vpack.c.b16 %v4639, %v4615
        %v6104 = vpack.c.b16 %v4640, %v4616
        %v6105 = vpack.c.b16 %v4641, %v4617
        %v6106 = vpack.c.b16 %v4642, %v4618
        %v6107 = vpack.c.b16 %v4643, %v4619
        %v6108 = vpack.c.b16 %v4644, %v4620
        %v6109 = vpack.c.b16 %v4645, %v4621
        %v6110 = vpack.c.b16 %v4646, %v4622
        %v6111 = vpack.c.b16 %v4647, %v4623
        %v6112 = vpack.c.b16 %v4648, %v4624
        %v6113 = vpack.c.b16 %v4649, %v4625
        %v6114 = vpack.c.b16 %v4650, %v4626
        %v6115 = vpack.c.b16 %v4651, %v4627
        %v6116 = vpack.c.b16 %v4652, %v4628
        %v6117 = vpack.c.b16 %v4653, %v4629
        %v6118 = vpack.c.b16 %v4654, %v4630
        %v6119 = vpack.c.b16 %v4655, %v4631
        %v6120 = vpack.c.b16 %v4680, %v4656
        %v6121 = vpack.c.b16 %v4681, %v4657
        %v6122 = vpack.c.b16 %v4682, %v4658
        %v6123 = vpack.c.b16 %v4683, %v4659
        %v6124 = vpack.c.b16 %v4684, %v4660
        %v6125 = vpack.c.b16 %v4685, %v4661
        %v6126 = vpack.c.b16 %v4686, %v4662
        %v6127 = vpack.c.b16 %v4687, %v4663
        %v6128 = vpack.c.b16 %v4688, %v4664
        %v6129 = vpack.c.b16 %v4689, %v4665
        %v6130 = vpack.c.b16 %v4690, %v4666
        %v6131 = vpack.c.b16 %v4691, %v4667
        %v6132 = vpack.c.b16 %v4692, %v4668
        %v6133 = vpack.c.b16 %v4693, %v4669
        %v6134 = vpack.c.b16 %v4694, %v4670
        %v6135 = vpack.c.b16 %v4695, %v4671
        %v6136 = vpack.c.b16 %v4696, %v4672
        %v6137 = vpack.c.b16 %v4697, %v4673
        %v6138 = vpack.c.b16 %v4698, %v4674
        %v6139 = vpack.c.b16 %v4699, %v4675
        %v6140 = vpack.c.b16 %v4700, %v4676
        %v6141 = vpack.c.b16 %v4701, %v4677
        %v6142 = vpack.c.b16 %v4702, %v4678
        %v6143 = vpack.c.b16 %v4703, %v4679
        %v6144 = vpack.c.b16 %v4728, %v4704
        %v6145 = vpack.c.b16 %v4729, %v4705
        %v6146 = vpack.c.b16 %v4730, %v4706
        %v6147 = vpack.c.b16 %v4731, %v4707
        %v6148 = vpack.c.b16 %v4732, %v4708
        %v6149 = vpack.c.b16 %v4733, %v4709
        %v6150 = vpack.c.b16 %v4734, %v4710
        %v6151 = vpack.c.b16 %v4735, %v4711
        %v6152 = vpack.c.b16 %v4736, %v4712
        %v6153 = vpack.c.b16 %v4737, %v4713
        %v6154 = vpack.c.b16 %v4738, %v4714
        %v6155 = vpack.c.b16 %v4739, %v4715
        %v6156 = vpack.c.b16 %v4740, %v4716
        %v6157 = vpack.c.b16 %v4741, %v4717
        %v6158 = vpack.c.b16 %v4742, %v4718
        %v6159 = vpack.c.b16 %v4743, %v4719
        %v6160 = vpack.c.b16 %v4744, %v4720
        %v6161 = vpack.c.b16 %v4745, %v4721
        %v6162 = vpack.c.b16 %v4746, %v4722
        %v6163 = vpack.c.b16 %v4747, %v4723
        %v6164 = vpack.c.b16 %v4748, %v4724
        %v6165 = vpack.c.b16 %v4749, %v4725
        %v6166 = vpack.c.b16 %v4750, %v4726
        %v6167 = vpack.c.b16 %v4751, %v4727
        %v6168 = vpack.c.b16 %v4776, %v4752
        %v6169 = vpack.c.b16 %v4777, %v4753
        %v6170 = vpack.c.b16 %v4778, %v4754
        %v6171 = vpack.c.b16 %v4779, %v4755
        %v6172 = vpack.c.b16 %v4780, %v4756
        %v6173 = vpack.c.b16 %v4781, %v4757
        %v6174 = vpack.c.b16 %v4782, %v4758
        %v6175 = vpack.c.b16 %v4783, %v4759
        %v6176 = vpack.c.b16 %v4784, %v4760
        %v6177 = vpack.c.b16 %v4785, %v4761
        %v6178 = vpack.c.b16 %v4786, %v4762
        %v6179 = vpack.c.b16 %v4787, %v4763
        %v6180 = vpack.c.b16 %v4788, %v4764
        %v6181 = vpack.c.b16 %v4789, %v4765
        %v6182 = vpack.c.b16 %v4790, %v4766
        %v6183 = vpack.c.b16 %v4791, %v4767
        %v6184 = vpack.c.b16 %v4792, %v4768
        %v6185 = vpack.c.b16 %v4793, %v4769
        %v6186 = vpack.c.b16 %v4794, %v4770
        %v6187 = vpack.c.b16 %v4795, %v4771
        %v6188 = vpack.c.b16 %v4796, %v4772
        %v6189 = vpack.c.b16 %v4797, %v4773
        %v6190 = vpack.c.b16 %v4798, %v4774
        %v6191 = vpack.c.b16 %v4799, %v4775
        %v6192 = vpack.c.b16 %v4824, %v4800
        %v6193 = vpack.c.b16 %v4825, %v4801
        %v6194 = vpack.c.b16 %v4826, %v4802
        %v6195 = vpack.c.b16 %v4827, %v4803
        %v6196 = vpack.c.b16 %v4828, %v4804
        %v6197 = vpack.c.b16 %v4829, %v4805
        %v6198 = vpack.c.b16 %v4830, %v4806
        %v6199 = vpack.c.b16 %v4831, %v4807
        %v6200 = vpack.c.b16 %v4832, %v4808
        %v6201 = vpack.c.b16 %v4833, %v4809
        %v6202 = vpack.c.b16 %v4834, %v4810
        %v6203 = vpack.c.b16 %v4835, %v4811
        %v6204 = vpack.c.b16 %v4836, %v4812
        %v6205 = vpack.c.b16 %v4837, %v4813
        %v6206 = vpack.c.b16 %v4838, %v4814
        %v6207 = vpack.c.b16 %v4839, %v4815
        %v6208 = vpack.c.b16 %v4840, %v4816
        %v6209 = vpack.c.b16 %v4841, %v4817
        %v6210 = vpack.c.b16 %v4842, %v4818
        %v6211 = vpack.c.b16 %v4843, %v4819
        %v6212 = vpack.c.b16 %v4844, %v4820
        %v6213 = vpack.c.b16 %v4845, %v4821
        %v6214 = vpack.c.b16 %v4846, %v4822
        %v6215 = vpack.c.b16 %v4847, %v4823
        %v6216 = vpack.c.b16 %v4872, %v4848
        %v6217 = vpack.c.b16 %v4873, %v4849
        %v6218 = vpack.c.b16 %v4874, %v4850
        %v6219 = vpack.c.b16 %v4875, %v4851
        %v6220 = vpack.c.b16 %v4876, %v4852
        %v6221 = vpack.c.b16 %v4877, %v4853
        %v6222 = vpack.c.b16 %v4878, %v4854
        %v6223 = vpack.c.b16 %v4879, %v4855
        %v6224 = vpack.c.b16 %v4880, %v4856
        %v6225 = vpack.c.b16 %v4881, %v4857
        %v6226 = vpack.c.b16 %v4882, %v4858
        %v6227 = vpack.c.b16 %v4883, %v4859
        %v6228 = vpack.c.b16 %v4884, %v4860
        %v6229 = vpack.c.b16 %v4885, %v4861
        %v6230 = vpack.c.b16 %v4886, %v4862
        %v6231 = vpack.c.b16 %v4887, %v4863
        %v6232 = vpack.c.b16 %v4888, %v4864
        %v6233 = vpack.c.b16 %v4889, %v4865
        %v6234 = vpack.c.b16 %v4890, %v4866
        %v6235 = vpack.c.b16 %v4891, %v4867
        %v6236 = vpack.c.b16 %v4892, %v4868
        %v6237 = vpack.c.b16 %v4893, %v4869
        %v6238 = vpack.c.b16 %v4894, %v4870
        %v6239 = vpack.c.b16 %v4895, %v4871
        %v6240 = vpack.c.b16 %v4920, %v4896
        %v6241 = vpack.c.b16 %v4921, %v4897
        %v6242 = vpack.c.b16 %v4922, %v4898
        %v6243 = vpack.c.b16 %v4923, %v4899
        %v6244 = vpack.c.b16 %v4924, %v4900
        %v6245 = vpack.c.b16 %v4925, %v4901
        %v6246 = vpack.c.b16 %v4926, %v4902
        %v6247 = vpack.c.b16 %v4927, %v4903
        %v6248 = vpack.c.b16 %v4928, %v4904
        %v6249 = vpack.c.b16 %v4929, %v4905
        %v6250 = vpack.c.b16 %v4930, %v4906
        %v6251 = vpack.c.b16 %v4931, %v4907
        %v6252 = vpack.c.b16 %v4932, %v4908
        %v6253 = vpack.c.b16 %v4933, %v4909
        %v6254 = vpack.c.b16 %v4934, %v4910
        %v6255 = vpack.c.b16 %v4935, %v4911
        %v6256 = vpack.c.b16 %v4936, %v4912
        %v6257 = vpack.c.b16 %v4937, %v4913
        %v6258 = vpack.c.b16 %v4938, %v4914
        %v6259 = vpack.c.b16 %v4939, %v4915
        %v6260 = vpack.c.b16 %v4940, %v4916
        %v6261 = vpack.c.b16 %v4941, %v4917
        %v6262 = vpack.c.b16 %v4942, %v4918
        %v6263 = vpack.c.b16 %v4943, %v4919
        %v6264 = vpack.c.b16 %v4968, %v4944
        %v6265 = vpack.c.b16 %v4969, %v4945
        %v6266 = vpack.c.b16 %v4970, %v4946
        %v6267 = vpack.c.b16 %v4971, %v4947
        %v6268 = vpack.c.b16 %v4972, %v4948
        %v6269 = vpack.c.b16 %v4973, %v4949
        %v6270 = vpack.c.b16 %v4974, %v4950
        %v6271 = vpack.c.b16 %v4975, %v4951
        %v6272 = vpack.c.b16 %v4976, %v4952
        %v6273 = vpack.c.b16 %v4977, %v4953
        %v6274 = vpack.c.b16 %v4978, %v4954
        %v6275 = vpack.c.b16 %v4979, %v4955
        %v6276 = vpack.c.b16 %v4980, %v4956
        %v6277 = vpack.c.b16 %v4981, %v4957
        %v6278 = vpack.c.b16 %v4982, %v4958
        %v6279 = vpack.c.b16 %v4983, %v4959
        %v6280 = vpack.c.b16 %v4984, %v4960
        %v6281 = vpack.c.b16 %v4985, %v4961
        %v6282 = vpack.c.b16 %v4986, %v4962
        %v6283 = vpack.c.b16 %v4987, %v4963
        %v6284 = vpack.c.b16 %v4988, %v4964
        %v6285 = vpack.c.b16 %v4989, %v4965
        %v6286 = vpack.c.b16 %v4990, %v4966
        %v6287 = vpack.c.b16 %v4991, %v4967
        %v6288 = vpack.c.b16 %v5016, %v4992
        %v6289 = vpack.c.b16 %v5017, %v4993
        %v6290 = vpack.c.b16 %v5018, %v4994
        %v6291 = vpack.c.b16 %v5019, %v4995
        %v6292 = vpack.c.b16 %v5020, %v4996
        %v6293 = vpack.c.b16 %v5021, %v4997
        %v6294 = vpack.c.b16 %v5022, %v4998
        %v6295 = vpack.c.b16 %v5023, %v4999
        %v6296 = vpack.c.b16 %v5024, %v5000
        %v6297 = vpack.c.b16 %v5025, %v5001
        %v6298 = vpack.c.b16 %v5026, %v5002
        %v6299 = vpack.c.b16 %v5027, %v5003
        %v6300 = vpack.c.b16 %v5028, %v5004
        %v6301 = vpack.c.b16 %v5029, %v5005
        %v6302 = vpack.c.b16 %v5030, %v5006
        %v6303 = vpack.c.b16 %v5031, %v5007
        %v6304 = vpack.c.b16 %v5032, %v5008
        %v6305 = vpack.c.b16 %v5033, %v5009
        %v6306 = vpack.c.b16 %v5034, %v5010
        %v6307 = vpack.c.b16 %v5035, %v5011
        %v6308 = vpack.c.b16 %v5036, %v5012
        %v6309 = vpack.c.b16 %v5037, %v5013
        %v6310 = vpack.c.b16 %v5038, %v5014
        %v6311 = vpack.c.b16 %v5039, %v5015
        %v6312 = vpack.c.b16 %v5064, %v5040
        %v6313 = vpack.c.b16 %v5065, %v5041
        %v6314 = vpack.c.b16 %v5066, %v5042
        %v6315 = vpack.c.b16 %v5067, %v5043
        %v6316 = vpack.c.b16 %v5068, %v5044
        %v6317 = vpack.c.b16 %v5069, %v5045
        %v6318 = vpack.c.b16 %v5070, %v5046
        %v6319 = vpack.c.b16 %v5071, %v5047
        %v6320 = vpack.c.b16 %v5072, %v5048
        %v6321 = vpack.c.b16 %v5073, %v5049
        %v6322 = vpack.c.b16 %v5074, %v5050
        %v6323 = vpack.c.b16 %v5075, %v5051
        %v6324 = vpack.c.b16 %v5076, %v5052
        %v6325 = vpack.c.b16 %v5077, %v5053
        %v6326 = vpack.c.b16 %v5078, %v5054
        %v6327 = vpack.c.b16 %v5079, %v5055
        %v6328 = vpack.c.b16 %v5080, %v5056
        %v6329 = vpack.c.b16 %v5081, %v5057
        %v6330 = vpack.c.b16 %v5082, %v5058
        %v6331 = vpack.c.b16 %v5083, %v5059
        %v6332 = vpack.c.b16 %v5084, %v5060
        %v6333 = vpack.c.b16 %v5085, %v5061
        %v6334 = vpack.c.b16 %v5086, %v5062
        %v6335 = vpack.c.b16 %v5087, %v5063
        %v6336 = vpack.c.b16 %v5112, %v5088
        %v6337 = vpack.c.b16 %v5113, %v5089
        %v6338 = vpack.c.b16 %v5114, %v5090
        %v6339 = vpack.c.b16 %v5115, %v5091
        %v6340 = vpack.c.b16 %v5116, %v5092
        %v6341 = vpack.c.b16 %v5117, %v5093
        %v6342 = vpack.c.b16 %v5118, %v5094
        %v6343 = vpack.c.b16 %v5119, %v5095
        %v6344 = vpack.c.b16 %v5120, %v5096
        %v6345 = vpack.c.b16 %v5121, %v5097
        %v6346 = vpack.c.b16 %v5122, %v5098
        %v6347 = vpack.c.b16 %v5123, %v5099
        %v6348 = vpack.c.b16 %v5124, %v5100
        %v6349 = vpack.c.b16 %v5125, %v5101
        %v6350 = vpack.c.b16 %v5126, %v5102
        %v6351 = vpack.c.b16 %v5127, %v5103
        %v6352 = vpack.c.b16 %v5128, %v5104
        %v6353 = vpack.c.b16 %v5129, %v5105
        %v6354 = vpack.c.b16 %v5130, %v5106
        %v6355 = vpack.c.b16 %v5131, %v5107
        %v6356 = vpack.c.b16 %v5132, %v5108
        %v6357 = vpack.c.b16 %v5133, %v5109
        %v6358 = vpack.c.b16 %v5134, %v5110
        %v6359 = vpack.c.b16 %v5135, %v5111
        %v6360 = vpack.c.b16 %v5160, %v5136
        %v6361 = vpack.c.b16 %v5161, %v5137
        %v6362 = vpack.c.b16 %v5162, %v5138
        %v6363 = vpack.c.b16 %v5163, %v5139
        %v6364 = vpack.c.b16 %v5164, %v5140
        %v6365 = vpack.c.b16 %v5165, %v5141
        %v6366 = vpack.c.b16 %v5166, %v5142
        %v6367 = vpack.c.b16 %v5167, %v5143
        %v6368 = vpack.c.b16 %v5168, %v5144
        %v6369 = vpack.c.b16 %v5169, %v5145
        %v6370 = vpack.c.b16 %v5170, %v5146
        %v6371 = vpack.c.b16 %v5171, %v5147
        %v6372 = vpack.c.b16 %v5172, %v5148
        %v6373 = vpack.c.b16 %v5173, %v5149
        %v6374 = vpack.c.b16 %v5174, %v5150
        %v6375 = vpack.c.b16 %v5175, %v5151
        %v6376 = vpack.c.b16 %v5176, %v5152
        %v6377 = vpack.c.b16 %v5177, %v5153
        %v6378 = vpack.c.b16 %v5178, %v5154
        %v6379 = vpack.c.b16 %v5179, %v5155
        %v6380 = vpack.c.b16 %v5180, %v5156
        %v6381 = vpack.c.b16 %v5181, %v5157
        %v6382 = vpack.c.b16 %v5182, %v5158
        %v6383 = vpack.c.b16 %v5183, %v5159
        %v6384 = vpack.c.b16 %v5208, %v5184
        %v6385 = vpack.c.b16 %v5209, %v5185
        %v6386 = vpack.c.b16 %v5210, %v5186
        %v6387 = vpack.c.b16 %v5211, %v5187
        %v6388 = vpack.c.b16 %v5212, %v5188
        %v6389 = vpack.c.b16 %v5213, %v5189
        %v6390 = vpack.c.b16 %v5214, %v5190
        %v6391 = vpack.c.b16 %v5215, %v5191
        %v6392 = vpack.c.b16 %v5216, %v5192
        %v6393 = vpack.c.b16 %v5217, %v5193
        %v6394 = vpack.c.b16 %v5218, %v5194
        %v6395 = vpack.c.b16 %v5219, %v5195
        %v6396 = vpack.c.b16 %v5220, %v5196
        %v6397 = vpack.c.b16 %v5221, %v5197
        %v6398 = vpack.c.b16 %v5222, %v5198
        %v6399 = vpack.c.b16 %v5223, %v5199
        %v6400 = vpack.c.b16 %v5224, %v5200
        %v6401 = vpack.c.b16 %v5225, %v5201
        %v6402 = vpack.c.b16 %v5226, %v5202
        %v6403 = vpack.c.b16 %v5227, %v5203
        %v6404 = vpack.c.b16 %v5228, %v5204
        %v6405 = vpack.c.b16 %v5229, %v5205
        %v6406 = vpack.c.b16 %v5230, %v5206
        %v6407 = vpack.c.b16 %v5231, %v5207
        %v6408 = vpack.c.b16 %v5256, %v5232
        %v6409 = vpack.c.b16 %v5257, %v5233
        %v6410 = vpack.c.b16 %v5258, %v5234
        %v6411 = vpack.c.b16 %v5259, %v5235
        %v6412 = vpack.c.b16 %v5260, %v5236
        %v6413 = vpack.c.b16 %v5261, %v5237
        %v6414 = vpack.c.b16 %v5262, %v5238
        %v6415 = vpack.c.b16 %v5263, %v5239
        %v6416 = vpack.c.b16 %v5264, %v5240
        %v6417 = vpack.c.b16 %v5265, %v5241
        %v6418 = vpack.c.b16 %v5266, %v5242
        %v6419 = vpack.c.b16 %v5267, %v5243
        %v6420 = vpack.c.b16 %v5268, %v5244
        %v6421 = vpack.c.b16 %v5269, %v5245
        %v6422 = vpack.c.b16 %v5270, %v5246
        %v6423 = vpack.c.b16 %v5271, %v5247
        %v6424 = vpack.c.b16 %v5272, %v5248
        %v6425 = vpack.c.b16 %v5273, %v5249
        %v6426 = vpack.c.b16 %v5274, %v5250
        %v6427 = vpack.c.b16 %v5275, %v5251
        %v6428 = vpack.c.b16 %v5276, %v5252
        %v6429 = vpack.c.b16 %v5277, %v5253
        %v6430 = vpack.c.b16 %v5278, %v5254
        %v6431 = vpack.c.b16 %v5279, %v5255
        %7584 = vmatprep.subr.bf16.mxu0 %v5281
        %7585 = vmatpush1.bf16.msra.mxu0 %v5280
        %7586 = vmatprep.subr.bf16.mxu0 %v5305
        %7587 = vmatpush1.bf16.msra.mxu0 %v5304
        %7588 = vmatprep.subr.bf16.mxu0 %v5329
        %7589 = vmatpush1.bf16.msra.mxu0 %v5328
        %7590 = vmatprep.subr.bf16.mxu0 %v5353
        %7591 = vmatpush1.bf16.msra.mxu0 %v5352
        %7592 = vmatprep.subr.bf16.mxu0 %v5377
        %7593 = vmatpush1.bf16.msra.mxu0 %v5376
        %7594 = vmatprep.subr.bf16.mxu0 %v5401
        %7595 = vmatpush1.bf16.msra.mxu0 %v5400
        %7596 = vmatprep.subr.bf16.mxu0 %v5425
        %7597 = vmatpush1.bf16.msra.mxu0 %v5424
        %7598 = vmatprep.subr.bf16.mxu0 %v5449
        %7599 = vmatpush1.bf16.msra.mxu0 %v5448
        %7600 = vmatprep.subr.bf16.mxu0 %v5473
        %7601 = vmatpush1.bf16.msra.mxu0 %v5472
        %7602 = vmatprep.subr.bf16.mxu0 %v5497
        %7603 = vmatpush1.bf16.msra.mxu0 %v5496
        %7604 = vmatprep.subr.bf16.mxu0 %v5521
        %7605 = vmatpush1.bf16.msra.mxu0 %v5520
        %7606 = vmatprep.subr.bf16.mxu0 %v5545
        %7607 = vmatpush1.bf16.msra.mxu0 %v5544
        %7608 = vmatprep.subr.bf16.mxu0 %v5569
        %7609 = vmatpush1.bf16.msra.mxu0 %v5568
        %7610 = vmatprep.subr.bf16.mxu0 %v5593
        %7611 = vmatpush1.bf16.msra.mxu0 %v5592
        %7612 = vmatprep.subr.bf16.mxu0 %v5617
        %7613 = vmatpush1.bf16.msra.mxu0 %v5616
        %7614 = vmatprep.subr.bf16.mxu0 %v5641
        %7615 = vmatpush1.bf16.msra.mxu0 %v5640
        %7616 = vmatprep.mubr.bf16.mxu0 %v1729
        %7617 = vmatmul.mubr.bf16.gmra.mrb[0].mxu0 %v1728
        %v7618 = vpop.f32.mrb[0].mxu0
        %v7619 = vadd.f32 %v1467, %v7618
        %v7620 = vpop.f32.mrb[0].mxu0
        %v7621 = vadd.f32 %v1471, %v7620
        %v7622 = vpop.f32.mrb[0].mxu0
        %v7623 = vadd.f32 %v1467, %v7622
        %v7624 = vpop.f32.mrb[0].mxu0
        %v7625 = vadd.f32 %v1471, %v7624
        %7626 = vmatprep.mubr.bf16.mxu0 %v1735
        %7627 = vmatmul.mubr.bf16.gmra.mrb[0].mxu0 %v1734
        %v7628 = vpop.f32.mrb[0].mxu0
        %v7629 = vadd.f32 %v1467, %v7628
        %v7630 = vpop.f32.mrb[0].mxu0
        %v7631 = vadd.f32 %v1471, %v7630
        %v7632 = vpop.f32.mrb[0].mxu0
        %v7633 = vadd.f32 %v1467, %v7632
        %v7634 = vpop.f32.mrb[0].mxu0
        %v7635 = vadd.f32 %v1471, %v7634
        %7636 = vmatprep.mubr.bf16.mxu0 %v1741
        %7637 = vmatmul.mubr.bf16.gmra.mrb[0].mxu0 %v1740
        %v7638 = vpop.f32.mrb[0].mxu0
        %v7639 = vadd.f32 %v1467, %v7638
        %v7640 = vpop.f32.mrb[0].mxu0
        %v7641 = vadd.f32 %v1471, %v7640
        %v7642 = vpop.f32.mrb[0].mxu0
        %v7643 = vadd.f32 %v1467, %v7642
        %v7644 = vpop.f32.mrb[0].mxu0
        %v7645 = vadd.f32 %v1471, %v7644
        %7646 = vmatprep.mubr.bf16.mxu0 %v1747
        %7647 = vmatmul.mubr.bf16.gmra.mrb[0].mxu0 %v1746
        %v7648 = vpop.f32.mrb[0].mxu0
        %v7649 = vadd.f32 %v1467, %v7648
        %v7650 = vpop.f32.mrb[0].mxu0
        %v7651 = vadd.f32 %v1471, %v7650
        %v7652 = vpop.f32.mrb[0].mxu0
        %v7653 = vadd.f32 %v1467, %v7652
        %v7654 = vpop.f32.mrb[0].mxu0
        %v7655 = vadd.f32 %v1471, %v7654
        %7656 = vmatprep.mubr.bf16.mxu0 %v1753
        %7657 = vmatmul.mubr.bf16.gmra.mrb[0].mxu0 %v1752
        %v7658 = vpop.f32.mrb[0].mxu0
        %v7659 = vadd.f32 %v1467, %v7658
        %v7660 = vpop.f32.mrb[0].mxu0
        %v7661 = vadd.f32 %v1471, %v7660
        %v7662 = vpop.f32.mrb[0].mxu0
        %v7663 = vadd.f32 %v1467, %v7662
        %v7664 = vpop.f32.mrb[0].mxu0
        %v7665 = vadd.f32 %v1471, %v7664
        %7666 = vmatprep.mubr.bf16.mxu0 %v1759
        %7667 = vmatmul.mubr.bf16.gmra.mrb[0].mxu0 %v1758
        %v7668 = vpop.f32.mrb[0].mxu0
        %v7669 = vadd.f32 %v1467, %v7668
        %v7670 = vpop.f32.mrb[0].mxu0
        %v7671 = vadd.f32 %v1471, %v7670
        %v7672 = vpop.f32.mrb[0].mxu0
        %v7673 = vadd.f32 %v1467, %v7672
        %v7674 = vpop.f32.mrb[0].mxu0
        %v7675 = vadd.f32 %v1471, %v7674
        %7676 = vmatprep.mubr.bf16.mxu0 %v1765
        %7677 = vmatmul.mubr.bf16.gmra.mrb[0].mxu0 %v1764
        %v7678 = vpop.f32.mrb[0].mxu0
        %v7679 = vadd.f32 %v1467, %v7678
        %v7680 = vpop.f32.mrb[0].mxu0
        %v7681 = vadd.f32 %v1471, %v7680
        %v7682 = vpop.f32.mrb[0].mxu0
        %v7683 = vadd.f32 %v1467, %v7682
        %v7684 = vpop.f32.mrb[0].mxu0
        %v7685 = vadd.f32 %v1471, %v7684
        %7686 = vmatprep.mubr.bf16.mxu0 %v1771
        %7687 = vmatmul.mubr.bf16.gmra.mrb[0].mxu0 %v1770
        %v7688 = vpop.f32.mrb[0].mxu0
        %v7689 = vadd.f32 %v1467, %v7688
        %v7690 = vpop.f32.mrb[0].mxu0
        %v7691 = vadd.f32 %v1471, %v7690
        %v7692 = vpop.f32.mrb[0].mxu0
        %v7693 = vadd.f32 %v1467, %v7692
        %v7694 = vpop.f32.mrb[0].mxu0
        %v7695 = vadd.f32 %v1471, %v7694
        %7696 = vdwg.mxu0
        %7697 = vmatprep.subr.bf16.mxu0 %v5665
        %7698 = vmatpush1.bf16.msra.mxu0 %v5664
        %7699 = vmatprep.subr.bf16.mxu0 %v5689
        %7700 = vmatpush1.bf16.msra.mxu0 %v5688
        %7701 = vmatprep.subr.bf16.mxu0 %v5713
        %7702 = vmatpush1.bf16.msra.mxu0 %v5712
        %7703 = vmatprep.subr.bf16.mxu0 %v5737
        %7704 = vmatpush1.bf16.msra.mxu0 %v5736
        %7705 = vmatprep.subr.bf16.mxu0 %v5761
        %7706 = vmatpush1.bf16.msra.mxu0 %v5760
        %7707 = vmatprep.subr.bf16.mxu0 %v5785
        %7708 = vmatpush1.bf16.msra.mxu0 %v5784
        %7709 = vmatprep.subr.bf16.mxu0 %v5809
        %7710 = vmatpush1.bf16.msra.mxu0 %v5808
        %7711 = vmatprep.subr.bf16.mxu0 %v5833
        %7712 = vmatpush1.bf16.msra.mxu0 %v5832
        %7713 = vmatprep.subr.bf16.mxu0 %v5857
        %7714 = vmatpush1.bf16.msra.mxu0 %v5856
        %7715 = vmatprep.subr.bf16.mxu0 %v5881
        %7716 = vmatpush1.bf16.msra.mxu0 %v5880
        %7717 = vmatprep.subr.bf16.mxu0 %v5905
        %7718 = vmatpush1.bf16.msra.mxu0 %v5904
        %7719 = vmatprep.subr.bf16.mxu0 %v5929
        %7720 = vmatpush1.bf16.msra.mxu0 %v5928
        %7721 = vmatprep.subr.bf16.mxu0 %v5953
        %7722 = vmatpush1.bf16.msra.mxu0 %v5952
        %7723 = vmatprep.subr.bf16.mxu0 %v5977
        %7724 = vmatpush1.bf16.msra.mxu0 %v5976
        %7725 = vmatprep.subr.bf16.mxu0 %v6001
        %7726 = vmatpush1.bf16.msra.mxu0 %v6000
        %7727 = vmatprep.subr.bf16.mxu0 %v6025
        %7728 = vmatpush1.bf16.msra.mxu0 %v6024
        %7729 = vmatprep.mubr.bf16.mxu0 %v1731
        %7730 = vmatmul.mubr.bf16.gmra.mrb[0].mxu0 %v1730
        %v7731 = vpop.f32.mrb[0].mxu0
        %v7732 = vadd.f32 %v7619, %v7731
        %v7733 = vpop.f32.mrb[0].mxu0
        %v7734 = vadd.f32 %v7621, %v7733
        %v7735 = vpop.f32.mrb[0].mxu0
        %v7736 = vadd.f32 %v7623, %v7735
        %v7737 = vpop.f32.mrb[0].mxu0
        %v7738 = vadd.f32 %v7625, %v7737
        %7739 = vmatprep.mubr.bf16.mxu0 %v1737
        %7740 = vmatmul.mubr.bf16.gmra.mrb[0].mxu0 %v1736
        %v7741 = vpop.f32.mrb[0].mxu0
        %v7742 = vadd.f32 %v7629, %v7741
        %v7743 = vpop.f32.mrb[0].mxu0
        %v7744 = vadd.f32 %v7631, %v7743
        %v7745 = vpop.f32.mrb[0].mxu0
        %v7746 = vadd.f32 %v7633, %v7745
        %v7747 = vpop.f32.mrb[0].mxu0
        %v7748 = vadd.f32 %v7635, %v7747
        %7749 = vmatprep.mubr.bf16.mxu0 %v1743
        %7750 = vmatmul.mubr.bf16.gmra.mrb[0].mxu0 %v1742
        %v7751 = vpop.f32.mrb[0].mxu0
        %v7752 = vadd.f32 %v7639, %v7751
        %v7753 = vpop.f32.mrb[0].mxu0
        %v7754 = vadd.f32 %v7641, %v7753
        %v7755 = vpop.f32.mrb[0].mxu0
        %v7756 = vadd.f32 %v7643, %v7755
        %v7757 = vpop.f32.mrb[0].mxu0
        %v7758 = vadd.f32 %v7645, %v7757
        %7759 = vmatprep.mubr.bf16.mxu0 %v1749
        %7760 = vmatmul.mubr.bf16.gmra.mrb[0].mxu0 %v1748
        %v7761 = vpop.f32.mrb[0].mxu0
        %v7762 = vadd.f32 %v7649, %v7761
        %v7763 = vpop.f32.mrb[0].mxu0
        %v7764 = vadd.f32 %v7651, %v7763
        %v7765 = vpop.f32.mrb[0].mxu0
        %v7766 = vadd.f32 %v7653, %v7765
        %v7767 = vpop.f32.mrb[0].mxu0
        %v7768 = vadd.f32 %v7655, %v7767
        %7769 = vmatprep.mubr.bf16.mxu0 %v1755
        %7770 = vmatmul.mubr.bf16.gmra.mrb[0].mxu0 %v1754
        %v7771 = vpop.f32.mrb[0].mxu0
        %v7772 = vadd.f32 %v7659, %v7771
        %v7773 = vpop.f32.mrb[0].mxu0
        %v7774 = vadd.f32 %v7661, %v7773
        %v7775 = vpop.f32.mrb[0].mxu0
        %v7776 = vadd.f32 %v7663, %v7775
        %v7777 = vpop.f32.mrb[0].mxu0
        %v7778 = vadd.f32 %v7665, %v7777
        %7779 = vmatprep.mubr.bf16.mxu0 %v1761
        %7780 = vmatmul.mubr.bf16.gmra.mrb[0].mxu0 %v1760
        %v7781 = vpop.f32.mrb[0].mxu0
        %v7782 = vadd.f32 %v7669, %v7781
        %v7783 = vpop.f32.mrb[0].mxu0
        %v7784 = vadd.f32 %v7671, %v7783
        %v7785 = vpop.f32.mrb[0].mxu0
        %v7786 = vadd.f32 %v7673, %v7785
        %v7787 = vpop.f32.mrb[0].mxu0
        %v7788 = vadd.f32 %v7675, %v7787
        %7789 = vmatprep.mubr.bf16.mxu0 %v1767
        %7790 = vmatmul.mubr.bf16.gmra.mrb[0].mxu0 %v1766
        %v7791 = vpop.f32.mrb[0].mxu0
        %v7792 = vadd.f32 %v7679, %v7791
        %v7793 = vpop.f32.mrb[0].mxu0
        %v7794 = vadd.f32 %v7681, %v7793
        %v7795 = vpop.f32.mrb[0].mxu0
        %v7796 = vadd.f32 %v7683, %v7795
        %v7797 = vpop.f32.mrb[0].mxu0
        %v7798 = vadd.f32 %v7685, %v7797
        %7799 = vmatprep.mubr.bf16.mxu0 %v1773
        %7800 = vmatmul.mubr.bf16.gmra.mrb[0].mxu0 %v1772
        %v7801 = vpop.f32.mrb[0].mxu0
        %v7802 = vadd.f32 %v7689, %v7801
        %v7803 = vpop.f32.mrb[0].mxu0
        %v7804 = vadd.f32 %v7691, %v7803
        %v7805 = vpop.f32.mrb[0].mxu0
        %v7806 = vadd.f32 %v7693, %v7805
        %v7807 = vpop.f32.mrb[0].mxu0
        %v7808 = vadd.f32 %v7695, %v7807
        %7809 = vdwg.mxu0
        %7810 = vmatprep.subr.bf16.mxu0 %v6049
        %7811 = vmatpush1.bf16.msra.mxu0 %v6048
        %7812 = vmatprep.subr.bf16.mxu0 %v6073
        %7813 = vmatpush1.bf16.msra.mxu0 %v6072
        %7814 = vmatprep.subr.bf16.mxu0 %v6097
        %7815 = vmatpush1.bf16.msra.mxu0 %v6096
        %7816 = vmatprep.subr.bf16.mxu0 %v6121
        %7817 = vmatpush1.bf16.msra.mxu0 %v6120
        %7818 = vmatprep.subr.bf16.mxu0 %v6145
        %7819 = vmatpush1.bf16.msra.mxu0 %v6144
        %7820 = vmatprep.subr.bf16.mxu0 %v6169
        %7821 = vmatpush1.bf16.msra.mxu0 %v6168
        %7822 = vmatprep.subr.bf16.mxu0 %v6193
        %7823 = vmatpush1.bf16.msra.mxu0 %v6192
        %7824 = vmatprep.subr.bf16.mxu0 %v6217
        %7825 = vmatpush1.bf16.msra.mxu0 %v6216
        %7826 = vmatprep.subr.bf16.mxu0 %v6241
        %7827 = vmatpush1.bf16.msra.mxu0 %v6240
        %7828 = vmatprep.subr.bf16.mxu0 %v6265
        %7829 = vmatpush1.bf16.msra.mxu0 %v6264
        %7830 = vmatprep.subr.bf16.mxu0 %v6289
        %7831 = vmatpush1.bf16.msra.mxu0 %v6288
        %7832 = vmatprep.subr.bf16.mxu0 %v6313
        %7833 = vmatpush1.bf16.msra.mxu0 %v6312
        %7834 = vmatprep.subr.bf16.mxu0 %v6337
        %7835 = vmatpush1.bf16.msra.mxu0 %v6336
        %7836 = vmatprep.subr.bf16.mxu0 %v6361
        %7837 = vmatpush1.bf16.msra.mxu0 %v6360
        %7838 = vmatprep.subr.bf16.mxu0 %v6385
        %7839 = vmatpush1.bf16.msra.mxu0 %v6384
        %7840 = vmatprep.subr.bf16.mxu0 %v6409
        %7841 = vmatpush1.bf16.msra.mxu0 %v6408
        %7842 = vmatprep.mubr.bf16.mxu0 %v1733
        %7843 = vmatmul.mubr.bf16.gmra.mrb[0].mxu0 %v1732
        %v7844 = vpop.f32.mrb[0].mxu0
        %v7845 = vadd.f32 %v7732, %v7844
        %v7846 = vpop.f32.mrb[0].mxu0
        %v7847 = vadd.f32 %v7734, %v7846
        %v7848 = vpop.f32.mrb[0].mxu0
        %v7849 = vadd.f32 %v7736, %v7848
        %v7850 = vpop.f32.mrb[0].mxu0
        %v7851 = vadd.f32 %v7738, %v7850
        %7852 = vmatprep.mubr.bf16.mxu0 %v1739
        %7853 = vmatmul.mubr.bf16.gmra.mrb[0].mxu0 %v1738
        %v7854 = vpop.f32.mrb[0].mxu0
        %v7855 = vadd.f32 %v7742, %v7854
        %v7856 = vpop.f32.mrb[0].mxu0
        %v7857 = vadd.f32 %v7744, %v7856
        %v7858 = vpop.f32.mrb[0].mxu0
        %v7859 = vadd.f32 %v7746, %v7858
        %v7860 = vpop.f32.mrb[0].mxu0
        %v7861 = vadd.f32 %v7748, %v7860
        %7862 = vmatprep.mubr.bf16.mxu0 %v1745
        %7863 = vmatmul.mubr.bf16.gmra.mrb[0].mxu0 %v1744
        %v7864 = vpop.f32.mrb[0].mxu0
        %v7865 = vadd.f32 %v7752, %v7864
        %v7866 = vpop.f32.mrb[0].mxu0
        %v7867 = vadd.f32 %v7754, %v7866
        %v7868 = vpop.f32.mrb[0].mxu0
        %v7869 = vadd.f32 %v7756, %v7868
        %v7870 = vpop.f32.mrb[0].mxu0
        %v7871 = vadd.f32 %v7758, %v7870
        %7872 = vmatprep.mubr.bf16.mxu0 %v1751
        %7873 = vmatmul.mubr.bf16.gmra.mrb[0].mxu0 %v1750
        %v7874 = vpop.f32.mrb[0].mxu0
        %v7875 = vadd.f32 %v7762, %v7874
        %v7876 = vpop.f32.mrb[0].mxu0
        %v7877 = vadd.f32 %v7764, %v7876
        %v7878 = vpop.f32.mrb[0].mxu0
        %v7879 = vadd.f32 %v7766, %v7878
        %v7880 = vpop.f32.mrb[0].mxu0
        %v7881 = vadd.f32 %v7768, %v7880
        %7882 = vmatprep.mubr.bf16.mxu0 %v1757
        %7883 = vmatmul.mubr.bf16.gmra.mrb[0].mxu0 %v1756
        %v7884 = vpop.f32.mrb[0].mxu0
        %v7885 = vadd.f32 %v7772, %v7884
        %v7886 = vpop.f32.mrb[0].mxu0
        %v7887 = vadd.f32 %v7774, %v7886
        %v7888 = vpop.f32.mrb[0].mxu0
        %v7889 = vadd.f32 %v7776, %v7888
        %v7890 = vpop.f32.mrb[0].mxu0
        %v7891 = vadd.f32 %v7778, %v7890
        %7892 = vmatprep.mubr.bf16.mxu0 %v1763
        %7893 = vmatmul.mubr.bf16.gmra.mrb[0].mxu0 %v1762
        %v7894 = vpop.f32.mrb[0].mxu0
        %v7895 = vadd.f32 %v7782, %v7894
        %v7896 = vpop.f32.mrb[0].mxu0
        %v7897 = vadd.f32 %v7784, %v7896
        %v7898 = vpop.f32.mrb[0].mxu0
        %v7899 = vadd.f32 %v7786, %v7898
        %v7900 = vpop.f32.mrb[0].mxu0
        %v7901 = vadd.f32 %v7788, %v7900
        %7902 = vmatprep.mubr.bf16.mxu0 %v1769
        %7903 = vmatmul.mubr.bf16.gmra.mrb[0].mxu0 %v1768
        %v7904 = vpop.f32.mrb[0].mxu0
        %v7905 = vadd.f32 %v7792, %v7904
        %v7906 = vpop.f32.mrb[0].mxu0
        %v7907 = vadd.f32 %v7794, %v7906
        %v7908 = vpop.f32.mrb[0].mxu0
        %v7909 = vadd.f32 %v7796, %v7908
        %v7910 = vpop.f32.mrb[0].mxu0
        %v7911 = vadd.f32 %v7798, %v7910
        %7912 = vmatprep.mubr.bf16.mxu0 %v1775
        %7913 = vmatmul.mubr.bf16.gmra.mrb[0].mxu0 %v1774
        %v7914 = vpop.f32.mrb[0].mxu0
        %v7915 = vadd.f32 %v7802, %v7914
        %v7916 = vpop.f32.mrb[0].mxu0
        %v7917 = vadd.f32 %v7804, %v7916
        %v7918 = vpop.f32.mrb[0].mxu0
        %v7919 = vadd.f32 %v7806, %v7918
        %v7920 = vpop.f32.mrb[0].mxu0
        %v7921 = vadd.f32 %v7808, %v7920
        %7922 = vdwg.mxu0
        %7923 = vmatprep.subr.bf16.mxu0 %v5283
        %7924 = vmatpush1.bf16.msra.mxu0 %v5282
        %7925 = vmatprep.subr.bf16.mxu0 %v5307
        %7926 = vmatpush1.bf16.msra.mxu0 %v5306
        %7927 = vmatprep.subr.bf16.mxu0 %v5331
        %7928 = vmatpush1.bf16.msra.mxu0 %v5330
        %7929 = vmatprep.subr.bf16.mxu0 %v5355
        %7930 = vmatpush1.bf16.msra.mxu0 %v5354
        %7931 = vmatprep.subr.bf16.mxu0 %v5379
        %7932 = vmatpush1.bf16.msra.mxu0 %v5378
        %7933 = vmatprep.subr.bf16.mxu0 %v5403
        %7934 = vmatpush1.bf16.msra.mxu0 %v5402
        %7935 = vmatprep.subr.bf16.mxu0 %v5427
        %7936 = vmatpush1.bf16.msra.mxu0 %v5426
        %7937 = vmatprep.subr.bf16.mxu0 %v5451
        %7938 = vmatpush1.bf16.msra.mxu0 %v5450
        %7939 = vmatprep.subr.bf16.mxu0 %v5475
        %7940 = vmatpush1.bf16.msra.mxu0 %v5474
        %7941 = vmatprep.subr.bf16.mxu0 %v5499
        %7942 = vmatpush1.bf16.msra.mxu0 %v5498
        %7943 = vmatprep.subr.bf16.mxu0 %v5523
        %7944 = vmatpush1.bf16.msra.mxu0 %v5522
        %7945 = vmatprep.subr.bf16.mxu0 %v5547
        %7946 = vmatpush1.bf16.msra.mxu0 %v5546
        %7947 = vmatprep.subr.bf16.mxu0 %v5571
        %7948 = vmatpush1.bf16.msra.mxu0 %v5570
        %7949 = vmatprep.subr.bf16.mxu0 %v5595
        %7950 = vmatpush1.bf16.msra.mxu0 %v5594
        %7951 = vmatprep.subr.bf16.mxu0 %v5619
        %7952 = vmatpush1.bf16.msra.mxu0 %v5618
        %7953 = vmatprep.subr.bf16.mxu0 %v5643
        %7954 = vmatpush1.bf16.msra.mxu0 %v5642
        %7955 = vmatprep.mubr.bf16.mxu0 %v1729
        %7956 = vmatmul.mubr.bf16.gmra.mrb[0].mxu0 %v1728
        %v7957 = vpop.f32.mrb[0].mxu0
        %v7958 = vadd.f32 %v1475, %v7957
        %v7959 = vpop.f32.mrb[0].mxu0
        %v7960 = vadd.f32 %v1479, %v7959
        %v7961 = vpop.f32.mrb[0].mxu0
        %v7962 = vadd.f32 %v1475, %v7961
        %v7963 = vpop.f32.mrb[0].mxu0
        %v7964 = vadd.f32 %v1479, %v7963
        %7965 = vmatprep.mubr.bf16.mxu0 %v1735
        %7966 = vmatmul.mubr.bf16.gmra.mrb[0].mxu0 %v1734
        %v7967 = vpop.f32.mrb[0].mxu0
        %v7968 = vadd.f32 %v1475, %v7967
        %v7969 = vpop.f32.mrb[0].mxu0
        %v7970 = vadd.f32 %v1479, %v7969
        %v7971 = vpop.f32.mrb[0].mxu0
        %v7972 = vadd.f32 %v1475, %v7971
        %v7973 = vpop.f32.mrb[0].mxu0
        %v7974 = vadd.f32 %v1479, %v7973
        %7975 = vmatprep.mubr.bf16.mxu0 %v1741
        %7976 = vmatmul.mubr.bf16.gmra.mrb[0].mxu0 %v1740
        %v7977 = vpop.f32.mrb[0].mxu0
        %v7978 = vadd.f32 %v1475, %v7977
        %v7979 = vpop.f32.mrb[0].mxu0
        %v7980 = vadd.f32 %v1479, %v7979
        %v7981 = vpop.f32.mrb[0].mxu0
        %v7982 = vadd.f32 %v1475, %v7981
        %v7983 = vpop.f32.mrb[0].mxu0
        %v7984 = vadd.f32 %v1479, %v7983
        %7985 = vmatprep.mubr.bf16.mxu0 %v1747
        %7986 = vmatmul.mubr.bf16.gmra.mrb[0].mxu0 %v1746
        %v7987 = vpop.f32.mrb[0].mxu0
        %v7988 = vadd.f32 %v1475, %v7987
        %v7989 = vpop.f32.mrb[0].mxu0
        %v7990 = vadd.f32 %v1479, %v7989
        %v7991 = vpop.f32.mrb[0].mxu0
        %v7992 = vadd.f32 %v1475, %v7991
        %v7993 = vpop.f32.mrb[0].mxu0
        %v7994 = vadd.f32 %v1479, %v7993
        %7995 = vmatprep.mubr.bf16.mxu0 %v1753
        %7996 = vmatmul.mubr.bf16.gmra.mrb[0].mxu0 %v1752
        %v7997 = vpop.f32.mrb[0].mxu0
        %v7998 = vadd.f32 %v1475, %v7997
        %v7999 = vpop.f32.mrb[0].mxu0
        %v8000 = vadd.f32 %v1479, %v7999
        %v8001 = vpop.f32.mrb[0].mxu0
        %v8002 = vadd.f32 %v1475, %v8001
        %v8003 = vpop.f32.mrb[0].mxu0
        %v8004 = vadd.f32 %v1479, %v8003
        %8005 = vmatprep.mubr.bf16.mxu0 %v1759
        %8006 = vmatmul.mubr.bf16.gmra.mrb[0].mxu0 %v1758
        %v8007 = vpop.f32.mrb[0].mxu0
        %v8008 = vadd.f32 %v1475, %v8007
        %v8009 = vpop.f32.mrb[0].mxu0
        %v8010 = vadd.f32 %v1479, %v8009
        %v8011 = vpop.f32.mrb[0].mxu0
        %v8012 = vadd.f32 %v1475, %v8011
        %v8013 = vpop.f32.mrb[0].mxu0
        %v8014 = vadd.f32 %v1479, %v8013
        %8015 = vmatprep.mubr.bf16.mxu0 %v1765
        %8016 = vmatmul.mubr.bf16.gmra.mrb[0].mxu0 %v1764
        %v8017 = vpop.f32.mrb[0].mxu0
        %v8018 = vadd.f32 %v1475, %v8017
        %v8019 = vpop.f32.mrb[0].mxu0
        %v8020 = vadd.f32 %v1479, %v8019
        %v8021 = vpop.f32.mrb[0].mxu0
        %v8022 = vadd.f32 %v1475, %v8021
        %v8023 = vpop.f32.mrb[0].mxu0
        %v8024 = vadd.f32 %v1479, %v8023
        %8025 = vmatprep.mubr.bf16.mxu0 %v1771
        %8026 = vmatmul.mubr.bf16.gmra.mrb[0].mxu0 %v1770
        %v8027 = vpop.f32.mrb[0].mxu0
        %v8028 = vadd.f32 %v1475, %v8027
        %v8029 = vpop.f32.mrb[0].mxu0
        %v8030 = vadd.f32 %v1479, %v8029
        %v8031 = vpop.f32.mrb[0].mxu0
        %v8032 = vadd.f32 %v1475, %v8031
        %v8033 = vpop.f32.mrb[0].mxu0
        %v8034 = vadd.f32 %v1479, %v8033
        %8035 = vdwg.mxu0
        %8036 = vmatprep.subr.bf16.mxu0 %v5667
        %8037 = vmatpush1.bf16.msra.mxu0 %v5666
        %8038 = vmatprep.subr.bf16.mxu0 %v5691
        %8039 = vmatpush1.bf16.msra.mxu0 %v5690
        %8040 = vmatprep.subr.bf16.mxu0 %v5715
        %8041 = vmatpush1.bf16.msra.mxu0 %v5714
        %8042 = vmatprep.subr.bf16.mxu0 %v5739
        %8043 = vmatpush1.bf16.msra.mxu0 %v5738
        %8044 = vmatprep.subr.bf16.mxu0 %v5763
        %8045 = vmatpush1.bf16.msra.mxu0 %v5762
        %8046 = vmatprep.subr.bf16.mxu0 %v5787
        %8047 = vmatpush1.bf16.msra.mxu0 %v5786
        %8048 = vmatprep.subr.bf16.mxu0 %v5811
        %8049 = vmatpush1.bf16.msra.mxu0 %v5810
        %8050 = vmatprep.subr.bf16.mxu0 %v5835
        %8051 = vmatpush1.bf16.msra.mxu0 %v5834
        %8052 = vmatprep.subr.bf16.mxu0 %v5859
        %8053 = vmatpush1.bf16.msra.mxu0 %v5858
        %8054 = vmatprep.subr.bf16.mxu0 %v5883
        %8055 = vmatpush1.bf16.msra.mxu0 %v5882
        %8056 = vmatprep.subr.bf16.mxu0 %v5907
        %8057 = vmatpush1.bf16.msra.mxu0 %v5906
        %8058 = vmatprep.subr.bf16.mxu0 %v5931
        %8059 = vmatpush1.bf16.msra.mxu0 %v5930
        %8060 = vmatprep.subr.bf16.mxu0 %v5955
        %8061 = vmatpush1.bf16.msra.mxu0 %v5954
        %8062 = vmatprep.subr.bf16.mxu0 %v5979
        %8063 = vmatpush1.bf16.msra.mxu0 %v5978
        %8064 = vmatprep.subr.bf16.mxu0 %v6003
        %8065 = vmatpush1.bf16.msra.mxu0 %v6002
        %8066 = vmatprep.subr.bf16.mxu0 %v6027
        %8067 = vmatpush1.bf16.msra.mxu0 %v6026
        %8068 = vmatprep.mubr.bf16.mxu0 %v1731
        %8069 = vmatmul.mubr.bf16.gmra.mrb[0].mxu0 %v1730
        %v8070 = vpop.f32.mrb[0].mxu0
        %v8071 = vadd.f32 %v7958, %v8070
        %v8072 = vpop.f32.mrb[0].mxu0
        %v8073 = vadd.f32 %v7960, %v8072
        %v8074 = vpop.f32.mrb[0].mxu0
        %v8075 = vadd.f32 %v7962, %v8074
        %v8076 = vpop.f32.mrb[0].mxu0
        %v8077 = vadd.f32 %v7964, %v8076
        %8078 = vmatprep.mubr.bf16.mxu0 %v1737
        %8079 = vmatmul.mubr.bf16.gmra.mrb[0].mxu0 %v1736
        %v8080 = vpop.f32.mrb[0].mxu0
        %v8081 = vadd.f32 %v7968, %v8080
        %v8082 = vpop.f32.mrb[0].mxu0
        %v8083 = vadd.f32 %v7970, %v8082
        %v8084 = vpop.f32.mrb[0].mxu0
        %v8085 = vadd.f32 %v7972, %v8084
        %v8086 = vpop.f32.mrb[0].mxu0
        %v8087 = vadd.f32 %v7974, %v8086
        %8088 = vmatprep.mubr.bf16.mxu0 %v1743
        %8089 = vmatmul.mubr.bf16.gmra.mrb[0].mxu0 %v1742
        %v8090 = vpop.f32.mrb[0].mxu0
        %v8091 = vadd.f32 %v7978, %v8090
        %v8092 = vpop.f32.mrb[0].mxu0
        %v8093 = vadd.f32 %v7980, %v8092
        %v8094 = vpop.f32.mrb[0].mxu0
        %v8095 = vadd.f32 %v7982, %v8094
        %v8096 = vpop.f32.mrb[0].mxu0
        %v8097 = vadd.f32 %v7984, %v8096
        %8098 = vmatprep.mubr.bf16.mxu0 %v1749
        %8099 = vmatmul.mubr.bf16.gmra.mrb[0].mxu0 %v1748
        %v8100 = vpop.f32.mrb[0].mxu0
        %v8101 = vadd.f32 %v7988, %v8100
        %v8102 = vpop.f32.mrb[0].mxu0
        %v8103 = vadd.f32 %v7990, %v8102
        %v8104 = vpop.f32.mrb[0].mxu0
        %v8105 = vadd.f32 %v7992, %v8104
        %v8106 = vpop.f32.mrb[0].mxu0
        %v8107 = vadd.f32 %v7994, %v8106
        %8108 = vmatprep.mubr.bf16.mxu0 %v1755
        %8109 = vmatmul.mubr.bf16.gmra.mrb[0].mxu0 %v1754
        %v8110 = vpop.f32.mrb[0].mxu0
        %v8111 = vadd.f32 %v7998, %v8110
        %v8112 = vpop.f32.mrb[0].mxu0
        %v8113 = vadd.f32 %v8000, %v8112
        %v8114 = vpop.f32.mrb[0].mxu0
        %v8115 = vadd.f32 %v8002, %v8114
        %v8116 = vpop.f32.mrb[0].mxu0
        %v8117 = vadd.f32 %v8004, %v8116
        %8118 = vmatprep.mubr.bf16.mxu0 %v1761
        %8119 = vmatmul.mubr.bf16.gmra.mrb[0].mxu0 %v1760
        %v8120 = vpop.f32.mrb[0].mxu0
        %v8121 = vadd.f32 %v8008, %v8120
        %v8122 = vpop.f32.mrb[0].mxu0
        %v8123 = vadd.f32 %v8010, %v8122
        %v8124 = vpop.f32.mrb[0].mxu0
        %v8125 = vadd.f32 %v8012, %v8124
        %v8126 = vpop.f32.mrb[0].mxu0
        %v8127 = vadd.f32 %v8014, %v8126
        %8128 = vmatprep.mubr.bf16.mxu0 %v1767
        %8129 = vmatmul.mubr.bf16.gmra.mrb[0].mxu0 %v1766
        %v8130 = vpop.f32.mrb[0].mxu0
        %v8131 = vadd.f32 %v8018, %v8130
        %v8132 = vpop.f32.mrb[0].mxu0
        %v8133 = vadd.f32 %v8020, %v8132
        %v8134 = vpop.f32.mrb[0].mxu0
        %v8135 = vadd.f32 %v8022, %v8134
        %v8136 = vpop.f32.mrb[0].mxu0
        %v8137 = vadd.f32 %v8024, %v8136
        %8138 = vmatprep.mubr.bf16.mxu0 %v1773
        %8139 = vmatmul.mubr.bf16.gmra.mrb[0].mxu0 %v1772
        %v8140 = vpop.f32.mrb[0].mxu0
        %v8141 = vadd.f32 %v8028, %v8140
        %v8142 = vpop.f32.mrb[0].mxu0
        %v8143 = vadd.f32 %v8030, %v8142
        %v8144 = vpop.f32.mrb[0].mxu0
        %v8145 = vadd.f32 %v8032, %v8144
        %v8146 = vpop.f32.mrb[0].mxu0
        %v8147 = vadd.f32 %v8034, %v8146
        %8148 = vdwg.mxu0
        %8149 = vmatprep.subr.bf16.mxu0 %v6051
        %8150 = vmatpush1.bf16.msra.mxu0 %v6050
        %8151 = vmatprep.subr.bf16.mxu0 %v6075
        %8152 = vmatpush1.bf16.msra.mxu0 %v6074
        %8153 = vmatprep.subr.bf16.mxu0 %v6099
        %8154 = vmatpush1.bf16.msra.mxu0 %v6098
        %8155 = vmatprep.subr.bf16.mxu0 %v6123
        %8156 = vmatpush1.bf16.msra.mxu0 %v6122
        %8157 = vmatprep.subr.bf16.mxu0 %v6147
        %8158 = vmatpush1.bf16.msra.mxu0 %v6146
        %8159 = vmatprep.subr.bf16.mxu0 %v6171
        %8160 = vmatpush1.bf16.msra.mxu0 %v6170
        %8161 = vmatprep.subr.bf16.mxu0 %v6195
        %8162 = vmatpush1.bf16.msra.mxu0 %v6194
        %8163 = vmatprep.subr.bf16.mxu0 %v6219
        %8164 = vmatpush1.bf16.msra.mxu0 %v6218
        %8165 = vmatprep.subr.bf16.mxu0 %v6243
        %8166 = vmatpush1.bf16.msra.mxu0 %v6242
        %8167 = vmatprep.subr.bf16.mxu0 %v6267
        %8168 = vmatpush1.bf16.msra.mxu0 %v6266
        %8169 = vmatprep.subr.bf16.mxu0 %v6291
        %8170 = vmatpush1.bf16.msra.mxu0 %v6290
        %8171 = vmatprep.subr.bf16.mxu0 %v6315
        %8172 = vmatpush1.bf16.msra.mxu0 %v6314
        %8173 = vmatprep.subr.bf16.mxu0 %v6339
        %8174 = vmatpush1.bf16.msra.mxu0 %v6338
        %8175 = vmatprep.subr.bf16.mxu0 %v6363
        %8176 = vmatpush1.bf16.msra.mxu0 %v6362
        %8177 = vmatprep.subr.bf16.mxu0 %v6387
        %8178 = vmatpush1.bf16.msra.mxu0 %v6386
        %8179 = vmatprep.subr.bf16.mxu0 %v6411
        %8180 = vmatpush1.bf16.msra.mxu0 %v6410
        %8181 = vmatprep.mubr.bf16.mxu0 %v1733
        %8182 = vmatmul.mubr.bf16.gmra.mrb[0].mxu0 %v1732
        %v8183 = vpop.f32.mrb[0].mxu0
        %v8184 = vadd.f32 %v8071, %v8183
        %v8185 = vpop.f32.mrb[0].mxu0
        %v8186 = vadd.f32 %v8073, %v8185
        %v8187 = vpop.f32.mrb[0].mxu0
        %v8188 = vadd.f32 %v8075, %v8187
        %v8189 = vpop.f32.mrb[0].mxu0
        %v8190 = vadd.f32 %v8077, %v8189
        %8191 = vmatprep.mubr.bf16.mxu0 %v1739
        %8192 = vmatmul.mubr.bf16.gmra.mrb[0].mxu0 %v1738
        %v8193 = vpop.f32.mrb[0].mxu0
        %v8194 = vadd.f32 %v8081, %v8193
        %v8195 = vpop.f32.mrb[0].mxu0
        %v8196 = vadd.f32 %v8083, %v8195
        %v8197 = vpop.f32.mrb[0].mxu0
        %v8198 = vadd.f32 %v8085, %v8197
        %v8199 = vpop.f32.mrb[0].mxu0
        %v8200 = vadd.f32 %v8087, %v8199
        %8201 = vmatprep.mubr.bf16.mxu0 %v1745
        %8202 = vmatmul.mubr.bf16.gmra.mrb[0].mxu0 %v1744
        %v8203 = vpop.f32.mrb[0].mxu0
        %v8204 = vadd.f32 %v8091, %v8203
        %v8205 = vpop.f32.mrb[0].mxu0
        %v8206 = vadd.f32 %v8093, %v8205
        %v8207 = vpop.f32.mrb[0].mxu0
        %v8208 = vadd.f32 %v8095, %v8207
        %v8209 = vpop.f32.mrb[0].mxu0
        %v8210 = vadd.f32 %v8097, %v8209
        %8211 = vmatprep.mubr.bf16.mxu0 %v1751
        %8212 = vmatmul.mubr.bf16.gmra.mrb[0].mxu0 %v1750
        %v8213 = vpop.f32.mrb[0].mxu0
        %v8214 = vadd.f32 %v8101, %v8213
        %v8215 = vpop.f32.mrb[0].mxu0
        %v8216 = vadd.f32 %v8103, %v8215
        %v8217 = vpop.f32.mrb[0].mxu0
        %v8218 = vadd.f32 %v8105, %v8217
        %v8219 = vpop.f32.mrb[0].mxu0
        %v8220 = vadd.f32 %v8107, %v8219
        %8221 = vmatprep.mubr.bf16.mxu0 %v1757
        %8222 = vmatmul.mubr.bf16.gmra.mrb[0].mxu0 %v1756
        %v8223 = vpop.f32.mrb[0].mxu0
        %v8224 = vadd.f32 %v8111, %v8223
        %v8225 = vpop.f32.mrb[0].mxu0
        %v8226 = vadd.f32 %v8113, %v8225
        %v8227 = vpop.f32.mrb[0].mxu0
        %v8228 = vadd.f32 %v8115, %v8227
        %v8229 = vpop.f32.mrb[0].mxu0
        %v8230 = vadd.f32 %v8117, %v8229
        %8231 = vmatprep.mubr.bf16.mxu0 %v1763
        %8232 = vmatmul.mubr.bf16.gmra.mrb[0].mxu0 %v1762
        %v8233 = vpop.f32.mrb[0].mxu0
        %v8234 = vadd.f32 %v8121, %v8233
        %v8235 = vpop.f32.mrb[0].mxu0
        %v8236 = vadd.f32 %v8123, %v8235
        %v8237 = vpop.f32.mrb[0].mxu0
        %v8238 = vadd.f32 %v8125, %v8237
        %v8239 = vpop.f32.mrb[0].mxu0
        %v8240 = vadd.f32 %v8127, %v8239
        %8241 = vmatprep.mubr.bf16.mxu0 %v1769
        %8242 = vmatmul.mubr.bf16.gmra.mrb[0].mxu0 %v1768
        %v8243 = vpop.f32.mrb[0].mxu0
        %v8244 = vadd.f32 %v8131, %v8243
        %v8245 = vpop.f32.mrb[0].mxu0
        %v8246 = vadd.f32 %v8133, %v8245
        %v8247 = vpop.f32.mrb[0].mxu0
        %v8248 = vadd.f32 %v8135, %v8247
        %v8249 = vpop.f32.mrb[0].mxu0
        %v8250 = vadd.f32 %v8137, %v8249
        %8251 = vmatprep.mubr.bf16.mxu0 %v1775
        %8252 = vmatmul.mubr.bf16.gmra.mrb[0].mxu0 %v1774
        %v8253 = vpop.f32.mrb[0].mxu0
        %v8254 = vadd.f32 %v8141, %v8253
        %v8255 = vpop.f32.mrb[0].mxu0
        %v8256 = vadd.f32 %v8143, %v8255
        %v8257 = vpop.f32.mrb[0].mxu0
        %v8258 = vadd.f32 %v8145, %v8257
        %v8259 = vpop.f32.mrb[0].mxu0
        %v8260 = vadd.f32 %v8147, %v8259
        %8261 = vdwg.mxu0
        %8262 = vmatprep.subr.bf16.mxu0 %v5285
        %8263 = vmatpush1.bf16.msra.mxu0 %v5284
        %8264 = vmatprep.subr.bf16.mxu0 %v5309
        %8265 = vmatpush1.bf16.msra.mxu0 %v5308
        %8266 = vmatprep.subr.bf16.mxu0 %v5333
        %8267 = vmatpush1.bf16.msra.mxu0 %v5332
        %8268 = vmatprep.subr.bf16.mxu0 %v5357
        %8269 = vmatpush1.bf16.msra.mxu0 %v5356
        %8270 = vmatprep.subr.bf16.mxu0 %v5381
        %8271 = vmatpush1.bf16.msra.mxu0 %v5380
        %8272 = vmatprep.subr.bf16.mxu0 %v5405
        %8273 = vmatpush1.bf16.msra.mxu0 %v5404
        %8274 = vmatprep.subr.bf16.mxu0 %v5429
        %8275 = vmatpush1.bf16.msra.mxu0 %v5428
        %8276 = vmatprep.subr.bf16.mxu0 %v5453
        %8277 = vmatpush1.bf16.msra.mxu0 %v5452
        %8278 = vmatprep.subr.bf16.mxu0 %v5477
        %8279 = vmatpush1.bf16.msra.mxu0 %v5476
        %8280 = vmatprep.subr.bf16.mxu0 %v5501
        %8281 = vmatpush1.bf16.msra.mxu0 %v5500
        %8282 = vmatprep.subr.bf16.mxu0 %v5525
        %8283 = vmatpush1.bf16.msra.mxu0 %v5524
        %8284 = vmatprep.subr.bf16.mxu0 %v5549
        %8285 = vmatpush1.bf16.msra.mxu0 %v5548
        %8286 = vmatprep.subr.bf16.mxu0 %v5573
        %8287 = vmatpush1.bf16.msra.mxu0 %v5572
        %8288 = vmatprep.subr.bf16.mxu0 %v5597
        %8289 = vmatpush1.bf16.msra.mxu0 %v5596
        %8290 = vmatprep.subr.bf16.mxu0 %v5621
        %8291 = vmatpush1.bf16.msra.mxu0 %v5620
        %8292 = vmatprep.subr.bf16.mxu0 %v5645
        %8293 = vmatpush1.bf16.msra.mxu0 %v5644
        %8294 = vmatprep.mubr.bf16.mxu0 %v1729
        %8295 = vmatmul.mubr.bf16.gmra.mrb[0].mxu0 %v1728
        %v8296 = vpop.f32.mrb[0].mxu0
        %v8297 = vadd.f32 %v1483, %v8296
        %v8298 = vpop.f32.mrb[0].mxu0
        %v8299 = vadd.f32 %v1487, %v8298
        %v8300 = vpop.f32.mrb[0].mxu0
        %v8301 = vadd.f32 %v1483, %v8300
        %v8302 = vpop.f32.mrb[0].mxu0
        %v8303 = vadd.f32 %v1487, %v8302
        %8304 = vmatprep.mubr.bf16.mxu0 %v1735
        %8305 = vmatmul.mubr.bf16.gmra.mrb[0].mxu0 %v1734
        %v8306 = vpop.f32.mrb[0].mxu0
        %v8307 = vadd.f32 %v1483, %v8306
        %v8308 = vpop.f32.mrb[0].mxu0
        %v8309 = vadd.f32 %v1487, %v8308
        %v8310 = vpop.f32.mrb[0].mxu0
        %v8311 = vadd.f32 %v1483, %v8310
        %v8312 = vpop.f32.mrb[0].mxu0
        %v8313 = vadd.f32 %v1487, %v8312
        %8314 = vmatprep.mubr.bf16.mxu0 %v1741
        %8315 = vmatmul.mubr.bf16.gmra.mrb[0].mxu0 %v1740
        %v8316 = vpop.f32.mrb[0].mxu0
        %v8317 = vadd.f32 %v1483, %v8316
        %v8318 = vpop.f32.mrb[0].mxu0
        %v8319 = vadd.f32 %v1487, %v8318
        %v8320 = vpop.f32.mrb[0].mxu0
        %v8321 = vadd.f32 %v1483, %v8320
        %v8322 = vpop.f32.mrb[0].mxu0
        %v8323 = vadd.f32 %v1487, %v8322
        %8324 = vmatprep.mubr.bf16.mxu0 %v1747
        %8325 = vmatmul.mubr.bf16.gmra.mrb[0].mxu0 %v1746
        %v8326 = vpop.f32.mrb[0].mxu0
        %v8327 = vadd.f32 %v1483, %v8326
        %v8328 = vpop.f32.mrb[0].mxu0
        %v8329 = vadd.f32 %v1487, %v8328
        %v8330 = vpop.f32.mrb[0].mxu0
        %v8331 = vadd.f32 %v1483, %v8330
        %v8332 = vpop.f32.mrb[0].mxu0
        %v8333 = vadd.f32 %v1487, %v8332
        %8334 = vmatprep.mubr.bf16.mxu0 %v1753
        %8335 = vmatmul.mubr.bf16.gmra.mrb[0].mxu0 %v1752
        %v8336 = vpop.f32.mrb[0].mxu0
        %v8337 = vadd.f32 %v1483, %v8336
        %v8338 = vpop.f32.mrb[0].mxu0
        %v8339 = vadd.f32 %v1487, %v8338
        %v8340 = vpop.f32.mrb[0].mxu0
        %v8341 = vadd.f32 %v1483, %v8340
        %v8342 = vpop.f32.mrb[0].mxu0
        %v8343 = vadd.f32 %v1487, %v8342
        %8344 = vmatprep.mubr.bf16.mxu0 %v1759
        %8345 = vmatmul.mubr.bf16.gmra.mrb[0].mxu0 %v1758
        %v8346 = vpop.f32.mrb[0].mxu0
        %v8347 = vadd.f32 %v1483, %v8346
        %v8348 = vpop.f32.mrb[0].mxu0
        %v8349 = vadd.f32 %v1487, %v8348
        %v8350 = vpop.f32.mrb[0].mxu0
        %v8351 = vadd.f32 %v1483, %v8350
        %v8352 = vpop.f32.mrb[0].mxu0
        %v8353 = vadd.f32 %v1487, %v8352
        %8354 = vmatprep.mubr.bf16.mxu0 %v1765
        %8355 = vmatmul.mubr.bf16.gmra.mrb[0].mxu0 %v1764
        %v8356 = vpop.f32.mrb[0].mxu0
        %v8357 = vadd.f32 %v1483, %v8356
        %v8358 = vpop.f32.mrb[0].mxu0
        %v8359 = vadd.f32 %v1487, %v8358
        %v8360 = vpop.f32.mrb[0].mxu0
        %v8361 = vadd.f32 %v1483, %v8360
        %v8362 = vpop.f32.mrb[0].mxu0
        %v8363 = vadd.f32 %v1487, %v8362
        %8364 = vmatprep.mubr.bf16.mxu0 %v1771
        %8365 = vmatmul.mubr.bf16.gmra.mrb[0].mxu0 %v1770
        %v8366 = vpop.f32.mrb[0].mxu0
        %v8367 = vadd.f32 %v1483, %v8366
        %v8368 = vpop.f32.mrb[0].mxu0
        %v8369 = vadd.f32 %v1487, %v8368
        %v8370 = vpop.f32.mrb[0].mxu0
        %v8371 = vadd.f32 %v1483, %v8370
        %v8372 = vpop.f32.mrb[0].mxu0
        %v8373 = vadd.f32 %v1487, %v8372
        %8374 = vdwg.mxu0
        %8375 = vmatprep.subr.bf16.mxu0 %v5669
        %8376 = vmatpush1.bf16.msra.mxu0 %v5668
        %8377 = vmatprep.subr.bf16.mxu0 %v5693
        %8378 = vmatpush1.bf16.msra.mxu0 %v5692
        %8379 = vmatprep.subr.bf16.mxu0 %v5717
        %8380 = vmatpush1.bf16.msra.mxu0 %v5716
        %8381 = vmatprep.subr.bf16.mxu0 %v5741
        %8382 = vmatpush1.bf16.msra.mxu0 %v5740
        %8383 = vmatprep.subr.bf16.mxu0 %v5765
        %8384 = vmatpush1.bf16.msra.mxu0 %v5764
        %8385 = vmatprep.subr.bf16.mxu0 %v5789
        %8386 = vmatpush1.bf16.msra.mxu0 %v5788
        %8387 = vmatprep.subr.bf16.mxu0 %v5813
        %8388 = vmatpush1.bf16.msra.mxu0 %v5812
        %8389 = vmatprep.subr.bf16.mxu0 %v5837
        %8390 = vmatpush1.bf16.msra.mxu0 %v5836
        %8391 = vmatprep.subr.bf16.mxu0 %v5861
        %8392 = vmatpush1.bf16.msra.mxu0 %v5860
        %8393 = vmatprep.subr.bf16.mxu0 %v5885
        %8394 = vmatpush1.bf16.msra.mxu0 %v5884
        %8395 = vmatprep.subr.bf16.mxu0 %v5909
        %8396 = vmatpush1.bf16.msra.mxu0 %v5908
        %8397 = vmatprep.subr.bf16.mxu0 %v5933
        %8398 = vmatpush1.bf16.msra.mxu0 %v5932
        %8399 = vmatprep.subr.bf16.mxu0 %v5957
        %8400 = vmatpush1.bf16.msra.mxu0 %v5956
        %8401 = vmatprep.subr.bf16.mxu0 %v5981
        %8402 = vmatpush1.bf16.msra.mxu0 %v5980
        %8403 = vmatprep.subr.bf16.mxu0 %v6005
        %8404 = vmatpush1.bf16.msra.mxu0 %v6004
        %8405 = vmatprep.subr.bf16.mxu0 %v6029
        %8406 = vmatpush1.bf16.msra.mxu0 %v6028
        %8407 = vmatprep.mubr.bf16.mxu0 %v1731
        %8408 = vmatmul.mubr.bf16.gmra.mrb[0].mxu0 %v1730
        %v8409 = vpop.f32.mrb[0].mxu0
        %v8410 = vadd.f32 %v8297, %v8409
        %v8411 = vpop.f32.mrb[0].mxu0
        %v8412 = vadd.f32 %v8299, %v8411
        %v8413 = vpop.f32.mrb[0].mxu0
        %v8414 = vadd.f32 %v8301, %v8413
        %v8415 = vpop.f32.mrb[0].mxu0
        %v8416 = vadd.f32 %v8303, %v8415
        %8417 = vmatprep.mubr.bf16.mxu0 %v1737
        %8418 = vmatmul.mubr.bf16.gmra.mrb[0].mxu0 %v1736
        %v8419 = vpop.f32.mrb[0].mxu0
        %v8420 = vadd.f32 %v8307, %v8419
        %v8421 = vpop.f32.mrb[0].mxu0
        %v8422 = vadd.f32 %v8309, %v8421
        %v8423 = vpop.f32.mrb[0].mxu0
        %v8424 = vadd.f32 %v8311, %v8423
        %v8425 = vpop.f32.mrb[0].mxu0
        %v8426 = vadd.f32 %v8313, %v8425
        %8427 = vmatprep.mubr.bf16.mxu0 %v1743
        %8428 = vmatmul.mubr.bf16.gmra.mrb[0].mxu0 %v1742
        %v8429 = vpop.f32.mrb[0].mxu0
        %v8430 = vadd.f32 %v8317, %v8429
        %v8431 = vpop.f32.mrb[0].mxu0
        %v8432 = vadd.f32 %v8319, %v8431
        %v8433 = vpop.f32.mrb[0].mxu0
        %v8434 = vadd.f32 %v8321, %v8433
        %v8435 = vpop.f32.mrb[0].mxu0
        %v8436 = vadd.f32 %v8323, %v8435
        %8437 = vmatprep.mubr.bf16.mxu0 %v1749
        %8438 = vmatmul.mubr.bf16.gmra.mrb[0].mxu0 %v1748
        %v8439 = vpop.f32.mrb[0].mxu0
        %v8440 = vadd.f32 %v8327, %v8439
        %v8441 = vpop.f32.mrb[0].mxu0
        %v8442 = vadd.f32 %v8329, %v8441
        %v8443 = vpop.f32.mrb[0].mxu0
        %v8444 = vadd.f32 %v8331, %v8443
        %v8445 = vpop.f32.mrb[0].mxu0
        %v8446 = vadd.f32 %v8333, %v8445
        %8447 = vmatprep.mubr.bf16.mxu0 %v1755
        %8448 = vmatmul.mubr.bf16.gmra.mrb[0].mxu0 %v1754
        %v8449 = vpop.f32.mrb[0].mxu0
        %v8450 = vadd.f32 %v8337, %v8449
        %v8451 = vpop.f32.mrb[0].mxu0
        %v8452 = vadd.f32 %v8339, %v8451
        %v8453 = vpop.f32.mrb[0].mxu0
        %v8454 = vadd.f32 %v8341, %v8453
        %v8455 = vpop.f32.mrb[0].mxu0
        %v8456 = vadd.f32 %v8343, %v8455
        %8457 = vmatprep.mubr.bf16.mxu0 %v1761
        %8458 = vmatmul.mubr.bf16.gmra.mrb[0].mxu0 %v1760
        %v8459 = vpop.f32.mrb[0].mxu0
        %v8460 = vadd.f32 %v8347, %v8459
        %v8461 = vpop.f32.mrb[0].mxu0
        %v8462 = vadd.f32 %v8349, %v8461
        %v8463 = vpop.f32.mrb[0].mxu0
        %v8464 = vadd.f32 %v8351, %v8463
        %v8465 = vpop.f32.mrb[0].mxu0
        %v8466 = vadd.f32 %v8353, %v8465
        %8467 = vmatprep.mubr.bf16.mxu0 %v1767
        %8468 = vmatmul.mubr.bf16.gmra.mrb[0].mxu0 %v1766
        %v8469 = vpop.f32.mrb[0].mxu0
        %v8470 = vadd.f32 %v8357, %v8469
        %v8471 = vpop.f32.mrb[0].mxu0
        %v8472 = vadd.f32 %v8359, %v8471
        %v8473 = vpop.f32.mrb[0].mxu0
        %v8474 = vadd.f32 %v8361, %v8473
        %v8475 = vpop.f32.mrb[0].mxu0
        %v8476 = vadd.f32 %v8363, %v8475
        %8477 = vmatprep.mubr.bf16.mxu0 %v1773
        %8478 = vmatmul.mubr.bf16.gmra.mrb[0].mxu0 %v1772
        %v8479 = vpop.f32.mrb[0].mxu0
        %v8480 = vadd.f32 %v8367, %v8479
        %v8481 = vpop.f32.mrb[0].mxu0
        %v8482 = vadd.f32 %v8369, %v8481
        %v8483 = vpop.f32.mrb[0].mxu0
        %v8484 = vadd.f32 %v8371, %v8483
        %v8485 = vpop.f32.mrb[0].mxu0
        %v8486 = vadd.f32 %v8373, %v8485
        %8487 = vdwg.mxu0
        %8488 = vmatprep.subr.bf16.mxu0 %v6053
        %8489 = vmatpush1.bf16.msra.mxu0 %v6052
        %8490 = vmatprep.subr.bf16.mxu0 %v6077
        %8491 = vmatpush1.bf16.msra.mxu0 %v6076
        %8492 = vmatprep.subr.bf16.mxu0 %v6101
        %8493 = vmatpush1.bf16.msra.mxu0 %v6100
        %8494 = vmatprep.subr.bf16.mxu0 %v6125
        %8495 = vmatpush1.bf16.msra.mxu0 %v6124
        %8496 = vmatprep.subr.bf16.mxu0 %v6149
        %8497 = vmatpush1.bf16.msra.mxu0 %v6148
        %8498 = vmatprep.subr.bf16.mxu0 %v6173
        %8499 = vmatpush1.bf16.msra.mxu0 %v6172
        %8500 = vmatprep.subr.bf16.mxu0 %v6197
        %8501 = vmatpush1.bf16.msra.mxu0 %v6196
        %8502 = vmatprep.subr.bf16.mxu0 %v6221
        %8503 = vmatpush1.bf16.msra.mxu0 %v6220
        %8504 = vmatprep.subr.bf16.mxu0 %v6245
        %8505 = vmatpush1.bf16.msra.mxu0 %v6244
        %8506 = vmatprep.subr.bf16.mxu0 %v6269
        %8507 = vmatpush1.bf16.msra.mxu0 %v6268
        %8508 = vmatprep.subr.bf16.mxu0 %v6293
        %8509 = vmatpush1.bf16.msra.mxu0 %v6292
        %8510 = vmatprep.subr.bf16.mxu0 %v6317
        %8511 = vmatpush1.bf16.msra.mxu0 %v6316
        %8512 = vmatprep.subr.bf16.mxu0 %v6341
        %8513 = vmatpush1.bf16.msra.mxu0 %v6340
        %8514 = vmatprep.subr.bf16.mxu0 %v6365
        %8515 = vmatpush1.bf16.msra.mxu0 %v6364
        %8516 = vmatprep.subr.bf16.mxu0 %v6389
        %8517 = vmatpush1.bf16.msra.mxu0 %v6388
        %8518 = vmatprep.subr.bf16.mxu0 %v6413
        %8519 = vmatpush1.bf16.msra.mxu0 %v6412
        %8520 = vmatprep.mubr.bf16.mxu0 %v1733
        %8521 = vmatmul.mubr.bf16.gmra.mrb[0].mxu0 %v1732
        %v8522 = vpop.f32.mrb[0].mxu0
        %v8523 = vadd.f32 %v8410, %v8522
        %v8524 = vpop.f32.mrb[0].mxu0
        %v8525 = vadd.f32 %v8412, %v8524
        %v8526 = vpop.f32.mrb[0].mxu0
        %v8527 = vadd.f32 %v8414, %v8526
        %v8528 = vpop.f32.mrb[0].mxu0
        %v8529 = vadd.f32 %v8416, %v8528
        %8530 = vmatprep.mubr.bf16.mxu0 %v1739
        %8531 = vmatmul.mubr.bf16.gmra.mrb[0].mxu0 %v1738
        %v8532 = vpop.f32.mrb[0].mxu0
        %v8533 = vadd.f32 %v8420, %v8532
        %v8534 = vpop.f32.mrb[0].mxu0
        %v8535 = vadd.f32 %v8422, %v8534
        %v8536 = vpop.f32.mrb[0].mxu0
        %v8537 = vadd.f32 %v8424, %v8536
        %v8538 = vpop.f32.mrb[0].mxu0
        %v8539 = vadd.f32 %v8426, %v8538
        %8540 = vmatprep.mubr.bf16.mxu0 %v1745
        %8541 = vmatmul.mubr.bf16.gmra.mrb[0].mxu0 %v1744
        %v8542 = vpop.f32.mrb[0].mxu0
        %v8543 = vadd.f32 %v8430, %v8542
        %v8544 = vpop.f32.mrb[0].mxu0
        %v8545 = vadd.f32 %v8432, %v8544
        %v8546 = vpop.f32.mrb[0].mxu0
        %v8547 = vadd.f32 %v8434, %v8546
        %v8548 = vpop.f32.mrb[0].mxu0
        %v8549 = vadd.f32 %v8436, %v8548
        %8550 = vmatprep.mubr.bf16.mxu0 %v1751
        %8551 = vmatmul.mubr.bf16.gmra.mrb[0].mxu0 %v1750
        %v8552 = vpop.f32.mrb[0].mxu0
        %v8553 = vadd.f32 %v8440, %v8552
        %v8554 = vpop.f32.mrb[0].mxu0
        %v8555 = vadd.f32 %v8442, %v8554
        %v8556 = vpop.f32.mrb[0].mxu0
        %v8557 = vadd.f32 %v8444, %v8556
        %v8558 = vpop.f32.mrb[0].mxu0
        %v8559 = vadd.f32 %v8446, %v8558
        %8560 = vmatprep.mubr.bf16.mxu0 %v1757
        %8561 = vmatmul.mubr.bf16.gmra.mrb[0].mxu0 %v1756
        %v8562 = vpop.f32.mrb[0].mxu0
        %v8563 = vadd.f32 %v8450, %v8562
        %v8564 = vpop.f32.mrb[0].mxu0
        %v8565 = vadd.f32 %v8452, %v8564
        %v8566 = vpop.f32.mrb[0].mxu0
        %v8567 = vadd.f32 %v8454, %v8566
        %v8568 = vpop.f32.mrb[0].mxu0
        %v8569 = vadd.f32 %v8456, %v8568
        %8570 = vmatprep.mubr.bf16.mxu0 %v1763
        %8571 = vmatmul.mubr.bf16.gmra.mrb[0].mxu0 %v1762
        %v8572 = vpop.f32.mrb[0].mxu0
        %v8573 = vadd.f32 %v8460, %v8572
        %v8574 = vpop.f32.mrb[0].mxu0
        %v8575 = vadd.f32 %v8462, %v8574
        %v8576 = vpop.f32.mrb[0].mxu0
        %v8577 = vadd.f32 %v8464, %v8576
        %v8578 = vpop.f32.mrb[0].mxu0
        %v8579 = vadd.f32 %v8466, %v8578
        %8580 = vmatprep.mubr.bf16.mxu0 %v1769
        %8581 = vmatmul.mubr.bf16.gmra.mrb[0].mxu0 %v1768
        %v8582 = vpop.f32.mrb[0].mxu0
        %v8583 = vadd.f32 %v8470, %v8582
        %v8584 = vpop.f32.mrb[0].mxu0
        %v8585 = vadd.f32 %v8472, %v8584
        %v8586 = vpop.f32.mrb[0].mxu0
        %v8587 = vadd.f32 %v8474, %v8586
        %v8588 = vpop.f32.mrb[0].mxu0
        %v8589 = vadd.f32 %v8476, %v8588
        %8590 = vmatprep.mubr.bf16.mxu0 %v1775
        %8591 = vmatmul.mubr.bf16.gmra.mrb[0].mxu0 %v1774
        %v8592 = vpop.f32.mrb[0].mxu0
        %v8593 = vadd.f32 %v8480, %v8592
        %v8594 = vpop.f32.mrb[0].mxu0
        %v8595 = vadd.f32 %v8482, %v8594
        %v8596 = vpop.f32.mrb[0].mxu0
        %v8597 = vadd.f32 %v8484, %v8596
        %v8598 = vpop.f32.mrb[0].mxu0
        %v8599 = vadd.f32 %v8486, %v8598
        %8600 = vdwg.mxu0
        %8601 = vmatprep.subr.bf16.mxu0 %v5287
        %8602 = vmatpush1.bf16.msra.mxu0 %v5286
        %8603 = vmatprep.subr.bf16.mxu0 %v5311
        %8604 = vmatpush1.bf16.msra.mxu0 %v5310
        %8605 = vmatprep.subr.bf16.mxu0 %v5335
        %8606 = vmatpush1.bf16.msra.mxu0 %v5334
        %8607 = vmatprep.subr.bf16.mxu0 %v5359
        %8608 = vmatpush1.bf16.msra.mxu0 %v5358
        %8609 = vmatprep.subr.bf16.mxu0 %v5383
        %8610 = vmatpush1.bf16.msra.mxu0 %v5382
        %8611 = vmatprep.subr.bf16.mxu0 %v5407
        %8612 = vmatpush1.bf16.msra.mxu0 %v5406
        %8613 = vmatprep.subr.bf16.mxu0 %v5431
        %8614 = vmatpush1.bf16.msra.mxu0 %v5430
        %8615 = vmatprep.subr.bf16.mxu0 %v5455
        %8616 = vmatpush1.bf16.msra.mxu0 %v5454
        %8617 = vmatprep.subr.bf16.mxu0 %v5479
        %8618 = vmatpush1.bf16.msra.mxu0 %v5478
        %8619 = vmatprep.subr.bf16.mxu0 %v5503
        %8620 = vmatpush1.bf16.msra.mxu0 %v5502
        %8621 = vmatprep.subr.bf16.mxu0 %v5527
        %8622 = vmatpush1.bf16.msra.mxu0 %v5526
        %8623 = vmatprep.subr.bf16.mxu0 %v5551
        %8624 = vmatpush1.bf16.msra.mxu0 %v5550
        %8625 = vmatprep.subr.bf16.mxu0 %v5575
        %8626 = vmatpush1.bf16.msra.mxu0 %v5574
        %8627 = vmatprep.subr.bf16.mxu0 %v5599
        %8628 = vmatpush1.bf16.msra.mxu0 %v5598
        %8629 = vmatprep.subr.bf16.mxu0 %v5623
        %8630 = vmatpush1.bf16.msra.mxu0 %v5622
        %8631 = vmatprep.subr.bf16.mxu0 %v5647
        %8632 = vmatpush1.bf16.msra.mxu0 %v5646
        %8633 = vmatprep.mubr.bf16.mxu0 %v1729
        %8634 = vmatmul.mubr.bf16.gmra.mrb[0].mxu0 %v1728
        %v8635 = vpop.f32.mrb[0].mxu0
        %v8636 = vadd.f32 %v1491, %v8635
        %v8637 = vpop.f32.mrb[0].mxu0
        %v8638 = vadd.f32 %v1495, %v8637
        %v8639 = vpop.f32.mrb[0].mxu0
        %v8640 = vadd.f32 %v1491, %v8639
        %v8641 = vpop.f32.mrb[0].mxu0
        %v8642 = vadd.f32 %v1495, %v8641
        %8643 = vmatprep.mubr.bf16.mxu0 %v1735
        %8644 = vmatmul.mubr.bf16.gmra.mrb[0].mxu0 %v1734
        %v8645 = vpop.f32.mrb[0].mxu0
        %v8646 = vadd.f32 %v1491, %v8645
        %v8647 = vpop.f32.mrb[0].mxu0
        %v8648 = vadd.f32 %v1495, %v8647
        %v8649 = vpop.f32.mrb[0].mxu0
        %v8650 = vadd.f32 %v1491, %v8649
        %v8651 = vpop.f32.mrb[0].mxu0
        %v8652 = vadd.f32 %v1495, %v8651
        %8653 = vmatprep.mubr.bf16.mxu0 %v1741
        %8654 = vmatmul.mubr.bf16.gmra.mrb[0].mxu0 %v1740
        %v8655 = vpop.f32.mrb[0].mxu0
        %v8656 = vadd.f32 %v1491, %v8655
        %v8657 = vpop.f32.mrb[0].mxu0
        %v8658 = vadd.f32 %v1495, %v8657
        %v8659 = vpop.f32.mrb[0].mxu0
        %v8660 = vadd.f32 %v1491, %v8659
        %v8661 = vpop.f32.mrb[0].mxu0
        %v8662 = vadd.f32 %v1495, %v8661
        %8663 = vmatprep.mubr.bf16.mxu0 %v1747
        %8664 = vmatmul.mubr.bf16.gmra.mrb[0].mxu0 %v1746
        %v8665 = vpop.f32.mrb[0].mxu0
        %v8666 = vadd.f32 %v1491, %v8665
        %v8667 = vpop.f32.mrb[0].mxu0
        %v8668 = vadd.f32 %v1495, %v8667
        %v8669 = vpop.f32.mrb[0].mxu0
        %v8670 = vadd.f32 %v1491, %v8669
        %v8671 = vpop.f32.mrb[0].mxu0
        %v8672 = vadd.f32 %v1495, %v8671
        %8673 = vmatprep.mubr.bf16.mxu0 %v1753
        %8674 = vmatmul.mubr.bf16.gmra.mrb[0].mxu0 %v1752
        %v8675 = vpop.f32.mrb[0].mxu0
        %v8676 = vadd.f32 %v1491, %v8675
        %v8677 = vpop.f32.mrb[0].mxu0
        %v8678 = vadd.f32 %v1495, %v8677
        %v8679 = vpop.f32.mrb[0].mxu0
        %v8680 = vadd.f32 %v1491, %v8679
        %v8681 = vpop.f32.mrb[0].mxu0
        %v8682 = vadd.f32 %v1495, %v8681
        %8683 = vmatprep.mubr.bf16.mxu0 %v1759
        %8684 = vmatmul.mubr.bf16.gmra.mrb[0].mxu0 %v1758
        %v8685 = vpop.f32.mrb[0].mxu0
        %v8686 = vadd.f32 %v1491, %v8685
        %v8687 = vpop.f32.mrb[0].mxu0
        %v8688 = vadd.f32 %v1495, %v8687
        %v8689 = vpop.f32.mrb[0].mxu0
        %v8690 = vadd.f32 %v1491, %v8689
        %v8691 = vpop.f32.mrb[0].mxu0
        %v8692 = vadd.f32 %v1495, %v8691
        %8693 = vmatprep.mubr.bf16.mxu0 %v1765
        %8694 = vmatmul.mubr.bf16.gmra.mrb[0].mxu0 %v1764
        %v8695 = vpop.f32.mrb[0].mxu0
        %v8696 = vadd.f32 %v1491, %v8695
        %v8697 = vpop.f32.mrb[0].mxu0
        %v8698 = vadd.f32 %v1495, %v8697
        %v8699 = vpop.f32.mrb[0].mxu0
        %v8700 = vadd.f32 %v1491, %v8699
        %v8701 = vpop.f32.mrb[0].mxu0
        %v8702 = vadd.f32 %v1495, %v8701
        %8703 = vmatprep.mubr.bf16.mxu0 %v1771
        %8704 = vmatmul.mubr.bf16.gmra.mrb[0].mxu0 %v1770
        %v8705 = vpop.f32.mrb[0].mxu0
        %v8706 = vadd.f32 %v1491, %v8705
        %v8707 = vpop.f32.mrb[0].mxu0
        %v8708 = vadd.f32 %v1495, %v8707
        %v8709 = vpop.f32.mrb[0].mxu0
        %v8710 = vadd.f32 %v1491, %v8709
        %v8711 = vpop.f32.mrb[0].mxu0
        %v8712 = vadd.f32 %v1495, %v8711
        %8713 = vdwg.mxu0
        %8714 = vmatprep.subr.bf16.mxu0 %v5671
        %8715 = vmatpush1.bf16.msra.mxu0 %v5670
        %8716 = vmatprep.subr.bf16.mxu0 %v5695
        %8717 = vmatpush1.bf16.msra.mxu0 %v5694
        %8718 = vmatprep.subr.bf16.mxu0 %v5719
        %8719 = vmatpush1.bf16.msra.mxu0 %v5718
        %8720 = vmatprep.subr.bf16.mxu0 %v5743
        %8721 = vmatpush1.bf16.msra.mxu0 %v5742
        %8722 = vmatprep.subr.bf16.mxu0 %v5767
        %8723 = vmatpush1.bf16.msra.mxu0 %v5766
        %8724 = vmatprep.subr.bf16.mxu0 %v5791
        %8725 = vmatpush1.bf16.msra.mxu0 %v5790
        %8726 = vmatprep.subr.bf16.mxu0 %v5815
        %8727 = vmatpush1.bf16.msra.mxu0 %v5814
        %8728 = vmatprep.subr.bf16.mxu0 %v5839
        %8729 = vmatpush1.bf16.msra.mxu0 %v5838
        %8730 = vmatprep.subr.bf16.mxu0 %v5863
        %8731 = vmatpush1.bf16.msra.mxu0 %v5862
        %8732 = vmatprep.subr.bf16.mxu0 %v5887
        %8733 = vmatpush1.bf16.msra.mxu0 %v5886
        %8734 = vmatprep.subr.bf16.mxu0 %v5911
        %8735 = vmatpush1.bf16.msra.mxu0 %v5910
        %8736 = vmatprep.subr.bf16.mxu0 %v5935
        %8737 = vmatpush1.bf16.msra.mxu0 %v5934
        %8738 = vmatprep.subr.bf16.mxu0 %v5959
        %8739 = vmatpush1.bf16.msra.mxu0 %v5958
        %8740 = vmatprep.subr.bf16.mxu0 %v5983
        %8741 = vmatpush1.bf16.msra.mxu0 %v5982
        %8742 = vmatprep.subr.bf16.mxu0 %v6007
        %8743 = vmatpush1.bf16.msra.mxu0 %v6006
        %8744 = vmatprep.subr.bf16.mxu0 %v6031
        %8745 = vmatpush1.bf16.msra.mxu0 %v6030
        %8746 = vmatprep.mubr.bf16.mxu0 %v1731
        %8747 = vmatmul.mubr.bf16.gmra.mrb[0].mxu0 %v1730
        %v8748 = vpop.f32.mrb[0].mxu0
        %v8749 = vadd.f32 %v8636, %v8748
        %v8750 = vpop.f32.mrb[0].mxu0
        %v8751 = vadd.f32 %v8638, %v8750
        %v8752 = vpop.f32.mrb[0].mxu0
        %v8753 = vadd.f32 %v8640, %v8752
        %v8754 = vpop.f32.mrb[0].mxu0
        %v8755 = vadd.f32 %v8642, %v8754
        %8756 = vmatprep.mubr.bf16.mxu0 %v1737
        %8757 = vmatmul.mubr.bf16.gmra.mrb[0].mxu0 %v1736
        %v8758 = vpop.f32.mrb[0].mxu0
        %v8759 = vadd.f32 %v8646, %v8758
        %v8760 = vpop.f32.mrb[0].mxu0
        %v8761 = vadd.f32 %v8648, %v8760
        %v8762 = vpop.f32.mrb[0].mxu0
        %v8763 = vadd.f32 %v8650, %v8762
        %v8764 = vpop.f32.mrb[0].mxu0
        %v8765 = vadd.f32 %v8652, %v8764
        %8766 = vmatprep.mubr.bf16.mxu0 %v1743
        %8767 = vmatmul.mubr.bf16.gmra.mrb[0].mxu0 %v1742
        %v8768 = vpop.f32.mrb[0].mxu0
        %v8769 = vadd.f32 %v8656, %v8768
        %v8770 = vpop.f32.mrb[0].mxu0
        %v8771 = vadd.f32 %v8658, %v8770
        %v8772 = vpop.f32.mrb[0].mxu0
        %v8773 = vadd.f32 %v8660, %v8772
        %v8774 = vpop.f32.mrb[0].mxu0
        %v8775 = vadd.f32 %v8662, %v8774
        %8776 = vmatprep.mubr.bf16.mxu0 %v1749
        %8777 = vmatmul.mubr.bf16.gmra.mrb[0].mxu0 %v1748
        %v8778 = vpop.f32.mrb[0].mxu0
        %v8779 = vadd.f32 %v8666, %v8778
        %v8780 = vpop.f32.mrb[0].mxu0
        %v8781 = vadd.f32 %v8668, %v8780
        %v8782 = vpop.f32.mrb[0].mxu0
        %v8783 = vadd.f32 %v8670, %v8782
        %v8784 = vpop.f32.mrb[0].mxu0
        %v8785 = vadd.f32 %v8672, %v8784
        %8786 = vmatprep.mubr.bf16.mxu0 %v1755
        %8787 = vmatmul.mubr.bf16.gmra.mrb[0].mxu0 %v1754
        %v8788 = vpop.f32.mrb[0].mxu0
        %v8789 = vadd.f32 %v8676, %v8788
        %v8790 = vpop.f32.mrb[0].mxu0
        %v8791 = vadd.f32 %v8678, %v8790
        %v8792 = vpop.f32.mrb[0].mxu0
        %v8793 = vadd.f32 %v8680, %v8792
        %v8794 = vpop.f32.mrb[0].mxu0
        %v8795 = vadd.f32 %v8682, %v8794
        %8796 = vmatprep.mubr.bf16.mxu0 %v1761
        %8797 = vmatmul.mubr.bf16.gmra.mrb[0].mxu0 %v1760
        %v8798 = vpop.f32.mrb[0].mxu0
        %v8799 = vadd.f32 %v8686, %v8798
        %v8800 = vpop.f32.mrb[0].mxu0
        %v8801 = vadd.f32 %v8688, %v8800
        %v8802 = vpop.f32.mrb[0].mxu0
        %v8803 = vadd.f32 %v8690, %v8802
        %v8804 = vpop.f32.mrb[0].mxu0
        %v8805 = vadd.f32 %v8692, %v8804
        %8806 = vmatprep.mubr.bf16.mxu0 %v1767
        %8807 = vmatmul.mubr.bf16.gmra.mrb[0].mxu0 %v1766
        %v8808 = vpop.f32.mrb[0].mxu0
        %v8809 = vadd.f32 %v8696, %v8808
        %v8810 = vpop.f32.mrb[0].mxu0
        %v8811 = vadd.f32 %v8698, %v8810
        %v8812 = vpop.f32.mrb[0].mxu0
        %v8813 = vadd.f32 %v8700, %v8812
        %v8814 = vpop.f32.mrb[0].mxu0
        %v8815 = vadd.f32 %v8702, %v8814
        %8816 = vmatprep.mubr.bf16.mxu0 %v1773
        %8817 = vmatmul.mubr.bf16.gmra.mrb[0].mxu0 %v1772
        %v8818 = vpop.f32.mrb[0].mxu0
        %v8819 = vadd.f32 %v8706, %v8818
        %v8820 = vpop.f32.mrb[0].mxu0
        %v8821 = vadd.f32 %v8708, %v8820
        %v8822 = vpop.f32.mrb[0].mxu0
        %v8823 = vadd.f32 %v8710, %v8822
        %v8824 = vpop.f32.mrb[0].mxu0
        %v8825 = vadd.f32 %v8712, %v8824
        %8826 = vdwg.mxu0
        %8827 = vmatprep.subr.bf16.mxu0 %v6055
        %8828 = vmatpush1.bf16.msra.mxu0 %v6054
        %8829 = vmatprep.subr.bf16.mxu0 %v6079
        %8830 = vmatpush1.bf16.msra.mxu0 %v6078
        %8831 = vmatprep.subr.bf16.mxu0 %v6103
        %8832 = vmatpush1.bf16.msra.mxu0 %v6102
        %8833 = vmatprep.subr.bf16.mxu0 %v6127
        %8834 = vmatpush1.bf16.msra.mxu0 %v6126
        %8835 = vmatprep.subr.bf16.mxu0 %v6151
        %8836 = vmatpush1.bf16.msra.mxu0 %v6150
        %8837 = vmatprep.subr.bf16.mxu0 %v6175
        %8838 = vmatpush1.bf16.msra.mxu0 %v6174
        %8839 = vmatprep.subr.bf16.mxu0 %v6199
        %8840 = vmatpush1.bf16.msra.mxu0 %v6198
        %8841 = vmatprep.subr.bf16.mxu0 %v6223
        %8842 = vmatpush1.bf16.msra.mxu0 %v6222
        %8843 = vmatprep.subr.bf16.mxu0 %v6247
        %8844 = vmatpush1.bf16.msra.mxu0 %v6246
        %8845 = vmatprep.subr.bf16.mxu0 %v6271
        %8846 = vmatpush1.bf16.msra.mxu0 %v6270
        %8847 = vmatprep.subr.bf16.mxu0 %v6295
        %8848 = vmatpush1.bf16.msra.mxu0 %v6294
        %8849 = vmatprep.subr.bf16.mxu0 %v6319
        %8850 = vmatpush1.bf16.msra.mxu0 %v6318
        %8851 = vmatprep.subr.bf16.mxu0 %v6343
        %8852 = vmatpush1.bf16.msra.mxu0 %v6342
        %8853 = vmatprep.subr.bf16.mxu0 %v6367
        %8854 = vmatpush1.bf16.msra.mxu0 %v6366
        %8855 = vmatprep.subr.bf16.mxu0 %v6391
        %8856 = vmatpush1.bf16.msra.mxu0 %v6390
        %8857 = vmatprep.subr.bf16.mxu0 %v6415
        %8858 = vmatpush1.bf16.msra.mxu0 %v6414
        %8859 = vmatprep.mubr.bf16.mxu0 %v1733
        %8860 = vmatmul.mubr.bf16.gmra.mrb[0].mxu0 %v1732
        %v8861 = vpop.f32.mrb[0].mxu0
        %v8862 = vadd.f32 %v8749, %v8861
        %v8863 = vpop.f32.mrb[0].mxu0
        %v8864 = vadd.f32 %v8751, %v8863
        %v8865 = vpop.f32.mrb[0].mxu0
        %v8866 = vadd.f32 %v8753, %v8865
        %v8867 = vpop.f32.mrb[0].mxu0
        %v8868 = vadd.f32 %v8755, %v8867
        %8869 = vmatprep.mubr.bf16.mxu0 %v1739
        %8870 = vmatmul.mubr.bf16.gmra.mrb[0].mxu0 %v1738
        %v8871 = vpop.f32.mrb[0].mxu0
        %v8872 = vadd.f32 %v8759, %v8871
        %v8873 = vpop.f32.mrb[0].mxu0
        %v8874 = vadd.f32 %v8761, %v8873
        %v8875 = vpop.f32.mrb[0].mxu0
        %v8876 = vadd.f32 %v8763, %v8875
        %v8877 = vpop.f32.mrb[0].mxu0
        %v8878 = vadd.f32 %v8765, %v8877
        %8879 = vmatprep.mubr.bf16.mxu0 %v1745
        %8880 = vmatmul.mubr.bf16.gmra.mrb[0].mxu0 %v1744
        %v8881 = vpop.f32.mrb[0].mxu0
        %v8882 = vadd.f32 %v8769, %v8881
        %v8883 = vpop.f32.mrb[0].mxu0
        %v8884 = vadd.f32 %v8771, %v8883
        %v8885 = vpop.f32.mrb[0].mxu0
        %v8886 = vadd.f32 %v8773, %v8885
        %v8887 = vpop.f32.mrb[0].mxu0
        %v8888 = vadd.f32 %v8775, %v8887
        %8889 = vmatprep.mubr.bf16.mxu0 %v1751
        %8890 = vmatmul.mubr.bf16.gmra.mrb[0].mxu0 %v1750
        %v8891 = vpop.f32.mrb[0].mxu0
        %v8892 = vadd.f32 %v8779, %v8891
        %v8893 = vpop.f32.mrb[0].mxu0
        %v8894 = vadd.f32 %v8781, %v8893
        %v8895 = vpop.f32.mrb[0].mxu0
        %v8896 = vadd.f32 %v8783, %v8895
        %v8897 = vpop.f32.mrb[0].mxu0
        %v8898 = vadd.f32 %v8785, %v8897
        %8899 = vmatprep.mubr.bf16.mxu0 %v1757
        %8900 = vmatmul.mubr.bf16.gmra.mrb[0].mxu0 %v1756
        %v8901 = vpop.f32.mrb[0].mxu0
        %v8902 = vadd.f32 %v8789, %v8901
        %v8903 = vpop.f32.mrb[0].mxu0
        %v8904 = vadd.f32 %v8791, %v8903
        %v8905 = vpop.f32.mrb[0].mxu0
        %v8906 = vadd.f32 %v8793, %v8905
        %v8907 = vpop.f32.mrb[0].mxu0
        %v8908 = vadd.f32 %v8795, %v8907
        %8909 = vmatprep.mubr.bf16.mxu0 %v1763
        %8910 = vmatmul.mubr.bf16.gmra.mrb[0].mxu0 %v1762
        %v8911 = vpop.f32.mrb[0].mxu0
        %v8912 = vadd.f32 %v8799, %v8911
        %v8913 = vpop.f32.mrb[0].mxu0
        %v8914 = vadd.f32 %v8801, %v8913
        %v8915 = vpop.f32.mrb[0].mxu0
        %v8916 = vadd.f32 %v8803, %v8915
        %v8917 = vpop.f32.mrb[0].mxu0
        %v8918 = vadd.f32 %v8805, %v8917
        %8919 = vmatprep.mubr.bf16.mxu0 %v1769
        %8920 = vmatmul.mubr.bf16.gmra.mrb[0].mxu0 %v1768
        %v8921 = vpop.f32.mrb[0].mxu0
        %v8922 = vadd.f32 %v8809, %v8921
        %v8923 = vpop.f32.mrb[0].mxu0
        %v8924 = vadd.f32 %v8811, %v8923
        %v8925 = vpop.f32.mrb[0].mxu0
        %v8926 = vadd.f32 %v8813, %v8925
        %v8927 = vpop.f32.mrb[0].mxu0
        %v8928 = vadd.f32 %v8815, %v8927
        %8929 = vmatprep.mubr.bf16.mxu0 %v1775
        %8930 = vmatmul.mubr.bf16.gmra.mrb[0].mxu0 %v1774
        %v8931 = vpop.f32.mrb[0].mxu0
        %v8932 = vadd.f32 %v8819, %v8931
        %v8933 = vpop.f32.mrb[0].mxu0
        %v8934 = vadd.f32 %v8821, %v8933
        %v8935 = vpop.f32.mrb[0].mxu0
        %v8936 = vadd.f32 %v8823, %v8935
        %v8937 = vpop.f32.mrb[0].mxu0
        %v8938 = vadd.f32 %v8825, %v8937
        %8939 = vdwg.mxu0
        %8940 = vmatprep.subr.bf16.mxu0 %v5289
        %8941 = vmatpush1.bf16.msra.mxu0 %v5288
        %8942 = vmatprep.subr.bf16.mxu0 %v5313
        %8943 = vmatpush1.bf16.msra.mxu0 %v5312
        %8944 = vmatprep.subr.bf16.mxu0 %v5337
        %8945 = vmatpush1.bf16.msra.mxu0 %v5336
        %8946 = vmatprep.subr.bf16.mxu0 %v5361
        %8947 = vmatpush1.bf16.msra.mxu0 %v5360
        %8948 = vmatprep.subr.bf16.mxu0 %v5385
        %8949 = vmatpush1.bf16.msra.mxu0 %v5384
        %8950 = vmatprep.subr.bf16.mxu0 %v5409
        %8951 = vmatpush1.bf16.msra.mxu0 %v5408
        %8952 = vmatprep.subr.bf16.mxu0 %v5433
        %8953 = vmatpush1.bf16.msra.mxu0 %v5432
        %8954 = vmatprep.subr.bf16.mxu0 %v5457
        %8955 = vmatpush1.bf16.msra.mxu0 %v5456
        %8956 = vmatprep.subr.bf16.mxu0 %v5481
        %8957 = vmatpush1.bf16.msra.mxu0 %v5480
        %8958 = vmatprep.subr.bf16.mxu0 %v5505
        %8959 = vmatpush1.bf16.msra.mxu0 %v5504
        %8960 = vmatprep.subr.bf16.mxu0 %v5529
        %8961 = vmatpush1.bf16.msra.mxu0 %v5528
        %8962 = vmatprep.subr.bf16.mxu0 %v5553
        %8963 = vmatpush1.bf16.msra.mxu0 %v5552
        %8964 = vmatprep.subr.bf16.mxu0 %v5577
        %8965 = vmatpush1.bf16.msra.mxu0 %v5576
        %8966 = vmatprep.subr.bf16.mxu0 %v5601
        %8967 = vmatpush1.bf16.msra.mxu0 %v5600
        %8968 = vmatprep.subr.bf16.mxu0 %v5625
        %8969 = vmatpush1.bf16.msra.mxu0 %v5624
        %8970 = vmatprep.subr.bf16.mxu0 %v5649
        %8971 = vmatpush1.bf16.msra.mxu0 %v5648
        %8972 = vmatprep.mubr.bf16.mxu0 %v1729
        %8973 = vmatmul.mubr.bf16.gmra.mrb[0].mxu0 %v1728
        %v8974 = vpop.f32.mrb[0].mxu0
        %v8975 = vadd.f32 %v1499, %v8974
        %v8976 = vpop.f32.mrb[0].mxu0
        %v8977 = vadd.f32 %v1503, %v8976
        %v8978 = vpop.f32.mrb[0].mxu0
        %v8979 = vadd.f32 %v1499, %v8978
        %v8980 = vpop.f32.mrb[0].mxu0
        %v8981 = vadd.f32 %v1503, %v8980
        %8982 = vmatprep.mubr.bf16.mxu0 %v1735
        %8983 = vmatmul.mubr.bf16.gmra.mrb[0].mxu0 %v1734
        %v8984 = vpop.f32.mrb[0].mxu0
        %v8985 = vadd.f32 %v1499, %v8984
        %v8986 = vpop.f32.mrb[0].mxu0
        %v8987 = vadd.f32 %v1503, %v8986
        %v8988 = vpop.f32.mrb[0].mxu0
        %v8989 = vadd.f32 %v1499, %v8988
        %v8990 = vpop.f32.mrb[0].mxu0
        %v8991 = vadd.f32 %v1503, %v8990
        %8992 = vmatprep.mubr.bf16.mxu0 %v1741
        %8993 = vmatmul.mubr.bf16.gmra.mrb[0].mxu0 %v1740
        %v8994 = vpop.f32.mrb[0].mxu0
        %v8995 = vadd.f32 %v1499, %v8994
        %v8996 = vpop.f32.mrb[0].mxu0
        %v8997 = vadd.f32 %v1503, %v8996
        %v8998 = vpop.f32.mrb[0].mxu0
        %v8999 = vadd.f32 %v1499, %v8998
        %v9000 = vpop.f32.mrb[0].mxu0
        %v9001 = vadd.f32 %v1503, %v9000
        %9002 = vmatprep.mubr.bf16.mxu0 %v1747
        %9003 = vmatmul.mubr.bf16.gmra.mrb[0].mxu0 %v1746
        %v9004 = vpop.f32.mrb[0].mxu0
        %v9005 = vadd.f32 %v1499, %v9004
        %v9006 = vpop.f32.mrb[0].mxu0
        %v9007 = vadd.f32 %v1503, %v9006
        %v9008 = vpop.f32.mrb[0].mxu0
        %v9009 = vadd.f32 %v1499, %v9008
        %v9010 = vpop.f32.mrb[0].mxu0
        %v9011 = vadd.f32 %v1503, %v9010
        %9012 = vmatprep.mubr.bf16.mxu0 %v1753
        %9013 = vmatmul.mubr.bf16.gmra.mrb[0].mxu0 %v1752
        %v9014 = vpop.f32.mrb[0].mxu0
        %v9015 = vadd.f32 %v1499, %v9014
        %v9016 = vpop.f32.mrb[0].mxu0
        %v9017 = vadd.f32 %v1503, %v9016
        %v9018 = vpop.f32.mrb[0].mxu0
        %v9019 = vadd.f32 %v1499, %v9018
        %v9020 = vpop.f32.mrb[0].mxu0
        %v9021 = vadd.f32 %v1503, %v9020
        %9022 = vmatprep.mubr.bf16.mxu0 %v1759
        %9023 = vmatmul.mubr.bf16.gmra.mrb[0].mxu0 %v1758
        %v9024 = vpop.f32.mrb[0].mxu0
        %v9025 = vadd.f32 %v1499, %v9024
        %v9026 = vpop.f32.mrb[0].mxu0
        %v9027 = vadd.f32 %v1503, %v9026
        %v9028 = vpop.f32.mrb[0].mxu0
        %v9029 = vadd.f32 %v1499, %v9028
        %v9030 = vpop.f32.mrb[0].mxu0
        %v9031 = vadd.f32 %v1503, %v9030
        %9032 = vmatprep.mubr.bf16.mxu0 %v1765
        %9033 = vmatmul.mubr.bf16.gmra.mrb[0].mxu0 %v1764
        %v9034 = vpop.f32.mrb[0].mxu0
        %v9035 = vadd.f32 %v1499, %v9034
        %v9036 = vpop.f32.mrb[0].mxu0
        %v9037 = vadd.f32 %v1503, %v9036
        %v9038 = vpop.f32.mrb[0].mxu0
        %v9039 = vadd.f32 %v1499, %v9038
        %v9040 = vpop.f32.mrb[0].mxu0
        %v9041 = vadd.f32 %v1503, %v9040
        %9042 = vmatprep.mubr.bf16.mxu0 %v1771
        %9043 = vmatmul.mubr.bf16.gmra.mrb[0].mxu0 %v1770
        %v9044 = vpop.f32.mrb[0].mxu0
        %v9045 = vadd.f32 %v1499, %v9044
        %v9046 = vpop.f32.mrb[0].mxu0
        %v9047 = vadd.f32 %v1503, %v9046
        %v9048 = vpop.f32.mrb[0].mxu0
        %v9049 = vadd.f32 %v1499, %v9048
        %v9050 = vpop.f32.mrb[0].mxu0
        %v9051 = vadd.f32 %v1503, %v9050
        %9052 = vdwg.mxu0
        %9053 = vmatprep.subr.bf16.mxu0 %v5673
        %9054 = vmatpush1.bf16.msra.mxu0 %v5672
        %9055 = vmatprep.subr.bf16.mxu0 %v5697
        %9056 = vmatpush1.bf16.msra.mxu0 %v5696
        %9057 = vmatprep.subr.bf16.mxu0 %v5721
        %9058 = vmatpush1.bf16.msra.mxu0 %v5720
        %9059 = vmatprep.subr.bf16.mxu0 %v5745
        %9060 = vmatpush1.bf16.msra.mxu0 %v5744
        %9061 = vmatprep.subr.bf16.mxu0 %v5769
        %9062 = vmatpush1.bf16.msra.mxu0 %v5768
        %9063 = vmatprep.subr.bf16.mxu0 %v5793
        %9064 = vmatpush1.bf16.msra.mxu0 %v5792
        %9065 = vmatprep.subr.bf16.mxu0 %v5817
        %9066 = vmatpush1.bf16.msra.mxu0 %v5816
        %9067 = vmatprep.subr.bf16.mxu0 %v5841
        %9068 = vmatpush1.bf16.msra.mxu0 %v5840
        %9069 = vmatprep.subr.bf16.mxu0 %v5865
        %9070 = vmatpush1.bf16.msra.mxu0 %v5864
        %9071 = vmatprep.subr.bf16.mxu0 %v5889
        %9072 = vmatpush1.bf16.msra.mxu0 %v5888
        %9073 = vmatprep.subr.bf16.mxu0 %v5913
        %9074 = vmatpush1.bf16.msra.mxu0 %v5912
        %9075 = vmatprep.subr.bf16.mxu0 %v5937
        %9076 = vmatpush1.bf16.msra.mxu0 %v5936
        %9077 = vmatprep.subr.bf16.mxu0 %v5961
        %9078 = vmatpush1.bf16.msra.mxu0 %v5960
        %9079 = vmatprep.subr.bf16.mxu0 %v5985
        %9080 = vmatpush1.bf16.msra.mxu0 %v5984
        %9081 = vmatprep.subr.bf16.mxu0 %v6009
        %9082 = vmatpush1.bf16.msra.mxu0 %v6008
        %9083 = vmatprep.subr.bf16.mxu0 %v6033
        %9084 = vmatpush1.bf16.msra.mxu0 %v6032
        %9085 = vmatprep.mubr.bf16.mxu0 %v1731
        %9086 = vmatmul.mubr.bf16.gmra.mrb[0].mxu0 %v1730
        %v9087 = vpop.f32.mrb[0].mxu0
        %v9088 = vadd.f32 %v8975, %v9087
        %v9089 = vpop.f32.mrb[0].mxu0
        %v9090 = vadd.f32 %v8977, %v9089
        %v9091 = vpop.f32.mrb[0].mxu0
        %v9092 = vadd.f32 %v8979, %v9091
        %v9093 = vpop.f32.mrb[0].mxu0
        %v9094 = vadd.f32 %v8981, %v9093
        %9095 = vmatprep.mubr.bf16.mxu0 %v1737
        %9096 = vmatmul.mubr.bf16.gmra.mrb[0].mxu0 %v1736
        %v9097 = vpop.f32.mrb[0].mxu0
        %v9098 = vadd.f32 %v8985, %v9097
        %v9099 = vpop.f32.mrb[0].mxu0
        %v9100 = vadd.f32 %v8987, %v9099
        %v9101 = vpop.f32.mrb[0].mxu0
        %v9102 = vadd.f32 %v8989, %v9101
        %v9103 = vpop.f32.mrb[0].mxu0
        %v9104 = vadd.f32 %v8991, %v9103
        %9105 = vmatprep.mubr.bf16.mxu0 %v1743
        %9106 = vmatmul.mubr.bf16.gmra.mrb[0].mxu0 %v1742
        %v9107 = vpop.f32.mrb[0].mxu0
        %v9108 = vadd.f32 %v8995, %v9107
        %v9109 = vpop.f32.mrb[0].mxu0
        %v9110 = vadd.f32 %v8997, %v9109
        %v9111 = vpop.f32.mrb[0].mxu0
        %v9112 = vadd.f32 %v8999, %v9111
        %v9113 = vpop.f32.mrb[0].mxu0
        %v9114 = vadd.f32 %v9001, %v9113
        %9115 = vmatprep.mubr.bf16.mxu0 %v1749
        %9116 = vmatmul.mubr.bf16.gmra.mrb[0].mxu0 %v1748
        %v9117 = vpop.f32.mrb[0].mxu0
        %v9118 = vadd.f32 %v9005, %v9117
        %v9119 = vpop.f32.mrb[0].mxu0
        %v9120 = vadd.f32 %v9007, %v9119
        %v9121 = vpop.f32.mrb[0].mxu0
        %v9122 = vadd.f32 %v9009, %v9121
        %v9123 = vpop.f32.mrb[0].mxu0
        %v9124 = vadd.f32 %v9011, %v9123
        %9125 = vmatprep.mubr.bf16.mxu0 %v1755
        %9126 = vmatmul.mubr.bf16.gmra.mrb[0].mxu0 %v1754
        %v9127 = vpop.f32.mrb[0].mxu0
        %v9128 = vadd.f32 %v9015, %v9127
        %v9129 = vpop.f32.mrb[0].mxu0
        %v9130 = vadd.f32 %v9017, %v9129
        %v9131 = vpop.f32.mrb[0].mxu0
        %v9132 = vadd.f32 %v9019, %v9131
        %v9133 = vpop.f32.mrb[0].mxu0
        %v9134 = vadd.f32 %v9021, %v9133
        %9135 = vmatprep.mubr.bf16.mxu0 %v1761
        %9136 = vmatmul.mubr.bf16.gmra.mrb[0].mxu0 %v1760
        %v9137 = vpop.f32.mrb[0].mxu0
        %v9138 = vadd.f32 %v9025, %v9137
        %v9139 = vpop.f32.mrb[0].mxu0
        %v9140 = vadd.f32 %v9027, %v9139
        %v9141 = vpop.f32.mrb[0].mxu0
        %v9142 = vadd.f32 %v9029, %v9141
        %v9143 = vpop.f32.mrb[0].mxu0
        %v9144 = vadd.f32 %v9031, %v9143
        %9145 = vmatprep.mubr.bf16.mxu0 %v1767
        %9146 = vmatmul.mubr.bf16.gmra.mrb[0].mxu0 %v1766
        %v9147 = vpop.f32.mrb[0].mxu0
        %v9148 = vadd.f32 %v9035, %v9147
        %v9149 = vpop.f32.mrb[0].mxu0
        %v9150 = vadd.f32 %v9037, %v9149
        %v9151 = vpop.f32.mrb[0].mxu0
        %v9152 = vadd.f32 %v9039, %v9151
        %v9153 = vpop.f32.mrb[0].mxu0
        %v9154 = vadd.f32 %v9041, %v9153
        %9155 = vmatprep.mubr.bf16.mxu0 %v1773
        %9156 = vmatmul.mubr.bf16.gmra.mrb[0].mxu0 %v1772
        %v9157 = vpop.f32.mrb[0].mxu0
        %v9158 = vadd.f32 %v9045, %v9157
        %v9159 = vpop.f32.mrb[0].mxu0
        %v9160 = vadd.f32 %v9047, %v9159
        %v9161 = vpop.f32.mrb[0].mxu0
        %v9162 = vadd.f32 %v9049, %v9161
        %v9163 = vpop.f32.mrb[0].mxu0
        %v9164 = vadd.f32 %v9051, %v9163
        %9165 = vdwg.mxu0
        %9166 = vmatprep.subr.bf16.mxu0 %v6057
        %9167 = vmatpush1.bf16.msra.mxu0 %v6056
        %9168 = vmatprep.subr.bf16.mxu0 %v6081
        %9169 = vmatpush1.bf16.msra.mxu0 %v6080
        %9170 = vmatprep.subr.bf16.mxu0 %v6105
        %9171 = vmatpush1.bf16.msra.mxu0 %v6104
        %9172 = vmatprep.subr.bf16.mxu0 %v6129
        %9173 = vmatpush1.bf16.msra.mxu0 %v6128
        %9174 = vmatprep.subr.bf16.mxu0 %v6153
        %9175 = vmatpush1.bf16.msra.mxu0 %v6152
        %9176 = vmatprep.subr.bf16.mxu0 %v6177
        %9177 = vmatpush1.bf16.msra.mxu0 %v6176
        %9178 = vmatprep.subr.bf16.mxu0 %v6201
        %9179 = vmatpush1.bf16.msra.mxu0 %v6200
        %9180 = vmatprep.subr.bf16.mxu0 %v6225
        %9181 = vmatpush1.bf16.msra.mxu0 %v6224
        %9182 = vmatprep.subr.bf16.mxu0 %v6249
        %9183 = vmatpush1.bf16.msra.mxu0 %v6248
        %9184 = vmatprep.subr.bf16.mxu0 %v6273
        %9185 = vmatpush1.bf16.msra.mxu0 %v6272
        %9186 = vmatprep.subr.bf16.mxu0 %v6297
        %9187 = vmatpush1.bf16.msra.mxu0 %v6296
        %9188 = vmatprep.subr.bf16.mxu0 %v6321
        %9189 = vmatpush1.bf16.msra.mxu0 %v6320
        %9190 = vmatprep.subr.bf16.mxu0 %v6345
        %9191 = vmatpush1.bf16.msra.mxu0 %v6344
        %9192 = vmatprep.subr.bf16.mxu0 %v6369
        %9193 = vmatpush1.bf16.msra.mxu0 %v6368
        %9194 = vmatprep.subr.bf16.mxu0 %v6393
        %9195 = vmatpush1.bf16.msra.mxu0 %v6392
        %9196 = vmatprep.subr.bf16.mxu0 %v6417
        %9197 = vmatpush1.bf16.msra.mxu0 %v6416
        %9198 = vmatprep.mubr.bf16.mxu0 %v1733
        %9199 = vmatmul.mubr.bf16.gmra.mrb[0].mxu0 %v1732
        %v9200 = vpop.f32.mrb[0].mxu0
        %v9201 = vadd.f32 %v9088, %v9200
        %v9202 = vpop.f32.mrb[0].mxu0
        %v9203 = vadd.f32 %v9090, %v9202
        %v9204 = vpop.f32.mrb[0].mxu0
        %v9205 = vadd.f32 %v9092, %v9204
        %v9206 = vpop.f32.mrb[0].mxu0
        %v9207 = vadd.f32 %v9094, %v9206
        %9208 = vmatprep.mubr.bf16.mxu0 %v1739
        %9209 = vmatmul.mubr.bf16.gmra.mrb[0].mxu0 %v1738
        %v9210 = vpop.f32.mrb[0].mxu0
        %v9211 = vadd.f32 %v9098, %v9210
        %v9212 = vpop.f32.mrb[0].mxu0
        %v9213 = vadd.f32 %v9100, %v9212
        %v9214 = vpop.f32.mrb[0].mxu0
        %v9215 = vadd.f32 %v9102, %v9214
        %v9216 = vpop.f32.mrb[0].mxu0
        %v9217 = vadd.f32 %v9104, %v9216
        %9218 = vmatprep.mubr.bf16.mxu0 %v1745
        %9219 = vmatmul.mubr.bf16.gmra.mrb[0].mxu0 %v1744
        %v9220 = vpop.f32.mrb[0].mxu0
        %v9221 = vadd.f32 %v9108, %v9220
        %v9222 = vpop.f32.mrb[0].mxu0
        %v9223 = vadd.f32 %v9110, %v9222
        %v9224 = vpop.f32.mrb[0].mxu0
        %v9225 = vadd.f32 %v9112, %v9224
        %v9226 = vpop.f32.mrb[0].mxu0
        %v9227 = vadd.f32 %v9114, %v9226
        %9228 = vmatprep.mubr.bf16.mxu0 %v1751
        %9229 = vmatmul.mubr.bf16.gmra.mrb[0].mxu0 %v1750
        %v9230 = vpop.f32.mrb[0].mxu0
        %v9231 = vadd.f32 %v9118, %v9230
        %v9232 = vpop.f32.mrb[0].mxu0
        %v9233 = vadd.f32 %v9120, %v9232
        %v9234 = vpop.f32.mrb[0].mxu0
        %v9235 = vadd.f32 %v9122, %v9234
        %v9236 = vpop.f32.mrb[0].mxu0
        %v9237 = vadd.f32 %v9124, %v9236
        %9238 = vmatprep.mubr.bf16.mxu0 %v1757
        %9239 = vmatmul.mubr.bf16.gmra.mrb[0].mxu0 %v1756
        %v9240 = vpop.f32.mrb[0].mxu0
        %v9241 = vadd.f32 %v9128, %v9240
        %v9242 = vpop.f32.mrb[0].mxu0
        %v9243 = vadd.f32 %v9130, %v9242
        %v9244 = vpop.f32.mrb[0].mxu0
        %v9245 = vadd.f32 %v9132, %v9244
        %v9246 = vpop.f32.mrb[0].mxu0
        %v9247 = vadd.f32 %v9134, %v9246
        %9248 = vmatprep.mubr.bf16.mxu0 %v1763
        %9249 = vmatmul.mubr.bf16.gmra.mrb[0].mxu0 %v1762
        %v9250 = vpop.f32.mrb[0].mxu0
        %v9251 = vadd.f32 %v9138, %v9250
        %v9252 = vpop.f32.mrb[0].mxu0
        %v9253 = vadd.f32 %v9140, %v9252
        %v9254 = vpop.f32.mrb[0].mxu0
        %v9255 = vadd.f32 %v9142, %v9254
        %v9256 = vpop.f32.mrb[0].mxu0
        %v9257 = vadd.f32 %v9144, %v9256
        %9258 = vmatprep.mubr.bf16.mxu0 %v1769
        %9259 = vmatmul.mubr.bf16.gmra.mrb[0].mxu0 %v1768
        %v9260 = vpop.f32.mrb[0].mxu0
        %v9261 = vadd.f32 %v9148, %v9260
        %v9262 = vpop.f32.mrb[0].mxu0
        %v9263 = vadd.f32 %v9150, %v9262
        %v9264 = vpop.f32.mrb[0].mxu0
        %v9265 = vadd.f32 %v9152, %v9264
        %v9266 = vpop.f32.mrb[0].mxu0
        %v9267 = vadd.f32 %v9154, %v9266
        %9268 = vmatprep.mubr.bf16.mxu0 %v1775
        %9269 = vmatmul.mubr.bf16.gmra.mrb[0].mxu0 %v1774
        %v9270 = vpop.f32.mrb[0].mxu0
        %v9271 = vadd.f32 %v9158, %v9270
        %v9272 = vpop.f32.mrb[0].mxu0
        %v9273 = vadd.f32 %v9160, %v9272
        %v9274 = vpop.f32.mrb[0].mxu0
        %v9275 = vadd.f32 %v9162, %v9274
        %v9276 = vpop.f32.mrb[0].mxu0
        %v9277 = vadd.f32 %v9164, %v9276
        %9278 = vdwg.mxu0
        %9279 = vmatprep.subr.bf16.mxu0 %v5291
        %9280 = vmatpush1.bf16.msra.mxu0 %v5290
        %9281 = vmatprep.subr.bf16.mxu0 %v5315
        %9282 = vmatpush1.bf16.msra.mxu0 %v5314
        %9283 = vmatprep.subr.bf16.mxu0 %v5339
        %9284 = vmatpush1.bf16.msra.mxu0 %v5338
        %9285 = vmatprep.subr.bf16.mxu0 %v5363
        %9286 = vmatpush1.bf16.msra.mxu0 %v5362
        %9287 = vmatprep.subr.bf16.mxu0 %v5387
        %9288 = vmatpush1.bf16.msra.mxu0 %v5386
        %9289 = vmatprep.subr.bf16.mxu0 %v5411
        %9290 = vmatpush1.bf16.msra.mxu0 %v5410
        %9291 = vmatprep.subr.bf16.mxu0 %v5435
        %9292 = vmatpush1.bf16.msra.mxu0 %v5434
        %9293 = vmatprep.subr.bf16.mxu0 %v5459
        %9294 = vmatpush1.bf16.msra.mxu0 %v5458
        %9295 = vmatprep.subr.bf16.mxu0 %v5483
        %9296 = vmatpush1.bf16.msra.mxu0 %v5482
        %9297 = vmatprep.subr.bf16.mxu0 %v5507
        %9298 = vmatpush1.bf16.msra.mxu0 %v5506
        %9299 = vmatprep.subr.bf16.mxu0 %v5531
        %9300 = vmatpush1.bf16.msra.mxu0 %v5530
        %9301 = vmatprep.subr.bf16.mxu0 %v5555
        %9302 = vmatpush1.bf16.msra.mxu0 %v5554
        %9303 = vmatprep.subr.bf16.mxu0 %v5579
        %9304 = vmatpush1.bf16.msra.mxu0 %v5578
        %9305 = vmatprep.subr.bf16.mxu0 %v5603
        %9306 = vmatpush1.bf16.msra.mxu0 %v5602
        %9307 = vmatprep.subr.bf16.mxu0 %v5627
        %9308 = vmatpush1.bf16.msra.mxu0 %v5626
        %9309 = vmatprep.subr.bf16.mxu0 %v5651
        %9310 = vmatpush1.bf16.msra.mxu0 %v5650
        %9311 = vmatprep.mubr.bf16.mxu0 %v1729
        %9312 = vmatmul.mubr.bf16.gmra.mrb[0].mxu0 %v1728
        %v9313 = vpop.f32.mrb[0].mxu0
        %v9314 = vadd.f32 %v1507, %v9313
        %v9315 = vpop.f32.mrb[0].mxu0
        %v9316 = vadd.f32 %v1511, %v9315
        %v9317 = vpop.f32.mrb[0].mxu0
        %v9318 = vadd.f32 %v1507, %v9317
        %v9319 = vpop.f32.mrb[0].mxu0
        %v9320 = vadd.f32 %v1511, %v9319
        %9321 = vmatprep.mubr.bf16.mxu0 %v1735
        %9322 = vmatmul.mubr.bf16.gmra.mrb[0].mxu0 %v1734
        %v9323 = vpop.f32.mrb[0].mxu0
        %v9324 = vadd.f32 %v1507, %v9323
        %v9325 = vpop.f32.mrb[0].mxu0
        %v9326 = vadd.f32 %v1511, %v9325
        %v9327 = vpop.f32.mrb[0].mxu0
        %v9328 = vadd.f32 %v1507, %v9327
        %v9329 = vpop.f32.mrb[0].mxu0
        %v9330 = vadd.f32 %v1511, %v9329
        %9331 = vmatprep.mubr.bf16.mxu0 %v1741
        %9332 = vmatmul.mubr.bf16.gmra.mrb[0].mxu0 %v1740
        %v9333 = vpop.f32.mrb[0].mxu0
        %v9334 = vadd.f32 %v1507, %v9333
        %v9335 = vpop.f32.mrb[0].mxu0
        %v9336 = vadd.f32 %v1511, %v9335
        %v9337 = vpop.f32.mrb[0].mxu0
        %v9338 = vadd.f32 %v1507, %v9337
        %v9339 = vpop.f32.mrb[0].mxu0
        %v9340 = vadd.f32 %v1511, %v9339
        %9341 = vmatprep.mubr.bf16.mxu0 %v1747
        %9342 = vmatmul.mubr.bf16.gmra.mrb[0].mxu0 %v1746
        %v9343 = vpop.f32.mrb[0].mxu0
        %v9344 = vadd.f32 %v1507, %v9343
        %v9345 = vpop.f32.mrb[0].mxu0
        %v9346 = vadd.f32 %v1511, %v9345
        %v9347 = vpop.f32.mrb[0].mxu0
        %v9348 = vadd.f32 %v1507, %v9347
        %v9349 = vpop.f32.mrb[0].mxu0
        %v9350 = vadd.f32 %v1511, %v9349
        %9351 = vmatprep.mubr.bf16.mxu0 %v1753
        %9352 = vmatmul.mubr.bf16.gmra.mrb[0].mxu0 %v1752
        %v9353 = vpop.f32.mrb[0].mxu0
        %v9354 = vadd.f32 %v1507, %v9353
        %v9355 = vpop.f32.mrb[0].mxu0
        %v9356 = vadd.f32 %v1511, %v9355
        %v9357 = vpop.f32.mrb[0].mxu0
        %v9358 = vadd.f32 %v1507, %v9357
        %v9359 = vpop.f32.mrb[0].mxu0
        %v9360 = vadd.f32 %v1511, %v9359
        %9361 = vmatprep.mubr.bf16.mxu0 %v1759
        %9362 = vmatmul.mubr.bf16.gmra.mrb[0].mxu0 %v1758
        %v9363 = vpop.f32.mrb[0].mxu0
        %v9364 = vadd.f32 %v1507, %v9363
        %v9365 = vpop.f32.mrb[0].mxu0
        %v9366 = vadd.f32 %v1511, %v9365
        %v9367 = vpop.f32.mrb[0].mxu0
        %v9368 = vadd.f32 %v1507, %v9367
        %v9369 = vpop.f32.mrb[0].mxu0
        %v9370 = vadd.f32 %v1511, %v9369
        %9371 = vmatprep.mubr.bf16.mxu0 %v1765
        %9372 = vmatmul.mubr.bf16.gmra.mrb[0].mxu0 %v1764
        %v9373 = vpop.f32.mrb[0].mxu0
        %v9374 = vadd.f32 %v1507, %v9373
        %v9375 = vpop.f32.mrb[0].mxu0
        %v9376 = vadd.f32 %v1511, %v9375
        %v9377 = vpop.f32.mrb[0].mxu0
        %v9378 = vadd.f32 %v1507, %v9377
        %v9379 = vpop.f32.mrb[0].mxu0
        %v9380 = vadd.f32 %v1511, %v9379
        %9381 = vmatprep.mubr.bf16.mxu0 %v1771
        %9382 = vmatmul.mubr.bf16.gmra.mrb[0].mxu0 %v1770
        %v9383 = vpop.f32.mrb[0].mxu0
        %v9384 = vadd.f32 %v1507, %v9383
        %v9385 = vpop.f32.mrb[0].mxu0
        %v9386 = vadd.f32 %v1511, %v9385
        %v9387 = vpop.f32.mrb[0].mxu0
        %v9388 = vadd.f32 %v1507, %v9387
        %v9389 = vpop.f32.mrb[0].mxu0
        %v9390 = vadd.f32 %v1511, %v9389
        %9391 = vdwg.mxu0
        %9392 = vmatprep.subr.bf16.mxu0 %v5675
        %9393 = vmatpush1.bf16.msra.mxu0 %v5674
        %9394 = vmatprep.subr.bf16.mxu0 %v5699
        %9395 = vmatpush1.bf16.msra.mxu0 %v5698
        %9396 = vmatprep.subr.bf16.mxu0 %v5723
        %9397 = vmatpush1.bf16.msra.mxu0 %v5722
        %9398 = vmatprep.subr.bf16.mxu0 %v5747
        %9399 = vmatpush1.bf16.msra.mxu0 %v5746
        %9400 = vmatprep.subr.bf16.mxu0 %v5771
        %9401 = vmatpush1.bf16.msra.mxu0 %v5770
        %9402 = vmatprep.subr.bf16.mxu0 %v5795
        %9403 = vmatpush1.bf16.msra.mxu0 %v5794
        %9404 = vmatprep.subr.bf16.mxu0 %v5819
        %9405 = vmatpush1.bf16.msra.mxu0 %v5818
        %9406 = vmatprep.subr.bf16.mxu0 %v5843
        %9407 = vmatpush1.bf16.msra.mxu0 %v5842
        %9408 = vmatprep.subr.bf16.mxu0 %v5867
        %9409 = vmatpush1.bf16.msra.mxu0 %v5866
        %9410 = vmatprep.subr.bf16.mxu0 %v5891
        %9411 = vmatpush1.bf16.msra.mxu0 %v5890
        %9412 = vmatprep.subr.bf16.mxu0 %v5915
        %9413 = vmatpush1.bf16.msra.mxu0 %v5914
        %9414 = vmatprep.subr.bf16.mxu0 %v5939
        %9415 = vmatpush1.bf16.msra.mxu0 %v5938
        %9416 = vmatprep.subr.bf16.mxu0 %v5963
        %9417 = vmatpush1.bf16.msra.mxu0 %v5962
        %9418 = vmatprep.subr.bf16.mxu0 %v5987
        %9419 = vmatpush1.bf16.msra.mxu0 %v5986
        %9420 = vmatprep.subr.bf16.mxu0 %v6011
        %9421 = vmatpush1.bf16.msra.mxu0 %v6010
        %9422 = vmatprep.subr.bf16.mxu0 %v6035
        %9423 = vmatpush1.bf16.msra.mxu0 %v6034
        %9424 = vmatprep.mubr.bf16.mxu0 %v1731
        %9425 = vmatmul.mubr.bf16.gmra.mrb[0].mxu0 %v1730
        %v9426 = vpop.f32.mrb[0].mxu0
        %v9427 = vadd.f32 %v9314, %v9426
        %v9428 = vpop.f32.mrb[0].mxu0
        %v9429 = vadd.f32 %v9316, %v9428
        %v9430 = vpop.f32.mrb[0].mxu0
        %v9431 = vadd.f32 %v9318, %v9430
        %v9432 = vpop.f32.mrb[0].mxu0
        %v9433 = vadd.f32 %v9320, %v9432
        %9434 = vmatprep.mubr.bf16.mxu0 %v1737
        %9435 = vmatmul.mubr.bf16.gmra.mrb[0].mxu0 %v1736
        %v9436 = vpop.f32.mrb[0].mxu0
        %v9437 = vadd.f32 %v9324, %v9436
        %v9438 = vpop.f32.mrb[0].mxu0
        %v9439 = vadd.f32 %v9326, %v9438
        %v9440 = vpop.f32.mrb[0].mxu0
        %v9441 = vadd.f32 %v9328, %v9440
        %v9442 = vpop.f32.mrb[0].mxu0
        %v9443 = vadd.f32 %v9330, %v9442
        %9444 = vmatprep.mubr.bf16.mxu0 %v1743
        %9445 = vmatmul.mubr.bf16.gmra.mrb[0].mxu0 %v1742
        %v9446 = vpop.f32.mrb[0].mxu0
        %v9447 = vadd.f32 %v9334, %v9446
        %v9448 = vpop.f32.mrb[0].mxu0
        %v9449 = vadd.f32 %v9336, %v9448
        %v9450 = vpop.f32.mrb[0].mxu0
        %v9451 = vadd.f32 %v9338, %v9450
        %v9452 = vpop.f32.mrb[0].mxu0
        %v9453 = vadd.f32 %v9340, %v9452
        %9454 = vmatprep.mubr.bf16.mxu0 %v1749
        %9455 = vmatmul.mubr.bf16.gmra.mrb[0].mxu0 %v1748
        %v9456 = vpop.f32.mrb[0].mxu0
        %v9457 = vadd.f32 %v9344, %v9456
        %v9458 = vpop.f32.mrb[0].mxu0
        %v9459 = vadd.f32 %v9346, %v9458
        %v9460 = vpop.f32.mrb[0].mxu0
        %v9461 = vadd.f32 %v9348, %v9460
        %v9462 = vpop.f32.mrb[0].mxu0
        %v9463 = vadd.f32 %v9350, %v9462
        %9464 = vmatprep.mubr.bf16.mxu0 %v1755
        %9465 = vmatmul.mubr.bf16.gmra.mrb[0].mxu0 %v1754
        %v9466 = vpop.f32.mrb[0].mxu0
        %v9467 = vadd.f32 %v9354, %v9466
        %v9468 = vpop.f32.mrb[0].mxu0
        %v9469 = vadd.f32 %v9356, %v9468
        %v9470 = vpop.f32.mrb[0].mxu0
        %v9471 = vadd.f32 %v9358, %v9470
        %v9472 = vpop.f32.mrb[0].mxu0
        %v9473 = vadd.f32 %v9360, %v9472
        %9474 = vmatprep.mubr.bf16.mxu0 %v1761
        %9475 = vmatmul.mubr.bf16.gmra.mrb[0].mxu0 %v1760
        %v9476 = vpop.f32.mrb[0].mxu0
        %v9477 = vadd.f32 %v9364, %v9476
        %v9478 = vpop.f32.mrb[0].mxu0
        %v9479 = vadd.f32 %v9366, %v9478
        %v9480 = vpop.f32.mrb[0].mxu0
        %v9481 = vadd.f32 %v9368, %v9480
        %v9482 = vpop.f32.mrb[0].mxu0
        %v9483 = vadd.f32 %v9370, %v9482
        %9484 = vmatprep.mubr.bf16.mxu0 %v1767
        %9485 = vmatmul.mubr.bf16.gmra.mrb[0].mxu0 %v1766
        %v9486 = vpop.f32.mrb[0].mxu0
        %v9487 = vadd.f32 %v9374, %v9486
        %v9488 = vpop.f32.mrb[0].mxu0
        %v9489 = vadd.f32 %v9376, %v9488
        %v9490 = vpop.f32.mrb[0].mxu0
        %v9491 = vadd.f32 %v9378, %v9490
        %v9492 = vpop.f32.mrb[0].mxu0
        %v9493 = vadd.f32 %v9380, %v9492
        %9494 = vmatprep.mubr.bf16.mxu0 %v1773
        %9495 = vmatmul.mubr.bf16.gmra.mrb[0].mxu0 %v1772
        %v9496 = vpop.f32.mrb[0].mxu0
        %v9497 = vadd.f32 %v9384, %v9496
        %v9498 = vpop.f32.mrb[0].mxu0
        %v9499 = vadd.f32 %v9386, %v9498
        %v9500 = vpop.f32.mrb[0].mxu0
        %v9501 = vadd.f32 %v9388, %v9500
        %v9502 = vpop.f32.mrb[0].mxu0
        %v9503 = vadd.f32 %v9390, %v9502
        %9504 = vdwg.mxu0
        %9505 = vmatprep.subr.bf16.mxu0 %v6059
        %9506 = vmatpush1.bf16.msra.mxu0 %v6058
        %9507 = vmatprep.subr.bf16.mxu0 %v6083
        %9508 = vmatpush1.bf16.msra.mxu0 %v6082
        %9509 = vmatprep.subr.bf16.mxu0 %v6107
        %9510 = vmatpush1.bf16.msra.mxu0 %v6106
        %9511 = vmatprep.subr.bf16.mxu0 %v6131
        %9512 = vmatpush1.bf16.msra.mxu0 %v6130
        %9513 = vmatprep.subr.bf16.mxu0 %v6155
        %9514 = vmatpush1.bf16.msra.mxu0 %v6154
        %9515 = vmatprep.subr.bf16.mxu0 %v6179
        %9516 = vmatpush1.bf16.msra.mxu0 %v6178
        %9517 = vmatprep.subr.bf16.mxu0 %v6203
        %9518 = vmatpush1.bf16.msra.mxu0 %v6202
        %9519 = vmatprep.subr.bf16.mxu0 %v6227
        %9520 = vmatpush1.bf16.msra.mxu0 %v6226
        %9521 = vmatprep.subr.bf16.mxu0 %v6251
        %9522 = vmatpush1.bf16.msra.mxu0 %v6250
        %9523 = vmatprep.subr.bf16.mxu0 %v6275
        %9524 = vmatpush1.bf16.msra.mxu0 %v6274
        %9525 = vmatprep.subr.bf16.mxu0 %v6299
        %9526 = vmatpush1.bf16.msra.mxu0 %v6298
        %9527 = vmatprep.subr.bf16.mxu0 %v6323
        %9528 = vmatpush1.bf16.msra.mxu0 %v6322
        %9529 = vmatprep.subr.bf16.mxu0 %v6347
        %9530 = vmatpush1.bf16.msra.mxu0 %v6346
        %9531 = vmatprep.subr.bf16.mxu0 %v6371
        %9532 = vmatpush1.bf16.msra.mxu0 %v6370
        %9533 = vmatprep.subr.bf16.mxu0 %v6395
        %9534 = vmatpush1.bf16.msra.mxu0 %v6394
        %9535 = vmatprep.subr.bf16.mxu0 %v6419
        %9536 = vmatpush1.bf16.msra.mxu0 %v6418
        %9537 = vmatprep.mubr.bf16.mxu0 %v1733
        %9538 = vmatmul.mubr.bf16.gmra.mrb[0].mxu0 %v1732
        %v9539 = vpop.f32.mrb[0].mxu0
        %v9540 = vadd.f32 %v9427, %v9539
        %v9541 = vpop.f32.mrb[0].mxu0
        %v9542 = vadd.f32 %v9429, %v9541
        %v9543 = vpop.f32.mrb[0].mxu0
        %v9544 = vadd.f32 %v9431, %v9543
        %v9545 = vpop.f32.mrb[0].mxu0
        %v9546 = vadd.f32 %v9433, %v9545
        %9547 = vmatprep.mubr.bf16.mxu0 %v1739
        %9548 = vmatmul.mubr.bf16.gmra.mrb[0].mxu0 %v1738
        %v9549 = vpop.f32.mrb[0].mxu0
        %v9550 = vadd.f32 %v9437, %v9549
        %v9551 = vpop.f32.mrb[0].mxu0
        %v9552 = vadd.f32 %v9439, %v9551
        %v9553 = vpop.f32.mrb[0].mxu0
        %v9554 = vadd.f32 %v9441, %v9553
        %v9555 = vpop.f32.mrb[0].mxu0
        %v9556 = vadd.f32 %v9443, %v9555
        %9557 = vmatprep.mubr.bf16.mxu0 %v1745
        %9558 = vmatmul.mubr.bf16.gmra.mrb[0].mxu0 %v1744
        %v9559 = vpop.f32.mrb[0].mxu0
        %v9560 = vadd.f32 %v9447, %v9559
        %v9561 = vpop.f32.mrb[0].mxu0
        %v9562 = vadd.f32 %v9449, %v9561
        %v9563 = vpop.f32.mrb[0].mxu0
        %v9564 = vadd.f32 %v9451, %v9563
        %v9565 = vpop.f32.mrb[0].mxu0
        %v9566 = vadd.f32 %v9453, %v9565
        %9567 = vmatprep.mubr.bf16.mxu0 %v1751
        %9568 = vmatmul.mubr.bf16.gmra.mrb[0].mxu0 %v1750
        %v9569 = vpop.f32.mrb[0].mxu0
        %v9570 = vadd.f32 %v9457, %v9569
        %v9571 = vpop.f32.mrb[0].mxu0
        %v9572 = vadd.f32 %v9459, %v9571
        %v9573 = vpop.f32.mrb[0].mxu0
        %v9574 = vadd.f32 %v9461, %v9573
        %v9575 = vpop.f32.mrb[0].mxu0
        %v9576 = vadd.f32 %v9463, %v9575
        %9577 = vmatprep.mubr.bf16.mxu0 %v1757
        %9578 = vmatmul.mubr.bf16.gmra.mrb[0].mxu0 %v1756
        %v9579 = vpop.f32.mrb[0].mxu0
        %v9580 = vadd.f32 %v9467, %v9579
        %v9581 = vpop.f32.mrb[0].mxu0
        %v9582 = vadd.f32 %v9469, %v9581
        %v9583 = vpop.f32.mrb[0].mxu0
        %v9584 = vadd.f32 %v9471, %v9583
        %v9585 = vpop.f32.mrb[0].mxu0
        %v9586 = vadd.f32 %v9473, %v9585
        %9587 = vmatprep.mubr.bf16.mxu0 %v1763
        %9588 = vmatmul.mubr.bf16.gmra.mrb[0].mxu0 %v1762
        %v9589 = vpop.f32.mrb[0].mxu0
        %v9590 = vadd.f32 %v9477, %v9589
        %v9591 = vpop.f32.mrb[0].mxu0
        %v9592 = vadd.f32 %v9479, %v9591
        %v9593 = vpop.f32.mrb[0].mxu0
        %v9594 = vadd.f32 %v9481, %v9593
        %v9595 = vpop.f32.mrb[0].mxu0
        %v9596 = vadd.f32 %v9483, %v9595
        %9597 = vmatprep.mubr.bf16.mxu0 %v1769
        %9598 = vmatmul.mubr.bf16.gmra.mrb[0].mxu0 %v1768
        %v9599 = vpop.f32.mrb[0].mxu0
        %v9600 = vadd.f32 %v9487, %v9599
        %v9601 = vpop.f32.mrb[0].mxu0
        %v9602 = vadd.f32 %v9489, %v9601
        %v9603 = vpop.f32.mrb[0].mxu0
        %v9604 = vadd.f32 %v9491, %v9603
        %v9605 = vpop.f32.mrb[0].mxu0
        %v9606 = vadd.f32 %v9493, %v9605
        %9607 = vmatprep.mubr.bf16.mxu0 %v1775
        %9608 = vmatmul.mubr.bf16.gmra.mrb[0].mxu0 %v1774
        %v9609 = vpop.f32.mrb[0].mxu0
        %v9610 = vadd.f32 %v9497, %v9609
        %v9611 = vpop.f32.mrb[0].mxu0
        %v9612 = vadd.f32 %v9499, %v9611
        %v9613 = vpop.f32.mrb[0].mxu0
        %v9614 = vadd.f32 %v9501, %v9613
        %v9615 = vpop.f32.mrb[0].mxu0
        %v9616 = vadd.f32 %v9503, %v9615
        %9617 = vdwg.mxu0
        %9618 = vmatprep.subr.bf16.mxu0 %v5293
        %9619 = vmatpush1.bf16.msra.mxu0 %v5292
        %9620 = vmatprep.subr.bf16.mxu0 %v5317
        %9621 = vmatpush1.bf16.msra.mxu0 %v5316
        %9622 = vmatprep.subr.bf16.mxu0 %v5341
        %9623 = vmatpush1.bf16.msra.mxu0 %v5340
        %9624 = vmatprep.subr.bf16.mxu0 %v5365
        %9625 = vmatpush1.bf16.msra.mxu0 %v5364
        %9626 = vmatprep.subr.bf16.mxu0 %v5389
        %9627 = vmatpush1.bf16.msra.mxu0 %v5388
        %9628 = vmatprep.subr.bf16.mxu0 %v5413
        %9629 = vmatpush1.bf16.msra.mxu0 %v5412
        %9630 = vmatprep.subr.bf16.mxu0 %v5437
        %9631 = vmatpush1.bf16.msra.mxu0 %v5436
        %9632 = vmatprep.subr.bf16.mxu0 %v5461
        %9633 = vmatpush1.bf16.msra.mxu0 %v5460
        %9634 = vmatprep.subr.bf16.mxu0 %v5485
        %9635 = vmatpush1.bf16.msra.mxu0 %v5484
        %9636 = vmatprep.subr.bf16.mxu0 %v5509
        %9637 = vmatpush1.bf16.msra.mxu0 %v5508
        %9638 = vmatprep.subr.bf16.mxu0 %v5533
        %9639 = vmatpush1.bf16.msra.mxu0 %v5532
        %9640 = vmatprep.subr.bf16.mxu0 %v5557
        %9641 = vmatpush1.bf16.msra.mxu0 %v5556
        %9642 = vmatprep.subr.bf16.mxu0 %v5581
        %9643 = vmatpush1.bf16.msra.mxu0 %v5580
        %9644 = vmatprep.subr.bf16.mxu0 %v5605
        %9645 = vmatpush1.bf16.msra.mxu0 %v5604
        %9646 = vmatprep.subr.bf16.mxu0 %v5629
        %9647 = vmatpush1.bf16.msra.mxu0 %v5628
        %9648 = vmatprep.subr.bf16.mxu0 %v5653
        %9649 = vmatpush1.bf16.msra.mxu0 %v5652
        %9650 = vmatprep.mubr.bf16.mxu0 %v1729
        %9651 = vmatmul.mubr.bf16.gmra.mrb[0].mxu0 %v1728
        %v9652 = vpop.f32.mrb[0].mxu0
        %v9653 = vadd.f32 %v1515, %v9652
        %v9654 = vpop.f32.mrb[0].mxu0
        %v9655 = vadd.f32 %v1519, %v9654
        %v9656 = vpop.f32.mrb[0].mxu0
        %v9657 = vadd.f32 %v1515, %v9656
        %v9658 = vpop.f32.mrb[0].mxu0
        %v9659 = vadd.f32 %v1519, %v9658
        %9660 = vmatprep.mubr.bf16.mxu0 %v1735
        %9661 = vmatmul.mubr.bf16.gmra.mrb[0].mxu0 %v1734
        %v9662 = vpop.f32.mrb[0].mxu0
        %v9663 = vadd.f32 %v1515, %v9662
        %v9664 = vpop.f32.mrb[0].mxu0
        %v9665 = vadd.f32 %v1519, %v9664
        %v9666 = vpop.f32.mrb[0].mxu0
        %v9667 = vadd.f32 %v1515, %v9666
        %v9668 = vpop.f32.mrb[0].mxu0
        %v9669 = vadd.f32 %v1519, %v9668
        %9670 = vmatprep.mubr.bf16.mxu0 %v1741
        %9671 = vmatmul.mubr.bf16.gmra.mrb[0].mxu0 %v1740
        %v9672 = vpop.f32.mrb[0].mxu0
        %v9673 = vadd.f32 %v1515, %v9672
        %v9674 = vpop.f32.mrb[0].mxu0
        %v9675 = vadd.f32 %v1519, %v9674
        %v9676 = vpop.f32.mrb[0].mxu0
        %v9677 = vadd.f32 %v1515, %v9676
        %v9678 = vpop.f32.mrb[0].mxu0
        %v9679 = vadd.f32 %v1519, %v9678
        %9680 = vmatprep.mubr.bf16.mxu0 %v1747
        %9681 = vmatmul.mubr.bf16.gmra.mrb[0].mxu0 %v1746
        %v9682 = vpop.f32.mrb[0].mxu0
        %v9683 = vadd.f32 %v1515, %v9682
        %v9684 = vpop.f32.mrb[0].mxu0
        %v9685 = vadd.f32 %v1519, %v9684
        %v9686 = vpop.f32.mrb[0].mxu0
        %v9687 = vadd.f32 %v1515, %v9686
        %v9688 = vpop.f32.mrb[0].mxu0
        %v9689 = vadd.f32 %v1519, %v9688
        %9690 = vmatprep.mubr.bf16.mxu0 %v1753
        %9691 = vmatmul.mubr.bf16.gmra.mrb[0].mxu0 %v1752
        %v9692 = vpop.f32.mrb[0].mxu0
        %v9693 = vadd.f32 %v1515, %v9692
        %v9694 = vpop.f32.mrb[0].mxu0
        %v9695 = vadd.f32 %v1519, %v9694
        %v9696 = vpop.f32.mrb[0].mxu0
        %v9697 = vadd.f32 %v1515, %v9696
        %v9698 = vpop.f32.mrb[0].mxu0
        %v9699 = vadd.f32 %v1519, %v9698
        %9700 = vmatprep.mubr.bf16.mxu0 %v1759
        %9701 = vmatmul.mubr.bf16.gmra.mrb[0].mxu0 %v1758
        %v9702 = vpop.f32.mrb[0].mxu0
        %v9703 = vadd.f32 %v1515, %v9702
        %v9704 = vpop.f32.mrb[0].mxu0
        %v9705 = vadd.f32 %v1519, %v9704
        %v9706 = vpop.f32.mrb[0].mxu0
        %v9707 = vadd.f32 %v1515, %v9706
        %v9708 = vpop.f32.mrb[0].mxu0
        %v9709 = vadd.f32 %v1519, %v9708
        %9710 = vmatprep.mubr.bf16.mxu0 %v1765
        %9711 = vmatmul.mubr.bf16.gmra.mrb[0].mxu0 %v1764
        %v9712 = vpop.f32.mrb[0].mxu0
        %v9713 = vadd.f32 %v1515, %v9712
        %v9714 = vpop.f32.mrb[0].mxu0
        %v9715 = vadd.f32 %v1519, %v9714
        %v9716 = vpop.f32.mrb[0].mxu0
        %v9717 = vadd.f32 %v1515, %v9716
        %v9718 = vpop.f32.mrb[0].mxu0
        %v9719 = vadd.f32 %v1519, %v9718
        %9720 = vmatprep.mubr.bf16.mxu0 %v1771
        %9721 = vmatmul.mubr.bf16.gmra.mrb[0].mxu0 %v1770
        %v9722 = vpop.f32.mrb[0].mxu0
        %v9723 = vadd.f32 %v1515, %v9722
        %v9724 = vpop.f32.mrb[0].mxu0
        %v9725 = vadd.f32 %v1519, %v9724
        %v9726 = vpop.f32.mrb[0].mxu0
        %v9727 = vadd.f32 %v1515, %v9726
        %v9728 = vpop.f32.mrb[0].mxu0
        %v9729 = vadd.f32 %v1519, %v9728
        %9730 = vdwg.mxu0
        %9731 = vmatprep.subr.bf16.mxu0 %v5677
        %9732 = vmatpush1.bf16.msra.mxu0 %v5676
        %9733 = vmatprep.subr.bf16.mxu0 %v5701
        %9734 = vmatpush1.bf16.msra.mxu0 %v5700
        %9735 = vmatprep.subr.bf16.mxu0 %v5725
        %9736 = vmatpush1.bf16.msra.mxu0 %v5724
        %9737 = vmatprep.subr.bf16.mxu0 %v5749
        %9738 = vmatpush1.bf16.msra.mxu0 %v5748
        %9739 = vmatprep.subr.bf16.mxu0 %v5773
        %9740 = vmatpush1.bf16.msra.mxu0 %v5772
        %9741 = vmatprep.subr.bf16.mxu0 %v5797
        %9742 = vmatpush1.bf16.msra.mxu0 %v5796
        %9743 = vmatprep.subr.bf16.mxu0 %v5821
        %9744 = vmatpush1.bf16.msra.mxu0 %v5820
        %9745 = vmatprep.subr.bf16.mxu0 %v5845
        %9746 = vmatpush1.bf16.msra.mxu0 %v5844
        %9747 = vmatprep.subr.bf16.mxu0 %v5869
        %9748 = vmatpush1.bf16.msra.mxu0 %v5868
        %9749 = vmatprep.subr.bf16.mxu0 %v5893
        %9750 = vmatpush1.bf16.msra.mxu0 %v5892
        %9751 = vmatprep.subr.bf16.mxu0 %v5917
        %9752 = vmatpush1.bf16.msra.mxu0 %v5916
        %9753 = vmatprep.subr.bf16.mxu0 %v5941
        %9754 = vmatpush1.bf16.msra.mxu0 %v5940
        %9755 = vmatprep.subr.bf16.mxu0 %v5965
        %9756 = vmatpush1.bf16.msra.mxu0 %v5964
        %9757 = vmatprep.subr.bf16.mxu0 %v5989
        %9758 = vmatpush1.bf16.msra.mxu0 %v5988
        %9759 = vmatprep.subr.bf16.mxu0 %v6013
        %9760 = vmatpush1.bf16.msra.mxu0 %v6012
        %9761 = vmatprep.subr.bf16.mxu0 %v6037
        %9762 = vmatpush1.bf16.msra.mxu0 %v6036
        %9763 = vmatprep.mubr.bf16.mxu0 %v1731
        %9764 = vmatmul.mubr.bf16.gmra.mrb[0].mxu0 %v1730
        %v9765 = vpop.f32.mrb[0].mxu0
        %v9766 = vadd.f32 %v9653, %v9765
        %v9767 = vpop.f32.mrb[0].mxu0
        %v9768 = vadd.f32 %v9655, %v9767
        %v9769 = vpop.f32.mrb[0].mxu0
        %v9770 = vadd.f32 %v9657, %v9769
        %v9771 = vpop.f32.mrb[0].mxu0
        %v9772 = vadd.f32 %v9659, %v9771
        %9773 = vmatprep.mubr.bf16.mxu0 %v1737
        %9774 = vmatmul.mubr.bf16.gmra.mrb[0].mxu0 %v1736
        %v9775 = vpop.f32.mrb[0].mxu0
        %v9776 = vadd.f32 %v9663, %v9775
        %v9777 = vpop.f32.mrb[0].mxu0
        %v9778 = vadd.f32 %v9665, %v9777
        %v9779 = vpop.f32.mrb[0].mxu0
        %v9780 = vadd.f32 %v9667, %v9779
        %v9781 = vpop.f32.mrb[0].mxu0
        %v9782 = vadd.f32 %v9669, %v9781
        %9783 = vmatprep.mubr.bf16.mxu0 %v1743
        %9784 = vmatmul.mubr.bf16.gmra.mrb[0].mxu0 %v1742
        %v9785 = vpop.f32.mrb[0].mxu0
        %v9786 = vadd.f32 %v9673, %v9785
        %v9787 = vpop.f32.mrb[0].mxu0
        %v9788 = vadd.f32 %v9675, %v9787
        %v9789 = vpop.f32.mrb[0].mxu0
        %v9790 = vadd.f32 %v9677, %v9789
        %v9791 = vpop.f32.mrb[0].mxu0
        %v9792 = vadd.f32 %v9679, %v9791
        %9793 = vmatprep.mubr.bf16.mxu0 %v1749
        %9794 = vmatmul.mubr.bf16.gmra.mrb[0].mxu0 %v1748
        %v9795 = vpop.f32.mrb[0].mxu0
        %v9796 = vadd.f32 %v9683, %v9795
        %v9797 = vpop.f32.mrb[0].mxu0
        %v9798 = vadd.f32 %v9685, %v9797
        %v9799 = vpop.f32.mrb[0].mxu0
        %v9800 = vadd.f32 %v9687, %v9799
        %v9801 = vpop.f32.mrb[0].mxu0
        %v9802 = vadd.f32 %v9689, %v9801
        %9803 = vmatprep.mubr.bf16.mxu0 %v1755
        %9804 = vmatmul.mubr.bf16.gmra.mrb[0].mxu0 %v1754
        %v9805 = vpop.f32.mrb[0].mxu0
        %v9806 = vadd.f32 %v9693, %v9805
        %v9807 = vpop.f32.mrb[0].mxu0
        %v9808 = vadd.f32 %v9695, %v9807
        %v9809 = vpop.f32.mrb[0].mxu0
        %v9810 = vadd.f32 %v9697, %v9809
        %v9811 = vpop.f32.mrb[0].mxu0
        %v9812 = vadd.f32 %v9699, %v9811
        %9813 = vmatprep.mubr.bf16.mxu0 %v1761
        %9814 = vmatmul.mubr.bf16.gmra.mrb[0].mxu0 %v1760
        %v9815 = vpop.f32.mrb[0].mxu0
        %v9816 = vadd.f32 %v9703, %v9815
        %v9817 = vpop.f32.mrb[0].mxu0
        %v9818 = vadd.f32 %v9705, %v9817
        %v9819 = vpop.f32.mrb[0].mxu0
        %v9820 = vadd.f32 %v9707, %v9819
        %v9821 = vpop.f32.mrb[0].mxu0
        %v9822 = vadd.f32 %v9709, %v9821
        %9823 = vmatprep.mubr.bf16.mxu0 %v1767
        %9824 = vmatmul.mubr.bf16.gmra.mrb[0].mxu0 %v1766
        %v9825 = vpop.f32.mrb[0].mxu0
        %v9826 = vadd.f32 %v9713, %v9825
        %v9827 = vpop.f32.mrb[0].mxu0
        %v9828 = vadd.f32 %v9715, %v9827
        %v9829 = vpop.f32.mrb[0].mxu0
        %v9830 = vadd.f32 %v9717, %v9829
        %v9831 = vpop.f32.mrb[0].mxu0
        %v9832 = vadd.f32 %v9719, %v9831
        %9833 = vmatprep.mubr.bf16.mxu0 %v1773
        %9834 = vmatmul.mubr.bf16.gmra.mrb[0].mxu0 %v1772
        %v9835 = vpop.f32.mrb[0].mxu0
        %v9836 = vadd.f32 %v9723, %v9835
        %v9837 = vpop.f32.mrb[0].mxu0
        %v9838 = vadd.f32 %v9725, %v9837
        %v9839 = vpop.f32.mrb[0].mxu0
        %v9840 = vadd.f32 %v9727, %v9839
        %v9841 = vpop.f32.mrb[0].mxu0
        %v9842 = vadd.f32 %v9729, %v9841
        %9843 = vdwg.mxu0
        %9844 = vmatprep.subr.bf16.mxu0 %v6061
        %9845 = vmatpush1.bf16.msra.mxu0 %v6060
        %9846 = vmatprep.subr.bf16.mxu0 %v6085
        %9847 = vmatpush1.bf16.msra.mxu0 %v6084
        %9848 = vmatprep.subr.bf16.mxu0 %v6109
        %9849 = vmatpush1.bf16.msra.mxu0 %v6108
        %9850 = vmatprep.subr.bf16.mxu0 %v6133
        %9851 = vmatpush1.bf16.msra.mxu0 %v6132
        %9852 = vmatprep.subr.bf16.mxu0 %v6157
        %9853 = vmatpush1.bf16.msra.mxu0 %v6156
        %9854 = vmatprep.subr.bf16.mxu0 %v6181
        %9855 = vmatpush1.bf16.msra.mxu0 %v6180
        %9856 = vmatprep.subr.bf16.mxu0 %v6205
        %9857 = vmatpush1.bf16.msra.mxu0 %v6204
        %9858 = vmatprep.subr.bf16.mxu0 %v6229
        %9859 = vmatpush1.bf16.msra.mxu0 %v6228
        %9860 = vmatprep.subr.bf16.mxu0 %v6253
        %9861 = vmatpush1.bf16.msra.mxu0 %v6252
        %9862 = vmatprep.subr.bf16.mxu0 %v6277
        %9863 = vmatpush1.bf16.msra.mxu0 %v6276
        %9864 = vmatprep.subr.bf16.mxu0 %v6301
        %9865 = vmatpush1.bf16.msra.mxu0 %v6300
        %9866 = vmatprep.subr.bf16.mxu0 %v6325
        %9867 = vmatpush1.bf16.msra.mxu0 %v6324
        %9868 = vmatprep.subr.bf16.mxu0 %v6349
        %9869 = vmatpush1.bf16.msra.mxu0 %v6348
        %9870 = vmatprep.subr.bf16.mxu0 %v6373
        %9871 = vmatpush1.bf16.msra.mxu0 %v6372
        %9872 = vmatprep.subr.bf16.mxu0 %v6397
        %9873 = vmatpush1.bf16.msra.mxu0 %v6396
        %9874 = vmatprep.subr.bf16.mxu0 %v6421
        %9875 = vmatpush1.bf16.msra.mxu0 %v6420
        %9876 = vmatprep.mubr.bf16.mxu0 %v1733
        %9877 = vmatmul.mubr.bf16.gmra.mrb[0].mxu0 %v1732
        %v9878 = vpop.f32.mrb[0].mxu0
        %v9879 = vadd.f32 %v9766, %v9878
        %v9880 = vpop.f32.mrb[0].mxu0
        %v9881 = vadd.f32 %v9768, %v9880
        %v9882 = vpop.f32.mrb[0].mxu0
        %v9883 = vadd.f32 %v9770, %v9882
        %v9884 = vpop.f32.mrb[0].mxu0
        %v9885 = vadd.f32 %v9772, %v9884
        %9886 = vmatprep.mubr.bf16.mxu0 %v1739
        %9887 = vmatmul.mubr.bf16.gmra.mrb[0].mxu0 %v1738
        %v9888 = vpop.f32.mrb[0].mxu0
        %v9889 = vadd.f32 %v9776, %v9888
        %v9890 = vpop.f32.mrb[0].mxu0
        %v9891 = vadd.f32 %v9778, %v9890
        %v9892 = vpop.f32.mrb[0].mxu0
        %v9893 = vadd.f32 %v9780, %v9892
        %v9894 = vpop.f32.mrb[0].mxu0
        %v9895 = vadd.f32 %v9782, %v9894
        %9896 = vmatprep.mubr.bf16.mxu0 %v1745
        %9897 = vmatmul.mubr.bf16.gmra.mrb[0].mxu0 %v1744
        %v9898 = vpop.f32.mrb[0].mxu0
        %v9899 = vadd.f32 %v9786, %v9898
        %v9900 = vpop.f32.mrb[0].mxu0
        %v9901 = vadd.f32 %v9788, %v9900
        %v9902 = vpop.f32.mrb[0].mxu0
        %v9903 = vadd.f32 %v9790, %v9902
        %v9904 = vpop.f32.mrb[0].mxu0
        %v9905 = vadd.f32 %v9792, %v9904
        %9906 = vmatprep.mubr.bf16.mxu0 %v1751
        %9907 = vmatmul.mubr.bf16.gmra.mrb[0].mxu0 %v1750
        %v9908 = vpop.f32.mrb[0].mxu0
        %v9909 = vadd.f32 %v9796, %v9908
        %v9910 = vpop.f32.mrb[0].mxu0
        %v9911 = vadd.f32 %v9798, %v9910
        %v9912 = vpop.f32.mrb[0].mxu0
        %v9913 = vadd.f32 %v9800, %v9912
        %v9914 = vpop.f32.mrb[0].mxu0
        %v9915 = vadd.f32 %v9802, %v9914
        %9916 = vmatprep.mubr.bf16.mxu0 %v1757
        %9917 = vmatmul.mubr.bf16.gmra.mrb[0].mxu0 %v1756
        %v9918 = vpop.f32.mrb[0].mxu0
        %v9919 = vadd.f32 %v9806, %v9918
        %v9920 = vpop.f32.mrb[0].mxu0
        %v9921 = vadd.f32 %v9808, %v9920
        %v9922 = vpop.f32.mrb[0].mxu0
        %v9923 = vadd.f32 %v9810, %v9922
        %v9924 = vpop.f32.mrb[0].mxu0
        %v9925 = vadd.f32 %v9812, %v9924
        %9926 = vmatprep.mubr.bf16.mxu0 %v1763
        %9927 = vmatmul.mubr.bf16.gmra.mrb[0].mxu0 %v1762
        %v9928 = vpop.f32.mrb[0].mxu0
        %v9929 = vadd.f32 %v9816, %v9928
        %v9930 = vpop.f32.mrb[0].mxu0
        %v9931 = vadd.f32 %v9818, %v9930
        %v9932 = vpop.f32.mrb[0].mxu0
        %v9933 = vadd.f32 %v9820, %v9932
        %v9934 = vpop.f32.mrb[0].mxu0
        %v9935 = vadd.f32 %v9822, %v9934
        %9936 = vmatprep.mubr.bf16.mxu0 %v1769
        %9937 = vmatmul.mubr.bf16.gmra.mrb[0].mxu0 %v1768
        %v9938 = vpop.f32.mrb[0].mxu0
        %v9939 = vadd.f32 %v9826, %v9938
        %v9940 = vpop.f32.mrb[0].mxu0
        %v9941 = vadd.f32 %v9828, %v9940
        %v9942 = vpop.f32.mrb[0].mxu0
        %v9943 = vadd.f32 %v9830, %v9942
        %v9944 = vpop.f32.mrb[0].mxu0
        %v9945 = vadd.f32 %v9832, %v9944
        %9946 = vmatprep.mubr.bf16.mxu0 %v1775
        %9947 = vmatmul.mubr.bf16.gmra.mrb[0].mxu0 %v1774
        %v9948 = vpop.f32.mrb[0].mxu0
        %v9949 = vadd.f32 %v9836, %v9948
        %v9950 = vpop.f32.mrb[0].mxu0
        %v9951 = vadd.f32 %v9838, %v9950
        %v9952 = vpop.f32.mrb[0].mxu0
        %v9953 = vadd.f32 %v9840, %v9952
        %v9954 = vpop.f32.mrb[0].mxu0
        %v9955 = vadd.f32 %v9842, %v9954
        %9956 = vdwg.mxu0
        %9957 = vmatprep.subr.bf16.mxu0 %v5295
        %9958 = vmatpush1.bf16.msra.mxu0 %v5294
        %9959 = vmatprep.subr.bf16.mxu0 %v5319
        %9960 = vmatpush1.bf16.msra.mxu0 %v5318
        %9961 = vmatprep.subr.bf16.mxu0 %v5343
        %9962 = vmatpush1.bf16.msra.mxu0 %v5342
        %9963 = vmatprep.subr.bf16.mxu0 %v5367
        %9964 = vmatpush1.bf16.msra.mxu0 %v5366
        %9965 = vmatprep.subr.bf16.mxu0 %v5391
        %9966 = vmatpush1.bf16.msra.mxu0 %v5390
        %9967 = vmatprep.subr.bf16.mxu0 %v5415
        %9968 = vmatpush1.bf16.msra.mxu0 %v5414
        %9969 = vmatprep.subr.bf16.mxu0 %v5439
        %9970 = vmatpush1.bf16.msra.mxu0 %v5438
        %9971 = vmatprep.subr.bf16.mxu0 %v5463
        %9972 = vmatpush1.bf16.msra.mxu0 %v5462
        %9973 = vmatprep.subr.bf16.mxu0 %v5487
        %9974 = vmatpush1.bf16.msra.mxu0 %v5486
        %9975 = vmatprep.subr.bf16.mxu0 %v5511
        %9976 = vmatpush1.bf16.msra.mxu0 %v5510
        %9977 = vmatprep.subr.bf16.mxu0 %v5535
        %9978 = vmatpush1.bf16.msra.mxu0 %v5534
        %9979 = vmatprep.subr.bf16.mxu0 %v5559
        %9980 = vmatpush1.bf16.msra.mxu0 %v5558
        %9981 = vmatprep.subr.bf16.mxu0 %v5583
        %9982 = vmatpush1.bf16.msra.mxu0 %v5582
        %9983 = vmatprep.subr.bf16.mxu0 %v5607
        %9984 = vmatpush1.bf16.msra.mxu0 %v5606
        %9985 = vmatprep.subr.bf16.mxu0 %v5631
        %9986 = vmatpush1.bf16.msra.mxu0 %v5630
        %9987 = vmatprep.subr.bf16.mxu0 %v5655
        %9988 = vmatpush1.bf16.msra.mxu0 %v5654
        %9989 = vmatprep.mubr.bf16.mxu0 %v1729
        %9990 = vmatmul.mubr.bf16.gmra.mrb[0].mxu0 %v1728
        %v9991 = vpop.f32.mrb[0].mxu0
        %v9992 = vadd.f32 %v1523, %v9991
        %v9993 = vpop.f32.mrb[0].mxu0
        %v9994 = vadd.f32 %v1527, %v9993
        %v9995 = vpop.f32.mrb[0].mxu0
        %v9996 = vadd.f32 %v1523, %v9995
        %v9997 = vpop.f32.mrb[0].mxu0
        %v9998 = vadd.f32 %v1527, %v9997
        %9999 = vmatprep.mubr.bf16.mxu0 %v1735
        %10000 = vmatmul.mubr.bf16.gmra.mrb[0].mxu0 %v1734
        %v10001 = vpop.f32.mrb[0].mxu0
        %v10002 = vadd.f32 %v1523, %v10001
        %v10003 = vpop.f32.mrb[0].mxu0
        %v10004 = vadd.f32 %v1527, %v10003
        %v10005 = vpop.f32.mrb[0].mxu0
        %v10006 = vadd.f32 %v1523, %v10005
        %v10007 = vpop.f32.mrb[0].mxu0
        %v10008 = vadd.f32 %v1527, %v10007
        %10009 = vmatprep.mubr.bf16.mxu0 %v1741
        %10010 = vmatmul.mubr.bf16.gmra.mrb[0].mxu0 %v1740
        %v10011 = vpop.f32.mrb[0].mxu0
        %v10012 = vadd.f32 %v1523, %v10011
        %v10013 = vpop.f32.mrb[0].mxu0
        %v10014 = vadd.f32 %v1527, %v10013
        %v10015 = vpop.f32.mrb[0].mxu0
        %v10016 = vadd.f32 %v1523, %v10015
        %v10017 = vpop.f32.mrb[0].mxu0
        %v10018 = vadd.f32 %v1527, %v10017
        %10019 = vmatprep.mubr.bf16.mxu0 %v1747
        %10020 = vmatmul.mubr.bf16.gmra.mrb[0].mxu0 %v1746
        %v10021 = vpop.f32.mrb[0].mxu0
        %v10022 = vadd.f32 %v1523, %v10021
        %v10023 = vpop.f32.mrb[0].mxu0
        %v10024 = vadd.f32 %v1527, %v10023
        %v10025 = vpop.f32.mrb[0].mxu0
        %v10026 = vadd.f32 %v1523, %v10025
        %v10027 = vpop.f32.mrb[0].mxu0
        %v10028 = vadd.f32 %v1527, %v10027
        %10029 = vmatprep.mubr.bf16.mxu0 %v1753
        %10030 = vmatmul.mubr.bf16.gmra.mrb[0].mxu0 %v1752
        %v10031 = vpop.f32.mrb[0].mxu0
        %v10032 = vadd.f32 %v1523, %v10031
        %v10033 = vpop.f32.mrb[0].mxu0
        %v10034 = vadd.f32 %v1527, %v10033
        %v10035 = vpop.f32.mrb[0].mxu0
        %v10036 = vadd.f32 %v1523, %v10035
        %v10037 = vpop.f32.mrb[0].mxu0
        %v10038 = vadd.f32 %v1527, %v10037
        %10039 = vmatprep.mubr.bf16.mxu0 %v1759
        %10040 = vmatmul.mubr.bf16.gmra.mrb[0].mxu0 %v1758
        %v10041 = vpop.f32.mrb[0].mxu0
        %v10042 = vadd.f32 %v1523, %v10041
        %v10043 = vpop.f32.mrb[0].mxu0
        %v10044 = vadd.f32 %v1527, %v10043
        %v10045 = vpop.f32.mrb[0].mxu0
        %v10046 = vadd.f32 %v1523, %v10045
        %v10047 = vpop.f32.mrb[0].mxu0
        %v10048 = vadd.f32 %v1527, %v10047
        %10049 = vmatprep.mubr.bf16.mxu0 %v1765
        %10050 = vmatmul.mubr.bf16.gmra.mrb[0].mxu0 %v1764
        %v10051 = vpop.f32.mrb[0].mxu0
        %v10052 = vadd.f32 %v1523, %v10051
        %v10053 = vpop.f32.mrb[0].mxu0
        %v10054 = vadd.f32 %v1527, %v10053
        %v10055 = vpop.f32.mrb[0].mxu0
        %v10056 = vadd.f32 %v1523, %v10055
        %v10057 = vpop.f32.mrb[0].mxu0
        %v10058 = vadd.f32 %v1527, %v10057
        %10059 = vmatprep.mubr.bf16.mxu0 %v1771
        %10060 = vmatmul.mubr.bf16.gmra.mrb[0].mxu0 %v1770
        %v10061 = vpop.f32.mrb[0].mxu0
        %v10062 = vadd.f32 %v1523, %v10061
        %v10063 = vpop.f32.mrb[0].mxu0
        %v10064 = vadd.f32 %v1527, %v10063
        %v10065 = vpop.f32.mrb[0].mxu0
        %v10066 = vadd.f32 %v1523, %v10065
        %v10067 = vpop.f32.mrb[0].mxu0
        %v10068 = vadd.f32 %v1527, %v10067
        %10069 = vdwg.mxu0
        %10070 = vmatprep.subr.bf16.mxu0 %v5679
        %10071 = vmatpush1.bf16.msra.mxu0 %v5678
        %10072 = vmatprep.subr.bf16.mxu0 %v5703
        %10073 = vmatpush1.bf16.msra.mxu0 %v5702
        %10074 = vmatprep.subr.bf16.mxu0 %v5727
        %10075 = vmatpush1.bf16.msra.mxu0 %v5726
        %10076 = vmatprep.subr.bf16.mxu0 %v5751
        %10077 = vmatpush1.bf16.msra.mxu0 %v5750
        %10078 = vmatprep.subr.bf16.mxu0 %v5775
        %10079 = vmatpush1.bf16.msra.mxu0 %v5774
        %10080 = vmatprep.subr.bf16.mxu0 %v5799
        %10081 = vmatpush1.bf16.msra.mxu0 %v5798
        %10082 = vmatprep.subr.bf16.mxu0 %v5823
        %10083 = vmatpush1.bf16.msra.mxu0 %v5822
        %10084 = vmatprep.subr.bf16.mxu0 %v5847
        %10085 = vmatpush1.bf16.msra.mxu0 %v5846
        %10086 = vmatprep.subr.bf16.mxu0 %v5871
        %10087 = vmatpush1.bf16.msra.mxu0 %v5870
        %10088 = vmatprep.subr.bf16.mxu0 %v5895
        %10089 = vmatpush1.bf16.msra.mxu0 %v5894
        %10090 = vmatprep.subr.bf16.mxu0 %v5919
        %10091 = vmatpush1.bf16.msra.mxu0 %v5918
        %10092 = vmatprep.subr.bf16.mxu0 %v5943
        %10093 = vmatpush1.bf16.msra.mxu0 %v5942
        %10094 = vmatprep.subr.bf16.mxu0 %v5967
        %10095 = vmatpush1.bf16.msra.mxu0 %v5966
        %10096 = vmatprep.subr.bf16.mxu0 %v5991
        %10097 = vmatpush1.bf16.msra.mxu0 %v5990
        %10098 = vmatprep.subr.bf16.mxu0 %v6015
        %10099 = vmatpush1.bf16.msra.mxu0 %v6014
        %10100 = vmatprep.subr.bf16.mxu0 %v6039
        %10101 = vmatpush1.bf16.msra.mxu0 %v6038
        %10102 = vmatprep.mubr.bf16.mxu0 %v1731
        %10103 = vmatmul.mubr.bf16.gmra.mrb[0].mxu0 %v1730
        %v10104 = vpop.f32.mrb[0].mxu0
        %v10105 = vadd.f32 %v9992, %v10104
        %v10106 = vpop.f32.mrb[0].mxu0
        %v10107 = vadd.f32 %v9994, %v10106
        %v10108 = vpop.f32.mrb[0].mxu0
        %v10109 = vadd.f32 %v9996, %v10108
        %v10110 = vpop.f32.mrb[0].mxu0
        %v10111 = vadd.f32 %v9998, %v10110
        %10112 = vmatprep.mubr.bf16.mxu0 %v1737
        %10113 = vmatmul.mubr.bf16.gmra.mrb[0].mxu0 %v1736
        %v10114 = vpop.f32.mrb[0].mxu0
        %v10115 = vadd.f32 %v10002, %v10114
        %v10116 = vpop.f32.mrb[0].mxu0
        %v10117 = vadd.f32 %v10004, %v10116
        %v10118 = vpop.f32.mrb[0].mxu0
        %v10119 = vadd.f32 %v10006, %v10118
        %v10120 = vpop.f32.mrb[0].mxu0
        %v10121 = vadd.f32 %v10008, %v10120
        %10122 = vmatprep.mubr.bf16.mxu0 %v1743
        %10123 = vmatmul.mubr.bf16.gmra.mrb[0].mxu0 %v1742
        %v10124 = vpop.f32.mrb[0].mxu0
        %v10125 = vadd.f32 %v10012, %v10124
        %v10126 = vpop.f32.mrb[0].mxu0
        %v10127 = vadd.f32 %v10014, %v10126
        %v10128 = vpop.f32.mrb[0].mxu0
        %v10129 = vadd.f32 %v10016, %v10128
        %v10130 = vpop.f32.mrb[0].mxu0
        %v10131 = vadd.f32 %v10018, %v10130
        %10132 = vmatprep.mubr.bf16.mxu0 %v1749
        %10133 = vmatmul.mubr.bf16.gmra.mrb[0].mxu0 %v1748
        %v10134 = vpop.f32.mrb[0].mxu0
        %v10135 = vadd.f32 %v10022, %v10134
        %v10136 = vpop.f32.mrb[0].mxu0
        %v10137 = vadd.f32 %v10024, %v10136
        %v10138 = vpop.f32.mrb[0].mxu0
        %v10139 = vadd.f32 %v10026, %v10138
        %v10140 = vpop.f32.mrb[0].mxu0
        %v10141 = vadd.f32 %v10028, %v10140
        %10142 = vmatprep.mubr.bf16.mxu0 %v1755
        %10143 = vmatmul.mubr.bf16.gmra.mrb[0].mxu0 %v1754
        %v10144 = vpop.f32.mrb[0].mxu0
        %v10145 = vadd.f32 %v10032, %v10144
        %v10146 = vpop.f32.mrb[0].mxu0
        %v10147 = vadd.f32 %v10034, %v10146
        %v10148 = vpop.f32.mrb[0].mxu0
        %v10149 = vadd.f32 %v10036, %v10148
        %v10150 = vpop.f32.mrb[0].mxu0
        %v10151 = vadd.f32 %v10038, %v10150
        %10152 = vmatprep.mubr.bf16.mxu0 %v1761
        %10153 = vmatmul.mubr.bf16.gmra.mrb[0].mxu0 %v1760
        %v10154 = vpop.f32.mrb[0].mxu0
        %v10155 = vadd.f32 %v10042, %v10154
        %v10156 = vpop.f32.mrb[0].mxu0
        %v10157 = vadd.f32 %v10044, %v10156
        %v10158 = vpop.f32.mrb[0].mxu0
        %v10159 = vadd.f32 %v10046, %v10158
        %v10160 = vpop.f32.mrb[0].mxu0
        %v10161 = vadd.f32 %v10048, %v10160
        %10162 = vmatprep.mubr.bf16.mxu0 %v1767
        %10163 = vmatmul.mubr.bf16.gmra.mrb[0].mxu0 %v1766
        %v10164 = vpop.f32.mrb[0].mxu0
        %v10165 = vadd.f32 %v10052, %v10164
        %v10166 = vpop.f32.mrb[0].mxu0
        %v10167 = vadd.f32 %v10054, %v10166
        %v10168 = vpop.f32.mrb[0].mxu0
        %v10169 = vadd.f32 %v10056, %v10168
        %v10170 = vpop.f32.mrb[0].mxu0
        %v10171 = vadd.f32 %v10058, %v10170
        %10172 = vmatprep.mubr.bf16.mxu0 %v1773
        %10173 = vmatmul.mubr.bf16.gmra.mrb[0].mxu0 %v1772
        %v10174 = vpop.f32.mrb[0].mxu0
        %v10175 = vadd.f32 %v10062, %v10174
        %v10176 = vpop.f32.mrb[0].mxu0
        %v10177 = vadd.f32 %v10064, %v10176
        %v10178 = vpop.f32.mrb[0].mxu0
        %v10179 = vadd.f32 %v10066, %v10178
        %v10180 = vpop.f32.mrb[0].mxu0
        %v10181 = vadd.f32 %v10068, %v10180
        %10182 = vdwg.mxu0
        %10183 = vmatprep.subr.bf16.mxu0 %v6063
        %10184 = vmatpush1.bf16.msra.mxu0 %v6062
        %10185 = vmatprep.subr.bf16.mxu0 %v6087
        %10186 = vmatpush1.bf16.msra.mxu0 %v6086
        %10187 = vmatprep.subr.bf16.mxu0 %v6111
        %10188 = vmatpush1.bf16.msra.mxu0 %v6110
        %10189 = vmatprep.subr.bf16.mxu0 %v6135
        %10190 = vmatpush1.bf16.msra.mxu0 %v6134
        %10191 = vmatprep.subr.bf16.mxu0 %v6159
        %10192 = vmatpush1.bf16.msra.mxu0 %v6158
        %10193 = vmatprep.subr.bf16.mxu0 %v6183
        %10194 = vmatpush1.bf16.msra.mxu0 %v6182
        %10195 = vmatprep.subr.bf16.mxu0 %v6207
        %10196 = vmatpush1.bf16.msra.mxu0 %v6206
        %10197 = vmatprep.subr.bf16.mxu0 %v6231
        %10198 = vmatpush1.bf16.msra.mxu0 %v6230
        %10199 = vmatprep.subr.bf16.mxu0 %v6255
        %10200 = vmatpush1.bf16.msra.mxu0 %v6254
        %10201 = vmatprep.subr.bf16.mxu0 %v6279
        %10202 = vmatpush1.bf16.msra.mxu0 %v6278
        %10203 = vmatprep.subr.bf16.mxu0 %v6303
        %10204 = vmatpush1.bf16.msra.mxu0 %v6302
        %10205 = vmatprep.subr.bf16.mxu0 %v6327
        %10206 = vmatpush1.bf16.msra.mxu0 %v6326
        %10207 = vmatprep.subr.bf16.mxu0 %v6351
        %10208 = vmatpush1.bf16.msra.mxu0 %v6350
        %10209 = vmatprep.subr.bf16.mxu0 %v6375
        %10210 = vmatpush1.bf16.msra.mxu0 %v6374
        %10211 = vmatprep.subr.bf16.mxu0 %v6399
        %10212 = vmatpush1.bf16.msra.mxu0 %v6398
        %10213 = vmatprep.subr.bf16.mxu0 %v6423
        %10214 = vmatpush1.bf16.msra.mxu0 %v6422
        %10215 = vmatprep.mubr.bf16.mxu0 %v1733
        %10216 = vmatmul.mubr.bf16.gmra.mrb[0].mxu0 %v1732
        %v10217 = vpop.f32.mrb[0].mxu0
        %v10218 = vadd.f32 %v10105, %v10217
        %v10219 = vpop.f32.mrb[0].mxu0
        %v10220 = vadd.f32 %v10107, %v10219
        %v10221 = vpop.f32.mrb[0].mxu0
        %v10222 = vadd.f32 %v10109, %v10221
        %v10223 = vpop.f32.mrb[0].mxu0
        %v10224 = vadd.f32 %v10111, %v10223
        %10225 = vmatprep.mubr.bf16.mxu0 %v1739
        %10226 = vmatmul.mubr.bf16.gmra.mrb[0].mxu0 %v1738
        %v10227 = vpop.f32.mrb[0].mxu0
        %v10228 = vadd.f32 %v10115, %v10227
        %v10229 = vpop.f32.mrb[0].mxu0
        %v10230 = vadd.f32 %v10117, %v10229
        %v10231 = vpop.f32.mrb[0].mxu0
        %v10232 = vadd.f32 %v10119, %v10231
        %v10233 = vpop.f32.mrb[0].mxu0
        %v10234 = vadd.f32 %v10121, %v10233
        %10235 = vmatprep.mubr.bf16.mxu0 %v1745
        %10236 = vmatmul.mubr.bf16.gmra.mrb[0].mxu0 %v1744
        %v10237 = vpop.f32.mrb[0].mxu0
        %v10238 = vadd.f32 %v10125, %v10237
        %v10239 = vpop.f32.mrb[0].mxu0
        %v10240 = vadd.f32 %v10127, %v10239
        %v10241 = vpop.f32.mrb[0].mxu0
        %v10242 = vadd.f32 %v10129, %v10241
        %v10243 = vpop.f32.mrb[0].mxu0
        %v10244 = vadd.f32 %v10131, %v10243
        %10245 = vmatprep.mubr.bf16.mxu0 %v1751
        %10246 = vmatmul.mubr.bf16.gmra.mrb[0].mxu0 %v1750
        %v10247 = vpop.f32.mrb[0].mxu0
        %v10248 = vadd.f32 %v10135, %v10247
        %v10249 = vpop.f32.mrb[0].mxu0
        %v10250 = vadd.f32 %v10137, %v10249
        %v10251 = vpop.f32.mrb[0].mxu0
        %v10252 = vadd.f32 %v10139, %v10251
        %v10253 = vpop.f32.mrb[0].mxu0
        %v10254 = vadd.f32 %v10141, %v10253
        %10255 = vmatprep.mubr.bf16.mxu0 %v1757
        %10256 = vmatmul.mubr.bf16.gmra.mrb[0].mxu0 %v1756
        %v10257 = vpop.f32.mrb[0].mxu0
        %v10258 = vadd.f32 %v10145, %v10257
        %v10259 = vpop.f32.mrb[0].mxu0
        %v10260 = vadd.f32 %v10147, %v10259
        %v10261 = vpop.f32.mrb[0].mxu0
        %v10262 = vadd.f32 %v10149, %v10261
        %v10263 = vpop.f32.mrb[0].mxu0
        %v10264 = vadd.f32 %v10151, %v10263
        %10265 = vmatprep.mubr.bf16.mxu0 %v1763
        %10266 = vmatmul.mubr.bf16.gmra.mrb[0].mxu0 %v1762
        %v10267 = vpop.f32.mrb[0].mxu0
        %v10268 = vadd.f32 %v10155, %v10267
        %v10269 = vpop.f32.mrb[0].mxu0
        %v10270 = vadd.f32 %v10157, %v10269
        %v10271 = vpop.f32.mrb[0].mxu0
        %v10272 = vadd.f32 %v10159, %v10271
        %v10273 = vpop.f32.mrb[0].mxu0
        %v10274 = vadd.f32 %v10161, %v10273
        %10275 = vmatprep.mubr.bf16.mxu0 %v1769
        %10276 = vmatmul.mubr.bf16.gmra.mrb[0].mxu0 %v1768
        %v10277 = vpop.f32.mrb[0].mxu0
        %v10278 = vadd.f32 %v10165, %v10277
        %v10279 = vpop.f32.mrb[0].mxu0
        %v10280 = vadd.f32 %v10167, %v10279
        %v10281 = vpop.f32.mrb[0].mxu0
        %v10282 = vadd.f32 %v10169, %v10281
        %v10283 = vpop.f32.mrb[0].mxu0
        %v10284 = vadd.f32 %v10171, %v10283
        %10285 = vmatprep.mubr.bf16.mxu0 %v1775
        %10286 = vmatmul.mubr.bf16.gmra.mrb[0].mxu0 %v1774
        %v10287 = vpop.f32.mrb[0].mxu0
        %v10288 = vadd.f32 %v10175, %v10287
        %v10289 = vpop.f32.mrb[0].mxu0
        %v10290 = vadd.f32 %v10177, %v10289
        %v10291 = vpop.f32.mrb[0].mxu0
        %v10292 = vadd.f32 %v10179, %v10291
        %v10293 = vpop.f32.mrb[0].mxu0
        %v10294 = vadd.f32 %v10181, %v10293
        %10295 = vdwg.mxu0
        %10296 = vmatprep.subr.bf16.mxu0 %v5297
        %10297 = vmatpush1.bf16.msra.mxu0 %v5296
        %10298 = vmatprep.subr.bf16.mxu0 %v5321
        %10299 = vmatpush1.bf16.msra.mxu0 %v5320
        %10300 = vmatprep.subr.bf16.mxu0 %v5345
        %10301 = vmatpush1.bf16.msra.mxu0 %v5344
        %10302 = vmatprep.subr.bf16.mxu0 %v5369
        %10303 = vmatpush1.bf16.msra.mxu0 %v5368
        %10304 = vmatprep.subr.bf16.mxu0 %v5393
        %10305 = vmatpush1.bf16.msra.mxu0 %v5392
        %10306 = vmatprep.subr.bf16.mxu0 %v5417
        %10307 = vmatpush1.bf16.msra.mxu0 %v5416
        %10308 = vmatprep.subr.bf16.mxu0 %v5441
        %10309 = vmatpush1.bf16.msra.mxu0 %v5440
        %10310 = vmatprep.subr.bf16.mxu0 %v5465
        %10311 = vmatpush1.bf16.msra.mxu0 %v5464
        %10312 = vmatprep.subr.bf16.mxu0 %v5489
        %10313 = vmatpush1.bf16.msra.mxu0 %v5488
        %10314 = vmatprep.subr.bf16.mxu0 %v5513
        %10315 = vmatpush1.bf16.msra.mxu0 %v5512
        %10316 = vmatprep.subr.bf16.mxu0 %v5537
        %10317 = vmatpush1.bf16.msra.mxu0 %v5536
        %10318 = vmatprep.subr.bf16.mxu0 %v5561
        %10319 = vmatpush1.bf16.msra.mxu0 %v5560
        %10320 = vmatprep.subr.bf16.mxu0 %v5585
        %10321 = vmatpush1.bf16.msra.mxu0 %v5584
        %10322 = vmatprep.subr.bf16.mxu0 %v5609
        %10323 = vmatpush1.bf16.msra.mxu0 %v5608
        %10324 = vmatprep.subr.bf16.mxu0 %v5633
        %10325 = vmatpush1.bf16.msra.mxu0 %v5632
        %10326 = vmatprep.subr.bf16.mxu0 %v5657
        %10327 = vmatpush1.bf16.msra.mxu0 %v5656
        %10328 = vmatprep.mubr.bf16.mxu0 %v1729
        %10329 = vmatmul.mubr.bf16.gmra.mrb[0].mxu0 %v1728
        %v10330 = vpop.f32.mrb[0].mxu0
        %v10331 = vadd.f32 %v1531, %v10330
        %v10332 = vpop.f32.mrb[0].mxu0
        %v10333 = vadd.f32 %v1535, %v10332
        %v10334 = vpop.f32.mrb[0].mxu0
        %v10335 = vadd.f32 %v1531, %v10334
        %v10336 = vpop.f32.mrb[0].mxu0
        %v10337 = vadd.f32 %v1535, %v10336
        %10338 = vmatprep.mubr.bf16.mxu0 %v1735
        %10339 = vmatmul.mubr.bf16.gmra.mrb[0].mxu0 %v1734
        %v10340 = vpop.f32.mrb[0].mxu0
        %v10341 = vadd.f32 %v1531, %v10340
        %v10342 = vpop.f32.mrb[0].mxu0
        %v10343 = vadd.f32 %v1535, %v10342
        %v10344 = vpop.f32.mrb[0].mxu0
        %v10345 = vadd.f32 %v1531, %v10344
        %v10346 = vpop.f32.mrb[0].mxu0
        %v10347 = vadd.f32 %v1535, %v10346
        %10348 = vmatprep.mubr.bf16.mxu0 %v1741
        %10349 = vmatmul.mubr.bf16.gmra.mrb[0].mxu0 %v1740
        %v10350 = vpop.f32.mrb[0].mxu0
        %v10351 = vadd.f32 %v1531, %v10350
        %v10352 = vpop.f32.mrb[0].mxu0
        %v10353 = vadd.f32 %v1535, %v10352
        %v10354 = vpop.f32.mrb[0].mxu0
        %v10355 = vadd.f32 %v1531, %v10354
        %v10356 = vpop.f32.mrb[0].mxu0
        %v10357 = vadd.f32 %v1535, %v10356
        %10358 = vmatprep.mubr.bf16.mxu0 %v1747
        %10359 = vmatmul.mubr.bf16.gmra.mrb[0].mxu0 %v1746
        %v10360 = vpop.f32.mrb[0].mxu0
        %v10361 = vadd.f32 %v1531, %v10360
        %v10362 = vpop.f32.mrb[0].mxu0
        %v10363 = vadd.f32 %v1535, %v10362
        %v10364 = vpop.f32.mrb[0].mxu0
        %v10365 = vadd.f32 %v1531, %v10364
        %v10366 = vpop.f32.mrb[0].mxu0
        %v10367 = vadd.f32 %v1535, %v10366
        %10368 = vmatprep.mubr.bf16.mxu0 %v1753
        %10369 = vmatmul.mubr.bf16.gmra.mrb[0].mxu0 %v1752
        %v10370 = vpop.f32.mrb[0].mxu0
        %v10371 = vadd.f32 %v1531, %v10370
        %v10372 = vpop.f32.mrb[0].mxu0
        %v10373 = vadd.f32 %v1535, %v10372
        %v10374 = vpop.f32.mrb[0].mxu0
        %v10375 = vadd.f32 %v1531, %v10374
        %v10376 = vpop.f32.mrb[0].mxu0
        %v10377 = vadd.f32 %v1535, %v10376
        %10378 = vmatprep.mubr.bf16.mxu0 %v1759
        %10379 = vmatmul.mubr.bf16.gmra.mrb[0].mxu0 %v1758
        %v10380 = vpop.f32.mrb[0].mxu0
        %v10381 = vadd.f32 %v1531, %v10380
        %v10382 = vpop.f32.mrb[0].mxu0
        %v10383 = vadd.f32 %v1535, %v10382
        %v10384 = vpop.f32.mrb[0].mxu0
        %v10385 = vadd.f32 %v1531, %v10384
        %v10386 = vpop.f32.mrb[0].mxu0
        %v10387 = vadd.f32 %v1535, %v10386
        %10388 = vmatprep.mubr.bf16.mxu0 %v1765
        %10389 = vmatmul.mubr.bf16.gmra.mrb[0].mxu0 %v1764
        %v10390 = vpop.f32.mrb[0].mxu0
        %v10391 = vadd.f32 %v1531, %v10390
        %v10392 = vpop.f32.mrb[0].mxu0
        %v10393 = vadd.f32 %v1535, %v10392
        %v10394 = vpop.f32.mrb[0].mxu0
        %v10395 = vadd.f32 %v1531, %v10394
        %v10396 = vpop.f32.mrb[0].mxu0
        %v10397 = vadd.f32 %v1535, %v10396
        %10398 = vmatprep.mubr.bf16.mxu0 %v1771
        %10399 = vmatmul.mubr.bf16.gmra.mrb[0].mxu0 %v1770
        %v10400 = vpop.f32.mrb[0].mxu0
        %v10401 = vadd.f32 %v1531, %v10400
        %v10402 = vpop.f32.mrb[0].mxu0
        %v10403 = vadd.f32 %v1535, %v10402
        %v10404 = vpop.f32.mrb[0].mxu0
        %v10405 = vadd.f32 %v1531, %v10404
        %v10406 = vpop.f32.mrb[0].mxu0
        %v10407 = vadd.f32 %v1535, %v10406
        %10408 = vdwg.mxu0
        %10409 = vmatprep.subr.bf16.mxu0 %v5681
        %10410 = vmatpush1.bf16.msra.mxu0 %v5680
        %10411 = vmatprep.subr.bf16.mxu0 %v5705
        %10412 = vmatpush1.bf16.msra.mxu0 %v5704
        %10413 = vmatprep.subr.bf16.mxu0 %v5729
        %10414 = vmatpush1.bf16.msra.mxu0 %v5728
        %10415 = vmatprep.subr.bf16.mxu0 %v5753
        %10416 = vmatpush1.bf16.msra.mxu0 %v5752
        %10417 = vmatprep.subr.bf16.mxu0 %v5777
        %10418 = vmatpush1.bf16.msra.mxu0 %v5776
        %10419 = vmatprep.subr.bf16.mxu0 %v5801
        %10420 = vmatpush1.bf16.msra.mxu0 %v5800
        %10421 = vmatprep.subr.bf16.mxu0 %v5825
        %10422 = vmatpush1.bf16.msra.mxu0 %v5824
        %10423 = vmatprep.subr.bf16.mxu0 %v5849
        %10424 = vmatpush1.bf16.msra.mxu0 %v5848
        %10425 = vmatprep.subr.bf16.mxu0 %v5873
        %10426 = vmatpush1.bf16.msra.mxu0 %v5872
        %10427 = vmatprep.subr.bf16.mxu0 %v5897
        %10428 = vmatpush1.bf16.msra.mxu0 %v5896
        %10429 = vmatprep.subr.bf16.mxu0 %v5921
        %10430 = vmatpush1.bf16.msra.mxu0 %v5920
        %10431 = vmatprep.subr.bf16.mxu0 %v5945
        %10432 = vmatpush1.bf16.msra.mxu0 %v5944
        %10433 = vmatprep.subr.bf16.mxu0 %v5969
        %10434 = vmatpush1.bf16.msra.mxu0 %v5968
        %10435 = vmatprep.subr.bf16.mxu0 %v5993
        %10436 = vmatpush1.bf16.msra.mxu0 %v5992
        %10437 = vmatprep.subr.bf16.mxu0 %v6017
        %10438 = vmatpush1.bf16.msra.mxu0 %v6016
        %10439 = vmatprep.subr.bf16.mxu0 %v6041
        %10440 = vmatpush1.bf16.msra.mxu0 %v6040
        %10441 = vmatprep.mubr.bf16.mxu0 %v1731
        %10442 = vmatmul.mubr.bf16.gmra.mrb[0].mxu0 %v1730
        %v10443 = vpop.f32.mrb[0].mxu0
        %v10444 = vadd.f32 %v10331, %v10443
        %v10445 = vpop.f32.mrb[0].mxu0
        %v10446 = vadd.f32 %v10333, %v10445
        %v10447 = vpop.f32.mrb[0].mxu0
        %v10448 = vadd.f32 %v10335, %v10447
        %v10449 = vpop.f32.mrb[0].mxu0
        %v10450 = vadd.f32 %v10337, %v10449
        %10451 = vmatprep.mubr.bf16.mxu0 %v1737
        %10452 = vmatmul.mubr.bf16.gmra.mrb[0].mxu0 %v1736
        %v10453 = vpop.f32.mrb[0].mxu0
        %v10454 = vadd.f32 %v10341, %v10453
        %v10455 = vpop.f32.mrb[0].mxu0
        %v10456 = vadd.f32 %v10343, %v10455
        %v10457 = vpop.f32.mrb[0].mxu0
        %v10458 = vadd.f32 %v10345, %v10457
        %v10459 = vpop.f32.mrb[0].mxu0
        %v10460 = vadd.f32 %v10347, %v10459
        %10461 = vmatprep.mubr.bf16.mxu0 %v1743
        %10462 = vmatmul.mubr.bf16.gmra.mrb[0].mxu0 %v1742
        %v10463 = vpop.f32.mrb[0].mxu0
        %v10464 = vadd.f32 %v10351, %v10463
        %v10465 = vpop.f32.mrb[0].mxu0
        %v10466 = vadd.f32 %v10353, %v10465
        %v10467 = vpop.f32.mrb[0].mxu0
        %v10468 = vadd.f32 %v10355, %v10467
        %v10469 = vpop.f32.mrb[0].mxu0
        %v10470 = vadd.f32 %v10357, %v10469
        %10471 = vmatprep.mubr.bf16.mxu0 %v1749
        %10472 = vmatmul.mubr.bf16.gmra.mrb[0].mxu0 %v1748
        %v10473 = vpop.f32.mrb[0].mxu0
        %v10474 = vadd.f32 %v10361, %v10473
        %v10475 = vpop.f32.mrb[0].mxu0
        %v10476 = vadd.f32 %v10363, %v10475
        %v10477 = vpop.f32.mrb[0].mxu0
        %v10478 = vadd.f32 %v10365, %v10477
        %v10479 = vpop.f32.mrb[0].mxu0
        %v10480 = vadd.f32 %v10367, %v10479
        %10481 = vmatprep.mubr.bf16.mxu0 %v1755
        %10482 = vmatmul.mubr.bf16.gmra.mrb[0].mxu0 %v1754
        %v10483 = vpop.f32.mrb[0].mxu0
        %v10484 = vadd.f32 %v10371, %v10483
        %v10485 = vpop.f32.mrb[0].mxu0
        %v10486 = vadd.f32 %v10373, %v10485
        %v10487 = vpop.f32.mrb[0].mxu0
        %v10488 = vadd.f32 %v10375, %v10487
        %v10489 = vpop.f32.mrb[0].mxu0
        %v10490 = vadd.f32 %v10377, %v10489
        %10491 = vmatprep.mubr.bf16.mxu0 %v1761
        %10492 = vmatmul.mubr.bf16.gmra.mrb[0].mxu0 %v1760
        %v10493 = vpop.f32.mrb[0].mxu0
        %v10494 = vadd.f32 %v10381, %v10493
        %v10495 = vpop.f32.mrb[0].mxu0
        %v10496 = vadd.f32 %v10383, %v10495
        %v10497 = vpop.f32.mrb[0].mxu0
        %v10498 = vadd.f32 %v10385, %v10497
        %v10499 = vpop.f32.mrb[0].mxu0
        %v10500 = vadd.f32 %v10387, %v10499
        %10501 = vmatprep.mubr.bf16.mxu0 %v1767
        %10502 = vmatmul.mubr.bf16.gmra.mrb[0].mxu0 %v1766
        %v10503 = vpop.f32.mrb[0].mxu0
        %v10504 = vadd.f32 %v10391, %v10503
        %v10505 = vpop.f32.mrb[0].mxu0
        %v10506 = vadd.f32 %v10393, %v10505
        %v10507 = vpop.f32.mrb[0].mxu0
        %v10508 = vadd.f32 %v10395, %v10507
        %v10509 = vpop.f32.mrb[0].mxu0
        %v10510 = vadd.f32 %v10397, %v10509
        %10511 = vmatprep.mubr.bf16.mxu0 %v1773
        %10512 = vmatmul.mubr.bf16.gmra.mrb[0].mxu0 %v1772
        %v10513 = vpop.f32.mrb[0].mxu0
        %v10514 = vadd.f32 %v10401, %v10513
        %v10515 = vpop.f32.mrb[0].mxu0
        %v10516 = vadd.f32 %v10403, %v10515
        %v10517 = vpop.f32.mrb[0].mxu0
        %v10518 = vadd.f32 %v10405, %v10517
        %v10519 = vpop.f32.mrb[0].mxu0
        %v10520 = vadd.f32 %v10407, %v10519
        %10521 = vdwg.mxu0
        %10522 = vmatprep.subr.bf16.mxu0 %v6065
        %10523 = vmatpush1.bf16.msra.mxu0 %v6064
        %10524 = vmatprep.subr.bf16.mxu0 %v6089
        %10525 = vmatpush1.bf16.msra.mxu0 %v6088
        %10526 = vmatprep.subr.bf16.mxu0 %v6113
        %10527 = vmatpush1.bf16.msra.mxu0 %v6112
        %10528 = vmatprep.subr.bf16.mxu0 %v6137
        %10529 = vmatpush1.bf16.msra.mxu0 %v6136
        %10530 = vmatprep.subr.bf16.mxu0 %v6161
        %10531 = vmatpush1.bf16.msra.mxu0 %v6160
        %10532 = vmatprep.subr.bf16.mxu0 %v6185
        %10533 = vmatpush1.bf16.msra.mxu0 %v6184
        %10534 = vmatprep.subr.bf16.mxu0 %v6209
        %10535 = vmatpush1.bf16.msra.mxu0 %v6208
        %10536 = vmatprep.subr.bf16.mxu0 %v6233
        %10537 = vmatpush1.bf16.msra.mxu0 %v6232
        %10538 = vmatprep.subr.bf16.mxu0 %v6257
        %10539 = vmatpush1.bf16.msra.mxu0 %v6256
        %10540 = vmatprep.subr.bf16.mxu0 %v6281
        %10541 = vmatpush1.bf16.msra.mxu0 %v6280
        %10542 = vmatprep.subr.bf16.mxu0 %v6305
        %10543 = vmatpush1.bf16.msra.mxu0 %v6304
        %10544 = vmatprep.subr.bf16.mxu0 %v6329
        %10545 = vmatpush1.bf16.msra.mxu0 %v6328
        %10546 = vmatprep.subr.bf16.mxu0 %v6353
        %10547 = vmatpush1.bf16.msra.mxu0 %v6352
        %10548 = vmatprep.subr.bf16.mxu0 %v6377
        %10549 = vmatpush1.bf16.msra.mxu0 %v6376
        %10550 = vmatprep.subr.bf16.mxu0 %v6401
        %10551 = vmatpush1.bf16.msra.mxu0 %v6400
        %10552 = vmatprep.subr.bf16.mxu0 %v6425
        %10553 = vmatpush1.bf16.msra.mxu0 %v6424
        %10554 = vmatprep.mubr.bf16.mxu0 %v1733
        %10555 = vmatmul.mubr.bf16.gmra.mrb[0].mxu0 %v1732
        %v10556 = vpop.f32.mrb[0].mxu0
        %v10557 = vadd.f32 %v10444, %v10556
        %v10558 = vpop.f32.mrb[0].mxu0
        %v10559 = vadd.f32 %v10446, %v10558
        %v10560 = vpop.f32.mrb[0].mxu0
        %v10561 = vadd.f32 %v10448, %v10560
        %v10562 = vpop.f32.mrb[0].mxu0
        %v10563 = vadd.f32 %v10450, %v10562
        %10564 = vmatprep.mubr.bf16.mxu0 %v1739
        %10565 = vmatmul.mubr.bf16.gmra.mrb[0].mxu0 %v1738
        %v10566 = vpop.f32.mrb[0].mxu0
        %v10567 = vadd.f32 %v10454, %v10566
        %v10568 = vpop.f32.mrb[0].mxu0
        %v10569 = vadd.f32 %v10456, %v10568
        %v10570 = vpop.f32.mrb[0].mxu0
        %v10571 = vadd.f32 %v10458, %v10570
        %v10572 = vpop.f32.mrb[0].mxu0
        %v10573 = vadd.f32 %v10460, %v10572
        %10574 = vmatprep.mubr.bf16.mxu0 %v1745
        %10575 = vmatmul.mubr.bf16.gmra.mrb[0].mxu0 %v1744
        %v10576 = vpop.f32.mrb[0].mxu0
        %v10577 = vadd.f32 %v10464, %v10576
        %v10578 = vpop.f32.mrb[0].mxu0
        %v10579 = vadd.f32 %v10466, %v10578
        %v10580 = vpop.f32.mrb[0].mxu0
        %v10581 = vadd.f32 %v10468, %v10580
        %v10582 = vpop.f32.mrb[0].mxu0
        %v10583 = vadd.f32 %v10470, %v10582
        %10584 = vmatprep.mubr.bf16.mxu0 %v1751
        %10585 = vmatmul.mubr.bf16.gmra.mrb[0].mxu0 %v1750
        %v10586 = vpop.f32.mrb[0].mxu0
        %v10587 = vadd.f32 %v10474, %v10586
        %v10588 = vpop.f32.mrb[0].mxu0
        %v10589 = vadd.f32 %v10476, %v10588
        %v10590 = vpop.f32.mrb[0].mxu0
        %v10591 = vadd.f32 %v10478, %v10590
        %v10592 = vpop.f32.mrb[0].mxu0
        %v10593 = vadd.f32 %v10480, %v10592
        %10594 = vmatprep.mubr.bf16.mxu0 %v1757
        %10595 = vmatmul.mubr.bf16.gmra.mrb[0].mxu0 %v1756
        %v10596 = vpop.f32.mrb[0].mxu0
        %v10597 = vadd.f32 %v10484, %v10596
        %v10598 = vpop.f32.mrb[0].mxu0
        %v10599 = vadd.f32 %v10486, %v10598
        %v10600 = vpop.f32.mrb[0].mxu0
        %v10601 = vadd.f32 %v10488, %v10600
        %v10602 = vpop.f32.mrb[0].mxu0
        %v10603 = vadd.f32 %v10490, %v10602
        %10604 = vmatprep.mubr.bf16.mxu0 %v1763
        %10605 = vmatmul.mubr.bf16.gmra.mrb[0].mxu0 %v1762
        %v10606 = vpop.f32.mrb[0].mxu0
        %v10607 = vadd.f32 %v10494, %v10606
        %v10608 = vpop.f32.mrb[0].mxu0
        %v10609 = vadd.f32 %v10496, %v10608
        %v10610 = vpop.f32.mrb[0].mxu0
        %v10611 = vadd.f32 %v10498, %v10610
        %v10612 = vpop.f32.mrb[0].mxu0
        %v10613 = vadd.f32 %v10500, %v10612
        %10614 = vmatprep.mubr.bf16.mxu0 %v1769
        %10615 = vmatmul.mubr.bf16.gmra.mrb[0].mxu0 %v1768
        %v10616 = vpop.f32.mrb[0].mxu0
        %v10617 = vadd.f32 %v10504, %v10616
        %v10618 = vpop.f32.mrb[0].mxu0
        %v10619 = vadd.f32 %v10506, %v10618
        %v10620 = vpop.f32.mrb[0].mxu0
        %v10621 = vadd.f32 %v10508, %v10620
        %v10622 = vpop.f32.mrb[0].mxu0
        %v10623 = vadd.f32 %v10510, %v10622
        %10624 = vmatprep.mubr.bf16.mxu0 %v1775
        %10625 = vmatmul.mubr.bf16.gmra.mrb[0].mxu0 %v1774
        %v10626 = vpop.f32.mrb[0].mxu0
        %v10627 = vadd.f32 %v10514, %v10626
        %v10628 = vpop.f32.mrb[0].mxu0
        %v10629 = vadd.f32 %v10516, %v10628
        %v10630 = vpop.f32.mrb[0].mxu0
        %v10631 = vadd.f32 %v10518, %v10630
        %v10632 = vpop.f32.mrb[0].mxu0
        %v10633 = vadd.f32 %v10520, %v10632
        %10634 = vdwg.mxu0
        %10635 = vmatprep.subr.bf16.mxu0 %v5299
        %10636 = vmatpush1.bf16.msra.mxu0 %v5298
        %10637 = vmatprep.subr.bf16.mxu0 %v5323
        %10638 = vmatpush1.bf16.msra.mxu0 %v5322
        %10639 = vmatprep.subr.bf16.mxu0 %v5347
        %10640 = vmatpush1.bf16.msra.mxu0 %v5346
        %10641 = vmatprep.subr.bf16.mxu0 %v5371
        %10642 = vmatpush1.bf16.msra.mxu0 %v5370
        %10643 = vmatprep.subr.bf16.mxu0 %v5395
        %10644 = vmatpush1.bf16.msra.mxu0 %v5394
        %10645 = vmatprep.subr.bf16.mxu0 %v5419
        %10646 = vmatpush1.bf16.msra.mxu0 %v5418
        %10647 = vmatprep.subr.bf16.mxu0 %v5443
        %10648 = vmatpush1.bf16.msra.mxu0 %v5442
        %10649 = vmatprep.subr.bf16.mxu0 %v5467
        %10650 = vmatpush1.bf16.msra.mxu0 %v5466
        %10651 = vmatprep.subr.bf16.mxu0 %v5491
        %10652 = vmatpush1.bf16.msra.mxu0 %v5490
        %10653 = vmatprep.subr.bf16.mxu0 %v5515
        %10654 = vmatpush1.bf16.msra.mxu0 %v5514
        %10655 = vmatprep.subr.bf16.mxu0 %v5539
        %10656 = vmatpush1.bf16.msra.mxu0 %v5538
        %10657 = vmatprep.subr.bf16.mxu0 %v5563
        %10658 = vmatpush1.bf16.msra.mxu0 %v5562
        %10659 = vmatprep.subr.bf16.mxu0 %v5587
        %10660 = vmatpush1.bf16.msra.mxu0 %v5586
        %10661 = vmatprep.subr.bf16.mxu0 %v5611
        %10662 = vmatpush1.bf16.msra.mxu0 %v5610
        %10663 = vmatprep.subr.bf16.mxu0 %v5635
        %10664 = vmatpush1.bf16.msra.mxu0 %v5634
        %10665 = vmatprep.subr.bf16.mxu0 %v5659
        %10666 = vmatpush1.bf16.msra.mxu0 %v5658
        %10667 = vmatprep.mubr.bf16.mxu0 %v1729
        %10668 = vmatmul.mubr.bf16.gmra.mrb[0].mxu0 %v1728
        %v10669 = vpop.f32.mrb[0].mxu0
        %v10670 = vadd.f32 %v1539, %v10669
        %v10671 = vpop.f32.mrb[0].mxu0
        %v10672 = vadd.f32 %v1543, %v10671
        %v10673 = vpop.f32.mrb[0].mxu0
        %v10674 = vadd.f32 %v1539, %v10673
        %v10675 = vpop.f32.mrb[0].mxu0
        %v10676 = vadd.f32 %v1543, %v10675
        %10677 = vmatprep.mubr.bf16.mxu0 %v1735
        %10678 = vmatmul.mubr.bf16.gmra.mrb[0].mxu0 %v1734
        %v10679 = vpop.f32.mrb[0].mxu0
        %v10680 = vadd.f32 %v1539, %v10679
        %v10681 = vpop.f32.mrb[0].mxu0
        %v10682 = vadd.f32 %v1543, %v10681
        %v10683 = vpop.f32.mrb[0].mxu0
        %v10684 = vadd.f32 %v1539, %v10683
        %v10685 = vpop.f32.mrb[0].mxu0
        %v10686 = vadd.f32 %v1543, %v10685
        %10687 = vmatprep.mubr.bf16.mxu0 %v1741
        %10688 = vmatmul.mubr.bf16.gmra.mrb[0].mxu0 %v1740
        %v10689 = vpop.f32.mrb[0].mxu0
        %v10690 = vadd.f32 %v1539, %v10689
        %v10691 = vpop.f32.mrb[0].mxu0
        %v10692 = vadd.f32 %v1543, %v10691
        %v10693 = vpop.f32.mrb[0].mxu0
        %v10694 = vadd.f32 %v1539, %v10693
        %v10695 = vpop.f32.mrb[0].mxu0
        %v10696 = vadd.f32 %v1543, %v10695
        %10697 = vmatprep.mubr.bf16.mxu0 %v1747
        %10698 = vmatmul.mubr.bf16.gmra.mrb[0].mxu0 %v1746
        %v10699 = vpop.f32.mrb[0].mxu0
        %v10700 = vadd.f32 %v1539, %v10699
        %v10701 = vpop.f32.mrb[0].mxu0
        %v10702 = vadd.f32 %v1543, %v10701
        %v10703 = vpop.f32.mrb[0].mxu0
        %v10704 = vadd.f32 %v1539, %v10703
        %v10705 = vpop.f32.mrb[0].mxu0
        %v10706 = vadd.f32 %v1543, %v10705
        %10707 = vmatprep.mubr.bf16.mxu0 %v1753
        %10708 = vmatmul.mubr.bf16.gmra.mrb[0].mxu0 %v1752
        %v10709 = vpop.f32.mrb[0].mxu0
        %v10710 = vadd.f32 %v1539, %v10709
        %v10711 = vpop.f32.mrb[0].mxu0
        %v10712 = vadd.f32 %v1543, %v10711
        %v10713 = vpop.f32.mrb[0].mxu0
        %v10714 = vadd.f32 %v1539, %v10713
        %v10715 = vpop.f32.mrb[0].mxu0
        %v10716 = vadd.f32 %v1543, %v10715
        %10717 = vmatprep.mubr.bf16.mxu0 %v1759
        %10718 = vmatmul.mubr.bf16.gmra.mrb[0].mxu0 %v1758
        %v10719 = vpop.f32.mrb[0].mxu0
        %v10720 = vadd.f32 %v1539, %v10719
        %v10721 = vpop.f32.mrb[0].mxu0
        %v10722 = vadd.f32 %v1543, %v10721
        %v10723 = vpop.f32.mrb[0].mxu0
        %v10724 = vadd.f32 %v1539, %v10723
        %v10725 = vpop.f32.mrb[0].mxu0
        %v10726 = vadd.f32 %v1543, %v10725
        %10727 = vmatprep.mubr.bf16.mxu0 %v1765
        %10728 = vmatmul.mubr.bf16.gmra.mrb[0].mxu0 %v1764
        %v10729 = vpop.f32.mrb[0].mxu0
        %v10730 = vadd.f32 %v1539, %v10729
        %v10731 = vpop.f32.mrb[0].mxu0
        %v10732 = vadd.f32 %v1543, %v10731
        %v10733 = vpop.f32.mrb[0].mxu0
        %v10734 = vadd.f32 %v1539, %v10733
        %v10735 = vpop.f32.mrb[0].mxu0
        %v10736 = vadd.f32 %v1543, %v10735
        %10737 = vmatprep.mubr.bf16.mxu0 %v1771
        %10738 = vmatmul.mubr.bf16.gmra.mrb[0].mxu0 %v1770
        %v10739 = vpop.f32.mrb[0].mxu0
        %v10740 = vadd.f32 %v1539, %v10739
        %v10741 = vpop.f32.mrb[0].mxu0
        %v10742 = vadd.f32 %v1543, %v10741
        %v10743 = vpop.f32.mrb[0].mxu0
        %v10744 = vadd.f32 %v1539, %v10743
        %v10745 = vpop.f32.mrb[0].mxu0
        %v10746 = vadd.f32 %v1543, %v10745
        %10747 = vdwg.mxu0
        %10748 = vmatprep.subr.bf16.mxu0 %v5683
        %10749 = vmatpush1.bf16.msra.mxu0 %v5682
        %10750 = vmatprep.subr.bf16.mxu0 %v5707
        %10751 = vmatpush1.bf16.msra.mxu0 %v5706
        %10752 = vmatprep.subr.bf16.mxu0 %v5731
        %10753 = vmatpush1.bf16.msra.mxu0 %v5730
        %10754 = vmatprep.subr.bf16.mxu0 %v5755
        %10755 = vmatpush1.bf16.msra.mxu0 %v5754
        %10756 = vmatprep.subr.bf16.mxu0 %v5779
        %10757 = vmatpush1.bf16.msra.mxu0 %v5778
        %10758 = vmatprep.subr.bf16.mxu0 %v5803
        %10759 = vmatpush1.bf16.msra.mxu0 %v5802
        %10760 = vmatprep.subr.bf16.mxu0 %v5827
        %10761 = vmatpush1.bf16.msra.mxu0 %v5826
        %10762 = vmatprep.subr.bf16.mxu0 %v5851
        %10763 = vmatpush1.bf16.msra.mxu0 %v5850
        %10764 = vmatprep.subr.bf16.mxu0 %v5875
        %10765 = vmatpush1.bf16.msra.mxu0 %v5874
        %10766 = vmatprep.subr.bf16.mxu0 %v5899
        %10767 = vmatpush1.bf16.msra.mxu0 %v5898
        %10768 = vmatprep.subr.bf16.mxu0 %v5923
        %10769 = vmatpush1.bf16.msra.mxu0 %v5922
        %10770 = vmatprep.subr.bf16.mxu0 %v5947
        %10771 = vmatpush1.bf16.msra.mxu0 %v5946
        %10772 = vmatprep.subr.bf16.mxu0 %v5971
        %10773 = vmatpush1.bf16.msra.mxu0 %v5970
        %10774 = vmatprep.subr.bf16.mxu0 %v5995
        %10775 = vmatpush1.bf16.msra.mxu0 %v5994
        %10776 = vmatprep.subr.bf16.mxu0 %v6019
        %10777 = vmatpush1.bf16.msra.mxu0 %v6018
        %10778 = vmatprep.subr.bf16.mxu0 %v6043
        %10779 = vmatpush1.bf16.msra.mxu0 %v6042
        %10780 = vmatprep.mubr.bf16.mxu0 %v1731
        %10781 = vmatmul.mubr.bf16.gmra.mrb[0].mxu0 %v1730
        %v10782 = vpop.f32.mrb[0].mxu0
        %v10783 = vadd.f32 %v10670, %v10782
        %v10784 = vpop.f32.mrb[0].mxu0
        %v10785 = vadd.f32 %v10672, %v10784
        %v10786 = vpop.f32.mrb[0].mxu0
        %v10787 = vadd.f32 %v10674, %v10786
        %v10788 = vpop.f32.mrb[0].mxu0
        %v10789 = vadd.f32 %v10676, %v10788
        %10790 = vmatprep.mubr.bf16.mxu0 %v1737
        %10791 = vmatmul.mubr.bf16.gmra.mrb[0].mxu0 %v1736
        %v10792 = vpop.f32.mrb[0].mxu0
        %v10793 = vadd.f32 %v10680, %v10792
        %v10794 = vpop.f32.mrb[0].mxu0
        %v10795 = vadd.f32 %v10682, %v10794
        %v10796 = vpop.f32.mrb[0].mxu0
        %v10797 = vadd.f32 %v10684, %v10796
        %v10798 = vpop.f32.mrb[0].mxu0
        %v10799 = vadd.f32 %v10686, %v10798
        %10800 = vmatprep.mubr.bf16.mxu0 %v1743
        %10801 = vmatmul.mubr.bf16.gmra.mrb[0].mxu0 %v1742
        %v10802 = vpop.f32.mrb[0].mxu0
        %v10803 = vadd.f32 %v10690, %v10802
        %v10804 = vpop.f32.mrb[0].mxu0
        %v10805 = vadd.f32 %v10692, %v10804
        %v10806 = vpop.f32.mrb[0].mxu0
        %v10807 = vadd.f32 %v10694, %v10806
        %v10808 = vpop.f32.mrb[0].mxu0
        %v10809 = vadd.f32 %v10696, %v10808
        %10810 = vmatprep.mubr.bf16.mxu0 %v1749
        %10811 = vmatmul.mubr.bf16.gmra.mrb[0].mxu0 %v1748
        %v10812 = vpop.f32.mrb[0].mxu0
        %v10813 = vadd.f32 %v10700, %v10812
        %v10814 = vpop.f32.mrb[0].mxu0
        %v10815 = vadd.f32 %v10702, %v10814
        %v10816 = vpop.f32.mrb[0].mxu0
        %v10817 = vadd.f32 %v10704, %v10816
        %v10818 = vpop.f32.mrb[0].mxu0
        %v10819 = vadd.f32 %v10706, %v10818
        %10820 = vmatprep.mubr.bf16.mxu0 %v1755
        %10821 = vmatmul.mubr.bf16.gmra.mrb[0].mxu0 %v1754
        %v10822 = vpop.f32.mrb[0].mxu0
        %v10823 = vadd.f32 %v10710, %v10822
        %v10824 = vpop.f32.mrb[0].mxu0
        %v10825 = vadd.f32 %v10712, %v10824
        %v10826 = vpop.f32.mrb[0].mxu0
        %v10827 = vadd.f32 %v10714, %v10826
        %v10828 = vpop.f32.mrb[0].mxu0
        %v10829 = vadd.f32 %v10716, %v10828
        %10830 = vmatprep.mubr.bf16.mxu0 %v1761
        %10831 = vmatmul.mubr.bf16.gmra.mrb[0].mxu0 %v1760
        %v10832 = vpop.f32.mrb[0].mxu0
        %v10833 = vadd.f32 %v10720, %v10832
        %v10834 = vpop.f32.mrb[0].mxu0
        %v10835 = vadd.f32 %v10722, %v10834
        %v10836 = vpop.f32.mrb[0].mxu0
        %v10837 = vadd.f32 %v10724, %v10836
        %v10838 = vpop.f32.mrb[0].mxu0
        %v10839 = vadd.f32 %v10726, %v10838
        %10840 = vmatprep.mubr.bf16.mxu0 %v1767
        %10841 = vmatmul.mubr.bf16.gmra.mrb[0].mxu0 %v1766
        %v10842 = vpop.f32.mrb[0].mxu0
        %v10843 = vadd.f32 %v10730, %v10842
        %v10844 = vpop.f32.mrb[0].mxu0
        %v10845 = vadd.f32 %v10732, %v10844
        %v10846 = vpop.f32.mrb[0].mxu0
        %v10847 = vadd.f32 %v10734, %v10846
        %v10848 = vpop.f32.mrb[0].mxu0
        %v10849 = vadd.f32 %v10736, %v10848
        %10850 = vmatprep.mubr.bf16.mxu0 %v1773
        %10851 = vmatmul.mubr.bf16.gmra.mrb[0].mxu0 %v1772
        %v10852 = vpop.f32.mrb[0].mxu0
        %v10853 = vadd.f32 %v10740, %v10852
        %v10854 = vpop.f32.mrb[0].mxu0
        %v10855 = vadd.f32 %v10742, %v10854
        %v10856 = vpop.f32.mrb[0].mxu0
        %v10857 = vadd.f32 %v10744, %v10856
        %v10858 = vpop.f32.mrb[0].mxu0
        %v10859 = vadd.f32 %v10746, %v10858
        %10860 = vdwg.mxu0
        %10861 = vmatprep.subr.bf16.mxu0 %v6067
        %10862 = vmatpush1.bf16.msra.mxu0 %v6066
        %10863 = vmatprep.subr.bf16.mxu0 %v6091
        %10864 = vmatpush1.bf16.msra.mxu0 %v6090
        %10865 = vmatprep.subr.bf16.mxu0 %v6115
        %10866 = vmatpush1.bf16.msra.mxu0 %v6114
        %10867 = vmatprep.subr.bf16.mxu0 %v6139
        %10868 = vmatpush1.bf16.msra.mxu0 %v6138
        %10869 = vmatprep.subr.bf16.mxu0 %v6163
        %10870 = vmatpush1.bf16.msra.mxu0 %v6162
        %10871 = vmatprep.subr.bf16.mxu0 %v6187
        %10872 = vmatpush1.bf16.msra.mxu0 %v6186
        %10873 = vmatprep.subr.bf16.mxu0 %v6211
        %10874 = vmatpush1.bf16.msra.mxu0 %v6210
        %10875 = vmatprep.subr.bf16.mxu0 %v6235
        %10876 = vmatpush1.bf16.msra.mxu0 %v6234
        %10877 = vmatprep.subr.bf16.mxu0 %v6259
        %10878 = vmatpush1.bf16.msra.mxu0 %v6258
        %10879 = vmatprep.subr.bf16.mxu0 %v6283
        %10880 = vmatpush1.bf16.msra.mxu0 %v6282
        %10881 = vmatprep.subr.bf16.mxu0 %v6307
        %10882 = vmatpush1.bf16.msra.mxu0 %v6306
        %10883 = vmatprep.subr.bf16.mxu0 %v6331
        %10884 = vmatpush1.bf16.msra.mxu0 %v6330
        %10885 = vmatprep.subr.bf16.mxu0 %v6355
        %10886 = vmatpush1.bf16.msra.mxu0 %v6354
        %10887 = vmatprep.subr.bf16.mxu0 %v6379
        %10888 = vmatpush1.bf16.msra.mxu0 %v6378
        %10889 = vmatprep.subr.bf16.mxu0 %v6403
        %10890 = vmatpush1.bf16.msra.mxu0 %v6402
        %10891 = vmatprep.subr.bf16.mxu0 %v6427
        %10892 = vmatpush1.bf16.msra.mxu0 %v6426
        %10893 = vmatprep.mubr.bf16.mxu0 %v1733
        %10894 = vmatmul.mubr.bf16.gmra.mrb[0].mxu0 %v1732
        %v10895 = vpop.f32.mrb[0].mxu0
        %v10896 = vadd.f32 %v10783, %v10895
        %v10897 = vpop.f32.mrb[0].mxu0
        %v10898 = vadd.f32 %v10785, %v10897
        %v10899 = vpop.f32.mrb[0].mxu0
        %v10900 = vadd.f32 %v10787, %v10899
        %v10901 = vpop.f32.mrb[0].mxu0
        %v10902 = vadd.f32 %v10789, %v10901
        %10903 = vmatprep.mubr.bf16.mxu0 %v1739
        %10904 = vmatmul.mubr.bf16.gmra.mrb[0].mxu0 %v1738
        %v10905 = vpop.f32.mrb[0].mxu0
        %v10906 = vadd.f32 %v10793, %v10905
        %v10907 = vpop.f32.mrb[0].mxu0
        %v10908 = vadd.f32 %v10795, %v10907
        %v10909 = vpop.f32.mrb[0].mxu0
        %v10910 = vadd.f32 %v10797, %v10909
        %v10911 = vpop.f32.mrb[0].mxu0
        %v10912 = vadd.f32 %v10799, %v10911
        %10913 = vmatprep.mubr.bf16.mxu0 %v1745
        %10914 = vmatmul.mubr.bf16.gmra.mrb[0].mxu0 %v1744
        %v10915 = vpop.f32.mrb[0].mxu0
        %v10916 = vadd.f32 %v10803, %v10915
        %v10917 = vpop.f32.mrb[0].mxu0
        %v10918 = vadd.f32 %v10805, %v10917
        %v10919 = vpop.f32.mrb[0].mxu0
        %v10920 = vadd.f32 %v10807, %v10919
        %v10921 = vpop.f32.mrb[0].mxu0
        %v10922 = vadd.f32 %v10809, %v10921
        %10923 = vmatprep.mubr.bf16.mxu0 %v1751
        %10924 = vmatmul.mubr.bf16.gmra.mrb[0].mxu0 %v1750
        %v10925 = vpop.f32.mrb[0].mxu0
        %v10926 = vadd.f32 %v10813, %v10925
        %v10927 = vpop.f32.mrb[0].mxu0
        %v10928 = vadd.f32 %v10815, %v10927
        %v10929 = vpop.f32.mrb[0].mxu0
        %v10930 = vadd.f32 %v10817, %v10929
        %v10931 = vpop.f32.mrb[0].mxu0
        %v10932 = vadd.f32 %v10819, %v10931
        %10933 = vmatprep.mubr.bf16.mxu0 %v1757
        %10934 = vmatmul.mubr.bf16.gmra.mrb[0].mxu0 %v1756
        %v10935 = vpop.f32.mrb[0].mxu0
        %v10936 = vadd.f32 %v10823, %v10935
        %v10937 = vpop.f32.mrb[0].mxu0
        %v10938 = vadd.f32 %v10825, %v10937
        %v10939 = vpop.f32.mrb[0].mxu0
        %v10940 = vadd.f32 %v10827, %v10939
        %v10941 = vpop.f32.mrb[0].mxu0
        %v10942 = vadd.f32 %v10829, %v10941
        %10943 = vmatprep.mubr.bf16.mxu0 %v1763
        %10944 = vmatmul.mubr.bf16.gmra.mrb[0].mxu0 %v1762
        %v10945 = vpop.f32.mrb[0].mxu0
        %v10946 = vadd.f32 %v10833, %v10945
        %v10947 = vpop.f32.mrb[0].mxu0
        %v10948 = vadd.f32 %v10835, %v10947
        %v10949 = vpop.f32.mrb[0].mxu0
        %v10950 = vadd.f32 %v10837, %v10949
        %v10951 = vpop.f32.mrb[0].mxu0
        %v10952 = vadd.f32 %v10839, %v10951
        %10953 = vmatprep.mubr.bf16.mxu0 %v1769
        %10954 = vmatmul.mubr.bf16.gmra.mrb[0].mxu0 %v1768
        %v10955 = vpop.f32.mrb[0].mxu0
        %v10956 = vadd.f32 %v10843, %v10955
        %v10957 = vpop.f32.mrb[0].mxu0
        %v10958 = vadd.f32 %v10845, %v10957
        %v10959 = vpop.f32.mrb[0].mxu0
        %v10960 = vadd.f32 %v10847, %v10959
        %v10961 = vpop.f32.mrb[0].mxu0
        %v10962 = vadd.f32 %v10849, %v10961
        %10963 = vmatprep.mubr.bf16.mxu0 %v1775
        %10964 = vmatmul.mubr.bf16.gmra.mrb[0].mxu0 %v1774
        %v10965 = vpop.f32.mrb[0].mxu0
        %v10966 = vadd.f32 %v10853, %v10965
        %v10967 = vpop.f32.mrb[0].mxu0
        %v10968 = vadd.f32 %v10855, %v10967
        %v10969 = vpop.f32.mrb[0].mxu0
        %v10970 = vadd.f32 %v10857, %v10969
        %v10971 = vpop.f32.mrb[0].mxu0
        %v10972 = vadd.f32 %v10859, %v10971
        %10973 = vdwg.mxu0
        %10974 = vmatprep.subr.bf16.mxu0 %v5301
        %10975 = vmatpush1.bf16.msra.mxu0 %v5300
        %10976 = vmatprep.subr.bf16.mxu0 %v5325
        %10977 = vmatpush1.bf16.msra.mxu0 %v5324
        %10978 = vmatprep.subr.bf16.mxu0 %v5349
        %10979 = vmatpush1.bf16.msra.mxu0 %v5348
        %10980 = vmatprep.subr.bf16.mxu0 %v5373
        %10981 = vmatpush1.bf16.msra.mxu0 %v5372
        %10982 = vmatprep.subr.bf16.mxu0 %v5397
        %10983 = vmatpush1.bf16.msra.mxu0 %v5396
        %10984 = vmatprep.subr.bf16.mxu0 %v5421
        %10985 = vmatpush1.bf16.msra.mxu0 %v5420
        %10986 = vmatprep.subr.bf16.mxu0 %v5445
        %10987 = vmatpush1.bf16.msra.mxu0 %v5444
        %10988 = vmatprep.subr.bf16.mxu0 %v5469
        %10989 = vmatpush1.bf16.msra.mxu0 %v5468
        %10990 = vmatprep.subr.bf16.mxu0 %v5493
        %10991 = vmatpush1.bf16.msra.mxu0 %v5492
        %10992 = vmatprep.subr.bf16.mxu0 %v5517
        %10993 = vmatpush1.bf16.msra.mxu0 %v5516
        %10994 = vmatprep.subr.bf16.mxu0 %v5541
        %10995 = vmatpush1.bf16.msra.mxu0 %v5540
        %10996 = vmatprep.subr.bf16.mxu0 %v5565
        %10997 = vmatpush1.bf16.msra.mxu0 %v5564
        %10998 = vmatprep.subr.bf16.mxu0 %v5589
        %10999 = vmatpush1.bf16.msra.mxu0 %v5588
        %11000 = vmatprep.subr.bf16.mxu0 %v5613
        %11001 = vmatpush1.bf16.msra.mxu0 %v5612
        %11002 = vmatprep.subr.bf16.mxu0 %v5637
        %11003 = vmatpush1.bf16.msra.mxu0 %v5636
        %11004 = vmatprep.subr.bf16.mxu0 %v5661
        %11005 = vmatpush1.bf16.msra.mxu0 %v5660
        %11006 = vmatprep.mubr.bf16.mxu0 %v1729
        %11007 = vmatmul.mubr.bf16.gmra.mrb[0].mxu0 %v1728
        %v11008 = vpop.f32.mrb[0].mxu0
        %v11009 = vadd.f32 %v1547, %v11008
        %v11010 = vpop.f32.mrb[0].mxu0
        %v11011 = vadd.f32 %v1551, %v11010
        %v11012 = vpop.f32.mrb[0].mxu0
        %v11013 = vadd.f32 %v1547, %v11012
        %v11014 = vpop.f32.mrb[0].mxu0
        %v11015 = vadd.f32 %v1551, %v11014
        %11016 = vmatprep.mubr.bf16.mxu0 %v1735
        %11017 = vmatmul.mubr.bf16.gmra.mrb[0].mxu0 %v1734
        %v11018 = vpop.f32.mrb[0].mxu0
        %v11019 = vadd.f32 %v1547, %v11018
        %v11020 = vpop.f32.mrb[0].mxu0
        %v11021 = vadd.f32 %v1551, %v11020
        %v11022 = vpop.f32.mrb[0].mxu0
        %v11023 = vadd.f32 %v1547, %v11022
        %v11024 = vpop.f32.mrb[0].mxu0
        %v11025 = vadd.f32 %v1551, %v11024
        %11026 = vmatprep.mubr.bf16.mxu0 %v1741
        %11027 = vmatmul.mubr.bf16.gmra.mrb[0].mxu0 %v1740
        %v11028 = vpop.f32.mrb[0].mxu0
        %v11029 = vadd.f32 %v1547, %v11028
        %v11030 = vpop.f32.mrb[0].mxu0
        %v11031 = vadd.f32 %v1551, %v11030
        %v11032 = vpop.f32.mrb[0].mxu0
        %v11033 = vadd.f32 %v1547, %v11032
        %v11034 = vpop.f32.mrb[0].mxu0
        %v11035 = vadd.f32 %v1551, %v11034
        %11036 = vmatprep.mubr.bf16.mxu0 %v1747
        %11037 = vmatmul.mubr.bf16.gmra.mrb[0].mxu0 %v1746
        %v11038 = vpop.f32.mrb[0].mxu0
        %v11039 = vadd.f32 %v1547, %v11038
        %v11040 = vpop.f32.mrb[0].mxu0
        %v11041 = vadd.f32 %v1551, %v11040
        %v11042 = vpop.f32.mrb[0].mxu0
        %v11043 = vadd.f32 %v1547, %v11042
        %v11044 = vpop.f32.mrb[0].mxu0
        %v11045 = vadd.f32 %v1551, %v11044
        %11046 = vmatprep.mubr.bf16.mxu0 %v1753
        %11047 = vmatmul.mubr.bf16.gmra.mrb[0].mxu0 %v1752
        %v11048 = vpop.f32.mrb[0].mxu0
        %v11049 = vadd.f32 %v1547, %v11048
        %v11050 = vpop.f32.mrb[0].mxu0
        %v11051 = vadd.f32 %v1551, %v11050
        %v11052 = vpop.f32.mrb[0].mxu0
        %v11053 = vadd.f32 %v1547, %v11052
        %v11054 = vpop.f32.mrb[0].mxu0
        %v11055 = vadd.f32 %v1551, %v11054
        %11056 = vmatprep.mubr.bf16.mxu0 %v1759
        %11057 = vmatmul.mubr.bf16.gmra.mrb[0].mxu0 %v1758
        %v11058 = vpop.f32.mrb[0].mxu0
        %v11059 = vadd.f32 %v1547, %v11058
        %v11060 = vpop.f32.mrb[0].mxu0
        %v11061 = vadd.f32 %v1551, %v11060
        %v11062 = vpop.f32.mrb[0].mxu0
        %v11063 = vadd.f32 %v1547, %v11062
        %v11064 = vpop.f32.mrb[0].mxu0
        %v11065 = vadd.f32 %v1551, %v11064
        %11066 = vmatprep.mubr.bf16.mxu0 %v1765
        %11067 = vmatmul.mubr.bf16.gmra.mrb[0].mxu0 %v1764
        %v11068 = vpop.f32.mrb[0].mxu0
        %v11069 = vadd.f32 %v1547, %v11068
        %v11070 = vpop.f32.mrb[0].mxu0
        %v11071 = vadd.f32 %v1551, %v11070
        %v11072 = vpop.f32.mrb[0].mxu0
        %v11073 = vadd.f32 %v1547, %v11072
        %v11074 = vpop.f32.mrb[0].mxu0
        %v11075 = vadd.f32 %v1551, %v11074
        %11076 = vmatprep.mubr.bf16.mxu0 %v1771
        %11077 = vmatmul.mubr.bf16.gmra.mrb[0].mxu0 %v1770
        %v11078 = vpop.f32.mrb[0].mxu0
        %v11079 = vadd.f32 %v1547, %v11078
        %v11080 = vpop.f32.mrb[0].mxu0
        %v11081 = vadd.f32 %v1551, %v11080
        %v11082 = vpop.f32.mrb[0].mxu0
        %v11083 = vadd.f32 %v1547, %v11082
        %v11084 = vpop.f32.mrb[0].mxu0
        %v11085 = vadd.f32 %v1551, %v11084
        %11086 = vdwg.mxu0
        %11087 = vmatprep.subr.bf16.mxu0 %v5685
        %11088 = vmatpush1.bf16.msra.mxu0 %v5684
        %11089 = vmatprep.subr.bf16.mxu0 %v5709
        %11090 = vmatpush1.bf16.msra.mxu0 %v5708
        %11091 = vmatprep.subr.bf16.mxu0 %v5733
        %11092 = vmatpush1.bf16.msra.mxu0 %v5732
        %11093 = vmatprep.subr.bf16.mxu0 %v5757
        %11094 = vmatpush1.bf16.msra.mxu0 %v5756
        %11095 = vmatprep.subr.bf16.mxu0 %v5781
        %11096 = vmatpush1.bf16.msra.mxu0 %v5780
        %11097 = vmatprep.subr.bf16.mxu0 %v5805
        %11098 = vmatpush1.bf16.msra.mxu0 %v5804
        %11099 = vmatprep.subr.bf16.mxu0 %v5829
        %11100 = vmatpush1.bf16.msra.mxu0 %v5828
        %11101 = vmatprep.subr.bf16.mxu0 %v5853
        %11102 = vmatpush1.bf16.msra.mxu0 %v5852
        %11103 = vmatprep.subr.bf16.mxu0 %v5877
        %11104 = vmatpush1.bf16.msra.mxu0 %v5876
        %11105 = vmatprep.subr.bf16.mxu0 %v5901
        %11106 = vmatpush1.bf16.msra.mxu0 %v5900
        %11107 = vmatprep.subr.bf16.mxu0 %v5925
        %11108 = vmatpush1.bf16.msra.mxu0 %v5924
        %11109 = vmatprep.subr.bf16.mxu0 %v5949
        %11110 = vmatpush1.bf16.msra.mxu0 %v5948
        %11111 = vmatprep.subr.bf16.mxu0 %v5973
        %11112 = vmatpush1.bf16.msra.mxu0 %v5972
        %11113 = vmatprep.subr.bf16.mxu0 %v5997
        %11114 = vmatpush1.bf16.msra.mxu0 %v5996
        %11115 = vmatprep.subr.bf16.mxu0 %v6021
        %11116 = vmatpush1.bf16.msra.mxu0 %v6020
        %11117 = vmatprep.subr.bf16.mxu0 %v6045
        %11118 = vmatpush1.bf16.msra.mxu0 %v6044
        %11119 = vmatprep.mubr.bf16.mxu0 %v1731
        %11120 = vmatmul.mubr.bf16.gmra.mrb[0].mxu0 %v1730
        %v11121 = vpop.f32.mrb[0].mxu0
        %v11122 = vadd.f32 %v11009, %v11121
        %v11123 = vpop.f32.mrb[0].mxu0
        %v11124 = vadd.f32 %v11011, %v11123
        %v11125 = vpop.f32.mrb[0].mxu0
        %v11126 = vadd.f32 %v11013, %v11125
        %v11127 = vpop.f32.mrb[0].mxu0
        %v11128 = vadd.f32 %v11015, %v11127
        %11129 = vmatprep.mubr.bf16.mxu0 %v1737
        %11130 = vmatmul.mubr.bf16.gmra.mrb[0].mxu0 %v1736
        %v11131 = vpop.f32.mrb[0].mxu0
        %v11132 = vadd.f32 %v11019, %v11131
        %v11133 = vpop.f32.mrb[0].mxu0
        %v11134 = vadd.f32 %v11021, %v11133
        %v11135 = vpop.f32.mrb[0].mxu0
        %v11136 = vadd.f32 %v11023, %v11135
        %v11137 = vpop.f32.mrb[0].mxu0
        %v11138 = vadd.f32 %v11025, %v11137
        %11139 = vmatprep.mubr.bf16.mxu0 %v1743
        %11140 = vmatmul.mubr.bf16.gmra.mrb[0].mxu0 %v1742
        %v11141 = vpop.f32.mrb[0].mxu0
        %v11142 = vadd.f32 %v11029, %v11141
        %v11143 = vpop.f32.mrb[0].mxu0
        %v11144 = vadd.f32 %v11031, %v11143
        %v11145 = vpop.f32.mrb[0].mxu0
        %v11146 = vadd.f32 %v11033, %v11145
        %v11147 = vpop.f32.mrb[0].mxu0
        %v11148 = vadd.f32 %v11035, %v11147
        %11149 = vmatprep.mubr.bf16.mxu0 %v1749
        %11150 = vmatmul.mubr.bf16.gmra.mrb[0].mxu0 %v1748
        %v11151 = vpop.f32.mrb[0].mxu0
        %v11152 = vadd.f32 %v11039, %v11151
        %v11153 = vpop.f32.mrb[0].mxu0
        %v11154 = vadd.f32 %v11041, %v11153
        %v11155 = vpop.f32.mrb[0].mxu0
        %v11156 = vadd.f32 %v11043, %v11155
        %v11157 = vpop.f32.mrb[0].mxu0
        %v11158 = vadd.f32 %v11045, %v11157
        %11159 = vmatprep.mubr.bf16.mxu0 %v1755
        %11160 = vmatmul.mubr.bf16.gmra.mrb[0].mxu0 %v1754
        %v11161 = vpop.f32.mrb[0].mxu0
        %v11162 = vadd.f32 %v11049, %v11161
        %v11163 = vpop.f32.mrb[0].mxu0
        %v11164 = vadd.f32 %v11051, %v11163
        %v11165 = vpop.f32.mrb[0].mxu0
        %v11166 = vadd.f32 %v11053, %v11165
        %v11167 = vpop.f32.mrb[0].mxu0
        %v11168 = vadd.f32 %v11055, %v11167
        %11169 = vmatprep.mubr.bf16.mxu0 %v1761
        %11170 = vmatmul.mubr.bf16.gmra.mrb[0].mxu0 %v1760
        %v11171 = vpop.f32.mrb[0].mxu0
        %v11172 = vadd.f32 %v11059, %v11171
        %v11173 = vpop.f32.mrb[0].mxu0
        %v11174 = vadd.f32 %v11061, %v11173
        %v11175 = vpop.f32.mrb[0].mxu0
        %v11176 = vadd.f32 %v11063, %v11175
        %v11177 = vpop.f32.mrb[0].mxu0
        %v11178 = vadd.f32 %v11065, %v11177
        %11179 = vmatprep.mubr.bf16.mxu0 %v1767
        %11180 = vmatmul.mubr.bf16.gmra.mrb[0].mxu0 %v1766
        %v11181 = vpop.f32.mrb[0].mxu0
        %v11182 = vadd.f32 %v11069, %v11181
        %v11183 = vpop.f32.mrb[0].mxu0
        %v11184 = vadd.f32 %v11071, %v11183
        %v11185 = vpop.f32.mrb[0].mxu0
        %v11186 = vadd.f32 %v11073, %v11185
        %v11187 = vpop.f32.mrb[0].mxu0
        %v11188 = vadd.f32 %v11075, %v11187
        %11189 = vmatprep.mubr.bf16.mxu0 %v1773
        %11190 = vmatmul.mubr.bf16.gmra.mrb[0].mxu0 %v1772
        %v11191 = vpop.f32.mrb[0].mxu0
        %v11192 = vadd.f32 %v11079, %v11191
        %v11193 = vpop.f32.mrb[0].mxu0
        %v11194 = vadd.f32 %v11081, %v11193
        %v11195 = vpop.f32.mrb[0].mxu0
        %v11196 = vadd.f32 %v11083, %v11195
        %v11197 = vpop.f32.mrb[0].mxu0
        %v11198 = vadd.f32 %v11085, %v11197
        %11199 = vdwg.mxu0
        %11200 = vmatprep.subr.bf16.mxu0 %v6069
        %11201 = vmatpush1.bf16.msra.mxu0 %v6068
        %11202 = vmatprep.subr.bf16.mxu0 %v6093
        %11203 = vmatpush1.bf16.msra.mxu0 %v6092
        %11204 = vmatprep.subr.bf16.mxu0 %v6117
        %11205 = vmatpush1.bf16.msra.mxu0 %v6116
        %11206 = vmatprep.subr.bf16.mxu0 %v6141
        %11207 = vmatpush1.bf16.msra.mxu0 %v6140
        %11208 = vmatprep.subr.bf16.mxu0 %v6165
        %11209 = vmatpush1.bf16.msra.mxu0 %v6164
        %11210 = vmatprep.subr.bf16.mxu0 %v6189
        %11211 = vmatpush1.bf16.msra.mxu0 %v6188
        %11212 = vmatprep.subr.bf16.mxu0 %v6213
        %11213 = vmatpush1.bf16.msra.mxu0 %v6212
        %11214 = vmatprep.subr.bf16.mxu0 %v6237
        %11215 = vmatpush1.bf16.msra.mxu0 %v6236
        %11216 = vmatprep.subr.bf16.mxu0 %v6261
        %11217 = vmatpush1.bf16.msra.mxu0 %v6260
        %11218 = vmatprep.subr.bf16.mxu0 %v6285
        %11219 = vmatpush1.bf16.msra.mxu0 %v6284
        %11220 = vmatprep.subr.bf16.mxu0 %v6309
        %11221 = vmatpush1.bf16.msra.mxu0 %v6308
        %11222 = vmatprep.subr.bf16.mxu0 %v6333
        %11223 = vmatpush1.bf16.msra.mxu0 %v6332
        %11224 = vmatprep.subr.bf16.mxu0 %v6357
        %11225 = vmatpush1.bf16.msra.mxu0 %v6356
        %11226 = vmatprep.subr.bf16.mxu0 %v6381
        %11227 = vmatpush1.bf16.msra.mxu0 %v6380
        %11228 = vmatprep.subr.bf16.mxu0 %v6405
        %11229 = vmatpush1.bf16.msra.mxu0 %v6404
        %11230 = vmatprep.subr.bf16.mxu0 %v6429
        %11231 = vmatpush1.bf16.msra.mxu0 %v6428
        %11232 = vmatprep.mubr.bf16.mxu0 %v1733
        %11233 = vmatmul.mubr.bf16.gmra.mrb[0].mxu0 %v1732
        %v11234 = vpop.f32.mrb[0].mxu0
        %v11235 = vadd.f32 %v11122, %v11234
        %v11236 = vpop.f32.mrb[0].mxu0
        %v11237 = vadd.f32 %v11124, %v11236
        %v11238 = vpop.f32.mrb[0].mxu0
        %v11239 = vadd.f32 %v11126, %v11238
        %v11240 = vpop.f32.mrb[0].mxu0
        %v11241 = vadd.f32 %v11128, %v11240
        %11242 = vmatprep.mubr.bf16.mxu0 %v1739
        %11243 = vmatmul.mubr.bf16.gmra.mrb[0].mxu0 %v1738
        %v11244 = vpop.f32.mrb[0].mxu0
        %v11245 = vadd.f32 %v11132, %v11244
        %v11246 = vpop.f32.mrb[0].mxu0
        %v11247 = vadd.f32 %v11134, %v11246
        %v11248 = vpop.f32.mrb[0].mxu0
        %v11249 = vadd.f32 %v11136, %v11248
        %v11250 = vpop.f32.mrb[0].mxu0
        %v11251 = vadd.f32 %v11138, %v11250
        %11252 = vmatprep.mubr.bf16.mxu0 %v1745
        %11253 = vmatmul.mubr.bf16.gmra.mrb[0].mxu0 %v1744
        %v11254 = vpop.f32.mrb[0].mxu0
        %v11255 = vadd.f32 %v11142, %v11254
        %v11256 = vpop.f32.mrb[0].mxu0
        %v11257 = vadd.f32 %v11144, %v11256
        %v11258 = vpop.f32.mrb[0].mxu0
        %v11259 = vadd.f32 %v11146, %v11258
        %v11260 = vpop.f32.mrb[0].mxu0
        %v11261 = vadd.f32 %v11148, %v11260
        %11262 = vmatprep.mubr.bf16.mxu0 %v1751
        %11263 = vmatmul.mubr.bf16.gmra.mrb[0].mxu0 %v1750
        %v11264 = vpop.f32.mrb[0].mxu0
        %v11265 = vadd.f32 %v11152, %v11264
        %v11266 = vpop.f32.mrb[0].mxu0
        %v11267 = vadd.f32 %v11154, %v11266
        %v11268 = vpop.f32.mrb[0].mxu0
        %v11269 = vadd.f32 %v11156, %v11268
        %v11270 = vpop.f32.mrb[0].mxu0
        %v11271 = vadd.f32 %v11158, %v11270
        %11272 = vmatprep.mubr.bf16.mxu0 %v1757
        %11273 = vmatmul.mubr.bf16.gmra.mrb[0].mxu0 %v1756
        %v11274 = vpop.f32.mrb[0].mxu0
        %v11275 = vadd.f32 %v11162, %v11274
        %v11276 = vpop.f32.mrb[0].mxu0
        %v11277 = vadd.f32 %v11164, %v11276
        %v11278 = vpop.f32.mrb[0].mxu0
        %v11279 = vadd.f32 %v11166, %v11278
        %v11280 = vpop.f32.mrb[0].mxu0
        %v11281 = vadd.f32 %v11168, %v11280
        %11282 = vmatprep.mubr.bf16.mxu0 %v1763
        %11283 = vmatmul.mubr.bf16.gmra.mrb[0].mxu0 %v1762
        %v11284 = vpop.f32.mrb[0].mxu0
        %v11285 = vadd.f32 %v11172, %v11284
        %v11286 = vpop.f32.mrb[0].mxu0
        %v11287 = vadd.f32 %v11174, %v11286
        %v11288 = vpop.f32.mrb[0].mxu0
        %v11289 = vadd.f32 %v11176, %v11288
        %v11290 = vpop.f32.mrb[0].mxu0
        %v11291 = vadd.f32 %v11178, %v11290
        %11292 = vmatprep.mubr.bf16.mxu0 %v1769
        %11293 = vmatmul.mubr.bf16.gmra.mrb[0].mxu0 %v1768
        %v11294 = vpop.f32.mrb[0].mxu0
        %v11295 = vadd.f32 %v11182, %v11294
        %v11296 = vpop.f32.mrb[0].mxu0
        %v11297 = vadd.f32 %v11184, %v11296
        %v11298 = vpop.f32.mrb[0].mxu0
        %v11299 = vadd.f32 %v11186, %v11298
        %v11300 = vpop.f32.mrb[0].mxu0
        %v11301 = vadd.f32 %v11188, %v11300
        %11302 = vmatprep.mubr.bf16.mxu0 %v1775
        %11303 = vmatmul.mubr.bf16.gmra.mrb[0].mxu0 %v1774
        %v11304 = vpop.f32.mrb[0].mxu0
        %v11305 = vadd.f32 %v11192, %v11304
        %v11306 = vpop.f32.mrb[0].mxu0
        %v11307 = vadd.f32 %v11194, %v11306
        %v11308 = vpop.f32.mrb[0].mxu0
        %v11309 = vadd.f32 %v11196, %v11308
        %v11310 = vpop.f32.mrb[0].mxu0
        %v11311 = vadd.f32 %v11198, %v11310
        %11312 = vdwg.mxu0
        %11313 = vmatprep.subr.bf16.mxu0 %v5303
        %11314 = vmatpush1.bf16.msra.mxu0 %v5302
        %11315 = vmatprep.subr.bf16.mxu0 %v5327
        %11316 = vmatpush1.bf16.msra.mxu0 %v5326
        %11317 = vmatprep.subr.bf16.mxu0 %v5351
        %11318 = vmatpush1.bf16.msra.mxu0 %v5350
        %11319 = vmatprep.subr.bf16.mxu0 %v5375
        %11320 = vmatpush1.bf16.msra.mxu0 %v5374
        %11321 = vmatprep.subr.bf16.mxu0 %v5399
        %11322 = vmatpush1.bf16.msra.mxu0 %v5398
        %11323 = vmatprep.subr.bf16.mxu0 %v5423
        %11324 = vmatpush1.bf16.msra.mxu0 %v5422
        %11325 = vmatprep.subr.bf16.mxu0 %v5447
        %11326 = vmatpush1.bf16.msra.mxu0 %v5446
        %11327 = vmatprep.subr.bf16.mxu0 %v5471
        %11328 = vmatpush1.bf16.msra.mxu0 %v5470
        %11329 = vmatprep.subr.bf16.mxu0 %v5495
        %11330 = vmatpush1.bf16.msra.mxu0 %v5494
        %11331 = vmatprep.subr.bf16.mxu0 %v5519
        %11332 = vmatpush1.bf16.msra.mxu0 %v5518
        %11333 = vmatprep.subr.bf16.mxu0 %v5543
        %11334 = vmatpush1.bf16.msra.mxu0 %v5542
        %11335 = vmatprep.subr.bf16.mxu0 %v5567
        %11336 = vmatpush1.bf16.msra.mxu0 %v5566
        %11337 = vmatprep.subr.bf16.mxu0 %v5591
        %11338 = vmatpush1.bf16.msra.mxu0 %v5590
        %11339 = vmatprep.subr.bf16.mxu0 %v5615
        %11340 = vmatpush1.bf16.msra.mxu0 %v5614
        %11341 = vmatprep.subr.bf16.mxu0 %v5639
        %11342 = vmatpush1.bf16.msra.mxu0 %v5638
        %11343 = vmatprep.subr.bf16.mxu0 %v5663
        %11344 = vmatpush1.bf16.msra.mxu0 %v5662
        %11345 = vmatprep.mubr.bf16.mxu0 %v1729
        %11346 = vmatmul.mubr.bf16.gmra.mrb[0].mxu0 %v1728
        %v11347 = vpop.f32.mrb[0].mxu0
        %v11348 = vadd.f32 %v1555, %v11347
        %v11349 = vpop.f32.mrb[0].mxu0
        %v11350 = vadd.f32 %v1559, %v11349
        %v11351 = vpop.f32.mrb[0].mxu0
        %v11352 = vadd.f32 %v1555, %v11351
        %v11353 = vpop.f32.mrb[0].mxu0
        %v11354 = vadd.f32 %v1559, %v11353
        %11355 = vmatprep.mubr.bf16.mxu0 %v1735
        %11356 = vmatmul.mubr.bf16.gmra.mrb[0].mxu0 %v1734
        %v11357 = vpop.f32.mrb[0].mxu0
        %v11358 = vadd.f32 %v1555, %v11357
        %v11359 = vpop.f32.mrb[0].mxu0
        %v11360 = vadd.f32 %v1559, %v11359
        %v11361 = vpop.f32.mrb[0].mxu0
        %v11362 = vadd.f32 %v1555, %v11361
        %v11363 = vpop.f32.mrb[0].mxu0
        %v11364 = vadd.f32 %v1559, %v11363
        %11365 = vmatprep.mubr.bf16.mxu0 %v1741
        %11366 = vmatmul.mubr.bf16.gmra.mrb[0].mxu0 %v1740
        %v11367 = vpop.f32.mrb[0].mxu0
        %v11368 = vadd.f32 %v1555, %v11367
        %v11369 = vpop.f32.mrb[0].mxu0
        %v11370 = vadd.f32 %v1559, %v11369
        %v11371 = vpop.f32.mrb[0].mxu0
        %v11372 = vadd.f32 %v1555, %v11371
        %v11373 = vpop.f32.mrb[0].mxu0
        %v11374 = vadd.f32 %v1559, %v11373
        %11375 = vmatprep.mubr.bf16.mxu0 %v1747
        %11376 = vmatmul.mubr.bf16.gmra.mrb[0].mxu0 %v1746
        %v11377 = vpop.f32.mrb[0].mxu0
        %v11378 = vadd.f32 %v1555, %v11377
        %v11379 = vpop.f32.mrb[0].mxu0
        %v11380 = vadd.f32 %v1559, %v11379
        %v11381 = vpop.f32.mrb[0].mxu0
        %v11382 = vadd.f32 %v1555, %v11381
        %v11383 = vpop.f32.mrb[0].mxu0
        %v11384 = vadd.f32 %v1559, %v11383
        %11385 = vmatprep.mubr.bf16.mxu0 %v1753
        %11386 = vmatmul.mubr.bf16.gmra.mrb[0].mxu0 %v1752
        %v11387 = vpop.f32.mrb[0].mxu0
        %v11388 = vadd.f32 %v1555, %v11387
        %v11389 = vpop.f32.mrb[0].mxu0
        %v11390 = vadd.f32 %v1559, %v11389
        %v11391 = vpop.f32.mrb[0].mxu0
        %v11392 = vadd.f32 %v1555, %v11391
        %v11393 = vpop.f32.mrb[0].mxu0
        %v11394 = vadd.f32 %v1559, %v11393
        %11395 = vmatprep.mubr.bf16.mxu0 %v1759
        %11396 = vmatmul.mubr.bf16.gmra.mrb[0].mxu0 %v1758
        %v11397 = vpop.f32.mrb[0].mxu0
        %v11398 = vadd.f32 %v1555, %v11397
        %v11399 = vpop.f32.mrb[0].mxu0
        %v11400 = vadd.f32 %v1559, %v11399
        %v11401 = vpop.f32.mrb[0].mxu0
        %v11402 = vadd.f32 %v1555, %v11401
        %v11403 = vpop.f32.mrb[0].mxu0
        %v11404 = vadd.f32 %v1559, %v11403
        %11405 = vmatprep.mubr.bf16.mxu0 %v1765
        %11406 = vmatmul.mubr.bf16.gmra.mrb[0].mxu0 %v1764
        %v11407 = vpop.f32.mrb[0].mxu0
        %v11408 = vadd.f32 %v1555, %v11407
        %v11409 = vpop.f32.mrb[0].mxu0
        %v11410 = vadd.f32 %v1559, %v11409
        %v11411 = vpop.f32.mrb[0].mxu0
        %v11412 = vadd.f32 %v1555, %v11411
        %v11413 = vpop.f32.mrb[0].mxu0
        %v11414 = vadd.f32 %v1559, %v11413
        %11415 = vmatprep.mubr.bf16.mxu0 %v1771
        %11416 = vmatmul.mubr.bf16.gmra.mrb[0].mxu0 %v1770
        %v11417 = vpop.f32.mrb[0].mxu0
        %v11418 = vadd.f32 %v1555, %v11417
        %v11419 = vpop.f32.mrb[0].mxu0
        %v11420 = vadd.f32 %v1559, %v11419
        %v11421 = vpop.f32.mrb[0].mxu0
        %v11422 = vadd.f32 %v1555, %v11421
        %v11423 = vpop.f32.mrb[0].mxu0
        %v11424 = vadd.f32 %v1559, %v11423
        %11425 = vdwg.mxu0
        %11426 = vmatprep.subr.bf16.mxu0 %v5687
        %11427 = vmatpush1.bf16.msra.mxu0 %v5686
        %11428 = vmatprep.subr.bf16.mxu0 %v5711
        %11429 = vmatpush1.bf16.msra.mxu0 %v5710
        %11430 = vmatprep.subr.bf16.mxu0 %v5735
        %11431 = vmatpush1.bf16.msra.mxu0 %v5734
        %11432 = vmatprep.subr.bf16.mxu0 %v5759
        %11433 = vmatpush1.bf16.msra.mxu0 %v5758
        %11434 = vmatprep.subr.bf16.mxu0 %v5783
        %11435 = vmatpush1.bf16.msra.mxu0 %v5782
        %11436 = vmatprep.subr.bf16.mxu0 %v5807
        %11437 = vmatpush1.bf16.msra.mxu0 %v5806
        %11438 = vmatprep.subr.bf16.mxu0 %v5831
        %11439 = vmatpush1.bf16.msra.mxu0 %v5830
        %11440 = vmatprep.subr.bf16.mxu0 %v5855
        %11441 = vmatpush1.bf16.msra.mxu0 %v5854
        %11442 = vmatprep.subr.bf16.mxu0 %v5879
        %11443 = vmatpush1.bf16.msra.mxu0 %v5878
        %11444 = vmatprep.subr.bf16.mxu0 %v5903
        %11445 = vmatpush1.bf16.msra.mxu0 %v5902
        %11446 = vmatprep.subr.bf16.mxu0 %v5927
        %11447 = vmatpush1.bf16.msra.mxu0 %v5926
        %11448 = vmatprep.subr.bf16.mxu0 %v5951
        %11449 = vmatpush1.bf16.msra.mxu0 %v5950
        %11450 = vmatprep.subr.bf16.mxu0 %v5975
        %11451 = vmatpush1.bf16.msra.mxu0 %v5974
        %11452 = vmatprep.subr.bf16.mxu0 %v5999
        %11453 = vmatpush1.bf16.msra.mxu0 %v5998
        %11454 = vmatprep.subr.bf16.mxu0 %v6023
        %11455 = vmatpush1.bf16.msra.mxu0 %v6022
        %11456 = vmatprep.subr.bf16.mxu0 %v6047
        %11457 = vmatpush1.bf16.msra.mxu0 %v6046
        %11458 = vmatprep.mubr.bf16.mxu0 %v1731
        %11459 = vmatmul.mubr.bf16.gmra.mrb[0].mxu0 %v1730
        %v11460 = vpop.f32.mrb[0].mxu0
        %v11461 = vadd.f32 %v11348, %v11460
        %v11462 = vpop.f32.mrb[0].mxu0
        %v11463 = vadd.f32 %v11350, %v11462
        %v11464 = vpop.f32.mrb[0].mxu0
        %v11465 = vadd.f32 %v11352, %v11464
        %v11466 = vpop.f32.mrb[0].mxu0
        %v11467 = vadd.f32 %v11354, %v11466
        %11468 = vmatprep.mubr.bf16.mxu0 %v1737
        %11469 = vmatmul.mubr.bf16.gmra.mrb[0].mxu0 %v1736
        %v11470 = vpop.f32.mrb[0].mxu0
        %v11471 = vadd.f32 %v11358, %v11470
        %v11472 = vpop.f32.mrb[0].mxu0
        %v11473 = vadd.f32 %v11360, %v11472
        %v11474 = vpop.f32.mrb[0].mxu0
        %v11475 = vadd.f32 %v11362, %v11474
        %v11476 = vpop.f32.mrb[0].mxu0
        %v11477 = vadd.f32 %v11364, %v11476
        %11478 = vmatprep.mubr.bf16.mxu0 %v1743
        %11479 = vmatmul.mubr.bf16.gmra.mrb[0].mxu0 %v1742
        %v11480 = vpop.f32.mrb[0].mxu0
        %v11481 = vadd.f32 %v11368, %v11480
        %v11482 = vpop.f32.mrb[0].mxu0
        %v11483 = vadd.f32 %v11370, %v11482
        %v11484 = vpop.f32.mrb[0].mxu0
        %v11485 = vadd.f32 %v11372, %v11484
        %v11486 = vpop.f32.mrb[0].mxu0
        %v11487 = vadd.f32 %v11374, %v11486
        %11488 = vmatprep.mubr.bf16.mxu0 %v1749
        %11489 = vmatmul.mubr.bf16.gmra.mrb[0].mxu0 %v1748
        %v11490 = vpop.f32.mrb[0].mxu0
        %v11491 = vadd.f32 %v11378, %v11490
        %v11492 = vpop.f32.mrb[0].mxu0
        %v11493 = vadd.f32 %v11380, %v11492
        %v11494 = vpop.f32.mrb[0].mxu0
        %v11495 = vadd.f32 %v11382, %v11494
        %v11496 = vpop.f32.mrb[0].mxu0
        %v11497 = vadd.f32 %v11384, %v11496
        %11498 = vmatprep.mubr.bf16.mxu0 %v1755
        %11499 = vmatmul.mubr.bf16.gmra.mrb[0].mxu0 %v1754
        %v11500 = vpop.f32.mrb[0].mxu0
        %v11501 = vadd.f32 %v11388, %v11500
        %v11502 = vpop.f32.mrb[0].mxu0
        %v11503 = vadd.f32 %v11390, %v11502
        %v11504 = vpop.f32.mrb[0].mxu0
        %v11505 = vadd.f32 %v11392, %v11504
        %v11506 = vpop.f32.mrb[0].mxu0
        %v11507 = vadd.f32 %v11394, %v11506
        %11508 = vmatprep.mubr.bf16.mxu0 %v1761
        %11509 = vmatmul.mubr.bf16.gmra.mrb[0].mxu0 %v1760
        %v11510 = vpop.f32.mrb[0].mxu0
        %v11511 = vadd.f32 %v11398, %v11510
        %v11512 = vpop.f32.mrb[0].mxu0
        %v11513 = vadd.f32 %v11400, %v11512
        %v11514 = vpop.f32.mrb[0].mxu0
        %v11515 = vadd.f32 %v11402, %v11514
        %v11516 = vpop.f32.mrb[0].mxu0
        %v11517 = vadd.f32 %v11404, %v11516
        %11518 = vmatprep.mubr.bf16.mxu0 %v1767
        %11519 = vmatmul.mubr.bf16.gmra.mrb[0].mxu0 %v1766
        %v11520 = vpop.f32.mrb[0].mxu0
        %v11521 = vadd.f32 %v11408, %v11520
        %v11522 = vpop.f32.mrb[0].mxu0
        %v11523 = vadd.f32 %v11410, %v11522
        %v11524 = vpop.f32.mrb[0].mxu0
        %v11525 = vadd.f32 %v11412, %v11524
        %v11526 = vpop.f32.mrb[0].mxu0
        %v11527 = vadd.f32 %v11414, %v11526
        %11528 = vmatprep.mubr.bf16.mxu0 %v1773
        %11529 = vmatmul.mubr.bf16.gmra.mrb[0].mxu0 %v1772
        %v11530 = vpop.f32.mrb[0].mxu0
        %v11531 = vadd.f32 %v11418, %v11530
        %v11532 = vpop.f32.mrb[0].mxu0
        %v11533 = vadd.f32 %v11420, %v11532
        %v11534 = vpop.f32.mrb[0].mxu0
        %v11535 = vadd.f32 %v11422, %v11534
        %v11536 = vpop.f32.mrb[0].mxu0
        %v11537 = vadd.f32 %v11424, %v11536
        %11538 = vdwg.mxu0
        %11539 = vmatprep.subr.bf16.mxu0 %v6071
        %11540 = vmatpush1.bf16.msra.mxu0 %v6070
        %11541 = vmatprep.subr.bf16.mxu0 %v6095
        %11542 = vmatpush1.bf16.msra.mxu0 %v6094
        %11543 = vmatprep.subr.bf16.mxu0 %v6119
        %11544 = vmatpush1.bf16.msra.mxu0 %v6118
        %11545 = vmatprep.subr.bf16.mxu0 %v6143
        %11546 = vmatpush1.bf16.msra.mxu0 %v6142
        %11547 = vmatprep.subr.bf16.mxu0 %v6167
        %11548 = vmatpush1.bf16.msra.mxu0 %v6166
        %11549 = vmatprep.subr.bf16.mxu0 %v6191
        %11550 = vmatpush1.bf16.msra.mxu0 %v6190
        %11551 = vmatprep.subr.bf16.mxu0 %v6215
        %11552 = vmatpush1.bf16.msra.mxu0 %v6214
        %11553 = vmatprep.subr.bf16.mxu0 %v6239
        %11554 = vmatpush1.bf16.msra.mxu0 %v6238
        %11555 = vmatprep.subr.bf16.mxu0 %v6263
        %11556 = vmatpush1.bf16.msra.mxu0 %v6262
        %11557 = vmatprep.subr.bf16.mxu0 %v6287
        %11558 = vmatpush1.bf16.msra.mxu0 %v6286
        %11559 = vmatprep.subr.bf16.mxu0 %v6311
        %11560 = vmatpush1.bf16.msra.mxu0 %v6310
        %11561 = vmatprep.subr.bf16.mxu0 %v6335
        %11562 = vmatpush1.bf16.msra.mxu0 %v6334
        %11563 = vmatprep.subr.bf16.mxu0 %v6359
        %11564 = vmatpush1.bf16.msra.mxu0 %v6358
        %11565 = vmatprep.subr.bf16.mxu0 %v6383
        %11566 = vmatpush1.bf16.msra.mxu0 %v6382
        %11567 = vmatprep.subr.bf16.mxu0 %v6407
        %11568 = vmatpush1.bf16.msra.mxu0 %v6406
        %11569 = vmatprep.subr.bf16.mxu0 %v6431
        %11570 = vmatpush1.bf16.msra.mxu0 %v6430
        %11571 = vmatprep.mubr.bf16.mxu0 %v1733
        %11572 = vmatmul.mubr.bf16.gmra.mrb[0].mxu0 %v1732
        %v11573 = vpop.f32.mrb[0].mxu0
        %v11574 = vadd.f32 %v11461, %v11573
        %v11575 = vpop.f32.mrb[0].mxu0
        %v11576 = vadd.f32 %v11463, %v11575
        %v11577 = vpop.f32.mrb[0].mxu0
        %v11578 = vadd.f32 %v11465, %v11577
        %v11579 = vpop.f32.mrb[0].mxu0
        %v11580 = vadd.f32 %v11467, %v11579
        %11581 = vmatprep.mubr.bf16.mxu0 %v1739
        %11582 = vmatmul.mubr.bf16.gmra.mrb[0].mxu0 %v1738
        %v11583 = vpop.f32.mrb[0].mxu0
        %v11584 = vadd.f32 %v11471, %v11583
        %v11585 = vpop.f32.mrb[0].mxu0
        %v11586 = vadd.f32 %v11473, %v11585
        %v11587 = vpop.f32.mrb[0].mxu0
        %v11588 = vadd.f32 %v11475, %v11587
        %v11589 = vpop.f32.mrb[0].mxu0
        %v11590 = vadd.f32 %v11477, %v11589
        %11591 = vmatprep.mubr.bf16.mxu0 %v1745
        %11592 = vmatmul.mubr.bf16.gmra.mrb[0].mxu0 %v1744
        %v11593 = vpop.f32.mrb[0].mxu0
        %v11594 = vadd.f32 %v11481, %v11593
        %v11595 = vpop.f32.mrb[0].mxu0
        %v11596 = vadd.f32 %v11483, %v11595
        %v11597 = vpop.f32.mrb[0].mxu0
        %v11598 = vadd.f32 %v11485, %v11597
        %v11599 = vpop.f32.mrb[0].mxu0
        %v11600 = vadd.f32 %v11487, %v11599
        %11601 = vmatprep.mubr.bf16.mxu0 %v1751
        %11602 = vmatmul.mubr.bf16.gmra.mrb[0].mxu0 %v1750
        %v11603 = vpop.f32.mrb[0].mxu0
        %v11604 = vadd.f32 %v11491, %v11603
        %v11605 = vpop.f32.mrb[0].mxu0
        %v11606 = vadd.f32 %v11493, %v11605
        %v11607 = vpop.f32.mrb[0].mxu0
        %v11608 = vadd.f32 %v11495, %v11607
        %v11609 = vpop.f32.mrb[0].mxu0
        %v11610 = vadd.f32 %v11497, %v11609
        %11611 = vmatprep.mubr.bf16.mxu0 %v1757
        %11612 = vmatmul.mubr.bf16.gmra.mrb[0].mxu0 %v1756
        %v11613 = vpop.f32.mrb[0].mxu0
        %v11614 = vadd.f32 %v11501, %v11613
        %v11615 = vpop.f32.mrb[0].mxu0
        %v11616 = vadd.f32 %v11503, %v11615
        %v11617 = vpop.f32.mrb[0].mxu0
        %v11618 = vadd.f32 %v11505, %v11617
        %v11619 = vpop.f32.mrb[0].mxu0
        %v11620 = vadd.f32 %v11507, %v11619
        %11621 = vmatprep.mubr.bf16.mxu0 %v1763
        %11622 = vmatmul.mubr.bf16.gmra.mrb[0].mxu0 %v1762
        %v11623 = vpop.f32.mrb[0].mxu0
        %v11624 = vadd.f32 %v11511, %v11623
        %v11625 = vpop.f32.mrb[0].mxu0
        %v11626 = vadd.f32 %v11513, %v11625
        %v11627 = vpop.f32.mrb[0].mxu0
        %v11628 = vadd.f32 %v11515, %v11627
        %v11629 = vpop.f32.mrb[0].mxu0
        %v11630 = vadd.f32 %v11517, %v11629
        %11631 = vmatprep.mubr.bf16.mxu0 %v1769
        %11632 = vmatmul.mubr.bf16.gmra.mrb[0].mxu0 %v1768
        %v11633 = vpop.f32.mrb[0].mxu0
        %v11634 = vadd.f32 %v11521, %v11633
        %v11635 = vpop.f32.mrb[0].mxu0
        %v11636 = vadd.f32 %v11523, %v11635
        %v11637 = vpop.f32.mrb[0].mxu0
        %v11638 = vadd.f32 %v11525, %v11637
        %v11639 = vpop.f32.mrb[0].mxu0
        %v11640 = vadd.f32 %v11527, %v11639
        %11641 = vmatprep.mubr.bf16.mxu0 %v1775
        %11642 = vmatmul.mubr.bf16.gmra.mrb[0].mxu0 %v1774
        %v11643 = vpop.f32.mrb[0].mxu0
        %v11644 = vadd.f32 %v11531, %v11643
        %v11645 = vpop.f32.mrb[0].mxu0
        %v11646 = vadd.f32 %v11533, %v11645
        %v11647 = vpop.f32.mrb[0].mxu0
        %v11648 = vadd.f32 %v11535, %v11647
        %v11649 = vpop.f32.mrb[0].mxu0
        %v11650 = vadd.f32 %v11537, %v11649
        %11651 = vdwg.mxu0
        %v11652 = vpack.c.bf16 %v7849, %v7845
        %v11653 = vpack.c.bf16 %v7851, %v7847
        %v11654 = vpack.c.bf16 %v8188, %v8184
        %v11655 = vpack.c.bf16 %v8190, %v8186
        %v11656 = vpack.c.bf16 %v8527, %v8523
        %v11657 = vpack.c.bf16 %v8529, %v8525
        %v11658 = vpack.c.bf16 %v8866, %v8862
        %v11659 = vpack.c.bf16 %v8868, %v8864
        %v11660 = vpack.c.bf16 %v9205, %v9201
        %v11661 = vpack.c.bf16 %v9207, %v9203
        %v11662 = vpack.c.bf16 %v9544, %v9540
        %v11663 = vpack.c.bf16 %v9546, %v9542
        %v11664 = vpack.c.bf16 %v9883, %v9879
        %v11665 = vpack.c.bf16 %v9885, %v9881
        %v11666 = vpack.c.bf16 %v10222, %v10218
        %v11667 = vpack.c.bf16 %v10224, %v10220
        %v11668 = vpack.c.bf16 %v10561, %v10557
        %v11669 = vpack.c.bf16 %v10563, %v10559
        %v11670 = vpack.c.bf16 %v10900, %v10896
        %v11671 = vpack.c.bf16 %v10902, %v10898
        %v11672 = vpack.c.bf16 %v11239, %v11235
        %v11673 = vpack.c.bf16 %v11241, %v11237
        %v11674 = vpack.c.bf16 %v11578, %v11574
        %v11675 = vpack.c.bf16 %v11580, %v11576
        %v11676 = vpack.c.bf16 %v7859, %v7855
        %v11677 = vpack.c.bf16 %v7861, %v7857
        %v11678 = vpack.c.bf16 %v8198, %v8194
        %v11679 = vpack.c.bf16 %v8200, %v8196
        %v11680 = vpack.c.bf16 %v8537, %v8533
        %v11681 = vpack.c.bf16 %v8539, %v8535
        %v11682 = vpack.c.bf16 %v8876, %v8872
        %v11683 = vpack.c.bf16 %v8878, %v8874
        %v11684 = vpack.c.bf16 %v9215, %v9211
        %v11685 = vpack.c.bf16 %v9217, %v9213
        %v11686 = vpack.c.bf16 %v9554, %v9550
        %v11687 = vpack.c.bf16 %v9556, %v9552
        %v11688 = vpack.c.bf16 %v9893, %v9889
        %v11689 = vpack.c.bf16 %v9895, %v9891
        %v11690 = vpack.c.bf16 %v10232, %v10228
        %v11691 = vpack.c.bf16 %v10234, %v10230
        %v11692 = vpack.c.bf16 %v10571, %v10567
        %v11693 = vpack.c.bf16 %v10573, %v10569
        %v11694 = vpack.c.bf16 %v10910, %v10906
        %v11695 = vpack.c.bf16 %v10912, %v10908
        %v11696 = vpack.c.bf16 %v11249, %v11245
        %v11697 = vpack.c.bf16 %v11251, %v11247
        %v11698 = vpack.c.bf16 %v11588, %v11584
        %v11699 = vpack.c.bf16 %v11590, %v11586
        %v11700 = vpack.c.bf16 %v7869, %v7865
        %v11701 = vpack.c.bf16 %v7871, %v7867
        %v11702 = vpack.c.bf16 %v8208, %v8204
        %v11703 = vpack.c.bf16 %v8210, %v8206
        %v11704 = vpack.c.bf16 %v8547, %v8543
        %v11705 = vpack.c.bf16 %v8549, %v8545
        %v11706 = vpack.c.bf16 %v8886, %v8882
        %v11707 = vpack.c.bf16 %v8888, %v8884
        %v11708 = vpack.c.bf16 %v9225, %v9221
        %v11709 = vpack.c.bf16 %v9227, %v9223
        %v11710 = vpack.c.bf16 %v9564, %v9560
        %v11711 = vpack.c.bf16 %v9566, %v9562
        %v11712 = vpack.c.bf16 %v9903, %v9899
        %v11713 = vpack.c.bf16 %v9905, %v9901
        %v11714 = vpack.c.bf16 %v10242, %v10238
        %v11715 = vpack.c.bf16 %v10244, %v10240
        %v11716 = vpack.c.bf16 %v10581, %v10577
        %v11717 = vpack.c.bf16 %v10583, %v10579
        %v11718 = vpack.c.bf16 %v10920, %v10916
        %v11719 = vpack.c.bf16 %v10922, %v10918
        %v11720 = vpack.c.bf16 %v11259, %v11255
        %v11721 = vpack.c.bf16 %v11261, %v11257
        %v11722 = vpack.c.bf16 %v11598, %v11594
        %v11723 = vpack.c.bf16 %v11600, %v11596
        %v11724 = vpack.c.bf16 %v7879, %v7875
        %v11725 = vpack.c.bf16 %v7881, %v7877
        %v11726 = vpack.c.bf16 %v8218, %v8214
        %v11727 = vpack.c.bf16 %v8220, %v8216
        %v11728 = vpack.c.bf16 %v8557, %v8553
        %v11729 = vpack.c.bf16 %v8559, %v8555
        %v11730 = vpack.c.bf16 %v8896, %v8892
        %v11731 = vpack.c.bf16 %v8898, %v8894
        %v11732 = vpack.c.bf16 %v9235, %v9231
        %v11733 = vpack.c.bf16 %v9237, %v9233
        %v11734 = vpack.c.bf16 %v9574, %v9570
        %v11735 = vpack.c.bf16 %v9576, %v9572
        %v11736 = vpack.c.bf16 %v9913, %v9909
        %v11737 = vpack.c.bf16 %v9915, %v9911
        %v11738 = vpack.c.bf16 %v10252, %v10248
        %v11739 = vpack.c.bf16 %v10254, %v10250
        %v11740 = vpack.c.bf16 %v10591, %v10587
        %v11741 = vpack.c.bf16 %v10593, %v10589
        %v11742 = vpack.c.bf16 %v10930, %v10926
        %v11743 = vpack.c.bf16 %v10932, %v10928
        %v11744 = vpack.c.bf16 %v11269, %v11265
        %v11745 = vpack.c.bf16 %v11271, %v11267
        %v11746 = vpack.c.bf16 %v11608, %v11604
        %v11747 = vpack.c.bf16 %v11610, %v11606
        %v11748 = vpack.c.bf16 %v7889, %v7885
        %v11749 = vpack.c.bf16 %v7891, %v7887
        %v11750 = vpack.c.bf16 %v8228, %v8224
        %v11751 = vpack.c.bf16 %v8230, %v8226
        %v11752 = vpack.c.bf16 %v8567, %v8563
        %v11753 = vpack.c.bf16 %v8569, %v8565
        %v11754 = vpack.c.bf16 %v8906, %v8902
        %v11755 = vpack.c.bf16 %v8908, %v8904
        %v11756 = vpack.c.bf16 %v9245, %v9241
        %v11757 = vpack.c.bf16 %v9247, %v9243
        %v11758 = vpack.c.bf16 %v9584, %v9580
        %v11759 = vpack.c.bf16 %v9586, %v9582
        %v11760 = vpack.c.bf16 %v9923, %v9919
        %v11761 = vpack.c.bf16 %v9925, %v9921
        %v11762 = vpack.c.bf16 %v10262, %v10258
        %v11763 = vpack.c.bf16 %v10264, %v10260
        %v11764 = vpack.c.bf16 %v10601, %v10597
        %v11765 = vpack.c.bf16 %v10603, %v10599
        %v11766 = vpack.c.bf16 %v10940, %v10936
        %v11767 = vpack.c.bf16 %v10942, %v10938
        %v11768 = vpack.c.bf16 %v11279, %v11275
        %v11769 = vpack.c.bf16 %v11281, %v11277
        %v11770 = vpack.c.bf16 %v11618, %v11614
        %v11771 = vpack.c.bf16 %v11620, %v11616
        %v11772 = vpack.c.bf16 %v7899, %v7895
        %v11773 = vpack.c.bf16 %v7901, %v7897
        %v11774 = vpack.c.bf16 %v8238, %v8234
        %v11775 = vpack.c.bf16 %v8240, %v8236
        %v11776 = vpack.c.bf16 %v8577, %v8573
        %v11777 = vpack.c.bf16 %v8579, %v8575
        %v11778 = vpack.c.bf16 %v8916, %v8912
        %v11779 = vpack.c.bf16 %v8918, %v8914
        %v11780 = vpack.c.bf16 %v9255, %v9251
        %v11781 = vpack.c.bf16 %v9257, %v9253
        %v11782 = vpack.c.bf16 %v9594, %v9590
        %v11783 = vpack.c.bf16 %v9596, %v9592
        %v11784 = vpack.c.bf16 %v9933, %v9929
        %v11785 = vpack.c.bf16 %v9935, %v9931
        %v11786 = vpack.c.bf16 %v10272, %v10268
        %v11787 = vpack.c.bf16 %v10274, %v10270
        %v11788 = vpack.c.bf16 %v10611, %v10607
        %v11789 = vpack.c.bf16 %v10613, %v10609
        %v11790 = vpack.c.bf16 %v10950, %v10946
        %v11791 = vpack.c.bf16 %v10952, %v10948
        %v11792 = vpack.c.bf16 %v11289, %v11285
        %v11793 = vpack.c.bf16 %v11291, %v11287
        %v11794 = vpack.c.bf16 %v11628, %v11624
        %v11795 = vpack.c.bf16 %v11630, %v11626
        %v11796 = vpack.c.bf16 %v7909, %v7905
        %v11797 = vpack.c.bf16 %v7911, %v7907
        %v11798 = vpack.c.bf16 %v8248, %v8244
        %v11799 = vpack.c.bf16 %v8250, %v8246
        %v11800 = vpack.c.bf16 %v8587, %v8583
        %v11801 = vpack.c.bf16 %v8589, %v8585
        %v11802 = vpack.c.bf16 %v8926, %v8922
        %v11803 = vpack.c.bf16 %v8928, %v8924
        %v11804 = vpack.c.bf16 %v9265, %v9261
        %v11805 = vpack.c.bf16 %v9267, %v9263
        %v11806 = vpack.c.bf16 %v9604, %v9600
        %v11807 = vpack.c.bf16 %v9606, %v9602
        %v11808 = vpack.c.bf16 %v9943, %v9939
        %v11809 = vpack.c.bf16 %v9945, %v9941
        %v11810 = vpack.c.bf16 %v10282, %v10278
        %v11811 = vpack.c.bf16 %v10284, %v10280
        %v11812 = vpack.c.bf16 %v10621, %v10617
        %v11813 = vpack.c.bf16 %v10623, %v10619
        %v11814 = vpack.c.bf16 %v10960, %v10956
        %v11815 = vpack.c.bf16 %v10962, %v10958
        %v11816 = vpack.c.bf16 %v11299, %v11295
        %v11817 = vpack.c.bf16 %v11301, %v11297
        %v11818 = vpack.c.bf16 %v11638, %v11634
        %v11819 = vpack.c.bf16 %v11640, %v11636
        %v11820 = vpack.c.bf16 %v7919, %v7915
        %v11821 = vpack.c.bf16 %v7921, %v7917
        %v11822 = vpack.c.bf16 %v8258, %v8254
        %v11823 = vpack.c.bf16 %v8260, %v8256
        %v11824 = vpack.c.bf16 %v8597, %v8593
        %v11825 = vpack.c.bf16 %v8599, %v8595
        %v11826 = vpack.c.bf16 %v8936, %v8932
        %v11827 = vpack.c.bf16 %v8938, %v8934
        %v11828 = vpack.c.bf16 %v9275, %v9271
        %v11829 = vpack.c.bf16 %v9277, %v9273
        %v11830 = vpack.c.bf16 %v9614, %v9610
        %v11831 = vpack.c.bf16 %v9616, %v9612
        %v11832 = vpack.c.bf16 %v9953, %v9949
        %v11833 = vpack.c.bf16 %v9955, %v9951
        %v11834 = vpack.c.bf16 %v10292, %v10288
        %v11835 = vpack.c.bf16 %v10294, %v10290
        %v11836 = vpack.c.bf16 %v10631, %v10627
        %v11837 = vpack.c.bf16 %v10633, %v10629
        %v11838 = vpack.c.bf16 %v10970, %v10966
        %v11839 = vpack.c.bf16 %v10972, %v10968
        %v11840 = vpack.c.bf16 %v11309, %v11305
        %v11841 = vpack.c.bf16 %v11311, %v11307
        %v11842 = vpack.c.bf16 %v11648, %v11644
        %v11843 = vpack.c.bf16 %v11650, %v11646
        %v11908 = vunpack.c.l.b16 %v11652
        %v11909 = vunpack.c.l.b16 %v11653
        %v11910 = vunpack.c.l.b16 %v11654
        %v11911 = vunpack.c.l.b16 %v11655
        %v11912 = vunpack.c.l.b16 %v11656
        %v11913 = vunpack.c.l.b16 %v11657
        %v11914 = vunpack.c.l.b16 %v11658
        %v11915 = vunpack.c.l.b16 %v11659
        %v11916 = vunpack.c.h.b16 %v11652
        %v11917 = vunpack.c.h.b16 %v11653
        %v11918 = vunpack.c.h.b16 %v11654
        %v11919 = vunpack.c.h.b16 %v11655
        %v11920 = vunpack.c.h.b16 %v11656
        %v11921 = vunpack.c.h.b16 %v11657
        %v11922 = vunpack.c.h.b16 %v11658
        %v11923 = vunpack.c.h.b16 %v11659
        %v11924 = vunpack.c.l.b16 %v11676
        %v11925 = vunpack.c.l.b16 %v11677
        %v11926 = vunpack.c.l.b16 %v11678
        %v11927 = vunpack.c.l.b16 %v11679
        %v11928 = vunpack.c.l.b16 %v11680
        %v11929 = vunpack.c.l.b16 %v11681
        %v11930 = vunpack.c.l.b16 %v11682
        %v11931 = vunpack.c.l.b16 %v11683
        %v11932 = vunpack.c.h.b16 %v11676
        %v11933 = vunpack.c.h.b16 %v11677
        %v11934 = vunpack.c.h.b16 %v11678
        %v11935 = vunpack.c.h.b16 %v11679
        %v11936 = vunpack.c.h.b16 %v11680
        %v11937 = vunpack.c.h.b16 %v11681
        %v11938 = vunpack.c.h.b16 %v11682
        %v11939 = vunpack.c.h.b16 %v11683
        %v11940 = vunpack.c.l.b16 %v11700
        %v11941 = vunpack.c.l.b16 %v11701
        %v11942 = vunpack.c.l.b16 %v11702
        %v11943 = vunpack.c.l.b16 %v11703
        %v11944 = vunpack.c.l.b16 %v11704
        %v11945 = vunpack.c.l.b16 %v11705
        %v11946 = vunpack.c.l.b16 %v11706
        %v11947 = vunpack.c.l.b16 %v11707
        %v11948 = vunpack.c.h.b16 %v11700
        %v11949 = vunpack.c.h.b16 %v11701
        %v11950 = vunpack.c.h.b16 %v11702
        %v11951 = vunpack.c.h.b16 %v11703
        %v11952 = vunpack.c.h.b16 %v11704
        %v11953 = vunpack.c.h.b16 %v11705
        %v11954 = vunpack.c.h.b16 %v11706
        %v11955 = vunpack.c.h.b16 %v11707
        %v11956 = vunpack.c.l.b16 %v11724
        %v11957 = vunpack.c.l.b16 %v11725
        %v11958 = vunpack.c.l.b16 %v11726
        %v11959 = vunpack.c.l.b16 %v11727
        %v11960 = vunpack.c.l.b16 %v11728
        %v11961 = vunpack.c.l.b16 %v11729
        %v11962 = vunpack.c.l.b16 %v11730
        %v11963 = vunpack.c.l.b16 %v11731
        %v11964 = vunpack.c.h.b16 %v11724
        %v11965 = vunpack.c.h.b16 %v11725
        %v11966 = vunpack.c.h.b16 %v11726
        %v11967 = vunpack.c.h.b16 %v11727
        %v11968 = vunpack.c.h.b16 %v11728
        %v11969 = vunpack.c.h.b16 %v11729
        %v11970 = vunpack.c.h.b16 %v11730
        %v11971 = vunpack.c.h.b16 %v11731
        %v11972 = vunpack.c.l.b16 %v11748
        %v11973 = vunpack.c.l.b16 %v11749
        %v11974 = vunpack.c.l.b16 %v11750
        %v11975 = vunpack.c.l.b16 %v11751
        %v11976 = vunpack.c.l.b16 %v11752
        %v11977 = vunpack.c.l.b16 %v11753
        %v11978 = vunpack.c.l.b16 %v11754
        %v11979 = vunpack.c.l.b16 %v11755
        %v11980 = vunpack.c.h.b16 %v11748
        %v11981 = vunpack.c.h.b16 %v11749
        %v11982 = vunpack.c.h.b16 %v11750
        %v11983 = vunpack.c.h.b16 %v11751
        %v11984 = vunpack.c.h.b16 %v11752
        %v11985 = vunpack.c.h.b16 %v11753
        %v11986 = vunpack.c.h.b16 %v11754
        %v11987 = vunpack.c.h.b16 %v11755
        %v11988 = vunpack.c.l.b16 %v11772
        %v11989 = vunpack.c.l.b16 %v11773
        %v11990 = vunpack.c.l.b16 %v11774
        %v11991 = vunpack.c.l.b16 %v11775
        %v11992 = vunpack.c.l.b16 %v11776
        %v11993 = vunpack.c.l.b16 %v11777
        %v11994 = vunpack.c.l.b16 %v11778
        %v11995 = vunpack.c.l.b16 %v11779
        %v11996 = vunpack.c.h.b16 %v11772
        %v11997 = vunpack.c.h.b16 %v11773
        %v11998 = vunpack.c.h.b16 %v11774
        %v11999 = vunpack.c.h.b16 %v11775
        %v12000 = vunpack.c.h.b16 %v11776
        %v12001 = vunpack.c.h.b16 %v11777
        %v12002 = vunpack.c.h.b16 %v11778
        %v12003 = vunpack.c.h.b16 %v11779
        %v12004 = vunpack.c.l.b16 %v11796
        %v12005 = vunpack.c.l.b16 %v11797
        %v12006 = vunpack.c.l.b16 %v11798
        %v12007 = vunpack.c.l.b16 %v11799
        %v12008 = vunpack.c.l.b16 %v11800
        %v12009 = vunpack.c.l.b16 %v11801
        %v12010 = vunpack.c.l.b16 %v11802
        %v12011 = vunpack.c.l.b16 %v11803
        %v12012 = vunpack.c.h.b16 %v11796
        %v12013 = vunpack.c.h.b16 %v11797
        %v12014 = vunpack.c.h.b16 %v11798
        %v12015 = vunpack.c.h.b16 %v11799
        %v12016 = vunpack.c.h.b16 %v11800
        %v12017 = vunpack.c.h.b16 %v11801
        %v12018 = vunpack.c.h.b16 %v11802
        %v12019 = vunpack.c.h.b16 %v11803
        %v12020 = vunpack.c.l.b16 %v11820
        %v12021 = vunpack.c.l.b16 %v11821
        %v12022 = vunpack.c.l.b16 %v11822
        %v12023 = vunpack.c.l.b16 %v11823
        %v12024 = vunpack.c.l.b16 %v11824
        %v12025 = vunpack.c.l.b16 %v11825
        %v12026 = vunpack.c.l.b16 %v11826
        %v12027 = vunpack.c.l.b16 %v11827
        %v12028 = vunpack.c.h.b16 %v11820
        %v12029 = vunpack.c.h.b16 %v11821
        %v12030 = vunpack.c.h.b16 %v11822
        %v12031 = vunpack.c.h.b16 %v11823
        %v12032 = vunpack.c.h.b16 %v11824
        %v12033 = vunpack.c.h.b16 %v11825
        %v12034 = vunpack.c.h.b16 %v11826
        %v12035 = vunpack.c.h.b16 %v11827
        %v12036 = vpack.c.b16 %v11909, %v11908
        %v12037 = vpack.c.b16 %v11911, %v11910
        %v12038 = vpack.c.b16 %v11913, %v11912
        %v12039 = vpack.c.b16 %v11915, %v11914
        %v12040 = vpack.c.b16 %v11917, %v11916
        %v12041 = vpack.c.b16 %v11919, %v11918
        %v12042 = vpack.c.b16 %v11921, %v11920
        %v12043 = vpack.c.b16 %v11923, %v11922
        %v12044 = vpack.c.b16 %v11925, %v11924
        %v12045 = vpack.c.b16 %v11927, %v11926
        %v12046 = vpack.c.b16 %v11929, %v11928
        %v12047 = vpack.c.b16 %v11931, %v11930
        %v12048 = vpack.c.b16 %v11933, %v11932
        %v12049 = vpack.c.b16 %v11935, %v11934
        %v12050 = vpack.c.b16 %v11937, %v11936
        %v12051 = vpack.c.b16 %v11939, %v11938
        %v12052 = vpack.c.b16 %v11941, %v11940
        %v12053 = vpack.c.b16 %v11943, %v11942
        %v12054 = vpack.c.b16 %v11945, %v11944
        %v12055 = vpack.c.b16 %v11947, %v11946
        %v12056 = vpack.c.b16 %v11949, %v11948
        %v12057 = vpack.c.b16 %v11951, %v11950
        %v12058 = vpack.c.b16 %v11953, %v11952
        %v12059 = vpack.c.b16 %v11955, %v11954
        %v12060 = vpack.c.b16 %v11957, %v11956
        %v12061 = vpack.c.b16 %v11959, %v11958
        %v12062 = vpack.c.b16 %v11961, %v11960
        %v12063 = vpack.c.b16 %v11963, %v11962
        %v12064 = vpack.c.b16 %v11965, %v11964
        %v12065 = vpack.c.b16 %v11967, %v11966
        %v12066 = vpack.c.b16 %v11969, %v11968
        %v12067 = vpack.c.b16 %v11971, %v11970
        %v12068 = vpack.c.b16 %v11973, %v11972
        %v12069 = vpack.c.b16 %v11975, %v11974
        %v12070 = vpack.c.b16 %v11977, %v11976
        %v12071 = vpack.c.b16 %v11979, %v11978
        %v12072 = vpack.c.b16 %v11981, %v11980
        %v12073 = vpack.c.b16 %v11983, %v11982
        %v12074 = vpack.c.b16 %v11985, %v11984
        %v12075 = vpack.c.b16 %v11987, %v11986
        %v12076 = vpack.c.b16 %v11989, %v11988
        %v12077 = vpack.c.b16 %v11991, %v11990
        %v12078 = vpack.c.b16 %v11993, %v11992
        %v12079 = vpack.c.b16 %v11995, %v11994
        %v12080 = vpack.c.b16 %v11997, %v11996
        %v12081 = vpack.c.b16 %v11999, %v11998
        %v12082 = vpack.c.b16 %v12001, %v12000
        %v12083 = vpack.c.b16 %v12003, %v12002
        %v12084 = vpack.c.b16 %v12005, %v12004
        %v12085 = vpack.c.b16 %v12007, %v12006
        %v12086 = vpack.c.b16 %v12009, %v12008
        %v12087 = vpack.c.b16 %v12011, %v12010
        %v12088 = vpack.c.b16 %v12013, %v12012
        %v12089 = vpack.c.b16 %v12015, %v12014
        %v12090 = vpack.c.b16 %v12017, %v12016
        %v12091 = vpack.c.b16 %v12019, %v12018
        %v12092 = vpack.c.b16 %v12021, %v12020
        %v12093 = vpack.c.b16 %v12023, %v12022
        %v12094 = vpack.c.b16 %v12025, %v12024
        %v12095 = vpack.c.b16 %v12027, %v12026
        %v12096 = vpack.c.b16 %v12029, %v12028
        %v12097 = vpack.c.b16 %v12031, %v12030
        %v12098 = vpack.c.b16 %v12033, %v12032
        %v12099 = vpack.c.b16 %v12035, %v12034
        %12164 = vst [vmem:[%s247] sm:$0xff] %v12036
        %12165 = vst [vmem:[%s247 + $0x8] sm:$0xff] %v12037
        %12166 = vst [vmem:[%s247 + $0x10] sm:$0xff] %v12038
        %12167 = vst [vmem:[%s247 + $0x18] sm:$0xff] %v12039
        %12168 = vst [vmem:[%s247 + $0x20] sm:$0xff] %v12040
        %12169 = vst [vmem:[%s247 + $0x28] sm:$0xff] %v12041
        %12170 = vst [vmem:[%s247 + $0x30] sm:$0xff] %v12042
        %12171 = vst [vmem:[%s247 + $0x38] sm:$0xff] %v12043
        %12172 = vst [vmem:[%s247 + $0x40] sm:$0xff] %v12044
        %12173 = vst [vmem:[%s247 + $0x48] sm:$0xff] %v12045
        %12174 = vst [vmem:[%s247 + $0x50] sm:$0xff] %v12046
        %12175 = vst [vmem:[%s247 + $0x58] sm:$0xff] %v12047
        %12176 = vst [vmem:[%s247 + $0x60] sm:$0xff] %v12048
        %12177 = vst [vmem:[%s247 + $0x68] sm:$0xff] %v12049
        %12178 = vst [vmem:[%s247 + $0x70] sm:$0xff] %v12050
        %12179 = vst [vmem:[%s247 + $0x78] sm:$0xff] %v12051
        %12180 = vst [vmem:[%s247 + $0x80] sm:$0xff] %v12052
        %12181 = vst [vmem:[%s247 + $0x88] sm:$0xff] %v12053
        %12182 = vst [vmem:[%s247 + $0x90] sm:$0xff] %v12054
        %12183 = vst [vmem:[%s247 + $0x98] sm:$0xff] %v12055
        %12184 = vst [vmem:[%s247 + $0xa0] sm:$0xff] %v12056
        %12185 = vst [vmem:[%s247 + $0xa8] sm:$0xff] %v12057
        %12186 = vst [vmem:[%s247 + $0xb0] sm:$0xff] %v12058
        %12187 = vst [vmem:[%s247 + $0xb8] sm:$0xff] %v12059
        %12188 = vst [vmem:[%s247 + $0xc0] sm:$0xff] %v12060
        %12189 = vst [vmem:[%s247 + $0xc8] sm:$0xff] %v12061
        %12190 = vst [vmem:[%s247 + $0xd0] sm:$0xff] %v12062
        %12191 = vst [vmem:[%s247 + $0xd8] sm:$0xff] %v12063
        %12192 = vst [vmem:[%s247 + $0xe0] sm:$0xff] %v12064
        %12193 = vst [vmem:[%s247 + $0xe8] sm:$0xff] %v12065
        %12194 = vst [vmem:[%s247 + $0xf0] sm:$0xff] %v12066
        %12195 = vst [vmem:[%s247 + $0xf8] sm:$0xff] %v12067
        %12196 = vst [vmem:[%s247 + $0x100] sm:$0xff] %v12068
        %12197 = vst [vmem:[%s247 + $0x108] sm:$0xff] %v12069
        %12198 = vst [vmem:[%s247 + $0x110] sm:$0xff] %v12070
        %12199 = vst [vmem:[%s247 + $0x118] sm:$0xff] %v12071
        %12200 = vst [vmem:[%s247 + $0x120] sm:$0xff] %v12072
        %12201 = vst [vmem:[%s247 + $0x128] sm:$0xff] %v12073
        %12202 = vst [vmem:[%s247 + $0x130] sm:$0xff] %v12074
        %12203 = vst [vmem:[%s247 + $0x138] sm:$0xff] %v12075
        %12204 = vst [vmem:[%s247 + $0x140] sm:$0xff] %v12076
        %12205 = vst [vmem:[%s247 + $0x148] sm:$0xff] %v12077
        %12206 = vst [vmem:[%s247 + $0x150] sm:$0xff] %v12078
        %12207 = vst [vmem:[%s247 + $0x158] sm:$0xff] %v12079
        %12208 = vst [vmem:[%s247 + $0x160] sm:$0xff] %v12080
        %12209 = vst [vmem:[%s247 + $0x168] sm:$0xff] %v12081
        %12210 = vst [vmem:[%s247 + $0x170] sm:$0xff] %v12082
        %12211 = vst [vmem:[%s247 + $0x178] sm:$0xff] %v12083
        %12212 = vst [vmem:[%s247 + $0x180] sm:$0xff] %v12084
        %12213 = vst [vmem:[%s247 + $0x188] sm:$0xff] %v12085
        %12214 = vst [vmem:[%s247 + $0x190] sm:$0xff] %v12086
        %12215 = vst [vmem:[%s247 + $0x198] sm:$0xff] %v12087
        %12216 = vst [vmem:[%s247 + $0x1a0] sm:$0xff] %v12088
        %12217 = vst [vmem:[%s247 + $0x1a8] sm:$0xff] %v12089
        %12218 = vst [vmem:[%s247 + $0x1b0] sm:$0xff] %v12090
        %12219 = vst [vmem:[%s247 + $0x1b8] sm:$0xff] %v12091
        %12220 = vst [vmem:[%s247 + $0x1c0] sm:$0xff] %v12092
        %12221 = vst [vmem:[%s247 + $0x1c8] sm:$0xff] %v12093
        %12222 = vst [vmem:[%s247 + $0x1d0] sm:$0xff] %v12094
        %12223 = vst [vmem:[%s247 + $0x1d8] sm:$0xff] %v12095
        %12224 = vst [vmem:[%s247 + $0x1e0] sm:$0xff] %v12096
        %12225 = vst [vmem:[%s247 + $0x1e8] sm:$0xff] %v12097
        %12226 = vst [vmem:[%s247 + $0x1f0] sm:$0xff] %v12098
        %12227 = vst [vmem:[%s247 + $0x1f8] sm:$0xff] %v12099
        %v12356 = vunpack.c.l.b16 %v11660
        %v12357 = vunpack.c.l.b16 %v11661
        %v12358 = vunpack.c.l.b16 %v11662
        %v12359 = vunpack.c.l.b16 %v11663
        %v12360 = vunpack.c.l.b16 %v11664
        %v12361 = vunpack.c.l.b16 %v11665
        %v12362 = vunpack.c.l.b16 %v11666
        %v12363 = vunpack.c.l.b16 %v11667
        %v12364 = vunpack.c.l.b16 %v11668
        %v12365 = vunpack.c.l.b16 %v11669
        %v12366 = vunpack.c.l.b16 %v11670
        %v12367 = vunpack.c.l.b16 %v11671
        %v12368 = vunpack.c.l.b16 %v11672
        %v12369 = vunpack.c.l.b16 %v11673
        %v12370 = vunpack.c.l.b16 %v11674
        %v12371 = vunpack.c.l.b16 %v11675
        %v12372 = vunpack.c.h.b16 %v11660
        %v12373 = vunpack.c.h.b16 %v11661
        %v12374 = vunpack.c.h.b16 %v11662
        %v12375 = vunpack.c.h.b16 %v11663
        %v12376 = vunpack.c.h.b16 %v11664
        %v12377 = vunpack.c.h.b16 %v11665
        %v12378 = vunpack.c.h.b16 %v11666
        %v12379 = vunpack.c.h.b16 %v11667
        %v12380 = vunpack.c.h.b16 %v11668
        %v12381 = vunpack.c.h.b16 %v11669
        %v12382 = vunpack.c.h.b16 %v11670
        %v12383 = vunpack.c.h.b16 %v11671
        %v12384 = vunpack.c.h.b16 %v11672
        %v12385 = vunpack.c.h.b16 %v11673
        %v12386 = vunpack.c.h.b16 %v11674
        %v12387 = vunpack.c.h.b16 %v11675
        %v12388 = vunpack.c.l.b16 %v11684
        %v12389 = vunpack.c.l.b16 %v11685
        %v12390 = vunpack.c.l.b16 %v11686
        %v12391 = vunpack.c.l.b16 %v11687
        %v12392 = vunpack.c.l.b16 %v11688
        %v12393 = vunpack.c.l.b16 %v11689
        %v12394 = vunpack.c.l.b16 %v11690
        %v12395 = vunpack.c.l.b16 %v11691
        %v12396 = vunpack.c.l.b16 %v11692
        %v12397 = vunpack.c.l.b16 %v11693
        %v12398 = vunpack.c.l.b16 %v11694
        %v12399 = vunpack.c.l.b16 %v11695
        %v12400 = vunpack.c.l.b16 %v11696
        %v12401 = vunpack.c.l.b16 %v11697
        %v12402 = vunpack.c.l.b16 %v11698
        %v12403 = vunpack.c.l.b16 %v11699
        %v12404 = vunpack.c.h.b16 %v11684
        %v12405 = vunpack.c.h.b16 %v11685
        %v12406 = vunpack.c.h.b16 %v11686
        %v12407 = vunpack.c.h.b16 %v11687
        %v12408 = vunpack.c.h.b16 %v11688
        %v12409 = vunpack.c.h.b16 %v11689
        %v12410 = vunpack.c.h.b16 %v11690
        %v12411 = vunpack.c.h.b16 %v11691
        %v12412 = vunpack.c.h.b16 %v11692
        %v12413 = vunpack.c.h.b16 %v11693
        %v12414 = vunpack.c.h.b16 %v11694
        %v12415 = vunpack.c.h.b16 %v11695
        %v12416 = vunpack.c.h.b16 %v11696
        %v12417 = vunpack.c.h.b16 %v11697
        %v12418 = vunpack.c.h.b16 %v11698
        %v12419 = vunpack.c.h.b16 %v11699
        %v12420 = vunpack.c.l.b16 %v11708
        %v12421 = vunpack.c.l.b16 %v11709
        %v12422 = vunpack.c.l.b16 %v11710
        %v12423 = vunpack.c.l.b16 %v11711
        %v12424 = vunpack.c.l.b16 %v11712
        %v12425 = vunpack.c.l.b16 %v11713
        %v12426 = vunpack.c.l.b16 %v11714
        %v12427 = vunpack.c.l.b16 %v11715
        %v12428 = vunpack.c.l.b16 %v11716
        %v12429 = vunpack.c.l.b16 %v11717
        %v12430 = vunpack.c.l.b16 %v11718
        %v12431 = vunpack.c.l.b16 %v11719
        %v12432 = vunpack.c.l.b16 %v11720
        %v12433 = vunpack.c.l.b16 %v11721
        %v12434 = vunpack.c.l.b16 %v11722
        %v12435 = vunpack.c.l.b16 %v11723
        %v12436 = vunpack.c.h.b16 %v11708
        %v12437 = vunpack.c.h.b16 %v11709
        %v12438 = vunpack.c.h.b16 %v11710
        %v12439 = vunpack.c.h.b16 %v11711
        %v12440 = vunpack.c.h.b16 %v11712
        %v12441 = vunpack.c.h.b16 %v11713
        %v12442 = vunpack.c.h.b16 %v11714
        %v12443 = vunpack.c.h.b16 %v11715
        %v12444 = vunpack.c.h.b16 %v11716
        %v12445 = vunpack.c.h.b16 %v11717
        %v12446 = vunpack.c.h.b16 %v11718
        %v12447 = vunpack.c.h.b16 %v11719
        %v12448 = vunpack.c.h.b16 %v11720
        %v12449 = vunpack.c.h.b16 %v11721
        %v12450 = vunpack.c.h.b16 %v11722
        %v12451 = vunpack.c.h.b16 %v11723
        %v12452 = vunpack.c.l.b16 %v11732
        %v12453 = vunpack.c.l.b16 %v11733
        %v12454 = vunpack.c.l.b16 %v11734
        %v12455 = vunpack.c.l.b16 %v11735
        %v12456 = vunpack.c.l.b16 %v11736
        %v12457 = vunpack.c.l.b16 %v11737
        %v12458 = vunpack.c.l.b16 %v11738
        %v12459 = vunpack.c.l.b16 %v11739
        %v12460 = vunpack.c.l.b16 %v11740
        %v12461 = vunpack.c.l.b16 %v11741
        %v12462 = vunpack.c.l.b16 %v11742
        %v12463 = vunpack.c.l.b16 %v11743
        %v12464 = vunpack.c.l.b16 %v11744
        %v12465 = vunpack.c.l.b16 %v11745
        %v12466 = vunpack.c.l.b16 %v11746
        %v12467 = vunpack.c.l.b16 %v11747
        %v12468 = vunpack.c.h.b16 %v11732
        %v12469 = vunpack.c.h.b16 %v11733
        %v12470 = vunpack.c.h.b16 %v11734
        %v12471 = vunpack.c.h.b16 %v11735
        %v12472 = vunpack.c.h.b16 %v11736
        %v12473 = vunpack.c.h.b16 %v11737
        %v12474 = vunpack.c.h.b16 %v11738
        %v12475 = vunpack.c.h.b16 %v11739
        %v12476 = vunpack.c.h.b16 %v11740
        %v12477 = vunpack.c.h.b16 %v11741
        %v12478 = vunpack.c.h.b16 %v11742
        %v12479 = vunpack.c.h.b16 %v11743
        %v12480 = vunpack.c.h.b16 %v11744
        %v12481 = vunpack.c.h.b16 %v11745
        %v12482 = vunpack.c.h.b16 %v11746
        %v12483 = vunpack.c.h.b16 %v11747
        %v12484 = vunpack.c.l.b16 %v11756
        %v12485 = vunpack.c.l.b16 %v11757
        %v12486 = vunpack.c.l.b16 %v11758
        %v12487 = vunpack.c.l.b16 %v11759
        %v12488 = vunpack.c.l.b16 %v11760
        %v12489 = vunpack.c.l.b16 %v11761
        %v12490 = vunpack.c.l.b16 %v11762
        %v12491 = vunpack.c.l.b16 %v11763
        %v12492 = vunpack.c.l.b16 %v11764
        %v12493 = vunpack.c.l.b16 %v11765
        %v12494 = vunpack.c.l.b16 %v11766
        %v12495 = vunpack.c.l.b16 %v11767
        %v12496 = vunpack.c.l.b16 %v11768
        %v12497 = vunpack.c.l.b16 %v11769
        %v12498 = vunpack.c.l.b16 %v11770
        %v12499 = vunpack.c.l.b16 %v11771
        %v12500 = vunpack.c.h.b16 %v11756
        %v12501 = vunpack.c.h.b16 %v11757
        %v12502 = vunpack.c.h.b16 %v11758
        %v12503 = vunpack.c.h.b16 %v11759
        %v12504 = vunpack.c.h.b16 %v11760
        %v12505 = vunpack.c.h.b16 %v11761
        %v12506 = vunpack.c.h.b16 %v11762
        %v12507 = vunpack.c.h.b16 %v11763
        %v12508 = vunpack.c.h.b16 %v11764
        %v12509 = vunpack.c.h.b16 %v11765
        %v12510 = vunpack.c.h.b16 %v11766
        %v12511 = vunpack.c.h.b16 %v11767
        %v12512 = vunpack.c.h.b16 %v11768
        %v12513 = vunpack.c.h.b16 %v11769
        %v12514 = vunpack.c.h.b16 %v11770
        %v12515 = vunpack.c.h.b16 %v11771
        %v12516 = vunpack.c.l.b16 %v11780
        %v12517 = vunpack.c.l.b16 %v11781
        %v12518 = vunpack.c.l.b16 %v11782
        %v12519 = vunpack.c.l.b16 %v11783
        %v12520 = vunpack.c.l.b16 %v11784
        %v12521 = vunpack.c.l.b16 %v11785
        %v12522 = vunpack.c.l.b16 %v11786
        %v12523 = vunpack.c.l.b16 %v11787
        %v12524 = vunpack.c.l.b16 %v11788
        %v12525 = vunpack.c.l.b16 %v11789
        %v12526 = vunpack.c.l.b16 %v11790
        %v12527 = vunpack.c.l.b16 %v11791
        %v12528 = vunpack.c.l.b16 %v11792
        %v12529 = vunpack.c.l.b16 %v11793
        %v12530 = vunpack.c.l.b16 %v11794
        %v12531 = vunpack.c.l.b16 %v11795
        %v12532 = vunpack.c.h.b16 %v11780
        %v12533 = vunpack.c.h.b16 %v11781
        %v12534 = vunpack.c.h.b16 %v11782
        %v12535 = vunpack.c.h.b16 %v11783
        %v12536 = vunpack.c.h.b16 %v11784
        %v12537 = vunpack.c.h.b16 %v11785
        %v12538 = vunpack.c.h.b16 %v11786
        %v12539 = vunpack.c.h.b16 %v11787
        %v12540 = vunpack.c.h.b16 %v11788
        %v12541 = vunpack.c.h.b16 %v11789
        %v12542 = vunpack.c.h.b16 %v11790
        %v12543 = vunpack.c.h.b16 %v11791
        %v12544 = vunpack.c.h.b16 %v11792
        %v12545 = vunpack.c.h.b16 %v11793
        %v12546 = vunpack.c.h.b16 %v11794
        %v12547 = vunpack.c.h.b16 %v11795
        %v12548 = vunpack.c.l.b16 %v11804
        %v12549 = vunpack.c.l.b16 %v11805
        %v12550 = vunpack.c.l.b16 %v11806
        %v12551 = vunpack.c.l.b16 %v11807
        %v12552 = vunpack.c.l.b16 %v11808
        %v12553 = vunpack.c.l.b16 %v11809
        %v12554 = vunpack.c.l.b16 %v11810
        %v12555 = vunpack.c.l.b16 %v11811
        %v12556 = vunpack.c.l.b16 %v11812
        %v12557 = vunpack.c.l.b16 %v11813
        %v12558 = vunpack.c.l.b16 %v11814
        %v12559 = vunpack.c.l.b16 %v11815
        %v12560 = vunpack.c.l.b16 %v11816
        %v12561 = vunpack.c.l.b16 %v11817
        %v12562 = vunpack.c.l.b16 %v11818
        %v12563 = vunpack.c.l.b16 %v11819
        %v12564 = vunpack.c.h.b16 %v11804
        %v12565 = vunpack.c.h.b16 %v11805
        %v12566 = vunpack.c.h.b16 %v11806
        %v12567 = vunpack.c.h.b16 %v11807
        %v12568 = vunpack.c.h.b16 %v11808
        %v12569 = vunpack.c.h.b16 %v11809
        %v12570 = vunpack.c.h.b16 %v11810
        %v12571 = vunpack.c.h.b16 %v11811
        %v12572 = vunpack.c.h.b16 %v11812
        %v12573 = vunpack.c.h.b16 %v11813
        %v12574 = vunpack.c.h.b16 %v11814
        %v12575 = vunpack.c.h.b16 %v11815
        %v12576 = vunpack.c.h.b16 %v11816
        %v12577 = vunpack.c.h.b16 %v11817
        %v12578 = vunpack.c.h.b16 %v11818
        %v12579 = vunpack.c.h.b16 %v11819
        %v12580 = vunpack.c.l.b16 %v11828
        %v12581 = vunpack.c.l.b16 %v11829
        %v12582 = vunpack.c.l.b16 %v11830
        %v12583 = vunpack.c.l.b16 %v11831
        %v12584 = vunpack.c.l.b16 %v11832
        %v12585 = vunpack.c.l.b16 %v11833
        %v12586 = vunpack.c.l.b16 %v11834
        %v12587 = vunpack.c.l.b16 %v11835
        %v12588 = vunpack.c.l.b16 %v11836
        %v12589 = vunpack.c.l.b16 %v11837
        %v12590 = vunpack.c.l.b16 %v11838
        %v12591 = vunpack.c.l.b16 %v11839
        %v12592 = vunpack.c.l.b16 %v11840
        %v12593 = vunpack.c.l.b16 %v11841
        %v12594 = vunpack.c.l.b16 %v11842
        %v12595 = vunpack.c.l.b16 %v11843
        %v12596 = vunpack.c.h.b16 %v11828
        %v12597 = vunpack.c.h.b16 %v11829
        %v12598 = vunpack.c.h.b16 %v11830
        %v12599 = vunpack.c.h.b16 %v11831
        %v12600 = vunpack.c.h.b16 %v11832
        %v12601 = vunpack.c.h.b16 %v11833
        %v12602 = vunpack.c.h.b16 %v11834
        %v12603 = vunpack.c.h.b16 %v11835
        %v12604 = vunpack.c.h.b16 %v11836
        %v12605 = vunpack.c.h.b16 %v11837
        %v12606 = vunpack.c.h.b16 %v11838
        %v12607 = vunpack.c.h.b16 %v11839
        %v12608 = vunpack.c.h.b16 %v11840
        %v12609 = vunpack.c.h.b16 %v11841
        %v12610 = vunpack.c.h.b16 %v11842
        %v12611 = vunpack.c.h.b16 %v11843
        %v12612 = vpack.c.b16 %v12357, %v12356
        %v12613 = vpack.c.b16 %v12359, %v12358
        %v12614 = vpack.c.b16 %v12361, %v12360
        %v12615 = vpack.c.b16 %v12363, %v12362
        %v12616 = vpack.c.b16 %v12365, %v12364
        %v12617 = vpack.c.b16 %v12367, %v12366
        %v12618 = vpack.c.b16 %v12369, %v12368
        %v12619 = vpack.c.b16 %v12371, %v12370
        %v12620 = vpack.c.b16 %v12373, %v12372
        %v12621 = vpack.c.b16 %v12375, %v12374
        %v12622 = vpack.c.b16 %v12377, %v12376
        %v12623 = vpack.c.b16 %v12379, %v12378
        %v12624 = vpack.c.b16 %v12381, %v12380
        %v12625 = vpack.c.b16 %v12383, %v12382
        %v12626 = vpack.c.b16 %v12385, %v12384
        %v12627 = vpack.c.b16 %v12387, %v12386
        %v12628 = vpack.c.b16 %v12389, %v12388
        %v12629 = vpack.c.b16 %v12391, %v12390
        %v12630 = vpack.c.b16 %v12393, %v12392
        %v12631 = vpack.c.b16 %v12395, %v12394
        %v12632 = vpack.c.b16 %v12397, %v12396
        %v12633 = vpack.c.b16 %v12399, %v12398
        %v12634 = vpack.c.b16 %v12401, %v12400
        %v12635 = vpack.c.b16 %v12403, %v12402
        %v12636 = vpack.c.b16 %v12405, %v12404
        %v12637 = vpack.c.b16 %v12407, %v12406
        %v12638 = vpack.c.b16 %v12409, %v12408
        %v12639 = vpack.c.b16 %v12411, %v12410
        %v12640 = vpack.c.b16 %v12413, %v12412
        %v12641 = vpack.c.b16 %v12415, %v12414
        %v12642 = vpack.c.b16 %v12417, %v12416
        %v12643 = vpack.c.b16 %v12419, %v12418
        %v12644 = vpack.c.b16 %v12421, %v12420
        %v12645 = vpack.c.b16 %v12423, %v12422
        %v12646 = vpack.c.b16 %v12425, %v12424
        %v12647 = vpack.c.b16 %v12427, %v12426
        %v12648 = vpack.c.b16 %v12429, %v12428
        %v12649 = vpack.c.b16 %v12431, %v12430
        %v12650 = vpack.c.b16 %v12433, %v12432
        %v12651 = vpack.c.b16 %v12435, %v12434
        %v12652 = vpack.c.b16 %v12437, %v12436
        %v12653 = vpack.c.b16 %v12439, %v12438
        %v12654 = vpack.c.b16 %v12441, %v12440
        %v12655 = vpack.c.b16 %v12443, %v12442
        %v12656 = vpack.c.b16 %v12445, %v12444
        %v12657 = vpack.c.b16 %v12447, %v12446
        %v12658 = vpack.c.b16 %v12449, %v12448
        %v12659 = vpack.c.b16 %v12451, %v12450
        %v12660 = vpack.c.b16 %v12453, %v12452
        %v12661 = vpack.c.b16 %v12455, %v12454
        %v12662 = vpack.c.b16 %v12457, %v12456
        %v12663 = vpack.c.b16 %v12459, %v12458
        %v12664 = vpack.c.b16 %v12461, %v12460
        %v12665 = vpack.c.b16 %v12463, %v12462
        %v12666 = vpack.c.b16 %v12465, %v12464
        %v12667 = vpack.c.b16 %v12467, %v12466
        %v12668 = vpack.c.b16 %v12469, %v12468
        %v12669 = vpack.c.b16 %v12471, %v12470
        %v12670 = vpack.c.b16 %v12473, %v12472
        %v12671 = vpack.c.b16 %v12475, %v12474
        %v12672 = vpack.c.b16 %v12477, %v12476
        %v12673 = vpack.c.b16 %v12479, %v12478
        %v12674 = vpack.c.b16 %v12481, %v12480
        %v12675 = vpack.c.b16 %v12483, %v12482
        %v12676 = vpack.c.b16 %v12485, %v12484
        %v12677 = vpack.c.b16 %v12487, %v12486
        %v12678 = vpack.c.b16 %v12489, %v12488
        %v12679 = vpack.c.b16 %v12491, %v12490
        %v12680 = vpack.c.b16 %v12493, %v12492
        %v12681 = vpack.c.b16 %v12495, %v12494
        %v12682 = vpack.c.b16 %v12497, %v12496
        %v12683 = vpack.c.b16 %v12499, %v12498
        %v12684 = vpack.c.b16 %v12501, %v12500
        %v12685 = vpack.c.b16 %v12503, %v12502
        %v12686 = vpack.c.b16 %v12505, %v12504
        %v12687 = vpack.c.b16 %v12507, %v12506
        %v12688 = vpack.c.b16 %v12509, %v12508
        %v12689 = vpack.c.b16 %v12511, %v12510
        %v12690 = vpack.c.b16 %v12513, %v12512
        %v12691 = vpack.c.b16 %v12515, %v12514
        %v12692 = vpack.c.b16 %v12517, %v12516
        %v12693 = vpack.c.b16 %v12519, %v12518
        %v12694 = vpack.c.b16 %v12521, %v12520
        %v12695 = vpack.c.b16 %v12523, %v12522
        %v12696 = vpack.c.b16 %v12525, %v12524
        %v12697 = vpack.c.b16 %v12527, %v12526
        %v12698 = vpack.c.b16 %v12529, %v12528
        %v12699 = vpack.c.b16 %v12531, %v12530
        %v12700 = vpack.c.b16 %v12533, %v12532
        %v12701 = vpack.c.b16 %v12535, %v12534
        %v12702 = vpack.c.b16 %v12537, %v12536
        %v12703 = vpack.c.b16 %v12539, %v12538
        %v12704 = vpack.c.b16 %v12541, %v12540
        %v12705 = vpack.c.b16 %v12543, %v12542
        %v12706 = vpack.c.b16 %v12545, %v12544
        %v12707 = vpack.c.b16 %v12547, %v12546
        %v12708 = vpack.c.b16 %v12549, %v12548
        %v12709 = vpack.c.b16 %v12551, %v12550
        %v12710 = vpack.c.b16 %v12553, %v12552
        %v12711 = vpack.c.b16 %v12555, %v12554
        %v12712 = vpack.c.b16 %v12557, %v12556
        %v12713 = vpack.c.b16 %v12559, %v12558
        %v12714 = vpack.c.b16 %v12561, %v12560
        %v12715 = vpack.c.b16 %v12563, %v12562
        %v12716 = vpack.c.b16 %v12565, %v12564
        %v12717 = vpack.c.b16 %v12567, %v12566
        %v12718 = vpack.c.b16 %v12569, %v12568
        %v12719 = vpack.c.b16 %v12571, %v12570
        %v12720 = vpack.c.b16 %v12573, %v12572
        %v12721 = vpack.c.b16 %v12575, %v12574
        %v12722 = vpack.c.b16 %v12577, %v12576
        %v12723 = vpack.c.b16 %v12579, %v12578
        %v12724 = vpack.c.b16 %v12581, %v12580
        %v12725 = vpack.c.b16 %v12583, %v12582
        %v12726 = vpack.c.b16 %v12585, %v12584
        %v12727 = vpack.c.b16 %v12587, %v12586
        %v12728 = vpack.c.b16 %v12589, %v12588
        %v12729 = vpack.c.b16 %v12591, %v12590
        %v12730 = vpack.c.b16 %v12593, %v12592
        %v12731 = vpack.c.b16 %v12595, %v12594
        %v12732 = vpack.c.b16 %v12597, %v12596
        %v12733 = vpack.c.b16 %v12599, %v12598
        %v12734 = vpack.c.b16 %v12601, %v12600
        %v12735 = vpack.c.b16 %v12603, %v12602
        %v12736 = vpack.c.b16 %v12605, %v12604
        %v12737 = vpack.c.b16 %v12607, %v12606
        %v12738 = vpack.c.b16 %v12609, %v12608
        %v12739 = vpack.c.b16 %v12611, %v12610
        %12868 = vst [vmem:[%s254] sm:$0xff] %v12612
        %12869 = vst [vmem:[%s254 + $0x8] sm:$0xff] %v12613
        %12870 = vst [vmem:[%s254 + $0x10] sm:$0xff] %v12614
        %12871 = vst [vmem:[%s254 + $0x18] sm:$0xff] %v12615
        %12872 = vst [vmem:[%s254 + $0x20] sm:$0xff] %v12616
        %12873 = vst [vmem:[%s254 + $0x28] sm:$0xff] %v12617
        %12874 = vst [vmem:[%s254 + $0x30] sm:$0xff] %v12618
        %12875 = vst [vmem:[%s254 + $0x38] sm:$0xff] %v12619
        %12876 = vst [vmem:[%s254 + $0x40] sm:$0xff] %v12620
        %12877 = vst [vmem:[%s254 + $0x48] sm:$0xff] %v12621
        %12878 = vst [vmem:[%s254 + $0x50] sm:$0xff] %v12622
        %12879 = vst [vmem:[%s254 + $0x58] sm:$0xff] %v12623
        %12880 = vst [vmem:[%s254 + $0x60] sm:$0xff] %v12624
        %12881 = vst [vmem:[%s254 + $0x68] sm:$0xff] %v12625
        %12882 = vst [vmem:[%s254 + $0x70] sm:$0xff] %v12626
        %12883 = vst [vmem:[%s254 + $0x78] sm:$0xff] %v12627
        %12884 = vst [vmem:[%s254 + $0x80] sm:$0xff] %v12628
        %12885 = vst [vmem:[%s254 + $0x88] sm:$0xff] %v12629
        %12886 = vst [vmem:[%s254 + $0x90] sm:$0xff] %v12630
        %12887 = vst [vmem:[%s254 + $0x98] sm:$0xff] %v12631
        %12888 = vst [vmem:[%s254 + $0xa0] sm:$0xff] %v12632
        %12889 = vst [vmem:[%s254 + $0xa8] sm:$0xff] %v12633
        %12890 = vst [vmem:[%s254 + $0xb0] sm:$0xff] %v12634
        %12891 = vst [vmem:[%s254 + $0xb8] sm:$0xff] %v12635
        %12892 = vst [vmem:[%s254 + $0xc0] sm:$0xff] %v12636
        %12893 = vst [vmem:[%s254 + $0xc8] sm:$0xff] %v12637
        %12894 = vst [vmem:[%s254 + $0xd0] sm:$0xff] %v12638
        %12895 = vst [vmem:[%s254 + $0xd8] sm:$0xff] %v12639
        %12896 = vst [vmem:[%s254 + $0xe0] sm:$0xff] %v12640
        %12897 = vst [vmem:[%s254 + $0xe8] sm:$0xff] %v12641
        %12898 = vst [vmem:[%s254 + $0xf0] sm:$0xff] %v12642
        %12899 = vst [vmem:[%s254 + $0xf8] sm:$0xff] %v12643
        %12900 = vst [vmem:[%s254 + $0x100] sm:$0xff] %v12644
        %12901 = vst [vmem:[%s254 + $0x108] sm:$0xff] %v12645
        %12902 = vst [vmem:[%s254 + $0x110] sm:$0xff] %v12646
        %12903 = vst [vmem:[%s254 + $0x118] sm:$0xff] %v12647
        %12904 = vst [vmem:[%s254 + $0x120] sm:$0xff] %v12648
        %12905 = vst [vmem:[%s254 + $0x128] sm:$0xff] %v12649
        %12906 = vst [vmem:[%s254 + $0x130] sm:$0xff] %v12650
        %12907 = vst [vmem:[%s254 + $0x138] sm:$0xff] %v12651
        %12908 = vst [vmem:[%s254 + $0x140] sm:$0xff] %v12652
        %12909 = vst [vmem:[%s254 + $0x148] sm:$0xff] %v12653
        %12910 = vst [vmem:[%s254 + $0x150] sm:$0xff] %v12654
        %12911 = vst [vmem:[%s254 + $0x158] sm:$0xff] %v12655
        %12912 = vst [vmem:[%s254 + $0x160] sm:$0xff] %v12656
        %12913 = vst [vmem:[%s254 + $0x168] sm:$0xff] %v12657
        %12914 = vst [vmem:[%s254 + $0x170] sm:$0xff] %v12658
        %12915 = vst [vmem:[%s254 + $0x178] sm:$0xff] %v12659
        %12916 = vst [vmem:[%s254 + $0x180] sm:$0xff] %v12660
        %12917 = vst [vmem:[%s254 + $0x188] sm:$0xff] %v12661
        %12918 = vst [vmem:[%s254 + $0x190] sm:$0xff] %v12662
        %12919 = vst [vmem:[%s254 + $0x198] sm:$0xff] %v12663
        %12920 = vst [vmem:[%s254 + $0x1a0] sm:$0xff] %v12664
        %12921 = vst [vmem:[%s254 + $0x1a8] sm:$0xff] %v12665
        %12922 = vst [vmem:[%s254 + $0x1b0] sm:$0xff] %v12666
        %12923 = vst [vmem:[%s254 + $0x1b8] sm:$0xff] %v12667
        %12924 = vst [vmem:[%s254 + $0x1c0] sm:$0xff] %v12668
        %12925 = vst [vmem:[%s254 + $0x1c8] sm:$0xff] %v12669
        %12926 = vst [vmem:[%s254 + $0x1d0] sm:$0xff] %v12670
        %12927 = vst [vmem:[%s254 + $0x1d8] sm:$0xff] %v12671
        %12928 = vst [vmem:[%s254 + $0x1e0] sm:$0xff] %v12672
        %12929 = vst [vmem:[%s254 + $0x1e8] sm:$0xff] %v12673
        %12930 = vst [vmem:[%s254 + $0x1f0] sm:$0xff] %v12674
        %12931 = vst [vmem:[%s254 + $0x1f8] sm:$0xff] %v12675
        %12932 = vst [vmem:[%s254 + $0x200] sm:$0xff] %v12676
        %12933 = vst [vmem:[%s254 + $0x208] sm:$0xff] %v12677
        %12934 = vst [vmem:[%s254 + $0x210] sm:$0xff] %v12678
        %12935 = vst [vmem:[%s254 + $0x218] sm:$0xff] %v12679
        %12936 = vst [vmem:[%s254 + $0x220] sm:$0xff] %v12680
        %12937 = vst [vmem:[%s254 + $0x228] sm:$0xff] %v12681
        %12938 = vst [vmem:[%s254 + $0x230] sm:$0xff] %v12682
        %12939 = vst [vmem:[%s254 + $0x238] sm:$0xff] %v12683
        %12940 = vst [vmem:[%s254 + $0x240] sm:$0xff] %v12684
        %12941 = vst [vmem:[%s254 + $0x248] sm:$0xff] %v12685
        %12942 = vst [vmem:[%s254 + $0x250] sm:$0xff] %v12686
        %12943 = vst [vmem:[%s254 + $0x258] sm:$0xff] %v12687
        %12944 = vst [vmem:[%s254 + $0x260] sm:$0xff] %v12688
        %12945 = vst [vmem:[%s254 + $0x268] sm:$0xff] %v12689
        %12946 = vst [vmem:[%s254 + $0x270] sm:$0xff] %v12690
        %12947 = vst [vmem:[%s254 + $0x278] sm:$0xff] %v12691
        %12948 = vst [vmem:[%s254 + $0x280] sm:$0xff] %v12692
        %12949 = vst [vmem:[%s254 + $0x288] sm:$0xff] %v12693
        %12950 = vst [vmem:[%s254 + $0x290] sm:$0xff] %v12694
        %12951 = vst [vmem:[%s254 + $0x298] sm:$0xff] %v12695
        %12952 = vst [vmem:[%s254 + $0x2a0] sm:$0xff] %v12696
        %12953 = vst [vmem:[%s254 + $0x2a8] sm:$0xff] %v12697
        %12954 = vst [vmem:[%s254 + $0x2b0] sm:$0xff] %v12698
        %12955 = vst [vmem:[%s254 + $0x2b8] sm:$0xff] %v12699
        %12956 = vst [vmem:[%s254 + $0x2c0] sm:$0xff] %v12700
        %12957 = vst [vmem:[%s254 + $0x2c8] sm:$0xff] %v12701
        %12958 = vst [vmem:[%s254 + $0x2d0] sm:$0xff] %v12702
        %12959 = vst [vmem:[%s254 + $0x2d8] sm:$0xff] %v12703
        %12960 = vst [vmem:[%s254 + $0x2e0] sm:$0xff] %v12704
        %12961 = vst [vmem:[%s254 + $0x2e8] sm:$0xff] %v12705
        %12962 = vst [vmem:[%s254 + $0x2f0] sm:$0xff] %v12706
        %12963 = vst [vmem:[%s254 + $0x2f8] sm:$0xff] %v12707
        %12964 = vst [vmem:[%s254 + $0x300] sm:$0xff] %v12708
        %12965 = vst [vmem:[%s254 + $0x308] sm:$0xff] %v12709
        %12966 = vst [vmem:[%s254 + $0x310] sm:$0xff] %v12710
        %12967 = vst [vmem:[%s254 + $0x318] sm:$0xff] %v12711
        %12968 = vst [vmem:[%s254 + $0x320] sm:$0xff] %v12712
        %12969 = vst [vmem:[%s254 + $0x328] sm:$0xff] %v12713
        %12970 = vst [vmem:[%s254 + $0x330] sm:$0xff] %v12714
        %12971 = vst [vmem:[%s254 + $0x338] sm:$0xff] %v12715
        %12972 = vst [vmem:[%s254 + $0x340] sm:$0xff] %v12716
        %12973 = vst [vmem:[%s254 + $0x348] sm:$0xff] %v12717
        %12974 = vst [vmem:[%s254 + $0x350] sm:$0xff] %v12718
        %12975 = vst [vmem:[%s254 + $0x358] sm:$0xff] %v12719
        %12976 = vst [vmem:[%s254 + $0x360] sm:$0xff] %v12720
        %12977 = vst [vmem:[%s254 + $0x368] sm:$0xff] %v12721
        %12978 = vst [vmem:[%s254 + $0x370] sm:$0xff] %v12722
        %12979 = vst [vmem:[%s254 + $0x378] sm:$0xff] %v12723
        %12980 = vst [vmem:[%s254 + $0x380] sm:$0xff] %v12724
        %12981 = vst [vmem:[%s254 + $0x388] sm:$0xff] %v12725
        %12982 = vst [vmem:[%s254 + $0x390] sm:$0xff] %v12726
        %12983 = vst [vmem:[%s254 + $0x398] sm:$0xff] %v12727
        %12984 = vst [vmem:[%s254 + $0x3a0] sm:$0xff] %v12728
        %12985 = vst [vmem:[%s254 + $0x3a8] sm:$0xff] %v12729
        %12986 = vst [vmem:[%s254 + $0x3b0] sm:$0xff] %v12730
        %12987 = vst [vmem:[%s254 + $0x3b8] sm:$0xff] %v12731
        %12988 = vst [vmem:[%s254 + $0x3c0] sm:$0xff] %v12732
        %12989 = vst [vmem:[%s254 + $0x3c8] sm:$0xff] %v12733
        %12990 = vst [vmem:[%s254 + $0x3d0] sm:$0xff] %v12734
        %12991 = vst [vmem:[%s254 + $0x3d8] sm:$0xff] %v12735
        %12992 = vst [vmem:[%s254 + $0x3e0] sm:$0xff] %v12736
        %12993 = vst [vmem:[%s254 + $0x3e8] sm:$0xff] %v12737
        %12994 = vst [vmem:[%s254 + $0x3f0] sm:$0xff] %v12738
        %12995 = vst [vmem:[%s254 + $0x3f8] sm:$0xff] %v12739
        %s12996 = sand.u32 %s102, 1
        %s12997 = scalar_lea.sflag [#allocation4], %s12996
        %s12998 = sand.u32 %s102, 1
        %s12999 = smul.addr %s12998, 512
        %s13000 = scalar_lea.vmem [#allocation8], %s12999
        %s13001 = sand.u32 %s128, 1
        %s13002 = scalar_lea.sflag [#allocation10], %s13001
        %s13003 = sand.u32 %s128, 1
        %s13004 = smul.addr %s13003, 1024
        %s13005 = scalar_lea.vmem [#allocation9], %s13004
        // Predicated region
        $region45: #{tpu_custom_call.1} parent=31 // pred_check
          %p13006 = pneg %p112
        $region46: #{tpu_custom_call.1} parent=31 // pred_check_branch
          %13008 = sbr.rel (%p13006) target = $region48
        $region47: #{tpu_custom_call.1} parent=31 // pred_region
          %s13009 = smul.u32 16, %s26
          %s13011 = ssub.s32 8192, 8192
          %13012 = vsyncadd %s12997, %s13011
          %s13013 = smul.addr %s13009, 8
          %s13014 = smul.addr %s13013, 64
          %s13015 = scalar_lea.hbm %s3, %s13014
          %s13016 = sshll.u32 %s13000, 4
          %s13017 = int_to_ptr.vmem [resolvable:$true] %s13016
          %13022 = dma.vmem_to_hbm [thread:$0]  %s13017, 8192, %s13015, %s12997, 512, 512, 32
        $region48: #{tpu_custom_call.1} parent=31 // pred_fallthru
          _
        // Predicated region
        $region49: #{tpu_custom_call.1} parent=31 // pred_check
          %p13023 = pneg %p138
        $region50: #{tpu_custom_call.1} parent=31 // pred_check_branch
          %13025 = sbr.rel (%p13023) target = $region52
        $region51: #{tpu_custom_call.1} parent=31 // pred_region
          %s13026 = smul.u32 16, %s26
          %s13028 = ssub.s32 16384, 16384
          %13029 = vsyncadd %s13002, %s13028
          %s13030 = smul.addr %s13026, 16
          %s13031 = smul.addr %s13030, 64
          %s13032 = scalar_lea.hbm %s4, %s13031
          %s13033 = sshll.u32 %s13005, 4
          %s13034 = int_to_ptr.vmem [resolvable:$true] %s13033
          %13039 = dma.vmem_to_hbm [thread:$0]  %s13034, 16384, %s13032, %s13002, 1024, 1024, 64
        $region52: #{tpu_custom_call.1} parent=31 // pred_fallthru
          _
      $region32: #{tpu_custom_call.1} parent=5 // pred_fallthru
        _
      %p13040 = scmp.le.s32.totalorder 2, %s21
      // Predicated region
      $region53: #{tpu_custom_call.1} parent=5 // pred_check
        %p13041 = pneg %p13040
      $region54: #{tpu_custom_call.1} parent=5 // pred_check_branch
        %13043 = sbr.rel (%p13041) target = $region56
      $region55: #{tpu_custom_call.1} parent=5 // pred_region
        %s13044 = ssub.s32 %s21, 2
        // Predicated region
        $region57: #{tpu_custom_call.1} parent=55 // pred_check
          %p13045 = pneg %p118
        $region58: #{tpu_custom_call.1} parent=55 // pred_check_branch
          %13047 = sbr.rel (%p13045) target = $region60
        $region59: #{tpu_custom_call.1} parent=55 // pred_region
          %s13048 = sand.u32 %s103, 1
          %s13049 = scalar_lea.sflag [#allocation4], %s13048
          %s13050 = sand.u32 %s103, 1
          %s13051 = smul.addr %s13050, 512
          %s13052 = scalar_lea.vmem [#allocation8], %s13051
          %13053 = dma.done %s13049, 8192
        $region60: #{tpu_custom_call.1} parent=55 // pred_fallthru
          _
        // Predicated region
        $region61: #{tpu_custom_call.1} parent=55 // pred_check
          %p13054 = pneg %p144
        $region62: #{tpu_custom_call.1} parent=55 // pred_check_branch
          %13056 = sbr.rel (%p13054) target = $region64
        $region63: #{tpu_custom_call.1} parent=55 // pred_region
          %s13057 = sand.u32 %s129, 1
          %s13058 = scalar_lea.sflag [#allocation10], %s13057
          %s13059 = sand.u32 %s129, 1
          %s13060 = smul.addr %s13059, 1024
          %s13061 = scalar_lea.vmem [#allocation9], %s13060
          %13062 = dma.done %s13058, 16384
        $region64: #{tpu_custom_call.1} parent=55 // pred_fallthru
          _
      $region56: #{tpu_custom_call.1} parent=5 // pred_fallthru
        _
    $region6: #{tpu_custom_call.1} parent=1 // loop_footer
      %s25 = sadd.s32 1, %s21
    $region7: #{tpu_custom_call.1} parent=1 // loop_footer_branch
      %20 = sbr.rel target = $region3
    $region8: #{tpu_custom_call.1} parent=1 // loop_exit
      _
    %13063 = vsyncpa [#allocation3], 1
    %s13064 = scalar_lea.sflag [#allocation3], 1
    %13065 = vsyncpa %s13064, 1
    %13066 = vsyncpa [#allocation6], 1
    %13067 = vsyncpa [#allocation4], 1
    %s13068 = scalar_lea.sflag [#allocation4], 1
    %13069 = vsyncpa %s13068, 1
    %13070 = vsyncpa [#allocation10], 1
    %s13071 = scalar_lea.sflag [#allocation10], 1
    %13072 = vsyncpa %s13071, 1

</llo_original>
